<compile_context>
chip_gen: v6e
topology: v6e:2x2x1
jax: 0.10.0
libtpu: 0.0.40
codegen_flags: <defaults>
</compile_context>

<pallas_src>
import jax
import jax.numpy as jnp
from jax import lax
from jax.experimental import pallas as pl
from jax.experimental.pallas import tpu as pltpu

MLP_SIZE = 300      # hard-coded in SR_Labeler / SR_Matcher
ROLE_DIM = 200      # hard-coded role-vector size


# ----------------------------------------------------------------------------
# Fused bidirectional LSTM layer.
#   grid=(2,) over direction ("parallel" -> both v7x TensorCores busy).
#   Input projection for all timesteps is computed first (off the recurrent
#   critical path); the recurrence then runs fully VMEM-resident.
# ----------------------------------------------------------------------------

def _lstm_layer_kernel(x_ref, wih_ref, b_ref, whh_ref, h0_ref, c0_ref, o_ref,
                       z_sc, h_sc, c_sc):
    S = x_ref.shape[0]
    H = h0_ref.shape[1]
    d = pl.program_id(0)                      # 0 = forward, 1 = backward

    # --- hoisted input projection: z[t] = x[t] @ Wih^T + (bih + bhh) ---------
    wih = wih_ref[...]                        # (In, 4H) bf16, VMEM-resident
    bias = b_ref[...]                         # (1, 4H) f32

    def proj_step(t, carry):
        z_sc[t] = jnp.dot(x_ref[t].astype(jnp.bfloat16), wih,
                          preferred_element_type=jnp.float32) + bias
        return carry

    lax.fori_loop(0, S, proj_step, 0)

    # --- recurrence: h, c, Whh stay on-chip ----------------------------------
    whh = whh_ref[...]                        # (H, 4H) bf16
    h_sc[...] = h0_ref[...]
    c_sc[...] = c0_ref[...]

    def rec_step(t, carry):
        idx = jnp.where(d == 0, t, S - 1 - t)
        zt = z_sc[idx] + jnp.dot(h_sc[...].astype(jnp.bfloat16), whh,
                                 preferred_element_type=jnp.float32)   # (B, 4H)
        i_g = jax.nn.sigmoid(zt[:, 0:H])          # PyTorch gate order i,f,g,o
        f_g = jax.nn.sigmoid(zt[:, H:2 * H])
        g_g = jnp.tanh(zt[:, 2 * H:3 * H])
        o_g = jax.nn.sigmoid(zt[:, 3 * H:4 * H])
        c_new = f_g * c_sc[...] + i_g * g_g
        h_new = o_g * jnp.tanh(c_new)
        c_sc[...] = c_new
        h_sc[...] = h_new
        o_ref[idx] = h_new                        # stored at original position
        return carry

    lax.fori_loop(0, S, rec_step, 0)


def lstm_layer(x_sbi, wih_t, bias, whh_t, h0, c0):
    """x_sbi: (S,B,In); wih_t/whh_t: (2,In,4H)/(2,H,4H) bf16; bias: (2,1,4H);
    h0/c0: (2,B,H).  Returns (S,B,2H) with [fwd | bwd] features."""
    S, B, In = x_sbi.shape
    H = h0.shape[2]
    G = 4 * H
    hs = pl.pallas_call(
        _lstm_layer_kernel,
        out_shape=jax.ShapeDtypeStruct((2, S, B, H), jnp.float32),
        grid=(2,),
        in_specs=[
            pl.BlockSpec((S, B, In), lambda d: (0, 0, 0)),     # shared across dirs
            pl.BlockSpec((None, In, G), lambda d: (d, 0, 0)),
            pl.BlockSpec((None, 1, G), lambda d: (d, 0, 0)),
            pl.BlockSpec((None, H, G), lambda d: (d, 0, 0)),
            pl.BlockSpec((None, B, H), lambda d: (d, 0, 0)),
            pl.BlockSpec((None, B, H), lambda d: (d, 0, 0)),
        ],
        out_specs=pl.BlockSpec((None, S, B, H), lambda d: (d, 0, 0, 0)),
        scratch_shapes=[
            pltpu.VMEM((S, B, G), jnp.float32),   # pre-projected z
            pltpu.VMEM((B, H), jnp.float32),      # h
            pltpu.VMEM((B, H), jnp.float32),      # c
        ],
        compiler_params=pltpu.CompilerParams(
            dimension_semantics=("parallel",)),
    )(x_sbi, wih_t, bias, whh_t, h0, c0)
    return jnp.concatenate([hs[0], hs[1]], axis=-1)


def bilstm(x_bsi, layers, h0, c0):
    """x_bsi: (B,S,In); PyTorch nn.LSTM(batch_first=True, bidirectional=True)."""
    x = jnp.transpose(x_bsi, (1, 0, 2))           # (S, B, In)
    for l, lp in enumerate(layers):
        x = lstm_layer(x, lp["wih_t"], lp["bias"], lp["whh_t"],
                       h0[2 * l:2 * l + 2], c0[2 * l:2 * l + 2])
    return jnp.transpose(x, (1, 0, 2))            # (B, S, 2H)


# ----------------------------------------------------------------------------
# mlp_pred + biaffine y-contraction:  Wy[b] = [relu(pred_recur @ Wp + bp), 1] @ rel_W_t
# Output (B, 301*V) is lane-dense; the tiny (B,301,V) reshape happens in XLA.
# ----------------------------------------------------------------------------

def _wy_kernel(pr_ref, pw_ref, pb_ref, rw_ref, rb_ref, wy_ref):
    ph = jnp.maximum(
        jnp.dot(pr_ref[...].astype(jnp.bfloat16), pw_ref[...],
                preferred_element_type=jnp.float32) + pb_ref[...], 0.0)   # (B,300)
    wy_ref[...] = jnp.dot(ph.astype(jnp.bfloat16), rw_ref[...],
                          preferred_element_type=jnp.float32) + rb_ref[...]


def wy_projection(pred_recur, mlp_pred_w, mlp_pred_b, rel_w_main, rel_w_bias):
    B = pred_recur.shape[0]
    N = rel_w_main.shape[1]
    return pl.pallas_call(
        _wy_kernel,
        out_shape=jax.ShapeDtypeStruct((B, N), jnp.float32),
        grid=(1,),
        in_specs=[
            pl.BlockSpec(pred_recur.shape, lambda i: (0, 0)),
            pl.BlockSpec(mlp_pred_w.shape, lambda i: (0, 0)),
            pl.BlockSpec(mlp_pred_b.shape, lambda i: (0, 0)),
            pl.BlockSpec(rel_w_main.shape, lambda i: (0, 0)),
            pl.BlockSpec(rel_w_bias.shape, lambda i: (0, 0)),
        ],
        out_specs=pl.BlockSpec((B, N), lambda i: (0, 0)),
    )(pred_recur, mlp_pred_w, mlp_pred_b, rel_w_main, rel_w_bias)


# ----------------------------------------------------------------------------
# Fused labeler head + compressor weight construction.  grid=(B,) "parallel".
#   arg = relu(hidden @ mlp_arg_w + b); scores = arg @ Wy[:300] + Wy[300]
#   weights = [softmax(scores, -1) | col-sums - softmax]   (static sub-stores)
# ----------------------------------------------------------------------------

def _labeler_head_kernel(hid_ref, w_ref, b_ref, wy_ref, srl_ref, aw_ref):
    V = wy_ref.shape[1]
    arg = jnp.dot(hid_ref[...].astype(jnp.bfloat16), w_ref[...],
                  preferred_element_type=jnp.float32) + b_ref[...]
    arg = jnp.maximum(arg, 0.0)                                      # mlp_arg + ReLU
    wy_main = wy_ref[:MLP_SIZE, :]                                   # static view (300, V)
    wy_bias = wy_ref[MLP_SIZE:, :]                                   # static view (1, V)
    scores = jnp.dot(arg.astype(jnp.bfloat16), wy_main.astype(jnp.bfloat16),
                     preferred_element_type=jnp.float32) + wy_bias   # (S, V)
    srl_ref[...] = scores
    # SR_Compressor weight construction (softmax over vocab + O-weights)
    m = jnp.max(scores, axis=-1, keepdims=True)
    e = jnp.exp(scores - m)
    wgt = e * pl.reciprocal(jnp.sum(e, axis=-1, keepdims=True), approx=True)
    wsum = jnp.sum(wgt, axis=0, keepdims=True)                       # (1, V)
    aw_ref[:, :V] = wgt
    aw_ref[:, V:] = wsum - wgt


def labeler_head(hidden, mlp_arg_w, mlp_arg_b, wy):
    B, S, H2 = hidden.shape
    V = wy.shape[2]
    M1 = MLP_SIZE + 1
    return pl.pallas_call(
        _labeler_head_kernel,
        out_shape=(jax.ShapeDtypeStruct((B, S, V), jnp.float32),
                   jax.ShapeDtypeStruct((B, S, 2 * V), jnp.float32)),
        grid=(B,),
        in_specs=[
            pl.BlockSpec((None, S, H2), lambda b: (b, 0, 0)),
            pl.BlockSpec((H2, MLP_SIZE), lambda b: (0, 0)),
            pl.BlockSpec((1, MLP_SIZE), lambda b: (0, 0)),
            pl.BlockSpec((None, M1, V), lambda b: (b, 0, 0)),
        ],
        out_specs=(
            pl.BlockSpec((None, S, V), lambda b: (b, 0, 0)),
            pl.BlockSpec((None, S, 2 * V), lambda b: (b, 0, 0)),
        ),
        compiler_params=pltpu.CompilerParams(
            dimension_semantics=("parallel",)),
    )(hidden, mlp_arg_w, mlp_arg_b, wy)


# ----------------------------------------------------------------------------
# Fused hidden2vector + gatherProb + compressor sum + matcher.  grid=(B,) "parallel".
# ----------------------------------------------------------------------------

def _match_head_kernel(ci_ref, w1_ref, b1_ref, w2_ref, b2_ref,
                       co_ref, gw_ref, gb_ref, mm_ref, out_ref):
    q = ci_ref[...].astype(jnp.bfloat16)                              # (S, Ep+Ef)
    # hidden2vector: Linear + ReLU + Linear (intermediate never leaves VMEM)
    h = jnp.maximum(jnp.dot(q, w1_ref[...],
                            preferred_element_type=jnp.float32) + b1_ref[...], 0.0)
    rv = jnp.dot(h.astype(jnp.bfloat16), w2_ref[...],
                 preferred_element_type=jnp.float32) + b2_ref[...]    # (S, 200)
    # gatherProb + sigmoid
    re_w = jax.nn.sigmoid(
        jnp.dot(co_ref[...].astype(jnp.bfloat16), gw_ref[...],
                preferred_element_type=jnp.float32) + gb_ref[...])    # (S, V)
    # compressor vector: contract over S (axis 0) -> no explicit transpose
    prv = lax.dot_general(re_w.astype(jnp.bfloat16), rv.astype(jnp.bfloat16),
                          dimension_numbers=(((0,), (0,)), ((), ())),
                          preferred_element_type=jnp.float32)          # (V, 200)
    # matcher: scores[s,v] = (q @ match_matrix)[s,:] . prv[v,:]
    y = jnp.dot(q, mm_ref[...], preferred_element_type=jnp.float32)    # (S, 200)
    scores = lax.dot_general(y.astype(jnp.bfloat16), prv.astype(jnp.bfloat16),
                             dimension_numbers=(((1,), (1,)), ((), ())),
                             preferred_element_type=jnp.float32)       # (S, V)
    col = lax.broadcasted_iota(jnp.int32, scores.shape, 1)
    out_ref[...] = jnp.where(col == 1, 0.0, scores)                    # zerosNull col 1


def match_head(compress_input, comp_out, params):
    B, S, Q = compress_input.shape
    V = params["gather_b"].shape[1]
    return pl.pallas_call(
        _match_head_kernel,
        out_shape=jax.ShapeDtypeStruct((B, S, V), jnp.float32),
        grid=(B,),
        in_specs=[
            pl.BlockSpec((None, S, Q), lambda b: (b, 0, 0)),
            pl.BlockSpec(params["h2v_w1"].shape, lambda b: (0, 0)),
            pl.BlockSpec(params["h2v_b1"].shape, lambda b: (0, 0)),
            pl.BlockSpec(params["h2v_w2"].shape, lambda b: (0, 0)),
            pl.BlockSpec(params["h2v_b2"].shape, lambda b: (0, 0)),
            pl.BlockSpec((None, S, 2 * V), lambda b: (b, 0, 0)),
            pl.BlockSpec(params["gather_w"].shape, lambda b: (0, 0)),
            pl.BlockSpec(params["gather_b"].shape, lambda b: (0, 0)),
            pl.BlockSpec(params["match_matrix"].shape, lambda b: (0, 0)),
        ],
        out_specs=pl.BlockSpec((None, S, V), lambda b: (b, 0, 0)),
        compiler_params=pltpu.CompilerParams(
            dimension_semantics=("parallel",)),
    )(compress_input, params["h2v_w1"], params["h2v_b1"],
      params["h2v_w2"], params["h2v_b2"], comp_out,
      params["gather_w"], params["gather_b"], params["match_matrix"])


# ----------------------------------------------------------------------------
# Parameter construction (deterministic, synthetic).  Weights are pre-transposed,
# pre-combined (bih+bhh), and pre-cast to bf16 once, per the perf review.
# ----------------------------------------------------------------------------

def make_params(key, cfg):
    keys = iter(jax.random.split(key, 256))
    B = cfg["batch_size"]
    V = cfg["target_vocab_size"]
    Ef = cfg["flag_embedding_size"]
    Ep = cfg["pretrain_emb_size"]
    H = cfg["bilstm_hidden_size"]
    L = cfg["bilstm_num_layers"]

    def rnd(shape, scale=0.1):
        return scale * jax.random.normal(next(keys), shape, jnp.float32)

    def bf16(x):
        return x.astype(jnp.bfloat16)

    def make_bilstm(num_layers, input_size, hidden):
        layers = []
        for l in range(num_layers):
            in_sz = input_size if l == 0 else 2 * hidden
            wih_t, whh_t, bias = [], [], []
            for _ in range(2):
                Wih = rnd((4 * hidden, in_sz))
                Whh = rnd((4 * hidden, hidden))
                bih = rnd((4 * hidden,))
                bhh = rnd((4 * hidden,))
                wih_t.append(bf16(Wih.T))
                whh_t.append(bf16(Whh.T))
                bias.append((bih + bhh).reshape(1, 4 * hidden))
            layers.append(dict(wih_t=jnp.stack(wih_t),    # (2, in_sz, 4H) bf16
                               whh_t=jnp.stack(whh_t),    # (2, H, 4H)     bf16
                               bias=jnp.stack(bias)))     # (2, 1, 4H)     f32
        return layers

    p = {}
    # embeddings
    p["pretrained_emb"] = rnd((cfg["pretrain_vocab_size"], Ep), 0.5)
    p["flag_emb"] = jax.random.uniform(next(keys), (2, Ef), jnp.float32, -1.0, 1.0)
    p["id_emb"] = jax.random.uniform(next(keys), (100, Ef), jnp.float32, -1.0, 1.0)
    # SR_Labeler
    p["labeler_lstm"] = make_bilstm(L, Ep + Ef, H)
    p["labeler_h0"] = rnd((2 * L, B, H), 1.0)
    p["labeler_c0"] = rnd((2 * L, B, H), 1.0)
    p["mlp_arg_w"] = bf16(rnd((2 * H, MLP_SIZE)))
    p["mlp_arg_b"] = rnd((1, MLP_SIZE))
    p["mlp_pred_w"] = bf16(rnd((2 * H, MLP_SIZE)))
    p["mlp_pred_b"] = rnd((1, MLP_SIZE))
    # nn.Parameter rel_W is zeros in __init__; random here to keep the kernel
    # numerically non-trivial (shape matches exactly).  Pre-restructured for the
    # y-first contraction: rel_W_t[j, i*V + v] = rel_W[i, v*(MLP_SIZE+1) + j].
    rel_W = rnd((MLP_SIZE + 1, V * (MLP_SIZE + 1)), 0.05)
    rel_W_t = (rel_W.reshape(MLP_SIZE + 1, V, MLP_SIZE + 1)
                    .transpose(2, 0, 1)
                    .reshape(MLP_SIZE + 1, (MLP_SIZE + 1) * V))
    p["rel_W_main"] = bf16(rel_W_t[:MLP_SIZE])        # (300, 301*V) bf16
    p["rel_W_bias"] = rel_W_t[MLP_SIZE:]              # (1, 301*V)   f32
    # SR_Compressor
    p["h2v_w1"] = bf16(rnd((Ep + Ef, MLP_SIZE)))
    p["h2v_b1"] = rnd((1, MLP_SIZE))
    p["h2v_w2"] = bf16(rnd((MLP_SIZE, ROLE_DIM)))
    p["h2v_b2"] = rnd((1, ROLE_DIM))
    p["comp_lstm"] = make_bilstm(2, 2 * V, V)
    p["comp_h0"] = rnd((4, B, V), 1.0)
    p["comp_c0"] = rnd((4, B, V), 1.0)
    p["gather_w"] = bf16(rnd((2 * V, V)))
    p["gather_b"] = rnd((1, V))
    # SR_Matcher (zeros in __init__, random here — shape matches)
    p["match_matrix"] = bf16(rnd((Ep + Ef, ROLE_DIM), 0.05))
    return p


# ----------------------------------------------------------------------------
# Forward pass (SR_Model.forward, lang='En', unlabeled=False, eval mode)
# ----------------------------------------------------------------------------

def sr_model_forward(params, pretrain_ids, flag_ids, word_times, predicates_1D):
    B, S = pretrain_ids.shape
    V = params["gather_b"].shape[1]

    pretrain_emb = jnp.take(params["pretrained_emb"], pretrain_ids, axis=0)   # (B,S,Ep)
    flag_emb = jnp.take(params["flag_emb"], flag_ids, axis=0)                 # (B,S,Ef)
    word_id_emb = jnp.take(params["id_emb"], word_times, axis=0)              # (B,S,Ef)

    # ---------------- SR_Labeler ----------------
    input_emb = jnp.concatenate([pretrain_emb, flag_emb], axis=2)
    # dropout_word(p=0.5) / dropout_hidden(p=0.3): identity in eval mode
    hidden_input = bilstm(input_emb, params["labeler_lstm"],
                          params["labeler_h0"], params["labeler_c0"])         # (B,S,2H)

    pred_recur = hidden_input[jnp.arange(B), predicates_1D]                   # (B,2H)
    wy_flat = wy_projection(pred_recur, params["mlp_pred_w"], params["mlp_pred_b"],
                            params["rel_W_main"], params["rel_W_bias"])       # (B,301*V)
    wy = wy_flat.reshape(B, MLP_SIZE + 1, V)                                  # (B,301,V)

    # fused: mlp_arg + biaffine scores + softmax/O-weights (SR_Compressor input)
    srl_bsv, all_weights = labeler_head(hidden_input, params["mlp_arg_w"],
                                        params["mlp_arg_b"], wy)
    SRL_output = srl_bsv.reshape(B * S, V)

    # ---------------- SR_Compressor + SR_Matcher ----------------
    # TODO(synk): no sequence-length masking (synthetic inputs are full-length).
    compress_input = jnp.concatenate([pretrain_emb, word_id_emb], axis=2)     # (B,S,Ep+Ef)
    comp_out = bilstm(all_weights, params["comp_lstm"],
                      params["comp_h0"], params["comp_c0"])                   # (B,S,2V)
    output_word = match_head(compress_input, comp_out, params).reshape(B * S, V)

    return SRL_output, output_word


# ----------------------------------------------------------------------------
# Main
# ----------------------------------------------------------------------------

if __name__ == "__main__":
    cfg = dict(
        batch_size=2,
        target_vocab_size=16,
        flag_embedding_size=8,
        pretrain_emb_size=32,
        bilstm_num_layers=2,
        bilstm_hidden_size=24,
        pretrain_vocab_size=50,
    )
    B, S = cfg["batch_size"], 8

    root = jax.random.PRNGKey(0)
    k_par, k_pre, k_flag, k_wid, k_pred = jax.random.split(root, 5)
    params = make_params(k_par, cfg)

    pretrain_ids = jax.random.randint(k_pre, (B, S), 0, cfg["pretrain_vocab_size"], jnp.int32)
    flag_ids = jax.random.randint(k_flag, (B, S), 0, 2, jnp.int32)
    word_times = jax.random.randint(k_wid, (B, S), 0, 100, jnp.int32)
    predicates_1D = jax.random.randint(k_pred, (B,), 0, S, jnp.int32)

    fwd = jax.jit(sr_model_forward)
    srl_out, out_word = fwd(params, pretrain_ids, flag_ids, word_times, predicates_1D)
    jax.block_until_ready((srl_out, out_word))
    assert srl_out.shape == (B * S, cfg["target_vocab_size"])
    assert out_word.shape == (B * S, cfg["target_vocab_size"])
    print("KERNEL_OK")
</pallas_src>

<mosaic_0001>
module attributes {stable_mosaic.version = 11 : i64} {
  func.func @_lstm_layer_kernel(%arg0: i32, %arg1: memref<8x2x40xf32, #tpu.memory_space<vmem>>, %arg2: memref<1x40x96xbf16, #tpu.memory_space<vmem>>, %arg3: memref<1x1x96xf32, #tpu.memory_space<vmem>>, %arg4: memref<1x24x96xbf16, #tpu.memory_space<vmem>>, %arg5: memref<1x2x24xf32, #tpu.memory_space<vmem>>, %arg6: memref<1x2x24xf32, #tpu.memory_space<vmem>>, %arg7: memref<1x8x2x24xf32, #tpu.memory_space<vmem>>, %arg8: memref<8x2x96xf32, #tpu.memory_space<vmem>>, %arg9: memref<2x24xf32, #tpu.memory_space<vmem>>, %arg10: memref<2x24xf32, #tpu.memory_space<vmem>>) attributes {dimension_semantics = [#tpu.dimension_semantics<parallel>], iteration_bounds = array<i64: 2>, scalar_prefetch = 0 : i64, scratch_operands = 3 : i64, tpu.core_type = #tpu.core_type<tc>, window_params = [{pipeline_mode = #tpu.pipeline_mode<synchronous>, transform_indices = @transform_0, window_bounds = array<i64: 8, 2, 40>}, {transform_indices = @transform_1, window_bounds = array<i64: 1, 40, 96>}, {transform_indices = @transform_2, window_bounds = array<i64: 1, 1, 96>}, {transform_indices = @transform_3, window_bounds = array<i64: 1, 24, 96>}, {transform_indices = @transform_4, window_bounds = array<i64: 1, 2, 24>}, {transform_indices = @transform_5, window_bounds = array<i64: 1, 2, 24>}, {transform_indices = @transform_6, window_bounds = array<i64: 1, 8, 2, 24>}]} {
    %c0 = arith.constant 0 : index
    %c0_0 = arith.constant 0 : index
    %c0_1 = arith.constant 0 : index
    %0 = vector.load %arg2[%c0, %c0_0, %c0_1] : memref<1x40x96xbf16, #tpu.memory_space<vmem>>, vector<1x40x96xbf16>
    %1 = vector.shape_cast %0 : vector<1x40x96xbf16> to vector<40x96xbf16>
    %c0_2 = arith.constant 0 : index
    %c0_3 = arith.constant 0 : index
    %c0_4 = arith.constant 0 : index
    %2 = vector.load %arg3[%c0_2, %c0_3, %c0_4] : memref<1x1x96xf32, #tpu.memory_space<vmem>>, vector<1x1x96xf32>
    %3 = vector.shape_cast %2 : vector<1x1x96xf32> to vector<1x96xf32>
    %c0_i32 = arith.constant 0 : i32
    %c8_i32 = arith.constant 8 : i32
    %4 = arith.addi %c0_i32, %c8_i32 : i32
    %c1_i32 = arith.constant 1 : i32
    scf.for %arg11 = %c0_i32 to %4 step %c1_i32  : i32 {
      %14 = arith.index_cast %arg11 : i32 to index
      %c0_23 = arith.constant 0 : index
      %c0_24 = arith.constant 0 : index
      %15 = vector.load %arg1[%14, %c0_23, %c0_24] : memref<8x2x40xf32, #tpu.memory_space<vmem>>, vector<1x2x40xf32>
      %16 = vector.shape_cast %15 : vector<1x2x40xf32> to vector<2x40xf32>
      %17 = arith.truncf %16 : vector<2x40xf32> to vector<2x40xbf16>
      %cst = arith.constant dense<0.000000e+00> : vector<2x96xf32>
      %18 = tpu.matmul %17, %1, %cst {dimension_numbers = #tpu.dot_dimension_numbers<[1], [0], [0], [1], [0, 0, 1, 1], [], []>} : vector<2x40xbf16>, vector<40x96xbf16>, vector<2x96xf32> -> vector<2x96xf32>
      %19 = vector.broadcast %3 : vector<1x96xf32> to vector<2x96xf32>
      %20 = arith.addf %18, %19 : vector<2x96xf32>
      %21 = arith.index_cast %arg11 : i32 to index
      %c0_25 = arith.constant 0 : index
      %c0_26 = arith.constant 0 : index
      %22 = vector.load %arg8[%21, %c0_25, %c0_26] : memref<8x2x96xf32, #tpu.memory_space<vmem>>, vector<1x2x96xf32>
      %23 = vector.shape_cast %22 : vector<1x2x96xf32> to vector<2x96xf32>
      %24 = vector.shape_cast %20 : vector<2x96xf32> to vector<1x2x96xf32>
      tpu.vector_store %arg8[%21, %c0_25, %c0_26], %24 {strides = array<i32>} : memref<8x2x96xf32, #tpu.memory_space<vmem>>, vector<1x2x96xf32>,
    }
    %c8_i32_5 = arith.constant 8 : i32
    %c0_6 = arith.constant 0 : index
    %c0_7 = arith.constant 0 : index
    %c0_8 = arith.constant 0 : index
    %5 = vector.load %arg4[%c0_6, %c0_7, %c0_8] : memref<1x24x96xbf16, #tpu.memory_space<vmem>>, vector<1x24x96xbf16>
    %6 = vector.shape_cast %5 : vector<1x24x96xbf16> to vector<24x96xbf16>
    %c0_9 = arith.constant 0 : index
    %c0_10 = arith.constant 0 : index
    %c0_11 = arith.constant 0 : index
    %7 = vector.load %arg5[%c0_9, %c0_10, %c0_11] : memref<1x2x24xf32, #tpu.memory_space<vmem>>, vector<1x2x24xf32>
    %8 = vector.shape_cast %7 : vector<1x2x24xf32> to vector<2x24xf32>
    %c0_12 = arith.constant 0 : index
    %c0_13 = arith.constant 0 : index
    %9 = vector.load %arg9[%c0_12, %c0_13] : memref<2x24xf32, #tpu.memory_space<vmem>>, vector<2x24xf32>
    tpu.vector_store %arg9[%c0_12, %c0_13], %8 {strides = array<i32>} : memref<2x24xf32, #tpu.memory_space<vmem>>, vector<2x24xf32>,
    %c0_14 = arith.constant 0 : index
    %c0_15 = arith.constant 0 : index
    %c0_16 = arith.constant 0 : index
    %10 = vector.load %arg6[%c0_14, %c0_15, %c0_16] : memref<1x2x24xf32, #tpu.memory_space<vmem>>, vector<1x2x24xf32>
    %11 = vector.shape_cast %10 : vector<1x2x24xf32> to vector<2x24xf32>
    %c0_17 = arith.constant 0 : index
    %c0_18 = arith.constant 0 : index
    %12 = vector.load %arg10[%c0_17, %c0_18] : memref<2x24xf32, #tpu.memory_space<vmem>>, vector<2x24xf32>
    tpu.vector_store %arg10[%c0_17, %c0_18], %11 {strides = array<i32>} : memref<2x24xf32, #tpu.memory_space<vmem>>, vector<2x24xf32>,
    %c0_i32_19 = arith.constant 0 : i32
    %c8_i32_20 = arith.constant 8 : i32
    %13 = arith.addi %c0_i32_19, %c8_i32_20 : i32
    %c1_i32_21 = arith.constant 1 : i32
    scf.for %arg11 = %c0_i32_19 to %13 step %c1_i32_21  : i32 {
      %c0_i32_23 = arith.constant 0 : i32
      %14 = arith.cmpi eq, %arg0, %c0_i32_23 : i32
      %c7_i32 = arith.constant 7 : i32
      %15 = arith.subi %c7_i32, %arg11 : i32
      %16 = arith.select %14, %arg11, %15 : i32
      %17 = arith.index_cast %16 : i32 to index
      %c0_24 = arith.constant 0 : index
      %c0_25 = arith.constant 0 : index
      %18 = vector.load %arg8[%17, %c0_24, %c0_25] : memref<8x2x96xf32, #tpu.memory_space<vmem>>, vector<1x2x96xf32>
      %19 = vector.shape_cast %18 : vector<1x2x96xf32> to vector<2x96xf32>
      %c0_26 = arith.constant 0 : index
      %c0_27 = arith.constant 0 : index
      %20 = vector.load %arg9[%c0_26, %c0_27] : memref<2x24xf32, #tpu.memory_space<vmem>>, vector<2x24xf32>
      %21 = arith.truncf %20 : vector<2x24xf32> to vector<2x24xbf16>
      %cst = arith.constant dense<0.000000e+00> : vector<2x96xf32>
      %22 = tpu.matmul %21, %6, %cst {dimension_numbers = #tpu.dot_dimension_numbers<[1], [0], [0], [1], [0, 0, 1, 1], [], []>} : vector<2x24xbf16>, vector<24x96xbf16>, vector<2x96xf32> -> vector<2x96xf32>
      %23 = arith.addf %19, %22 : vector<2x96xf32>
      %24 = vector.extract_strided_slice %23 {offsets = [0, 0], sizes = [2, 24], strides = [1, 1]} : vector<2x96xf32> to vector<2x24xf32>
      %25 = arith.negf %24 : vector<2x24xf32>
      %26 = math.exp %25 : vector<2x24xf32>
      %cst_28 = arith.constant 1.000000e+00 : f32
      %27 = vector.broadcast %cst_28 : f32 to vector<2x24xf32>
      %28 = arith.addf %27, %26 : vector<2x24xf32>
      %29 = arith.divf %27, %28 : vector<2x24xf32>
      %30 = vector.extract_strided_slice %23 {offsets = [0, 24], sizes = [2, 24], strides = [1, 1]} : vector<2x96xf32> to vector<2x24xf32>
      %31 = arith.negf %30 : vector<2x24xf32>
      %32 = math.exp %31 : vector<2x24xf32>
      %cst_29 = arith.constant 1.000000e+00 : f32
      %33 = vector.broadcast %cst_29 : f32 to vector<2x24xf32>
      %34 = arith.addf %33, %32 : vector<2x24xf32>
      %35 = arith.divf %33, %34 : vector<2x24xf32>
      %36 = vector.extract_strided_slice %23 {offsets = [0, 48], sizes = [2, 24], strides = [1, 1]} : vector<2x96xf32> to vector<2x24xf32>
      %37 = math.tanh %36 : vector<2x24xf32>
      %38 = vector.extract_strided_slice %23 {offsets = [0, 72], sizes = [2, 24], strides = [1, 1]} : vector<2x96xf32> to vector<2x24xf32>
      %39 = arith.negf %38 : vector<2x24xf32>
      %40 = math.exp %39 : vector<2x24xf32>
      %cst_30 = arith.constant 1.000000e+00 : f32
      %41 = vector.broadcast %cst_30 : f32 to vector<2x24xf32>
      %42 = arith.addf %41, %40 : vector<2x24xf32>
      %43 = arith.divf %41, %42 : vector<2x24xf32>
      %c0_31 = arith.constant 0 : index
      %c0_32 = arith.constant 0 : index
      %44 = vector.load %arg10[%c0_31, %c0_32] : memref<2x24xf32, #tpu.memory_space<vmem>>, vector<2x24xf32>
      %45 = arith.mulf %35, %44 : vector<2x24xf32>
      %46 = arith.mulf %29, %37 : vector<2x24xf32>
      %47 = arith.addf %45, %46 : vector<2x24xf32>
      %48 = math.tanh %47 : vector<2x24xf32>
      %49 = arith.mulf %43, %48 : vector<2x24xf32>
      %c0_33 = arith.constant 0 : index
      %c0_34 = arith.constant 0 : index
      %50 = vector.load %arg10[%c0_33, %c0_34] : memref<2x24xf32, #tpu.memory_space<vmem>>, vector<2x24xf32>
      tpu.vector_store %arg10[%c0_33, %c0_34], %47 {strides = array<i32>} : memref<2x24xf32, #tpu.memory_space<vmem>>, vector<2x24xf32>,
      %c0_35 = arith.constant 0 : index
      %c0_36 = arith.constant 0 : index
      %51 = vector.load %arg9[%c0_35, %c0_36] : memref<2x24xf32, #tpu.memory_space<vmem>>, vector<2x24xf32>
      tpu.vector_store %arg9[%c0_35, %c0_36], %49 {strides = array<i32>} : memref<2x24xf32, #tpu.memory_space<vmem>>, vector<2x24xf32>,
      %c0_37 = arith.constant 0 : index
      %52 = arith.index_cast %16 : i32 to index
      %c0_38 = arith.constant 0 : index
      %c0_39 = arith.constant 0 : index
      %53 = vector.load %arg7[%c0_37, %52, %c0_38, %c0_39] : memref<1x8x2x24xf32, #tpu.memory_space<vmem>>, vector<1x1x2x24xf32>
      %54 = vector.shape_cast %53 : vector<1x1x2x24xf32> to vector<2x24xf32>
      %55 = vector.shape_cast %49 : vector<2x24xf32> to vector<1x1x2x24xf32>
      tpu.vector_store %arg7[%c0_37, %52, %c0_38, %c0_39], %55 {strides = array<i32>} : memref<1x8x2x24xf32, #tpu.memory_space<vmem>>, vector<1x1x2x24xf32>,
    }
    %c8_i32_22 = arith.constant 8 : i32
    return
  }
  func.func @transform_0(%arg0: i32) -> (i32, i32, i32) {
    %c0_i32 = arith.constant 0 : i32
    %c0_i32_0 = arith.constant 0 : i32
    %c0_i32_1 = arith.constant 0 : i32
    %c0_i32_2 = arith.constant 0 : i32
    return %c0_i32, %c0_i32_0, %c0_i32_1 : i32, i32, i32
  }
  func.func @transform_1(%arg0: i32) -> (i32, i32, i32) {
    %c0_i32 = arith.constant 0 : i32
    %c0_i32_0 = arith.constant 0 : i32
    %c0_i32_1 = arith.constant 0 : i32
    return %arg0, %c0_i32, %c0_i32_0 : i32, i32, i32
  }
  func.func @transform_2(%arg0: i32) -> (i32, i32, i32) {
    %c0_i32 = arith.constant 0 : i32
    %c0_i32_0 = arith.constant 0 : i32
    %c0_i32_1 = arith.constant 0 : i32
    return %arg0, %c0_i32, %c0_i32_0 : i32, i32, i32
  }
  func.func @transform_3(%arg0: i32) -> (i32, i32, i32) {
    %c0_i32 = arith.constant 0 : i32
    %c0_i32_0 = arith.constant 0 : i32
    %c0_i32_1 = arith.constant 0 : i32
    return %arg0, %c0_i32, %c0_i32_0 : i32, i32, i32
  }
  func.func @transform_4(%arg0: i32) -> (i32, i32, i32) {
    %c0_i32 = arith.constant 0 : i32
    %c0_i32_0 = arith.constant 0 : i32
    %c0_i32_1 = arith.constant 0 : i32
    return %arg0, %c0_i32, %c0_i32_0 : i32, i32, i32
  }
  func.func @transform_5(%arg0: i32) -> (i32, i32, i32) {
    %c0_i32 = arith.constant 0 : i32
    %c0_i32_0 = arith.constant 0 : i32
    %c0_i32_1 = arith.constant 0 : i32
    return %arg0, %c0_i32, %c0_i32_0 : i32, i32, i32
  }
  func.func @transform_6(%arg0: i32) -> (i32, i32, i32, i32) {
    %c0_i32 = arith.constant 0 : i32
    %c0_i32_0 = arith.constant 0 : i32
    %c0_i32_1 = arith.constant 0 : i32
    %c0_i32_2 = arith.constant 0 : i32
    return %arg0, %c0_i32, %c0_i32_0, %c0_i32_1 : i32, i32, i32, i32
  }
}

module attributes {stable_mosaic.version = 11 : i64} {
  func.func @_lstm_layer_kernel(%arg0: i32, %arg1: memref<8x2x48xf32, #tpu.memory_space<vmem>>, %arg2: memref<1x48x96xbf16, #tpu.memory_space<vmem>>, %arg3: memref<1x1x96xf32, #tpu.memory_space<vmem>>, %arg4: memref<1x24x96xbf16, #tpu.memory_space<vmem>>, %arg5: memref<1x2x24xf32, #tpu.memory_space<vmem>>, %arg6: memref<1x2x24xf32, #tpu.memory_space<vmem>>, %arg7: memref<1x8x2x24xf32, #tpu.memory_space<vmem>>, %arg8: memref<8x2x96xf32, #tpu.memory_space<vmem>>, %arg9: memref<2x24xf32, #tpu.memory_space<vmem>>, %arg10: memref<2x24xf32, #tpu.memory_space<vmem>>) attributes {dimension_semantics = [#tpu.dimension_semantics<parallel>], iteration_bounds = array<i64: 2>, scalar_prefetch = 0 : i64, scratch_operands = 3 : i64, tpu.core_type = #tpu.core_type<tc>, window_params = [{pipeline_mode = #tpu.pipeline_mode<synchronous>, transform_indices = @transform_0, window_bounds = array<i64: 8, 2, 48>}, {transform_indices = @transform_1, window_bounds = array<i64: 1, 48, 96>}, {transform_indices = @transform_2, window_bounds = array<i64: 1, 1, 96>}, {transform_indices = @transform_3, window_bounds = array<i64: 1, 24, 96>}, {transform_indices = @transform_4, window_bounds = array<i64: 1, 2, 24>}, {transform_indices = @transform_5, window_bounds = array<i64: 1, 2, 24>}, {transform_indices = @transform_6, window_bounds = array<i64: 1, 8, 2, 24>}]} {
    %c0 = arith.constant 0 : index
    %c0_0 = arith.constant 0 : index
    %c0_1 = arith.constant 0 : index
    %0 = vector.load %arg2[%c0, %c0_0, %c0_1] : memref<1x48x96xbf16, #tpu.memory_space<vmem>>, vector<1x48x96xbf16>
    %1 = vector.shape_cast %0 : vector<1x48x96xbf16> to vector<48x96xbf16>
    %c0_2 = arith.constant 0 : index
    %c0_3 = arith.constant 0 : index
    %c0_4 = arith.constant 0 : index
    %2 = vector.load %arg3[%c0_2, %c0_3, %c0_4] : memref<1x1x96xf32, #tpu.memory_space<vmem>>, vector<1x1x96xf32>
    %3 = vector.shape_cast %2 : vector<1x1x96xf32> to vector<1x96xf32>
    %c0_i32 = arith.constant 0 : i32
    %c8_i32 = arith.constant 8 : i32
    %4 = arith.addi %c0_i32, %c8_i32 : i32
    %c1_i32 = arith.constant 1 : i32
    scf.for %arg11 = %c0_i32 to %4 step %c1_i32  : i32 {
      %14 = arith.index_cast %arg11 : i32 to index
      %c0_23 = arith.constant 0 : index
      %c0_24 = arith.constant 0 : index
      %15 = vector.load %arg1[%14, %c0_23, %c0_24] : memref<8x2x48xf32, #tpu.memory_space<vmem>>, vector<1x2x48xf32>
      %16 = vector.shape_cast %15 : vector<1x2x48xf32> to vector<2x48xf32>
      %17 = arith.truncf %16 : vector<2x48xf32> to vector<2x48xbf16>
      %cst = arith.constant dense<0.000000e+00> : vector<2x96xf32>
      %18 = tpu.matmul %17, %1, %cst {dimension_numbers = #tpu.dot_dimension_numbers<[1], [0], [0], [1], [0, 0, 1, 1], [], []>} : vector<2x48xbf16>, vector<48x96xbf16>, vector<2x96xf32> -> vector<2x96xf32>
      %19 = vector.broadcast %3 : vector<1x96xf32> to vector<2x96xf32>
      %20 = arith.addf %18, %19 : vector<2x96xf32>
      %21 = arith.index_cast %arg11 : i32 to index
      %c0_25 = arith.constant 0 : index
      %c0_26 = arith.constant 0 : index
      %22 = vector.load %arg8[%21, %c0_25, %c0_26] : memref<8x2x96xf32, #tpu.memory_space<vmem>>, vector<1x2x96xf32>
      %23 = vector.shape_cast %22 : vector<1x2x96xf32> to vector<2x96xf32>
      %24 = vector.shape_cast %20 : vector<2x96xf32> to vector<1x2x96xf32>
      tpu.vector_store %arg8[%21, %c0_25, %c0_26], %24 {strides = array<i32>} : memref<8x2x96xf32, #tpu.memory_space<vmem>>, vector<1x2x96xf32>,
    }
    %c8_i32_5 = arith.constant 8 : i32
    %c0_6 = arith.constant 0 : index
    %c0_7 = arith.constant 0 : index
    %c0_8 = arith.constant 0 : index
    %5 = vector.load %arg4[%c0_6, %c0_7, %c0_8] : memref<1x24x96xbf16, #tpu.memory_space<vmem>>, vector<1x24x96xbf16>
    %6 = vector.shape_cast %5 : vector<1x24x96xbf16> to vector<24x96xbf16>
    %c0_9 = arith.constant 0 : index
    %c0_10 = arith.constant 0 : index
    %c0_11 = arith.constant 0 : index
    %7 = vector.load %arg5[%c0_9, %c0_10, %c0_11] : memref<1x2x24xf32, #tpu.memory_space<vmem>>, vector<1x2x24xf32>
    %8 = vector.shape_cast %7 : vector<1x2x24xf32> to vector<2x24xf32>
    %c0_12 = arith.constant 0 : index
    %c0_13 = arith.constant 0 : index
    %9 = vector.load %arg9[%c0_12, %c0_13] : memref<2x24xf32, #tpu.memory_space<vmem>>, vector<2x24xf32>
    tpu.vector_store %arg9[%c0_12, %c0_13], %8 {strides = array<i32>} : memref<2x24xf32, #tpu.memory_space<vmem>>, vector<2x24xf32>,
    %c0_14 = arith.constant 0 : index
    %c0_15 = arith.constant 0 : index
    %c0_16 = arith.constant 0 : index
    %10 = vector.load %arg6[%c0_14, %c0_15, %c0_16] : memref<1x2x24xf32, #tpu.memory_space<vmem>>, vector<1x2x24xf32>
    %11 = vector.shape_cast %10 : vector<1x2x24xf32> to vector<2x24xf32>
    %c0_17 = arith.constant 0 : index
    %c0_18 = arith.constant 0 : index
    %12 = vector.load %arg10[%c0_17, %c0_18] : memref<2x24xf32, #tpu.memory_space<vmem>>, vector<2x24xf32>
    tpu.vector_store %arg10[%c0_17, %c0_18], %11 {strides = array<i32>} : memref<2x24xf32, #tpu.memory_space<vmem>>, vector<2x24xf32>,
    %c0_i32_19 = arith.constant 0 : i32
    %c8_i32_20 = arith.constant 8 : i32
    %13 = arith.addi %c0_i32_19, %c8_i32_20 : i32
    %c1_i32_21 = arith.constant 1 : i32
    scf.for %arg11 = %c0_i32_19 to %13 step %c1_i32_21  : i32 {
      %c0_i32_23 = arith.constant 0 : i32
      %14 = arith.cmpi eq, %arg0, %c0_i32_23 : i32
      %c7_i32 = arith.constant 7 : i32
      %15 = arith.subi %c7_i32, %arg11 : i32
      %16 = arith.select %14, %arg11, %15 : i32
      %17 = arith.index_cast %16 : i32 to index
      %c0_24 = arith.constant 0 : index
      %c0_25 = arith.constant 0 : index
      %18 = vector.load %arg8[%17, %c0_24, %c0_25] : memref<8x2x96xf32, #tpu.memory_space<vmem>>, vector<1x2x96xf32>
      %19 = vector.shape_cast %18 : vector<1x2x96xf32> to vector<2x96xf32>
      %c0_26 = arith.constant 0 : index
      %c0_27 = arith.constant 0 : index
      %20 = vector.load %arg9[%c0_26, %c0_27] : memref<2x24xf32, #tpu.memory_space<vmem>>, vector<2x24xf32>
      %21 = arith.truncf %20 : vector<2x24xf32> to vector<2x24xbf16>
      %cst = arith.constant dense<0.000000e+00> : vector<2x96xf32>
      %22 = tpu.matmul %21, %6, %cst {dimension_numbers = #tpu.dot_dimension_numbers<[1], [0], [0], [1], [0, 0, 1, 1], [], []>} : vector<2x24xbf16>, vector<24x96xbf16>, vector<2x96xf32> -> vector<2x96xf32>
      %23 = arith.addf %19, %22 : vector<2x96xf32>
      %24 = vector.extract_strided_slice %23 {offsets = [0, 0], sizes = [2, 24], strides = [1, 1]} : vector<2x96xf32> to vector<2x24xf32>
      %25 = arith.negf %24 : vector<2x24xf32>
      %26 = math.exp %25 : vector<2x24xf32>
      %cst_28 = arith.constant 1.000000e+00 : f32
      %27 = vector.broadcast %cst_28 : f32 to vector<2x24xf32>
      %28 = arith.addf %27, %26 : vector<2x24xf32>
      %29 = arith.divf %27, %28 : vector<2x24xf32>
      %30 = vector.extract_strided_slice %23 {offsets = [0, 24], sizes = [2, 24], strides = [1, 1]} : vector<2x96xf32> to vector<2x24xf32>
      %31 = arith.negf %30 : vector<2x24xf32>
      %32 = math.exp %31 : vector<2x24xf32>
      %cst_29 = arith.constant 1.000000e+00 : f32
      %33 = vector.broadcast %cst_29 : f32 to vector<2x24xf32>
      %34 = arith.addf %33, %32 : vector<2x24xf32>
      %35 = arith.divf %33, %34 : vector<2x24xf32>
      %36 = vector.extract_strided_slice %23 {offsets = [0, 48], sizes = [2, 24], strides = [1, 1]} : vector<2x96xf32> to vector<2x24xf32>
      %37 = math.tanh %36 : vector<2x24xf32>
      %38 = vector.extract_strided_slice %23 {offsets = [0, 72], sizes = [2, 24], strides = [1, 1]} : vector<2x96xf32> to vector<2x24xf32>
      %39 = arith.negf %38 : vector<2x24xf32>
      %40 = math.exp %39 : vector<2x24xf32>
      %cst_30 = arith.constant 1.000000e+00 : f32
      %41 = vector.broadcast %cst_30 : f32 to vector<2x24xf32>
      %42 = arith.addf %41, %40 : vector<2x24xf32>
      %43 = arith.divf %41, %42 : vector<2x24xf32>
      %c0_31 = arith.constant 0 : index
      %c0_32 = arith.constant 0 : index
      %44 = vector.load %arg10[%c0_31, %c0_32] : memref<2x24xf32, #tpu.memory_space<vmem>>, vector<2x24xf32>
      %45 = arith.mulf %35, %44 : vector<2x24xf32>
      %46 = arith.mulf %29, %37 : vector<2x24xf32>
      %47 = arith.addf %45, %46 : vector<2x24xf32>
      %48 = math.tanh %47 : vector<2x24xf32>
      %49 = arith.mulf %43, %48 : vector<2x24xf32>
      %c0_33 = arith.constant 0 : index
      %c0_34 = arith.constant 0 : index
      %50 = vector.load %arg10[%c0_33, %c0_34] : memref<2x24xf32, #tpu.memory_space<vmem>>, vector<2x24xf32>
      tpu.vector_store %arg10[%c0_33, %c0_34], %47 {strides = array<i32>} : memref<2x24xf32, #tpu.memory_space<vmem>>, vector<2x24xf32>,
      %c0_35 = arith.constant 0 : index
      %c0_36 = arith.constant 0 : index
      %51 = vector.load %arg9[%c0_35, %c0_36] : memref<2x24xf32, #tpu.memory_space<vmem>>, vector<2x24xf32>
      tpu.vector_store %arg9[%c0_35, %c0_36], %49 {strides = array<i32>} : memref<2x24xf32, #tpu.memory_space<vmem>>, vector<2x24xf32>,
      %c0_37 = arith.constant 0 : index
      %52 = arith.index_cast %16 : i32 to index
      %c0_38 = arith.constant 0 : index
      %c0_39 = arith.constant 0 : index
      %53 = vector.load %arg7[%c0_37, %52, %c0_38, %c0_39] : memref<1x8x2x24xf32, #tpu.memory_space<vmem>>, vector<1x1x2x24xf32>
      %54 = vector.shape_cast %53 : vector<1x1x2x24xf32> to vector<2x24xf32>
      %55 = vector.shape_cast %49 : vector<2x24xf32> to vector<1x1x2x24xf32>
      tpu.vector_store %arg7[%c0_37, %52, %c0_38, %c0_39], %55 {strides = array<i32>} : memref<1x8x2x24xf32, #tpu.memory_space<vmem>>, vector<1x1x2x24xf32>,
    }
    %c8_i32_22 = arith.constant 8 : i32
    return
  }
  func.func @transform_0(%arg0: i32) -> (i32, i32, i32) {
    %c0_i32 = arith.constant 0 : i32
    %c0_i32_0 = arith.constant 0 : i32
    %c0_i32_1 = arith.constant 0 : i32
    %c0_i32_2 = arith.constant 0 : i32
    return %c0_i32, %c0_i32_0, %c0_i32_1 : i32, i32, i32
  }
  func.func @transform_1(%arg0: i32) -> (i32, i32, i32) {
    %c0_i32 = arith.constant 0 : i32
    %c0_i32_0 = arith.constant 0 : i32
    %c0_i32_1 = arith.constant 0 : i32
    return %arg0, %c0_i32, %c0_i32_0 : i32, i32, i32
  }
  func.func @transform_2(%arg0: i32) -> (i32, i32, i32) {
    %c0_i32 = arith.constant 0 : i32
    %c0_i32_0 = arith.constant 0 : i32
    %c0_i32_1 = arith.constant 0 : i32
    return %arg0, %c0_i32, %c0_i32_0 : i32, i32, i32
  }
  func.func @transform_3(%arg0: i32) -> (i32, i32, i32) {
    %c0_i32 = arith.constant 0 : i32
    %c0_i32_0 = arith.constant 0 : i32
    %c0_i32_1 = arith.constant 0 : i32
    return %arg0, %c0_i32, %c0_i32_0 : i32, i32, i32
  }
  func.func @transform_4(%arg0: i32) -> (i32, i32, i32) {
    %c0_i32 = arith.constant 0 : i32
    %c0_i32_0 = arith.constant 0 : i32
    %c0_i32_1 = arith.constant 0 : i32
    return %arg0, %c0_i32, %c0_i32_0 : i32, i32, i32
  }
  func.func @transform_5(%arg0: i32) -> (i32, i32, i32) {
    %c0_i32 = arith.constant 0 : i32
    %c0_i32_0 = arith.constant 0 : i32
    %c0_i32_1 = arith.constant 0 : i32
    return %arg0, %c0_i32, %c0_i32_0 : i32, i32, i32
  }
  func.func @transform_6(%arg0: i32) -> (i32, i32, i32, i32) {
    %c0_i32 = arith.constant 0 : i32
    %c0_i32_0 = arith.constant 0 : i32
    %c0_i32_1 = arith.constant 0 : i32
    %c0_i32_2 = arith.constant 0 : i32
    return %arg0, %c0_i32, %c0_i32_0, %c0_i32_1 : i32, i32, i32, i32
  }
}

module attributes {stable_mosaic.version = 11 : i64} {
  func.func @_wy_kernel(%arg0: i32, %arg1: memref<2x48xf32, #tpu.memory_space<vmem>>, %arg2: memref<48x300xbf16, #tpu.memory_space<vmem>>, %arg3: memref<1x300xf32, #tpu.memory_space<vmem>>, %arg4: memref<300x4816xbf16, #tpu.memory_space<vmem>>, %arg5: memref<1x4816xf32, #tpu.memory_space<vmem>>, %arg6: memref<2x4816xf32, #tpu.memory_space<vmem>>) attributes {dimension_semantics = [#tpu.dimension_semantics<arbitrary>], iteration_bounds = array<i64: 1>, scalar_prefetch = 0 : i64, scratch_operands = 0 : i64, tpu.core_type = #tpu.core_type<tc>, window_params = [{pipeline_mode = #tpu.pipeline_mode<synchronous>, transform_indices = @transform_0, window_bounds = array<i64: 2, 48>}, {pipeline_mode = #tpu.pipeline_mode<synchronous>, transform_indices = @transform_1, window_bounds = array<i64: 48, 300>}, {pipeline_mode = #tpu.pipeline_mode<synchronous>, transform_indices = @transform_2, window_bounds = array<i64: 1, 300>}, {pipeline_mode = #tpu.pipeline_mode<synchronous>, transform_indices = @transform_3, window_bounds = array<i64: 300, 4816>}, {pipeline_mode = #tpu.pipeline_mode<synchronous>, transform_indices = @transform_4, window_bounds = array<i64: 1, 4816>}, {pipeline_mode = #tpu.pipeline_mode<synchronous>, transform_indices = @transform_5, window_bounds = array<i64: 2, 4816>}]} {
    %c0 = arith.constant 0 : index
    %c0_0 = arith.constant 0 : index
    %0 = vector.load %arg1[%c0, %c0_0] : memref<2x48xf32, #tpu.memory_space<vmem>>, vector<2x48xf32>
    %1 = arith.truncf %0 : vector<2x48xf32> to vector<2x48xbf16>
    %c0_1 = arith.constant 0 : index
    %c0_2 = arith.constant 0 : index
    %2 = vector.load %arg2[%c0_1, %c0_2] : memref<48x300xbf16, #tpu.memory_space<vmem>>, vector<48x300xbf16>
    %cst = arith.constant dense<0.000000e+00> : vector<2x300xf32>
    %3 = tpu.matmul %1, %2, %cst {dimension_numbers = #tpu.dot_dimension_numbers<[1], [0], [0], [1], [0, 0, 1, 1], [], []>} : vector<2x48xbf16>, vector<48x300xbf16>, vector<2x300xf32> -> vector<2x300xf32>
    %c0_3 = arith.constant 0 : index
    %c0_4 = arith.constant 0 : index
    %4 = vector.load %arg3[%c0_3, %c0_4] : memref<1x300xf32, #tpu.memory_space<vmem>>, vector<1x300xf32>
    %5 = vector.broadcast %4 : vector<1x300xf32> to vector<2x300xf32>
    %6 = arith.addf %3, %5 : vector<2x300xf32>
    %cst_5 = arith.constant 0.000000e+00 : f32
    %7 = vector.broadcast %cst_5 : f32 to vector<2x300xf32>
    %8 = arith.maximumf %6, %7 : vector<2x300xf32>
    %9 = arith.truncf %8 : vector<2x300xf32> to vector<2x300xbf16>
    %c0_6 = arith.constant 0 : index
    %c0_7 = arith.constant 0 : index
    %10 = vector.load %arg4[%c0_6, %c0_7] : memref<300x4816xbf16, #tpu.memory_space<vmem>>, vector<300x4816xbf16>
    %cst_8 = arith.constant dense<0.000000e+00> : vector<2x4816xf32>
    %11 = tpu.matmul %9, %10, %cst_8 {dimension_numbers = #tpu.dot_dimension_numbers<[1], [0], [0], [1], [0, 0, 1, 1], [], []>} : vector<2x300xbf16>, vector<300x4816xbf16>, vector<2x4816xf32> -> vector<2x4816xf32>
    %c0_9 = arith.constant 0 : index
    %c0_10 = arith.constant 0 : index
    %12 = vector.load %arg5[%c0_9, %c0_10] : memref<1x4816xf32, #tpu.memory_space<vmem>>, vector<1x4816xf32>
    %13 = vector.broadcast %12 : vector<1x4816xf32> to vector<2x4816xf32>
    %14 = arith.addf %11, %13 : vector<2x4816xf32>
    %c0_11 = arith.constant 0 : index
    %c0_12 = arith.constant 0 : index
    %15 = vector.load %arg6[%c0_11, %c0_12] : memref<2x4816xf32, #tpu.memory_space<vmem>>, vector<2x4816xf32>
    tpu.vector_store %arg6[%c0_11, %c0_12], %14 {strides = array<i32>} : memref<2x4816xf32, #tpu.memory_space<vmem>>, vector<2x4816xf32>,
    return
  }
  func.func @transform_0(%arg0: i32) -> (i32, i32) {
    %c0_i32 = arith.constant 0 : i32
    %c0_i32_0 = arith.constant 0 : i32
    %c0_i32_1 = arith.constant 0 : i32
    return %c0_i32, %c0_i32_0 : i32, i32
  }
  func.func @transform_1(%arg0: i32) -> (i32, i32) {
    %c0_i32 = arith.constant 0 : i32
    %c0_i32_0 = arith.constant 0 : i32
    %c0_i32_1 = arith.constant 0 : i32
    return %c0_i32, %c0_i32_0 : i32, i32
  }
  func.func @transform_2(%arg0: i32) -> (i32, i32) {
    %c0_i32 = arith.constant 0 : i32
    %c0_i32_0 = arith.constant 0 : i32
    %c0_i32_1 = arith.constant 0 : i32
    return %c0_i32, %c0_i32_0 : i32, i32
  }
  func.func @transform_3(%arg0: i32) -> (i32, i32) {
    %c0_i32 = arith.constant 0 : i32
    %c0_i32_0 = arith.constant 0 : i32
    %c0_i32_1 = arith.constant 0 : i32
    return %c0_i32, %c0_i32_0 : i32, i32
  }
  func.func @transform_4(%arg0: i32) -> (i32, i32) {
    %c0_i32 = arith.constant 0 : i32
    %c0_i32_0 = arith.constant 0 : i32
    %c0_i32_1 = arith.constant 0 : i32
    return %c0_i32, %c0_i32_0 : i32, i32
  }
  func.func @transform_5(%arg0: i32) -> (i32, i32) {
    %c0_i32 = arith.constant 0 : i32
    %c0_i32_0 = arith.constant 0 : i32
    %c0_i32_1 = arith.constant 0 : i32
    return %c0_i32, %c0_i32_0 : i32, i32
  }
}

module attributes {stable_mosaic.version = 11 : i64} {
  func.func @_labeler_head_kernel(%arg0: i32, %arg1: memref<1x8x48xf32, #tpu.memory_space<vmem>>, %arg2: memref<48x300xbf16, #tpu.memory_space<vmem>>, %arg3: memref<1x300xf32, #tpu.memory_space<vmem>>, %arg4: memref<1x301x16xf32, #tpu.memory_space<vmem>>, %arg5: memref<1x8x16xf32, #tpu.memory_space<vmem>>, %arg6: memref<1x8x32xf32, #tpu.memory_space<vmem>>) attributes {dimension_semantics = [#tpu.dimension_semantics<parallel>], iteration_bounds = array<i64: 2>, scalar_prefetch = 0 : i64, scratch_operands = 0 : i64, tpu.core_type = #tpu.core_type<tc>, window_params = [{transform_indices = @transform_0, window_bounds = array<i64: 1, 8, 48>}, {pipeline_mode = #tpu.pipeline_mode<synchronous>, transform_indices = @transform_1, window_bounds = array<i64: 48, 300>}, {pipeline_mode = #tpu.pipeline_mode<synchronous>, transform_indices = @transform_2, window_bounds = array<i64: 1, 300>}, {transform_indices = @transform_3, window_bounds = array<i64: 1, 301, 16>}, {transform_indices = @transform_4, window_bounds = array<i64: 1, 8, 16>}, {transform_indices = @transform_5, window_bounds = array<i64: 1, 8, 32>}]} {
    %c0 = arith.constant 0 : index
    %c0_0 = arith.constant 0 : index
    %c0_1 = arith.constant 0 : index
    %0 = vector.load %arg1[%c0, %c0_0, %c0_1] : memref<1x8x48xf32, #tpu.memory_space<vmem>>, vector<1x8x48xf32>
    %1 = vector.shape_cast %0 : vector<1x8x48xf32> to vector<8x48xf32>
    %2 = arith.truncf %1 : vector<8x48xf32> to vector<8x48xbf16>
    %c0_2 = arith.constant 0 : index
    %c0_3 = arith.constant 0 : index
    %3 = vector.load %arg2[%c0_2, %c0_3] : memref<48x300xbf16, #tpu.memory_space<vmem>>, vector<48x300xbf16>
    %cst = arith.constant dense<0.000000e+00> : vector<8x300xf32>
    %4 = tpu.matmul %2, %3, %cst {dimension_numbers = #tpu.dot_dimension_numbers<[1], [0], [0], [1], [0, 0, 1, 1], [], []>} : vector<8x48xbf16>, vector<48x300xbf16>, vector<8x300xf32> -> vector<8x300xf32>
    %c0_4 = arith.constant 0 : index
    %c0_5 = arith.constant 0 : index
    %5 = vector.load %arg3[%c0_4, %c0_5] : memref<1x300xf32, #tpu.memory_space<vmem>>, vector<1x300xf32>
    %6 = vector.broadcast %5 : vector<1x300xf32> to vector<8x300xf32>
    %7 = arith.addf %4, %6 : vector<8x300xf32>
    %cst_6 = arith.constant 0.000000e+00 : f32
    %8 = vector.broadcast %cst_6 : f32 to vector<8x300xf32>
    %9 = arith.maximumf %7, %8 : vector<8x300xf32>
    %c0_7 = arith.constant 0 : index
    %c0_8 = arith.constant 0 : index
    %c0_9 = arith.constant 0 : index
    %10 = vector.load %arg4[%c0_7, %c0_8, %c0_9] : memref<1x301x16xf32, #tpu.memory_space<vmem>>, vector<1x300x16xf32>
    %11 = vector.shape_cast %10 : vector<1x300x16xf32> to vector<300x16xf32>
    %c0_10 = arith.constant 0 : index
    %c300 = arith.constant 300 : index
    %c0_11 = arith.constant 0 : index
    %12 = vector.load %arg4[%c0_10, %c300, %c0_11] : memref<1x301x16xf32, #tpu.memory_space<vmem>>, vector<1x1x16xf32>
    %13 = vector.shape_cast %12 : vector<1x1x16xf32> to vector<1x16xf32>
    %14 = arith.truncf %9 : vector<8x300xf32> to vector<8x300xbf16>
    %15 = arith.truncf %11 : vector<300x16xf32> to vector<300x16xbf16>
    %cst_12 = arith.constant dense<0.000000e+00> : vector<8x16xf32>
    %16 = tpu.matmul %14, %15, %cst_12 {dimension_numbers = #tpu.dot_dimension_numbers<[1], [0], [0], [1], [0, 0, 1, 1], [], []>} : vector<8x300xbf16>, vector<300x16xbf16>, vector<8x16xf32> -> vector<8x16xf32>
    %17 = vector.broadcast %13 : vector<1x16xf32> to vector<8x16xf32>
    %18 = arith.addf %16, %17 : vector<8x16xf32>
    %c0_13 = arith.constant 0 : index
    %c0_14 = arith.constant 0 : index
    %c0_15 = arith.constant 0 : index
    %19 = vector.load %arg5[%c0_13, %c0_14, %c0_15] : memref<1x8x16xf32, #tpu.memory_space<vmem>>, vector<1x8x16xf32>
    %20 = vector.shape_cast %19 : vector<1x8x16xf32> to vector<8x16xf32>
    %21 = vector.shape_cast %18 : vector<8x16xf32> to vector<1x8x16xf32>
    tpu.vector_store %arg5[%c0_13, %c0_14, %c0_15], %21 {strides = array<i32>} : memref<1x8x16xf32, #tpu.memory_space<vmem>>, vector<1x8x16xf32>,
    %cst_16 = arith.constant dense<0xFF800000> : vector<8xf32>
    %22 = vector.multi_reduction <maximumf>, %18, %cst_16 [1] : vector<8x16xf32> to vector<8xf32>
    %23 = vector.shape_cast %22 : vector<8xf32> to vector<8x1xf32>
    %24 = vector.broadcast %23 : vector<8x1xf32> to vector<8x16xf32>
    %25 = arith.subf %18, %24 : vector<8x16xf32>
    %26 = math.exp %25 : vector<8x16xf32>
    %cst_17 = arith.constant dense<0.000000e+00> : vector<8xf32>
    %27 = vector.multi_reduction <add>, %26, %cst_17 [1] : vector<8x16xf32> to vector<8xf32>
    %28 = vector.shape_cast %27 : vector<8xf32> to vector<8x1xf32>
    %29 = tpu.reciprocal %28 {approx = true} : vector<8x1xf32> -> vector<8x1xf32>
    %30 = vector.broadcast %29 : vector<8x1xf32> to vector<8x16xf32>
    %31 = arith.mulf %26, %30 : vector<8x16xf32>
    %cst_18 = arith.constant dense<0.000000e+00> : vector<16xf32>
    %32 = vector.multi_reduction <add>, %31, %cst_18 [0] : vector<8x16xf32> to vector<16xf32>
    %33 = vector.shape_cast %32 : vector<16xf32> to vector<1x16xf32>
    %c0_19 = arith.constant 0 : index
    %c0_20 = arith.constant 0 : index
    %c0_21 = arith.constant 0 : index
    %34 = vector.load %arg6[%c0_19, %c0_20, %c0_21] : memref<1x8x32xf32, #tpu.memory_space<vmem>>, vector<1x8x16xf32>
    %35 = vector.shape_cast %34 : vector<1x8x16xf32> to vector<8x16xf32>
    %36 = vector.shape_cast %31 : vector<8x16xf32> to vector<1x8x16xf32>
    tpu.vector_store %arg6[%c0_19, %c0_20, %c0_21], %36 {strides = array<i32>} : memref<1x8x32xf32, #tpu.memory_space<vmem>>, vector<1x8x16xf32>,
    %37 = vector.broadcast %33 : vector<1x16xf32> to vector<8x16xf32>
    %38 = arith.subf %37, %31 : vector<8x16xf32>
    %c0_22 = arith.constant 0 : index
    %c0_23 = arith.constant 0 : index
    %c16 = arith.constant 16 : index
    %39 = vector.load %arg6[%c0_22, %c0_23, %c16] : memref<1x8x32xf32, #tpu.memory_space<vmem>>, vector<1x8x16xf32>
    %40 = vector.shape_cast %39 : vector<1x8x16xf32> to vector<8x16xf32>
    %41 = vector.shape_cast %38 : vector<8x16xf32> to vector<1x8x16xf32>
    tpu.vector_store %arg6[%c0_22, %c0_23, %c16], %41 {strides = array<i32>} : memref<1x8x32xf32, #tpu.memory_space<vmem>>, vector<1x8x16xf32>,
    return
  }
  func.func @transform_0(%arg0: i32) -> (i32, i32, i32) {
    %c0_i32 = arith.constant 0 : i32
    %c0_i32_0 = arith.constant 0 : i32
    %c0_i32_1 = arith.constant 0 : i32
    return %arg0, %c0_i32, %c0_i32_0 : i32, i32, i32
  }
  func.func @transform_1(%arg0: i32) -> (i32, i32) {
    %c0_i32 = arith.constant 0 : i32
    %c0_i32_0 = arith.constant 0 : i32
    %c0_i32_1 = arith.constant 0 : i32
    return %c0_i32, %c0_i32_0 : i32, i32
  }
  func.func @transform_2(%arg0: i32) -> (i32, i32) {
    %c0_i32 = arith.constant 0 : i32
    %c0_i32_0 = arith.constant 0 : i32
    %c0_i32_1 = arith.constant 0 : i32
    return %c0_i32, %c0_i32_0 : i32, i32
  }
  func.func @transform_3(%arg0: i32) -> (i32, i32, i32) {
    %c0_i32 = arith.constant 0 : i32
    %c0_i32_0 = arith.constant 0 : i32
    %c0_i32_1 = arith.constant 0 : i32
    return %arg0, %c0_i32, %c0_i32_0 : i32, i32, i32
  }
  func.func @transform_4(%arg0: i32) -> (i32, i32, i32) {
    %c0_i32 = arith.constant 0 : i32
    %c0_i32_0 = arith.constant 0 : i32
    %c0_i32_1 = arith.constant 0 : i32
    return %arg0, %c0_i32, %c0_i32_0 : i32, i32, i32
  }
  func.func @transform_5(%arg0: i32) -> (i32, i32, i32) {
    %c0_i32 = arith.constant 0 : i32
    %c0_i32_0 = arith.constant 0 : i32
    %c0_i32_1 = arith.constant 0 : i32
    return %arg0, %c0_i32, %c0_i32_0 : i32, i32, i32
  }
}

module attributes {stable_mosaic.version = 11 : i64} {
  func.func @_lstm_layer_kernel(%arg0: i32, %arg1: memref<8x2x32xf32, #tpu.memory_space<vmem>>, %arg2: memref<1x32x64xbf16, #tpu.memory_space<vmem>>, %arg3: memref<1x1x64xf32, #tpu.memory_space<vmem>>, %arg4: memref<1x16x64xbf16, #tpu.memory_space<vmem>>, %arg5: memref<1x2x16xf32, #tpu.memory_space<vmem>>, %arg6: memref<1x2x16xf32, #tpu.memory_space<vmem>>, %arg7: memref<1x8x2x16xf32, #tpu.memory_space<vmem>>, %arg8: memref<8x2x64xf32, #tpu.memory_space<vmem>>, %arg9: memref<2x16xf32, #tpu.memory_space<vmem>>, %arg10: memref<2x16xf32, #tpu.memory_space<vmem>>) attributes {dimension_semantics = [#tpu.dimension_semantics<parallel>], iteration_bounds = array<i64: 2>, scalar_prefetch = 0 : i64, scratch_operands = 3 : i64, tpu.core_type = #tpu.core_type<tc>, window_params = [{pipeline_mode = #tpu.pipeline_mode<synchronous>, transform_indices = @transform_0, window_bounds = array<i64: 8, 2, 32>}, {transform_indices = @transform_1, window_bounds = array<i64: 1, 32, 64>}, {transform_indices = @transform_2, window_bounds = array<i64: 1, 1, 64>}, {transform_indices = @transform_3, window_bounds = array<i64: 1, 16, 64>}, {transform_indices = @transform_4, window_bounds = array<i64: 1, 2, 16>}, {transform_indices = @transform_5, window_bounds = array<i64: 1, 2, 16>}, {transform_indices = @transform_6, window_bounds = array<i64: 1, 8, 2, 16>}]} {
    %c0 = arith.constant 0 : index
    %c0_0 = arith.constant 0 : index
    %c0_1 = arith.constant 0 : index
    %0 = vector.load %arg2[%c0, %c0_0, %c0_1] : memref<1x32x64xbf16, #tpu.memory_space<vmem>>, vector<1x32x64xbf16>
    %1 = vector.shape_cast %0 : vector<1x32x64xbf16> to vector<32x64xbf16>
    %c0_2 = arith.constant 0 : index
    %c0_3 = arith.constant 0 : index
    %c0_4 = arith.constant 0 : index
    %2 = vector.load %arg3[%c0_2, %c0_3, %c0_4] : memref<1x1x64xf32, #tpu.memory_space<vmem>>, vector<1x1x64xf32>
    %3 = vector.shape_cast %2 : vector<1x1x64xf32> to vector<1x64xf32>
    %c0_i32 = arith.constant 0 : i32
    %c8_i32 = arith.constant 8 : i32
    %4 = arith.addi %c0_i32, %c8_i32 : i32
    %c1_i32 = arith.constant 1 : i32
    scf.for %arg11 = %c0_i32 to %4 step %c1_i32  : i32 {
      %14 = arith.index_cast %arg11 : i32 to index
      %c0_23 = arith.constant 0 : index
      %c0_24 = arith.constant 0 : index
      %15 = vector.load %arg1[%14, %c0_23, %c0_24] : memref<8x2x32xf32, #tpu.memory_space<vmem>>, vector<1x2x32xf32>
      %16 = vector.shape_cast %15 : vector<1x2x32xf32> to vector<2x32xf32>
      %17 = arith.truncf %16 : vector<2x32xf32> to vector<2x32xbf16>
      %cst = arith.constant dense<0.000000e+00> : vector<2x64xf32>
      %18 = tpu.matmul %17, %1, %cst {dimension_numbers = #tpu.dot_dimension_numbers<[1], [0], [0], [1], [0, 0, 1, 1], [], []>} : vector<2x32xbf16>, vector<32x64xbf16>, vector<2x64xf32> -> vector<2x64xf32>
      %19 = vector.broadcast %3 : vector<1x64xf32> to vector<2x64xf32>
      %20 = arith.addf %18, %19 : vector<2x64xf32>
      %21 = arith.index_cast %arg11 : i32 to index
      %c0_25 = arith.constant 0 : index
      %c0_26 = arith.constant 0 : index
      %22 = vector.load %arg8[%21, %c0_25, %c0_26] : memref<8x2x64xf32, #tpu.memory_space<vmem>>, vector<1x2x64xf32>
      %23 = vector.shape_cast %22 : vector<1x2x64xf32> to vector<2x64xf32>
      %24 = vector.shape_cast %20 : vector<2x64xf32> to vector<1x2x64xf32>
      tpu.vector_store %arg8[%21, %c0_25, %c0_26], %24 {strides = array<i32>} : memref<8x2x64xf32, #tpu.memory_space<vmem>>, vector<1x2x64xf32>,
    }
    %c8_i32_5 = arith.constant 8 : i32
    %c0_6 = arith.constant 0 : index
    %c0_7 = arith.constant 0 : index
    %c0_8 = arith.constant 0 : index
    %5 = vector.load %arg4[%c0_6, %c0_7, %c0_8] : memref<1x16x64xbf16, #tpu.memory_space<vmem>>, vector<1x16x64xbf16>
    %6 = vector.shape_cast %5 : vector<1x16x64xbf16> to vector<16x64xbf16>
    %c0_9 = arith.constant 0 : index
    %c0_10 = arith.constant 0 : index
    %c0_11 = arith.constant 0 : index
    %7 = vector.load %arg5[%c0_9, %c0_10, %c0_11] : memref<1x2x16xf32, #tpu.memory_space<vmem>>, vector<1x2x16xf32>
    %8 = vector.shape_cast %7 : vector<1x2x16xf32> to vector<2x16xf32>
    %c0_12 = arith.constant 0 : index
    %c0_13 = arith.constant 0 : index
    %9 = vector.load %arg9[%c0_12, %c0_13] : memref<2x16xf32, #tpu.memory_space<vmem>>, vector<2x16xf32>
    tpu.vector_store %arg9[%c0_12, %c0_13], %8 {strides = array<i32>} : memref<2x16xf32, #tpu.memory_space<vmem>>, vector<2x16xf32>,
    %c0_14 = arith.constant 0 : index
    %c0_15 = arith.constant 0 : index
    %c0_16 = arith.constant 0 : index
    %10 = vector.load %arg6[%c0_14, %c0_15, %c0_16] : memref<1x2x16xf32, #tpu.memory_space<vmem>>, vector<1x2x16xf32>
    %11 = vector.shape_cast %10 : vector<1x2x16xf32> to vector<2x16xf32>
    %c0_17 = arith.constant 0 : index
    %c0_18 = arith.constant 0 : index
    %12 = vector.load %arg10[%c0_17, %c0_18] : memref<2x16xf32, #tpu.memory_space<vmem>>, vector<2x16xf32>
    tpu.vector_store %arg10[%c0_17, %c0_18], %11 {strides = array<i32>} : memref<2x16xf32, #tpu.memory_space<vmem>>, vector<2x16xf32>,
    %c0_i32_19 = arith.constant 0 : i32
    %c8_i32_20 = arith.constant 8 : i32
    %13 = arith.addi %c0_i32_19, %c8_i32_20 : i32
    %c1_i32_21 = arith.constant 1 : i32
    scf.for %arg11 = %c0_i32_19 to %13 step %c1_i32_21  : i32 {
      %c0_i32_23 = arith.constant 0 : i32
      %14 = arith.cmpi eq, %arg0, %c0_i32_23 : i32
      %c7_i32 = arith.constant 7 : i32
      %15 = arith.subi %c7_i32, %arg11 : i32
      %16 = arith.select %14, %arg11, %15 : i32
      %17 = arith.index_cast %16 : i32 to index
      %c0_24 = arith.constant 0 : index
      %c0_25 = arith.constant 0 : index
      %18 = vector.load %arg8[%17, %c0_24, %c0_25] : memref<8x2x64xf32, #tpu.memory_space<vmem>>, vector<1x2x64xf32>
      %19 = vector.shape_cast %18 : vector<1x2x64xf32> to vector<2x64xf32>
      %c0_26 = arith.constant 0 : index
      %c0_27 = arith.constant 0 : index
      %20 = vector.load %arg9[%c0_26, %c0_27] : memref<2x16xf32, #tpu.memory_space<vmem>>, vector<2x16xf32>
      %21 = arith.truncf %20 : vector<2x16xf32> to vector<2x16xbf16>
      %cst = arith.constant dense<0.000000e+00> : vector<2x64xf32>
      %22 = tpu.matmul %21, %6, %cst {dimension_numbers = #tpu.dot_dimension_numbers<[1], [0], [0], [1], [0, 0, 1, 1], [], []>} : vector<2x16xbf16>, vector<16x64xbf16>, vector<2x64xf32> -> vector<2x64xf32>
      %23 = arith.addf %19, %22 : vector<2x64xf32>
      %24 = vector.extract_strided_slice %23 {offsets = [0, 0], sizes = [2, 16], strides = [1, 1]} : vector<2x64xf32> to vector<2x16xf32>
      %25 = arith.negf %24 : vector<2x16xf32>
      %26 = math.exp %25 : vector<2x16xf32>
      %cst_28 = arith.constant 1.000000e+00 : f32
      %27 = vector.broadcast %cst_28 : f32 to vector<2x16xf32>
      %28 = arith.addf %27, %26 : vector<2x16xf32>
      %29 = arith.divf %27, %28 : vector<2x16xf32>
      %30 = vector.extract_strided_slice %23 {offsets = [0, 16], sizes = [2, 16], strides = [1, 1]} : vector<2x64xf32> to vector<2x16xf32>
      %31 = arith.negf %30 : vector<2x16xf32>
      %32 = math.exp %31 : vector<2x16xf32>
      %cst_29 = arith.constant 1.000000e+00 : f32
      %33 = vector.broadcast %cst_29 : f32 to vector<2x16xf32>
      %34 = arith.addf %33, %32 : vector<2x16xf32>
      %35 = arith.divf %33, %34 : vector<2x16xf32>
      %36 = vector.extract_strided_slice %23 {offsets = [0, 32], sizes = [2, 16], strides = [1, 1]} : vector<2x64xf32> to vector<2x16xf32>
      %37 = math.tanh %36 : vector<2x16xf32>
      %38 = vector.extract_strided_slice %23 {offsets = [0, 48], sizes = [2, 16], strides = [1, 1]} : vector<2x64xf32> to vector<2x16xf32>
      %39 = arith.negf %38 : vector<2x16xf32>
      %40 = math.exp %39 : vector<2x16xf32>
      %cst_30 = arith.constant 1.000000e+00 : f32
      %41 = vector.broadcast %cst_30 : f32 to vector<2x16xf32>
      %42 = arith.addf %41, %40 : vector<2x16xf32>
      %43 = arith.divf %41, %42 : vector<2x16xf32>
      %c0_31 = arith.constant 0 : index
      %c0_32 = arith.constant 0 : index
      %44 = vector.load %arg10[%c0_31, %c0_32] : memref<2x16xf32, #tpu.memory_space<vmem>>, vector<2x16xf32>
      %45 = arith.mulf %35, %44 : vector<2x16xf32>
      %46 = arith.mulf %29, %37 : vector<2x16xf32>
      %47 = arith.addf %45, %46 : vector<2x16xf32>
      %48 = math.tanh %47 : vector<2x16xf32>
      %49 = arith.mulf %43, %48 : vector<2x16xf32>
      %c0_33 = arith.constant 0 : index
      %c0_34 = arith.constant 0 : index
      %50 = vector.load %arg10[%c0_33, %c0_34] : memref<2x16xf32, #tpu.memory_space<vmem>>, vector<2x16xf32>
      tpu.vector_store %arg10[%c0_33, %c0_34], %47 {strides = array<i32>} : memref<2x16xf32, #tpu.memory_space<vmem>>, vector<2x16xf32>,
      %c0_35 = arith.constant 0 : index
      %c0_36 = arith.constant 0 : index
      %51 = vector.load %arg9[%c0_35, %c0_36] : memref<2x16xf32, #tpu.memory_space<vmem>>, vector<2x16xf32>
      tpu.vector_store %arg9[%c0_35, %c0_36], %49 {strides = array<i32>} : memref<2x16xf32, #tpu.memory_space<vmem>>, vector<2x16xf32>,
      %c0_37 = arith.constant 0 : index
      %52 = arith.index_cast %16 : i32 to index
      %c0_38 = arith.constant 0 : index
      %c0_39 = arith.constant 0 : index
      %53 = vector.load %arg7[%c0_37, %52, %c0_38, %c0_39] : memref<1x8x2x16xf32, #tpu.memory_space<vmem>>, vector<1x1x2x16xf32>
      %54 = vector.shape_cast %53 : vector<1x1x2x16xf32> to vector<2x16xf32>
      %55 = vector.shape_cast %49 : vector<2x16xf32> to vector<1x1x2x16xf32>
      tpu.vector_store %arg7[%c0_37, %52, %c0_38, %c0_39], %55 {strides = array<i32>} : memref<1x8x2x16xf32, #tpu.memory_space<vmem>>, vector<1x1x2x16xf32>,
    }
    %c8_i32_22 = arith.constant 8 : i32
    return
  }
  func.func @transform_0(%arg0: i32) -> (i32, i32, i32) {
    %c0_i32 = arith.constant 0 : i32
    %c0_i32_0 = arith.constant 0 : i32
    %c0_i32_1 = arith.constant 0 : i32
    %c0_i32_2 = arith.constant 0 : i32
    return %c0_i32, %c0_i32_0, %c0_i32_1 : i32, i32, i32
  }
  func.func @transform_1(%arg0: i32) -> (i32, i32, i32) {
    %c0_i32 = arith.constant 0 : i32
    %c0_i32_0 = arith.constant 0 : i32
    %c0_i32_1 = arith.constant 0 : i32
    return %arg0, %c0_i32, %c0_i32_0 : i32, i32, i32
  }
  func.func @transform_2(%arg0: i32) -> (i32, i32, i32) {
    %c0_i32 = arith.constant 0 : i32
    %c0_i32_0 = arith.constant 0 : i32
    %c0_i32_1 = arith.constant 0 : i32
    return %arg0, %c0_i32, %c0_i32_0 : i32, i32, i32
  }
  func.func @transform_3(%arg0: i32) -> (i32, i32, i32) {
    %c0_i32 = arith.constant 0 : i32
    %c0_i32_0 = arith.constant 0 : i32
    %c0_i32_1 = arith.constant 0 : i32
    return %arg0, %c0_i32, %c0_i32_0 : i32, i32, i32
  }
  func.func @transform_4(%arg0: i32) -> (i32, i32, i32) {
    %c0_i32 = arith.constant 0 : i32
    %c0_i32_0 = arith.constant 0 : i32
    %c0_i32_1 = arith.constant 0 : i32
    return %arg0, %c0_i32, %c0_i32_0 : i32, i32, i32
  }
  func.func @transform_5(%arg0: i32) -> (i32, i32, i32) {
    %c0_i32 = arith.constant 0 : i32
    %c0_i32_0 = arith.constant 0 : i32
    %c0_i32_1 = arith.constant 0 : i32
    return %arg0, %c0_i32, %c0_i32_0 : i32, i32, i32
  }
  func.func @transform_6(%arg0: i32) -> (i32, i32, i32, i32) {
    %c0_i32 = arith.constant 0 : i32
    %c0_i32_0 = arith.constant 0 : i32
    %c0_i32_1 = arith.constant 0 : i32
    %c0_i32_2 = arith.constant 0 : i32
    return %arg0, %c0_i32, %c0_i32_0, %c0_i32_1 : i32, i32, i32, i32
  }
}

module attributes {stable_mosaic.version = 11 : i64} {
  func.func @_match_head_kernel(%arg0: i32, %arg1: memref<1x8x40xf32, #tpu.memory_space<vmem>>, %arg2: memref<40x300xbf16, #tpu.memory_space<vmem>>, %arg3: memref<1x300xf32, #tpu.memory_space<vmem>>, %arg4: memref<300x200xbf16, #tpu.memory_space<vmem>>, %arg5: memref<1x200xf32, #tpu.memory_space<vmem>>, %arg6: memref<1x8x32xf32, #tpu.memory_space<vmem>>, %arg7: memref<32x16xbf16, #tpu.memory_space<vmem>>, %arg8: memref<1x16xf32, #tpu.memory_space<vmem>>, %arg9: memref<40x200xbf16, #tpu.memory_space<vmem>>, %arg10: memref<1x8x16xf32, #tpu.memory_space<vmem>>) attributes {dimension_semantics = [#tpu.dimension_semantics<parallel>], iteration_bounds = array<i64: 2>, scalar_prefetch = 0 : i64, scratch_operands = 0 : i64, tpu.core_type = #tpu.core_type<tc>, window_params = [{transform_indices = @transform_0, window_bounds = array<i64: 1, 8, 40>}, {pipeline_mode = #tpu.pipeline_mode<synchronous>, transform_indices = @transform_1, window_bounds = array<i64: 40, 300>}, {pipeline_mode = #tpu.pipeline_mode<synchronous>, transform_indices = @transform_2, window_bounds = array<i64: 1, 300>}, {pipeline_mode = #tpu.pipeline_mode<synchronous>, transform_indices = @transform_3, window_bounds = array<i64: 300, 200>}, {pipeline_mode = #tpu.pipeline_mode<synchronous>, transform_indices = @transform_4, window_bounds = array<i64: 1, 200>}, {transform_indices = @transform_5, window_bounds = array<i64: 1, 8, 32>}, {pipeline_mode = #tpu.pipeline_mode<synchronous>, transform_indices = @transform_6, window_bounds = array<i64: 32, 16>}, {pipeline_mode = #tpu.pipeline_mode<synchronous>, transform_indices = @transform_7, window_bounds = array<i64: 1, 16>}, {pipeline_mode = #tpu.pipeline_mode<synchronous>, transform_indices = @transform_8, window_bounds = array<i64: 40, 200>}, {transform_indices = @transform_9, window_bounds = array<i64: 1, 8, 16>}]} {
    %c0 = arith.constant 0 : index
    %c0_0 = arith.constant 0 : index
    %c0_1 = arith.constant 0 : index
    %0 = vector.load %arg1[%c0, %c0_0, %c0_1] : memref<1x8x40xf32, #tpu.memory_space<vmem>>, vector<1x8x40xf32>
    %1 = vector.shape_cast %0 : vector<1x8x40xf32> to vector<8x40xf32>
    %2 = arith.truncf %1 : vector<8x40xf32> to vector<8x40xbf16>
    %c0_2 = arith.constant 0 : index
    %c0_3 = arith.constant 0 : index
    %3 = vector.load %arg2[%c0_2, %c0_3] : memref<40x300xbf16, #tpu.memory_space<vmem>>, vector<40x300xbf16>
    %cst = arith.constant dense<0.000000e+00> : vector<8x300xf32>
    %4 = tpu.matmul %2, %3, %cst {dimension_numbers = #tpu.dot_dimension_numbers<[1], [0], [0], [1], [0, 0, 1, 1], [], []>} : vector<8x40xbf16>, vector<40x300xbf16>, vector<8x300xf32> -> vector<8x300xf32>
    %c0_4 = arith.constant 0 : index
    %c0_5 = arith.constant 0 : index
    %5 = vector.load %arg3[%c0_4, %c0_5] : memref<1x300xf32, #tpu.memory_space<vmem>>, vector<1x300xf32>
    %6 = vector.broadcast %5 : vector<1x300xf32> to vector<8x300xf32>
    %7 = arith.addf %4, %6 : vector<8x300xf32>
    %cst_6 = arith.constant 0.000000e+00 : f32
    %8 = vector.broadcast %cst_6 : f32 to vector<8x300xf32>
    %9 = arith.maximumf %7, %8 : vector<8x300xf32>
    %10 = arith.truncf %9 : vector<8x300xf32> to vector<8x300xbf16>
    %c0_7 = arith.constant 0 : index
    %c0_8 = arith.constant 0 : index
    %11 = vector.load %arg4[%c0_7, %c0_8] : memref<300x200xbf16, #tpu.memory_space<vmem>>, vector<300x200xbf16>
    %cst_9 = arith.constant dense<0.000000e+00> : vector<8x200xf32>
    %12 = tpu.matmul %10, %11, %cst_9 {dimension_numbers = #tpu.dot_dimension_numbers<[1], [0], [0], [1], [0, 0, 1, 1], [], []>} : vector<8x300xbf16>, vector<300x200xbf16>, vector<8x200xf32> -> vector<8x200xf32>
    %c0_10 = arith.constant 0 : index
    %c0_11 = arith.constant 0 : index
    %13 = vector.load %arg5[%c0_10, %c0_11] : memref<1x200xf32, #tpu.memory_space<vmem>>, vector<1x200xf32>
    %14 = vector.broadcast %13 : vector<1x200xf32> to vector<8x200xf32>
    %15 = arith.addf %12, %14 : vector<8x200xf32>
    %c0_12 = arith.constant 0 : index
    %c0_13 = arith.constant 0 : index
    %c0_14 = arith.constant 0 : index
    %16 = vector.load %arg6[%c0_12, %c0_13, %c0_14] : memref<1x8x32xf32, #tpu.memory_space<vmem>>, vector<1x8x32xf32>
    %17 = vector.shape_cast %16 : vector<1x8x32xf32> to vector<8x32xf32>
    %18 = arith.truncf %17 : vector<8x32xf32> to vector<8x32xbf16>
    %c0_15 = arith.constant 0 : index
    %c0_16 = arith.constant 0 : index
    %19 = vector.load %arg7[%c0_15, %c0_16] : memref<32x16xbf16, #tpu.memory_space<vmem>>, vector<32x16xbf16>
    %cst_17 = arith.constant dense<0.000000e+00> : vector<8x16xf32>
    %20 = tpu.matmul %18, %19, %cst_17 {dimension_numbers = #tpu.dot_dimension_numbers<[1], [0], [0], [1], [0, 0, 1, 1], [], []>} : vector<8x32xbf16>, vector<32x16xbf16>, vector<8x16xf32> -> vector<8x16xf32>
    %c0_18 = arith.constant 0 : index
    %c0_19 = arith.constant 0 : index
    %21 = vector.load %arg8[%c0_18, %c0_19] : memref<1x16xf32, #tpu.memory_space<vmem>>, vector<1x16xf32>
    %22 = vector.broadcast %21 : vector<1x16xf32> to vector<8x16xf32>
    %23 = arith.addf %20, %22 : vector<8x16xf32>
    %24 = arith.negf %23 : vector<8x16xf32>
    %25 = math.exp %24 : vector<8x16xf32>
    %cst_20 = arith.constant 1.000000e+00 : f32
    %26 = vector.broadcast %cst_20 : f32 to vector<8x16xf32>
    %27 = arith.addf %26, %25 : vector<8x16xf32>
    %28 = arith.divf %26, %27 : vector<8x16xf32>
    %29 = arith.truncf %28 : vector<8x16xf32> to vector<8x16xbf16>
    %30 = arith.truncf %15 : vector<8x200xf32> to vector<8x200xbf16>
    %cst_21 = arith.constant dense<0.000000e+00> : vector<16x200xf32>
    %31 = tpu.matmul %29, %30, %cst_21 {dimension_numbers = #tpu.dot_dimension_numbers<[0], [0], [1], [1], [0, 1, 1, 1], [], []>} : vector<8x16xbf16>, vector<8x200xbf16>, vector<16x200xf32> -> vector<16x200xf32>
    %c0_22 = arith.constant 0 : index
    %c0_23 = arith.constant 0 : index
    %32 = vector.load %arg9[%c0_22, %c0_23] : memref<40x200xbf16, #tpu.memory_space<vmem>>, vector<40x200xbf16>
    %cst_24 = arith.constant dense<0.000000e+00> : vector<8x200xf32>
    %33 = tpu.matmul %2, %32, %cst_24 {dimension_numbers = #tpu.dot_dimension_numbers<[1], [0], [0], [1], [0, 0, 1, 1], [], []>} : vector<8x40xbf16>, vector<40x200xbf16>, vector<8x200xf32> -> vector<8x200xf32>
    %34 = arith.truncf %33 : vector<8x200xf32> to vector<8x200xbf16>
    %35 = arith.truncf %31 : vector<16x200xf32> to vector<16x200xbf16>
    %cst_25 = arith.constant dense<0.000000e+00> : vector<8x16xf32>
    %36 = tpu.matmul %34, %35, %cst_25 {dimension_numbers = #tpu.dot_dimension_numbers<[1], [1], [0], [0], [0, 0, 1, 0], [], []>} : vector<8x200xbf16>, vector<16x200xbf16>, vector<8x16xf32> -> vector<8x16xf32>
    %37 = tpu.iota {dimensions = array<i32: 1>} : vector<8x16xi32>
    %c1_i32 = arith.constant 1 : i32
    %38 = vector.broadcast %c1_i32 : i32 to vector<8x16xi32>
    %39 = arith.cmpi eq, %37, %38 : vector<8x16xi32>
    %cst_26 = arith.constant 0.000000e+00 : f32
    %40 = vector.broadcast %cst_26 : f32 to vector<8x16xf32>
    %41 = arith.select %39, %40, %36 : vector<8x16xi1>, vector<8x16xf32>
    %c0_27 = arith.constant 0 : index
    %c0_28 = arith.constant 0 : index
    %c0_29 = arith.constant 0 : index
    %42 = vector.load %arg10[%c0_27, %c0_28, %c0_29] : memref<1x8x16xf32, #tpu.memory_space<vmem>>, vector<1x8x16xf32>
    %43 = vector.shape_cast %42 : vector<1x8x16xf32> to vector<8x16xf32>
    %44 = vector.shape_cast %41 : vector<8x16xf32> to vector<1x8x16xf32>
    tpu.vector_store %arg10[%c0_27, %c0_28, %c0_29], %44 {strides = array<i32>} : memref<1x8x16xf32, #tpu.memory_space<vmem>>, vector<1x8x16xf32>,
    return
  }
  func.func @transform_0(%arg0: i32) -> (i32, i32, i32) {
    %c0_i32 = arith.constant 0 : i32
    %c0_i32_0 = arith.constant 0 : i32
    %c0_i32_1 = arith.constant 0 : i32
    return %arg0, %c0_i32, %c0_i32_0 : i32, i32, i32
  }
  func.func @transform_1(%arg0: i32) -> (i32, i32) {
    %c0_i32 = arith.constant 0 : i32
    %c0_i32_0 = arith.constant 0 : i32
    %c0_i32_1 = arith.constant 0 : i32
    return %c0_i32, %c0_i32_0 : i32, i32
  }
  func.func @transform_2(%arg0: i32) -> (i32, i32) {
    %c0_i32 = arith.constant 0 : i32
    %c0_i32_0 = arith.constant 0 : i32
    %c0_i32_1 = arith.constant 0 : i32
    return %c0_i32, %c0_i32_0 : i32, i32
  }
  func.func @transform_3(%arg0: i32) -> (i32, i32) {
    %c0_i32 = arith.constant 0 : i32
    %c0_i32_0 = arith.constant 0 : i32
    %c0_i32_1 = arith.constant 0 : i32
    return %c0_i32, %c0_i32_0 : i32, i32
  }
  func.func @transform_4(%arg0: i32) -> (i32, i32) {
    %c0_i32 = arith.constant 0 : i32
    %c0_i32_0 = arith.constant 0 : i32
    %c0_i32_1 = arith.constant 0 : i32
    return %c0_i32, %c0_i32_0 : i32, i32
  }
  func.func @transform_5(%arg0: i32) -> (i32, i32, i32) {
    %c0_i32 = arith.constant 0 : i32
    %c0_i32_0 = arith.constant 0 : i32
    %c0_i32_1 = arith.constant 0 : i32
    return %arg0, %c0_i32, %c0_i32_0 : i32, i32, i32
  }
  func.func @transform_6(%arg0: i32) -> (i32, i32) {
    %c0_i32 = arith.constant 0 : i32
    %c0_i32_0 = arith.constant 0 : i32
    %c0_i32_1 = arith.constant 0 : i32
    return %c0_i32, %c0_i32_0 : i32, i32
  }
  func.func @transform_7(%arg0: i32) -> (i32, i32) {
    %c0_i32 = arith.constant 0 : i32
    %c0_i32_0 = arith.constant 0 : i32
    %c0_i32_1 = arith.constant 0 : i32
    return %c0_i32, %c0_i32_0 : i32, i32
  }
  func.func @transform_8(%arg0: i32) -> (i32, i32) {
    %c0_i32 = arith.constant 0 : i32
    %c0_i32_0 = arith.constant 0 : i32
    %c0_i32_1 = arith.constant 0 : i32
    return %c0_i32, %c0_i32_0 : i32, i32
  }
  func.func @transform_9(%arg0: i32) -> (i32, i32, i32) {
    %c0_i32 = arith.constant 0 : i32
    %c0_i32_0 = arith.constant 0 : i32
    %c0_i32_1 = arith.constant 0 : i32
    return %arg0, %c0_i32, %c0_i32_0 : i32, i32, i32
  }
}

</mosaic_0001>

<llo_original>
// kernel: sr_model_forward.8
$region0: #{sr_model_forward.8}
  #allocation0 [shape = 'u32[]', space=smem, size = 0x4, offset = 0x4, fixed_abs, tag = 'smem constant byte address 0x4 - core index']
  #allocation1 [shape = 'u32[144,128]{1,0:T(1,128)}', space=vmem, size = 0x12000, scoped, tag = 'internal scratch']
  #allocation2 [shape = 'f32[8,2,96]{2,1,0:T(2,128)}', space=vmem, size = 0x2000, scoped, tag = 'scratch operand']
  #allocation3 [shape = 'f32[2,24]{1,0:T(2,128)}', space=vmem, size = 0x400, scoped, tag = 'scratch operand']
  #allocation4 [shape = 'f32[2,24]{1,0:T(2,128)}', space=vmem, size = 0x400, scoped, tag = 'scratch operand']
  %s0 = inlined_call_operand.vmem [shape: f32[8,2,48], index: 0, kind: input, shape index: {}]
  %s1 = inlined_call_operand.hbm [shape: bf16[2,48,96], index: 1, kind: input, shape index: {}]
  %s2 = inlined_call_operand.hbm [shape: f32[2,1,96], index: 2, kind: input, shape index: {}]
  %s3 = inlined_call_operand.hbm [shape: bf16[2,24,96], index: 3, kind: input, shape index: {}]
  %s4 = inlined_call_operand.vmem [shape: f32[2,2,24], index: 4, kind: input, shape index: {}]
  %s5 = inlined_call_operand.vmem [shape: f32[2,2,24], index: 5, kind: input, shape index: {}]
  %s6 = inlined_call_operand.vmem [shape: f32[2,8,2,24], index: 6, kind: output, shape index: {}]
  %s7 = sld [smem:[#allocation0]]
  $region83: #{sr_model_forward.8} parent=0
    _
  %s9 = ssub.s32 1, %s7
  %s10 = scalar_select 0, %s9, %s7
  $region1: #{sr_model_forward.8} parent=0
    #allocation5 [shape = 'u8[24576]{0}', space=vmem, size = 0x6000, scoped, tag = 'input window, operand 1']
    #allocation6 [shape = 's32[2]{0}', space=sflag, size = 0x8, scoped, tag = 'scoped memory for sr_model_forward.8']
    #allocation7 [shape = 'u8[1024]{0}', space=vmem, size = 0x400, scoped, tag = 'input window, operand 2']
    #allocation8 [shape = 's32[2]{0}', space=sflag, size = 0x8, scoped, tag = 'scoped memory for sr_model_forward.8']
    #allocation9 [shape = 'u8[12288]{0}', space=vmem, size = 0x3000, scoped, tag = 'input window, operand 3']
    %11 = vsyncpa [#allocation6], 0
    %s12 = scalar_lea.sflag [#allocation6], 1
    %13 = vsyncpa %s12, 0
    %14 = vsyncpa [#allocation8], 0
    %s15 = scalar_lea.sflag [#allocation8], 1
    %16 = vsyncpa %s15, 0
    loop: start=0, step=1, limit=4
    $region2: #{sr_model_forward.8} parent=1 // loop_pre_header
      _
    $region3: #{sr_model_forward.8} parent=1 // loop_header
      %s18 = sphi 0, %s22
      %p19 = scmp.ge.s32.totalorder %s18, 4
      %s26 = sphi 0, %s26
      %s28 = sphi 0, %s26
      %s29 = sphi 0, %s28
      %s43 = sphi 0, %s29
      %s49 = sphi 0, %s51
      %s52 = sphi 0, %s49
      %s53 = sphi 0, %s52
      %s69 = sphi 0, %s53
      %s75 = sphi 0, %s77
      %s78 = sphi 0, %s75
      %s79 = sphi 0, %s78
      %s95 = sphi 0, %s79
      %s101 = sphi 0, %s103
      %s104 = sphi 0, %s101
      %s105 = sphi 0, %s104
      %s121 = sphi 0, %s105
      %s127 = sphi 0, %s129
      %s130 = sphi 0, %s127
      %s131 = sphi 0, %s130
      %s147 = sphi 0, %s131
      %s153 = sphi 0, %s155
      %s156 = sphi 0, %s153
      %s157 = sphi 0, %s156
      %s173 = sphi 0, %s157
      %s179 = sphi 0, %s181
      %s182 = sphi 0, %s179
      %s183 = sphi 0, %s182
      %s199 = sphi 0, %s183
    $region4: #{sr_model_forward.8} parent=1 // loop_header_branch
      %21 = sbr.rel (%p19) target = $region8
    $region5: #{sr_model_forward.8} parent=1 // loop_body
      %s23 = ssub.s32 %s18, 1
      %s24 = ssub.s32 %s18, 2
      %s25 = sadd.s32 %s18, 1
      %s27 = sadd.s32 %s26, 1
      %p30 = scmp.eq.s32.totalorder %s18, 1
      %p31 = scmp.ne.s32.totalorder %s26, %s28
      %p32 = scmp.eq.s32.totalorder %s18, 0
      %p33 = por %p31, %p32
      %p34 = scmp.ne.s32.totalorder %s26, %s28
      %p35 = scmp.eq.s32.totalorder %s23, 1
      %p36 = por %p34, %p35
      %p37 = scmp.ne.s32.totalorder %s28, %s29
      %p38 = scmp.eq.s32.totalorder %s23, 0
      %p39 = por %p37, %p38
      %p40 = scmp.ne.s32.totalorder %s28, %s29
      %p41 = scmp.eq.s32.totalorder %s24, 1
      %p42 = por %p40, %p41
      %p44 = scmp.ne.s32.totalorder %s29, %s43
      %p45 = scmp.eq.s32.totalorder %s24, 0
      %p46 = por %p44, %p45
      %s47 = ssub.s32 %s18, %s25
      %p48 = scmp.eq.s32.totalorder %s47, 0
      %s50 = sadd.s32 %s49, 1
      %s51 = scalar_select %p48, %s49, %s50
      %p54 = pneg %p48
      %p55 = scmp.eq.s32.totalorder %s18, 1
      %p56 = por %p54, %p55
      %p57 = scmp.ne.s32.totalorder %s49, %s52
      %p58 = scmp.eq.s32.totalorder %s18, 0
      %p59 = por %p57, %p58
      %p60 = scmp.ne.s32.totalorder %s49, %s52
      %p61 = scmp.eq.s32.totalorder %s23, 1
      %p62 = por %p60, %p61
      %p63 = scmp.ne.s32.totalorder %s52, %s53
      %p64 = scmp.eq.s32.totalorder %s23, 0
      %p65 = por %p63, %p64
      %p66 = scmp.ne.s32.totalorder %s52, %s53
      %p67 = scmp.eq.s32.totalorder %s24, 1
      %p68 = por %p66, %p67
      %p70 = scmp.ne.s32.totalorder %s53, %s69
      %p71 = scmp.eq.s32.totalorder %s24, 0
      %p72 = por %p70, %p71
      %s73 = ssub.s32 %s18, %s25
      %p74 = scmp.eq.s32.totalorder %s73, 0
      %s76 = sadd.s32 %s75, 1
      %s77 = scalar_select %p74, %s75, %s76
      %p80 = pneg %p74
      %p81 = scmp.eq.s32.totalorder %s18, 1
      %p82 = por %p80, %p81
      %p83 = scmp.ne.s32.totalorder %s75, %s78
      %p84 = scmp.eq.s32.totalorder %s18, 0
      %p85 = por %p83, %p84
      %p86 = scmp.ne.s32.totalorder %s75, %s78
      %p87 = scmp.eq.s32.totalorder %s23, 1
      %p88 = por %p86, %p87
      %p89 = scmp.ne.s32.totalorder %s78, %s79
      %p90 = scmp.eq.s32.totalorder %s23, 0
      %p91 = por %p89, %p90
      %p92 = scmp.ne.s32.totalorder %s78, %s79
      %p93 = scmp.eq.s32.totalorder %s24, 1
      %p94 = por %p92, %p93
      %p96 = scmp.ne.s32.totalorder %s79, %s95
      %p97 = scmp.eq.s32.totalorder %s24, 0
      %p98 = por %p96, %p97
      %s99 = ssub.s32 %s18, %s25
      %p100 = scmp.eq.s32.totalorder %s99, 0
      %s102 = sadd.s32 %s101, 1
      %s103 = scalar_select %p100, %s101, %s102
      %p106 = pneg %p100
      %p107 = scmp.eq.s32.totalorder %s18, 1
      %p108 = por %p106, %p107
      %p109 = scmp.ne.s32.totalorder %s101, %s104
      %p110 = scmp.eq.s32.totalorder %s18, 0
      %p111 = por %p109, %p110
      %p112 = scmp.ne.s32.totalorder %s101, %s104
      %p113 = scmp.eq.s32.totalorder %s23, 1
      %p114 = por %p112, %p113
      %p115 = scmp.ne.s32.totalorder %s104, %s105
      %p116 = scmp.eq.s32.totalorder %s23, 0
      %p117 = por %p115, %p116
      %p118 = scmp.ne.s32.totalorder %s104, %s105
      %p119 = scmp.eq.s32.totalorder %s24, 1
      %p120 = por %p118, %p119
      %p122 = scmp.ne.s32.totalorder %s105, %s121
      %p123 = scmp.eq.s32.totalorder %s24, 0
      %p124 = por %p122, %p123
      %s125 = ssub.s32 %s18, %s25
      %p126 = scmp.eq.s32.totalorder %s125, 0
      %s128 = sadd.s32 %s127, 1
      %s129 = scalar_select %p126, %s127, %s128
      %p132 = pneg %p126
      %p133 = scmp.eq.s32.totalorder %s18, 1
      %p134 = por %p132, %p133
      %p135 = scmp.ne.s32.totalorder %s127, %s130
      %p136 = scmp.eq.s32.totalorder %s18, 0
      %p137 = por %p135, %p136
      %p138 = scmp.ne.s32.totalorder %s127, %s130
      %p139 = scmp.eq.s32.totalorder %s23, 1
      %p140 = por %p138, %p139
      %p141 = scmp.ne.s32.totalorder %s130, %s131
      %p142 = scmp.eq.s32.totalorder %s23, 0
      %p143 = por %p141, %p142
      %p144 = scmp.ne.s32.totalorder %s130, %s131
      %p145 = scmp.eq.s32.totalorder %s24, 1
      %p146 = por %p144, %p145
      %p148 = scmp.ne.s32.totalorder %s131, %s147
      %p149 = scmp.eq.s32.totalorder %s24, 0
      %p150 = por %p148, %p149
      %s151 = ssub.s32 %s18, %s25
      %p152 = scmp.eq.s32.totalorder %s151, 0
      %s154 = sadd.s32 %s153, 1
      %s155 = scalar_select %p152, %s153, %s154
      %p158 = pneg %p152
      %p159 = scmp.eq.s32.totalorder %s18, 1
      %p160 = por %p158, %p159
      %p161 = scmp.ne.s32.totalorder %s153, %s156
      %p162 = scmp.eq.s32.totalorder %s18, 0
      %p163 = por %p161, %p162
      %p164 = scmp.ne.s32.totalorder %s153, %s156
      %p165 = scmp.eq.s32.totalorder %s23, 1
      %p166 = por %p164, %p165
      %p167 = scmp.ne.s32.totalorder %s156, %s157
      %p168 = scmp.eq.s32.totalorder %s23, 0
      %p169 = por %p167, %p168
      %p170 = scmp.ne.s32.totalorder %s156, %s157
      %p171 = scmp.eq.s32.totalorder %s24, 1
      %p172 = por %p170, %p171
      %p174 = scmp.ne.s32.totalorder %s157, %s173
      %p175 = scmp.eq.s32.totalorder %s24, 0
      %p176 = por %p174, %p175
      %s177 = ssub.s32 %s18, %s25
      %p178 = scmp.eq.s32.totalorder %s177, 0
      %s180 = sadd.s32 %s179, 1
      %s181 = scalar_select %p178, %s179, %s180
      %p184 = pneg %p178
      %p185 = scmp.eq.s32.totalorder %s18, 1
      %p186 = por %p184, %p185
      %p187 = scmp.ne.s32.totalorder %s179, %s182
      %p188 = scmp.eq.s32.totalorder %s18, 0
      %p189 = por %p187, %p188
      %p190 = scmp.ne.s32.totalorder %s179, %s182
      %p191 = scmp.eq.s32.totalorder %s23, 1
      %p192 = por %p190, %p191
      %p193 = scmp.ne.s32.totalorder %s182, %s183
      %p194 = scmp.eq.s32.totalorder %s23, 0
      %p195 = por %p193, %p194
      %p196 = scmp.ne.s32.totalorder %s182, %s183
      %p197 = scmp.eq.s32.totalorder %s24, 1
      %p198 = por %p196, %p197
      %p200 = scmp.ne.s32.totalorder %s183, %s199
      %p201 = scmp.eq.s32.totalorder %s24, 0
      %p202 = por %p200, %p201
      %p203 = scmp.le.s32.totalorder 1, %s18
      %p204 = scmp.lt.s32.totalorder %s18, 3
      %p205 = pnand %p203, %p204
      %p206 = pneg %p205
      // Predicated region
      $region9: #{sr_model_forward.8} parent=5 // pred_check
        _
      $region10: #{sr_model_forward.8} parent=5 // pred_check_branch
        %208 = sbr.rel (%p205) target = $region12
      $region11: #{sr_model_forward.8} parent=5 // pred_region
        %s209 = ssub.s32 %s18, 1
        // Predicated region
        $region13: #{sr_model_forward.8} parent=11 // pred_check
          %p210 = pneg %p39
        $region14: #{sr_model_forward.8} parent=11 // pred_check_branch
          %212 = sbr.rel (%p210) target = $region16
        $region15: #{sr_model_forward.8} parent=11 // pred_region
          _
        $region16: #{sr_model_forward.8} parent=11 // pred_fallthru
          _
      $region12: #{sr_model_forward.8} parent=5 // pred_fallthru
        _
      %p213 = scmp.lt.s32.totalorder %s18, 2
      // Predicated region
      $region17: #{sr_model_forward.8} parent=5 // pred_check
        %p214 = pneg %p213
      $region18: #{sr_model_forward.8} parent=5 // pred_check_branch
        %216 = sbr.rel (%p214) target = $region20
      $region19: #{sr_model_forward.8} parent=5 // pred_region
        // Predicated region
        $region21: #{sr_model_forward.8} parent=19 // pred_check
          %p217 = pneg %p59
        $region22: #{sr_model_forward.8} parent=19 // pred_check_branch
          %219 = sbr.rel (%p217) target = $region24
        $region23: #{sr_model_forward.8} parent=19 // pred_region
          %s220 = sand.u32 %s49, 1
          %s221 = scalar_lea.sflag [#allocation6], %s220
          %s222 = sand.u32 %s49, 1
          %s223 = smul.addr %s222, 24
          %s224 = scalar_lea.vmem [#allocation5], %s223
          %s226 = ssub.s32 384, 384
          %227 = vsyncadd %s221, %s226
          %s228 = smul.addr %s18, 6
          %s229 = smul.addr %s228, 64
          %s230 = scalar_lea.hbm %s1, %s229
          %s231 = sshll.u32 %s224, 4
          %s232 = int_to_ptr.vmem [resolvable:$true] %s231
          %237 = dma.hbm_to_vmem [thread:$0]  %s230, 384, %s232, %s221, 64, 64, 4
        $region24: #{sr_model_forward.8} parent=19 // pred_fallthru
          _
        // Predicated region
        $region25: #{sr_model_forward.8} parent=19 // pred_check
          %p238 = pneg %p85
        $region26: #{sr_model_forward.8} parent=19 // pred_check_branch
          %240 = sbr.rel (%p238) target = $region28
        $region27: #{sr_model_forward.8} parent=19 // pred_region
          %s241 = sand.u32 %s18, 1
          %s242 = scalar_lea.sflag [#allocation8], %s241
          %s243 = sand.u32 %s75, 1
          %s244 = scalar_lea.vmem [#allocation7], %s243
          %s246 = ssub.s32 16, 16
          %247 = vsyncadd %s242, %s246
          %s248 = smul.addr %s18, 16
          %s249 = scalar_lea.hbm %s2, %s248
          %s251 = sshll.u32 %s244, 4
          %s252 = int_to_ptr.vmem [resolvable:$true] %s251
          %254 = dma.hbm_to_vmem [thread:$0]  %s249, 16, %s252, %s242
        $region28: #{sr_model_forward.8} parent=19 // pred_fallthru
          _
        // Predicated region
        $region29: #{sr_model_forward.8} parent=19 // pred_check
          %p255 = pneg %p111
        $region30: #{sr_model_forward.8} parent=19 // pred_check_branch
          %257 = sbr.rel (%p255) target = $region32
        $region31: #{sr_model_forward.8} parent=19 // pred_region
          %s258 = sand.u32 %s18, 1
          %s259 = scalar_lea.sflag [#allocation8], %s258
          %s260 = sand.u32 %s101, 1
          %s261 = smul.addr %s260, 12
          %s262 = scalar_lea.vmem [#allocation9], %s261
          %s264 = ssub.s32 192, 192
          %265 = vsyncadd %s259, %s264
          %s266 = smul.addr %s18, 3
          %s267 = smul.addr %s266, 64
          %s268 = scalar_lea.hbm %s3, %s267
          %s269 = sshll.u32 %s262, 4
          %s270 = int_to_ptr.vmem [resolvable:$true] %s269
          %275 = dma.hbm_to_vmem [thread:$0]  %s268, 192, %s270, %s259, 64, 64, 4
        $region32: #{sr_model_forward.8} parent=19 // pred_fallthru
          _
        // Predicated region
        $region33: #{sr_model_forward.8} parent=19 // pred_check
          %p276 = pneg %p137
        $region34: #{sr_model_forward.8} parent=19 // pred_check_branch
          %278 = sbr.rel (%p276) target = $region36
        $region35: #{sr_model_forward.8} parent=19 // pred_region
          %p279 = scmp.lt.s32.totalorder %s18, 1
          %s280 = scalar_select %p279, %s18, 1
          %s281 = smul.addr %s280, 2
          %s282 = scalar_lea.vmem %s4, %s281
        $region36: #{sr_model_forward.8} parent=19 // pred_fallthru
          _
        // Predicated region
        $region37: #{sr_model_forward.8} parent=19 // pred_check
          %p283 = pneg %p163
        $region38: #{sr_model_forward.8} parent=19 // pred_check_branch
          %285 = sbr.rel (%p283) target = $region40
        $region39: #{sr_model_forward.8} parent=19 // pred_region
          %p286 = scmp.lt.s32.totalorder %s18, 1
          %s287 = scalar_select %p286, %s18, 1
          %s288 = smul.addr %s287, 2
          %s289 = scalar_lea.vmem %s5, %s288
        $region40: #{sr_model_forward.8} parent=19 // pred_fallthru
          _
      $region20: #{sr_model_forward.8} parent=5 // pred_fallthru
        _
      %p290 = scmp.le.s32.totalorder 1, %s18
      %p291 = scmp.lt.s32.totalorder %s18, 3
      %p292 = pnand %p290, %p291
      %p293 = pneg %p292
      // Predicated region
      $region41: #{sr_model_forward.8} parent=5 // pred_check
        _
      $region42: #{sr_model_forward.8} parent=5 // pred_check_branch
        %295 = sbr.rel (%p292) target = $region44
      $region43: #{sr_model_forward.8} parent=5 // pred_region
        %s296 = ssub.s32 %s18, 1
        %s297 = sand.u32 %s52, 1
        %s298 = scalar_lea.sflag [#allocation6], %s297
        %s299 = sand.u32 %s52, 1
        %s300 = smul.addr %s299, 24
        %s301 = scalar_lea.vmem [#allocation5], %s300
        // Predicated region
        $region45: #{sr_model_forward.8} parent=43 // pred_check
          %p302 = pneg %p65
        $region46: #{sr_model_forward.8} parent=43 // pred_check_branch
          %304 = sbr.rel (%p302) target = $region48
        $region47: #{sr_model_forward.8} parent=43 // pred_region
          %305 = dma.done %s298, 384
        $region48: #{sr_model_forward.8} parent=43 // pred_fallthru
          _
        %s306 = sand.u32 %s23, 1
        %s307 = scalar_lea.sflag [#allocation8], %s306
        %s308 = sand.u32 %s78, 1
        %s309 = scalar_lea.vmem [#allocation7], %s308
        // Predicated region
        $region49: #{sr_model_forward.8} parent=43 // pred_check
          %p310 = pneg %p91
        $region50: #{sr_model_forward.8} parent=43 // pred_check_branch
          %312 = sbr.rel (%p310) target = $region52
        $region51: #{sr_model_forward.8} parent=43 // pred_region
          %313 = dma.done %s307, 16
        $region52: #{sr_model_forward.8} parent=43 // pred_fallthru
          _
        %s314 = sand.u32 %s23, 1
        %s315 = scalar_lea.sflag [#allocation8], %s314
        %s316 = sand.u32 %s104, 1
        %s317 = smul.addr %s316, 12
        %s318 = scalar_lea.vmem [#allocation9], %s317
        // Predicated region
        $region53: #{sr_model_forward.8} parent=43 // pred_check
          %p319 = pneg %p117
        $region54: #{sr_model_forward.8} parent=43 // pred_check_branch
          %321 = sbr.rel (%p319) target = $region56
        $region55: #{sr_model_forward.8} parent=43 // pred_region
          %322 = dma.done %s315, 192
        $region56: #{sr_model_forward.8} parent=43 // pred_fallthru
          _
        %p323 = pneg %p39
        %p324 = pneg %p36
        %s325 = sand.u32 %s52, 1
        %s326 = scalar_lea.sflag [#allocation6], %s325
        %s327 = sand.u32 %s52, 1
        %s328 = smul.addr %s327, 24
        %s329 = scalar_lea.vmem [#allocation5], %s328
        %p330 = pneg %p65
        %p331 = pneg %p62
        %s332 = sand.u32 %s23, 1
        %s333 = scalar_lea.sflag [#allocation8], %s332
        %s334 = sand.u32 %s78, 1
        %s335 = scalar_lea.vmem [#allocation7], %s334
        %p336 = pneg %p91
        %p337 = pneg %p88
        %s338 = sand.u32 %s23, 1
        %s339 = scalar_lea.sflag [#allocation8], %s338
        %s340 = sand.u32 %s104, 1
        %s341 = smul.addr %s340, 12
        %s342 = scalar_lea.vmem [#allocation9], %s341
        %p343 = pneg %p117
        %p344 = pneg %p114
        %p345 = scmp.lt.s32.totalorder %s23, 1
        %s346 = scalar_select %p345, %s23, 1
        %s347 = smul.addr %s346, 2
        %s348 = scalar_lea.vmem %s4, %s347
        %p349 = pneg %p143
        %p350 = pneg %p140
        %p351 = scmp.lt.s32.totalorder %s23, 1
        %s352 = scalar_select %p351, %s23, 1
        %s353 = smul.addr %s352, 2
        %s354 = scalar_lea.vmem %s5, %s353
        %p355 = pneg %p169
        %p356 = pneg %p166
        %p357 = pneg %p195
        %p358 = pneg %p192
        %p359 = scmp.lt.s32.totalorder %s23, 1
        %s360 = scalar_select %p359, %s23, 1
        %s361 = smul.addr %s360, 8
        %s362 = smul.addr %s361, 2
        %s363 = scalar_lea.vmem %s6, %s362
        %p364 = scmp.lt.s32.totalorder %s23, 1
        %s365 = scalar_select %p364, %s23, 1
        %s366 = smul.addr %s365, 2
        %s367 = scalar_lea.vmem %s4, %s366
        %p368 = scmp.lt.s32.totalorder %s23, 1
        %s369 = scalar_select %p368, %s23, 1
        %s370 = smul.addr %s369, 2
        %s371 = scalar_lea.vmem %s5, %s370
        %p372 = scmp.lt.s32.totalorder %s23, 1
        %s373 = scalar_select %p372, %s23, 1
        %s374 = smul.addr %s373, 8
        %s375 = smul.addr %s374, 2
        %s376 = scalar_lea.vmem %s6, %s375
        %v378 = vld [vmem:[%s301] sm:$0xf]
        %v379 = vld [vmem:[%s301 + $0x4] sm:$0xf]
        %v380 = vld [vmem:[%s301 + $0x8] sm:$0xf]
        %v381 = vld [vmem:[%s301 + $0xc] sm:$0xf]
        %v382 = vld [vmem:[%s301 + $0x10] sm:$0xf]
        %v383 = vld [vmem:[%s301 + $0x14] sm:$0xf]
        %v384 = vld [vmem:[%s309] sm:$0x1]
        loop: start=0, step=1, limit=8
        $region57: #{sr_model_forward.8} parent=43 // loop_pre_header
          _
        $region58: #{sr_model_forward.8} parent=43 // loop_header
          %s386 = sphi 0, %s390
          %p387 = scmp.ge.s32.totalorder %s386, 8
        $region59: #{sr_model_forward.8} parent=43 // loop_header_branch
          %389 = sbr.rel (%p387) target = $region63
        $region60: #{sr_model_forward.8} parent=43 // loop_body
          %s391 = smul.u32 %s386, 2
          %s392 = scalar_lea.vmem %s0, %s391
          %v393 = vld [vmem:[%s392] sm:$0x3]
          %v394 = vpack.c.bf16 %v393, %v393
          %v396 = vlaneseq
          %v397 = vshrl.u32 %v396, 7
          %v398 = vsub.s32 0, %v397
          %v399 = vrot.slane %v384, %v398
          %v407 = vunpack.c.l.b16 %v378
          %v408 = vunpack.c.l.b16 %v379
          %v409 = vunpack.c.l.b16 %v380
          %v410 = vunpack.c.l.b16 %v381
          %v411 = vunpack.c.l.b16 %v382
          %v412 = vunpack.c.l.b16 %v383
          %v413 = vpack.c.b16 %v408, %v407
          %v414 = vpack.c.b16 %v410, %v409
          %v415 = vpack.c.b16 %v412, %v411
          %vm419 = vcmask 392192
          %v421 = vsel %vm419, %v394, 0
          %423 = vmatprep.subr.bf16.mxu0 0
          %424 = vmatpush1.bf16.msra.mxu0 0
          %425 = vmatprep.subr.bf16.mxu0 0
          %426 = vmatpush1.bf16.msra.mxu0 0
          %427 = vmatprep.subr.bf16.mxu0 0
          %428 = vmatpush1.bf16.msra.mxu0 0
          %429 = vmatprep.subr.bf16.mxu0 0
          %430 = vmatpush1.bf16.msra.mxu0 0
          %431 = vmatprep.subr.bf16.mxu0 0
          %432 = vmatpush1.bf16.msra.mxu0 0
          %433 = vmatprep.subr.bf16.mxu0 0
          %434 = vmatpush1.bf16.msra.mxu0 %v415
          %435 = vmatprep.subr.bf16.mxu0 0
          %436 = vmatpush1.bf16.msra.mxu0 %v414
          %437 = vmatprep.subr.bf16.mxu0 0
          %438 = vmatpush1.bf16.msra.mxu0 %v413
          %439 = vmatprep.subr.bf16.mxu0 0
          %440 = vmatpush2.bf16.msra.mxu0 0
          %441 = vmatprep.subr.bf16.mxu0 0
          %442 = vmatpush2.bf16.msra.mxu0 0
          %443 = vmatprep.subr.bf16.mxu0 0
          %444 = vmatpush2.bf16.msra.mxu0 0
          %445 = vmatprep.subr.bf16.mxu0 0
          %446 = vmatpush2.bf16.msra.mxu0 0
          %447 = vmatprep.subr.bf16.mxu0 0
          %448 = vmatpush2.bf16.msra.mxu0 0
          %449 = vmatprep.subr.bf16.mxu0 0
          %450 = vmatpush2.bf16.msra.mxu0 0
          %451 = vmatprep.subr.bf16.mxu0 0
          %452 = vmatpush2.bf16.msra.mxu0 0
          %453 = vmatprep.subr.bf16.mxu0 0
          %454 = vmatpush2.bf16.msra.mxu0 0
          %455 = vmatprep.mubr.bf16.mxu0 0
          %456 = vmatmul.mubr.bf16.gmra.mxu0 %v421
          %v457 = vpop.f32.mrf.mxu0
          %v458 = vadd.f32 %v399, %v457
          %v459 = vpop.f32.mrf.mxu0
          %v460 = vpop.f32.mrf.mxu0
          %v461 = vpop.f32.mrf.mxu0
          %462 = vdwg.mxu0
          %s463 = scalar_lea.vmem [#allocation2], %s391
          %vm464 = vcmask 779264
          %465 = vst.msk [vmem:[%s463] sm:$0x3] %vm464, %v458
        $region61: #{sr_model_forward.8} parent=43 // loop_footer
          %s390 = sadd.s32 1, %s386
        $region62: #{sr_model_forward.8} parent=43 // loop_footer_branch
          %385 = sbr.rel target = $region58
        $region63: #{sr_model_forward.8} parent=43 // loop_exit
          _
        %v466 = vld [vmem:[%s318] sm:$0xf]
        %v467 = vld [vmem:[%s318 + $0x4] sm:$0xf]
        %v468 = vld [vmem:[%s318 + $0x8] sm:$0xf]
        %v469 = vld [vmem:[%s367] sm:$0x3]
        %vm470 = vcmask 189440
        %471 = vst.msk [vmem:[#allocation3] sm:$0x3] %vm470, %v469
        %v472 = vld [vmem:[%s371] sm:$0x3]
        %473 = vst.msk [vmem:[#allocation4] sm:$0x3] %vm470, %v472
        loop: start=0, step=1, limit=8
        $region64: #{sr_model_forward.8} parent=43 // loop_pre_header
          _
        $region65: #{sr_model_forward.8} parent=43 // loop_header
          %s475 = sphi 0, %s479
          %p476 = scmp.ge.s32.totalorder %s475, 8
        $region66: #{sr_model_forward.8} parent=43 // loop_header_branch
          %478 = sbr.rel (%p476) target = $region70
        $region67: #{sr_model_forward.8} parent=43 // loop_body
          %p480 = scmp.eq.s32.totalorder %s23, 0
          %s481 = ssub.s32 7, %s475
          %s482 = scalar_select %p480, %s475, %s481
          %s483 = smul.u32 %s482, 2
          %s484 = scalar_lea.vmem [#allocation2], %s483
          %v485 = vld [vmem:[%s484] sm:$0x3]
          %v486 = vld [vmem:[#allocation3] sm:$0x3]
          %v487 = vpack.c.bf16 %v486, %v486
          %v491 = vunpack.c.l.b16 %v466
          %v492 = vunpack.c.l.b16 %v467
          %v493 = vunpack.c.l.b16 %v468
          %v494 = vpack.c.b16 %v492, %v491
          %v495 = vpack.c.b16 %v493, %v493
          %vm497 = vcmask 195584
          %v499 = vsel %vm497, %v487, 0
          %vm501 = vcmask 1043456
          %v503 = vsel %vm501, %v495, 0
          %505 = vmatprep.subr.bf16.mxu0 0
          %506 = vmatpush1.bf16.msra.mxu0 0
          %507 = vmatprep.subr.bf16.mxu0 0
          %508 = vmatpush1.bf16.msra.mxu0 0
          %509 = vmatprep.subr.bf16.mxu0 0
          %510 = vmatpush1.bf16.msra.mxu0 0
          %511 = vmatprep.subr.bf16.mxu0 0
          %512 = vmatpush1.bf16.msra.mxu0 0
          %513 = vmatprep.subr.bf16.mxu0 0
          %514 = vmatpush1.bf16.msra.mxu0 0
          %515 = vmatprep.subr.bf16.mxu0 0
          %516 = vmatpush1.bf16.msra.mxu0 0
          %517 = vmatprep.subr.bf16.mxu0 0
          %518 = vmatpush1.bf16.msra.mxu0 %v503
          %519 = vmatprep.subr.bf16.mxu0 0
          %520 = vmatpush1.bf16.msra.mxu0 %v494
          %521 = vmatprep.subr.bf16.mxu0 0
          %522 = vmatpush2.bf16.msra.mxu0 0
          %523 = vmatprep.subr.bf16.mxu0 0
          %524 = vmatpush2.bf16.msra.mxu0 0
          %525 = vmatprep.subr.bf16.mxu0 0
          %526 = vmatpush2.bf16.msra.mxu0 0
          %527 = vmatprep.subr.bf16.mxu0 0
          %528 = vmatpush2.bf16.msra.mxu0 0
          %529 = vmatprep.subr.bf16.mxu0 0
          %530 = vmatpush2.bf16.msra.mxu0 0
          %531 = vmatprep.subr.bf16.mxu0 0
          %532 = vmatpush2.bf16.msra.mxu0 0
          %533 = vmatprep.subr.bf16.mxu0 0
          %534 = vmatpush2.bf16.msra.mxu0 0
          %535 = vmatprep.subr.bf16.mxu0 0
          %536 = vmatpush2.bf16.msra.mxu0 0
          %537 = vmatprep.mubr.bf16.mxu0 0
          %538 = vmatmul.mubr.bf16.gmra.mxu0 %v499
          %v539 = vpop.f32.mrf.mxu0
          %v540 = vadd.f32 0.0, %v539
          %v541 = vpop.f32.mrf.mxu0
          %v542 = vpop.f32.mrf.mxu0
          %v543 = vpop.f32.mrf.mxu0
          %544 = vdwg.mxu0
          %v545 = vadd.f32 %v485, %v540
          %v546 = vxor.u32 %v545, 2147483648
          %v547 = vmul.f32 %v546, 1.442695
          %v548 = vpow.pop %v547
          %v549 = vadd.f32 %v548, 1.0
          %v550 = vrcp.pop %v549
          %v551 = vmul.f32 1.0, %v550
          %v552 = vtanh.pop %v545
          %v553 = vld [vmem:[#allocation4] sm:$0x3]
          %555 = vrot.lane.b32.xlu0 %v553, 24
          %v556 = vpop.permute.xlu0 %555
          %v558 = vmul.f32 %v551, %v556
          %560 = vrot.lane.b32.xlu0 %v552, 80
          %v561 = vpop.permute.xlu0 %560
          %v563 = vmul.f32 %v551, %v561
          %565 = vrot.lane.b32.xlu0 %v563, 24
          %v566 = vpop.permute.xlu0 %565
          %v568 = vadd.f32 %v558, %v566
          %v569 = vtanh.pop %v568
          %571 = vrot.lane.b32.xlu0 %v569, 48
          %v572 = vpop.permute.xlu0 %571
          %v574 = vmul.f32 %v551, %v572
          %576 = vrot.lane.b32.xlu0 %v568, 104
          %v577 = vpop.permute.xlu0 %576
          %579 = vst.msk [vmem:[#allocation4] sm:$0x3] %vm470, %v577
          %581 = vrot.lane.b32.xlu0 %v574, 56
          %v582 = vpop.permute.xlu0 %581
          %584 = vst.msk [vmem:[#allocation3] sm:$0x3] %vm470, %v582
          %s585 = scalar_lea.vmem %s376, %s483
          %586 = vst.msk [vmem:[%s585] sm:$0x3] %vm470, %v582
        $region68: #{sr_model_forward.8} parent=43 // loop_footer
          %s479 = sadd.s32 1, %s475
        $region69: #{sr_model_forward.8} parent=43 // loop_footer_branch
          %474 = sbr.rel target = $region65
        $region70: #{sr_model_forward.8} parent=43 // loop_exit
          _
        %p587 = scmp.lt.s32.totalorder %s23, 1
        %s588 = scalar_select %p587, %s23, 1
        %s589 = smul.addr %s588, 8
        %s590 = smul.addr %s589, 2
        %s591 = scalar_lea.vmem %s6, %s590
        // Predicated region
        $region71: #{sr_model_forward.8} parent=43 // pred_check
          %p592 = pneg %p192
        $region72: #{sr_model_forward.8} parent=43 // pred_check_branch
          %594 = sbr.rel (%p592) target = $region74
        $region73: #{sr_model_forward.8} parent=43 // pred_region
          _
        $region74: #{sr_model_forward.8} parent=43 // pred_fallthru
          _
      $region44: #{sr_model_forward.8} parent=5 // pred_fallthru
        _
      %p595 = scmp.le.s32.totalorder 2, %s18
      // Predicated region
      $region75: #{sr_model_forward.8} parent=5 // pred_check
        %p596 = pneg %p595
      $region76: #{sr_model_forward.8} parent=5 // pred_check_branch
        %598 = sbr.rel (%p596) target = $region78
      $region77: #{sr_model_forward.8} parent=5 // pred_region
        %s599 = ssub.s32 %s18, 2
        // Predicated region
        $region79: #{sr_model_forward.8} parent=77 // pred_check
          %p600 = pneg %p198
        $region80: #{sr_model_forward.8} parent=77 // pred_check_branch
          %602 = sbr.rel (%p600) target = $region82
        $region81: #{sr_model_forward.8} parent=77 // pred_region
          %p603 = scmp.lt.s32.totalorder %s24, 1
          %s604 = scalar_select %p603, %s24, 1
          %s605 = smul.addr %s604, 8
          %s606 = smul.addr %s605, 2
          %s607 = scalar_lea.vmem %s6, %s606
        $region82: #{sr_model_forward.8} parent=77 // pred_fallthru
          _
      $region78: #{sr_model_forward.8} parent=5 // pred_fallthru
        _
    $region6: #{sr_model_forward.8} parent=1 // loop_footer
      %s22 = sadd.s32 1, %s18
    $region7: #{sr_model_forward.8} parent=1 // loop_footer_branch
      %17 = sbr.rel target = $region3
    $region8: #{sr_model_forward.8} parent=1 // loop_exit
      _
    %608 = vsyncpa [#allocation6], 1
    %s609 = scalar_lea.sflag [#allocation6], 1
    %610 = vsyncpa %s609, 1
    %611 = vsyncpa [#allocation8], 1
    %s612 = scalar_lea.sflag [#allocation8], 1
    %613 = vsyncpa %s612, 1

// kernel: sr_model_forward.10
$region0: #{sr_model_forward.10}
  #allocation0 [shape = 'u32[]', space=smem, size = 0x4, offset = 0x4, fixed_abs, tag = 'smem constant byte address 0x4 - core index']
  #allocation1 [shape = 'u32[144,128]{1,0:T(1,128)}', space=vmem, size = 0x12000, scoped, tag = 'internal scratch']
  %s0 = inlined_call_operand.vmem [shape: f32[2,8,48], index: 0, kind: input, shape index: {}]
  %s1 = inlined_call_operand.vmem [shape: bf16[48,300], index: 1, kind: input, shape index: {}]
  %s2 = inlined_call_operand.vmem [shape: f32[1,300], index: 2, kind: input, shape index: {}]
  %s3 = inlined_call_operand.vmem [shape: f32[2,301,16], index: 3, kind: input, shape index: {}]
  %s4 = inlined_call_operand.hbm [shape: f32[2,8,16], index: 4, kind: output, shape index: {0}]
  %s5 = inlined_call_operand.vmem [shape: f32[2,8,32], index: 5, kind: output, shape index: {1}]
  %6 = xla_tuple %s4, %s5
  %s7 = sld [smem:[#allocation0]]
  $region57: #{sr_model_forward.10} parent=0
    _
  %s9 = ssub.s32 1, %s7
  %s10 = scalar_select 0, %s9, %s7
  $region1: #{sr_model_forward.10} parent=0
    #allocation2 [shape = 'u8[8192]{0}', space=vmem, size = 0x2000, scoped, tag = 'output window, operand 0']
    #allocation3 [shape = 's32[2]{0}', space=sflag, size = 0x8, scoped, tag = 'scoped memory for sr_model_forward.10']
    %11 = vsyncpa [#allocation3], 0
    %s12 = scalar_lea.sflag [#allocation3], 1
    %13 = vsyncpa %s12, 0
    loop: start=0, step=1, limit=4
    $region2: #{sr_model_forward.10} parent=1 // loop_pre_header
      _
    $region3: #{sr_model_forward.10} parent=1 // loop_header
      %s15 = sphi 0, %s19
      %p16 = scmp.ge.s32.totalorder %s15, 4
      %s25 = sphi 0, %s27
      %s28 = sphi 0, %s25
      %s29 = sphi 0, %s28
      %s45 = sphi 0, %s29
      %s49 = sphi 0, %s49
      %s51 = sphi 0, %s49
      %s52 = sphi 0, %s51
      %s66 = sphi 0, %s52
      %s70 = sphi 0, %s70
      %s72 = sphi 0, %s70
      %s73 = sphi 0, %s72
      %s87 = sphi 0, %s73
      %s93 = sphi 0, %s95
      %s96 = sphi 0, %s93
      %s97 = sphi 0, %s96
      %s113 = sphi 0, %s97
      %s119 = sphi 0, %s121
      %s122 = sphi 0, %s119
      %s123 = sphi 0, %s122
      %s139 = sphi 0, %s123
      %s145 = sphi 0, %s147
      %s148 = sphi 0, %s145
      %s149 = sphi 0, %s148
      %s165 = sphi 0, %s149
    $region4: #{sr_model_forward.10} parent=1 // loop_header_branch
      %18 = sbr.rel (%p16) target = $region8
    $region5: #{sr_model_forward.10} parent=1 // loop_body
      %s20 = ssub.s32 %s15, 1
      %s21 = ssub.s32 %s15, 2
      %s22 = sadd.s32 %s15, 1
      %s23 = ssub.s32 %s15, %s22
      %p24 = scmp.eq.s32.totalorder %s23, 0
      %s26 = sadd.s32 %s25, 1
      %s27 = scalar_select %p24, %s25, %s26
      %p30 = pneg %p24
      %p31 = scmp.eq.s32.totalorder %s15, 1
      %p32 = por %p30, %p31
      %p33 = scmp.ne.s32.totalorder %s25, %s28
      %p34 = scmp.eq.s32.totalorder %s15, 0
      %p35 = por %p33, %p34
      %p36 = scmp.ne.s32.totalorder %s25, %s28
      %p37 = scmp.eq.s32.totalorder %s20, 1
      %p38 = por %p36, %p37
      %p39 = scmp.ne.s32.totalorder %s28, %s29
      %p40 = scmp.eq.s32.totalorder %s20, 0
      %p41 = por %p39, %p40
      %p42 = scmp.ne.s32.totalorder %s28, %s29
      %p43 = scmp.eq.s32.totalorder %s21, 1
      %p44 = por %p42, %p43
      %p46 = scmp.ne.s32.totalorder %s29, %s45
      %p47 = scmp.eq.s32.totalorder %s21, 0
      %p48 = por %p46, %p47
      %s50 = sadd.s32 %s49, 1
      %p53 = scmp.eq.s32.totalorder %s15, 1
      %p54 = scmp.ne.s32.totalorder %s49, %s51
      %p55 = scmp.eq.s32.totalorder %s15, 0
      %p56 = por %p54, %p55
      %p57 = scmp.ne.s32.totalorder %s49, %s51
      %p58 = scmp.eq.s32.totalorder %s20, 1
      %p59 = por %p57, %p58
      %p60 = scmp.ne.s32.totalorder %s51, %s52
      %p61 = scmp.eq.s32.totalorder %s20, 0
      %p62 = por %p60, %p61
      %p63 = scmp.ne.s32.totalorder %s51, %s52
      %p64 = scmp.eq.s32.totalorder %s21, 1
      %p65 = por %p63, %p64
      %p67 = scmp.ne.s32.totalorder %s52, %s66
      %p68 = scmp.eq.s32.totalorder %s21, 0
      %p69 = por %p67, %p68
      %s71 = sadd.s32 %s70, 1
      %p74 = scmp.eq.s32.totalorder %s15, 1
      %p75 = scmp.ne.s32.totalorder %s70, %s72
      %p76 = scmp.eq.s32.totalorder %s15, 0
      %p77 = por %p75, %p76
      %p78 = scmp.ne.s32.totalorder %s70, %s72
      %p79 = scmp.eq.s32.totalorder %s20, 1
      %p80 = por %p78, %p79
      %p81 = scmp.ne.s32.totalorder %s72, %s73
      %p82 = scmp.eq.s32.totalorder %s20, 0
      %p83 = por %p81, %p82
      %p84 = scmp.ne.s32.totalorder %s72, %s73
      %p85 = scmp.eq.s32.totalorder %s21, 1
      %p86 = por %p84, %p85
      %p88 = scmp.ne.s32.totalorder %s73, %s87
      %p89 = scmp.eq.s32.totalorder %s21, 0
      %p90 = por %p88, %p89
      %s91 = ssub.s32 %s15, %s22
      %p92 = scmp.eq.s32.totalorder %s91, 0
      %s94 = sadd.s32 %s93, 1
      %s95 = scalar_select %p92, %s93, %s94
      %p98 = pneg %p92
      %p99 = scmp.eq.s32.totalorder %s15, 1
      %p100 = por %p98, %p99
      %p101 = scmp.ne.s32.totalorder %s93, %s96
      %p102 = scmp.eq.s32.totalorder %s15, 0
      %p103 = por %p101, %p102
      %p104 = scmp.ne.s32.totalorder %s93, %s96
      %p105 = scmp.eq.s32.totalorder %s20, 1
      %p106 = por %p104, %p105
      %p107 = scmp.ne.s32.totalorder %s96, %s97
      %p108 = scmp.eq.s32.totalorder %s20, 0
      %p109 = por %p107, %p108
      %p110 = scmp.ne.s32.totalorder %s96, %s97
      %p111 = scmp.eq.s32.totalorder %s21, 1
      %p112 = por %p110, %p111
      %p114 = scmp.ne.s32.totalorder %s97, %s113
      %p115 = scmp.eq.s32.totalorder %s21, 0
      %p116 = por %p114, %p115
      %s117 = ssub.s32 %s15, %s22
      %p118 = scmp.eq.s32.totalorder %s117, 0
      %s120 = sadd.s32 %s119, 1
      %s121 = scalar_select %p118, %s119, %s120
      %p124 = pneg %p118
      %p125 = scmp.eq.s32.totalorder %s15, 1
      %p126 = por %p124, %p125
      %p127 = scmp.ne.s32.totalorder %s119, %s122
      %p128 = scmp.eq.s32.totalorder %s15, 0
      %p129 = por %p127, %p128
      %p130 = scmp.ne.s32.totalorder %s119, %s122
      %p131 = scmp.eq.s32.totalorder %s20, 1
      %p132 = por %p130, %p131
      %p133 = scmp.ne.s32.totalorder %s122, %s123
      %p134 = scmp.eq.s32.totalorder %s20, 0
      %p135 = por %p133, %p134
      %p136 = scmp.ne.s32.totalorder %s122, %s123
      %p137 = scmp.eq.s32.totalorder %s21, 1
      %p138 = por %p136, %p137
      %p140 = scmp.ne.s32.totalorder %s123, %s139
      %p141 = scmp.eq.s32.totalorder %s21, 0
      %p142 = por %p140, %p141
      %s143 = ssub.s32 %s15, %s22
      %p144 = scmp.eq.s32.totalorder %s143, 0
      %s146 = sadd.s32 %s145, 1
      %s147 = scalar_select %p144, %s145, %s146
      %p150 = pneg %p144
      %p151 = scmp.eq.s32.totalorder %s15, 1
      %p152 = por %p150, %p151
      %p153 = scmp.ne.s32.totalorder %s145, %s148
      %p154 = scmp.eq.s32.totalorder %s15, 0
      %p155 = por %p153, %p154
      %p156 = scmp.ne.s32.totalorder %s145, %s148
      %p157 = scmp.eq.s32.totalorder %s20, 1
      %p158 = por %p156, %p157
      %p159 = scmp.ne.s32.totalorder %s148, %s149
      %p160 = scmp.eq.s32.totalorder %s20, 0
      %p161 = por %p159, %p160
      %p162 = scmp.ne.s32.totalorder %s148, %s149
      %p163 = scmp.eq.s32.totalorder %s21, 1
      %p164 = por %p162, %p163
      %p166 = scmp.ne.s32.totalorder %s149, %s165
      %p167 = scmp.eq.s32.totalorder %s21, 0
      %p168 = por %p166, %p167
      %p169 = scmp.le.s32.totalorder 1, %s15
      %p170 = scmp.lt.s32.totalorder %s15, 3
      %p171 = pnand %p169, %p170
      %p172 = pneg %p171
      // Predicated region
      $region9: #{sr_model_forward.10} parent=5 // pred_check
        _
      $region10: #{sr_model_forward.10} parent=5 // pred_check_branch
        %174 = sbr.rel (%p171) target = $region12
      $region11: #{sr_model_forward.10} parent=5 // pred_region
        %s175 = ssub.s32 %s15, 1
        // Predicated region
        $region13: #{sr_model_forward.10} parent=11 // pred_check
          %p176 = pneg %p62
        $region14: #{sr_model_forward.10} parent=11 // pred_check_branch
          %178 = sbr.rel (%p176) target = $region16
        $region15: #{sr_model_forward.10} parent=11 // pred_region
          _
        $region16: #{sr_model_forward.10} parent=11 // pred_fallthru
          _
        // Predicated region
        $region17: #{sr_model_forward.10} parent=11 // pred_check
          %p179 = pneg %p83
        $region18: #{sr_model_forward.10} parent=11 // pred_check_branch
          %181 = sbr.rel (%p179) target = $region20
        $region19: #{sr_model_forward.10} parent=11 // pred_region
          _
        $region20: #{sr_model_forward.10} parent=11 // pred_fallthru
          _
      $region12: #{sr_model_forward.10} parent=5 // pred_fallthru
        _
      %p182 = scmp.lt.s32.totalorder %s15, 2
      // Predicated region
      $region21: #{sr_model_forward.10} parent=5 // pred_check
        %p183 = pneg %p182
      $region22: #{sr_model_forward.10} parent=5 // pred_check_branch
        %185 = sbr.rel (%p183) target = $region24
      $region23: #{sr_model_forward.10} parent=5 // pred_region
        // Predicated region
        $region25: #{sr_model_forward.10} parent=23 // pred_check
          %p186 = pneg %p35
        $region26: #{sr_model_forward.10} parent=23 // pred_check_branch
          %188 = sbr.rel (%p186) target = $region28
        $region27: #{sr_model_forward.10} parent=23 // pred_region
          %p189 = scmp.lt.s32.totalorder %s15, 1
          %s190 = scalar_select %p189, %s15, 1
          %s191 = smul.addr %s190, 8
          %s192 = scalar_lea.vmem %s0, %s191
        $region28: #{sr_model_forward.10} parent=23 // pred_fallthru
          _
        // Predicated region
        $region29: #{sr_model_forward.10} parent=23 // pred_check
          %p193 = pneg %p103
        $region30: #{sr_model_forward.10} parent=23 // pred_check_branch
          %195 = sbr.rel (%p193) target = $region32
        $region31: #{sr_model_forward.10} parent=23 // pred_region
          %p196 = scmp.lt.s32.totalorder %s15, 1
          %s197 = scalar_select %p196, %s15, 1
          %s198 = smul.addr %s197, 38
          %s199 = smul.addr %s198, 8
          %s200 = scalar_lea.vmem %s3, %s199
        $region32: #{sr_model_forward.10} parent=23 // pred_fallthru
          _
      $region24: #{sr_model_forward.10} parent=5 // pred_fallthru
        _
      %p201 = scmp.le.s32.totalorder 1, %s15
      %p202 = scmp.lt.s32.totalorder %s15, 3
      %p203 = pnand %p201, %p202
      %p204 = pneg %p203
      // Predicated region
      $region33: #{sr_model_forward.10} parent=5 // pred_check
        _
      $region34: #{sr_model_forward.10} parent=5 // pred_check_branch
        %206 = sbr.rel (%p203) target = $region36
      $region35: #{sr_model_forward.10} parent=5 // pred_region
        %s207 = ssub.s32 %s15, 1
        %p208 = scmp.lt.s32.totalorder %s20, 1
        %s209 = scalar_select %p208, %s20, 1
        %s210 = smul.addr %s209, 8
        %s211 = scalar_lea.vmem %s0, %s210
        %p212 = pneg %p41
        %p213 = pneg %p38
        %p214 = pneg %p62
        %p215 = pneg %p59
        %p216 = pneg %p83
        %p217 = pneg %p80
        %p218 = scmp.lt.s32.totalorder %s20, 1
        %s219 = scalar_select %p218, %s20, 1
        %s220 = smul.addr %s219, 38
        %s221 = smul.addr %s220, 8
        %s222 = scalar_lea.vmem %s3, %s221
        %p223 = pneg %p109
        %p224 = pneg %p106
        %p225 = pneg %p135
        %p226 = pneg %p132
        %s227 = sand.u32 %s122, 1
        %s228 = scalar_lea.sflag [#allocation3], %s227
        %s229 = sand.u32 %s122, 1
        %s230 = smul.addr %s229, 8
        %s231 = scalar_lea.vmem [#allocation2], %s230
        %p232 = pneg %p161
        %p233 = pneg %p158
        %p234 = scmp.lt.s32.totalorder %s20, 1
        %s235 = scalar_select %p234, %s20, 1
        %s236 = smul.addr %s235, 8
        %s237 = scalar_lea.vmem %s5, %s236
        %p238 = scmp.lt.s32.totalorder %s20, 1
        %s239 = scalar_select %p238, %s20, 1
        %s240 = smul.addr %s239, 8
        %s241 = scalar_lea.vmem %s0, %s240
        %p242 = scmp.lt.s32.totalorder %s20, 1
        %s243 = scalar_select %p242, %s20, 1
        %s244 = smul.addr %s243, 38
        %s245 = smul.addr %s244, 8
        %s246 = scalar_lea.vmem %s3, %s245
        %p247 = scmp.lt.s32.totalorder %s20, 1
        %s248 = scalar_select %p247, %s20, 1
        %s249 = smul.addr %s248, 8
        %s250 = scalar_lea.vmem %s5, %s249
        %v252 = vld [vmem:[%s241] sm:$0xff]
        %v253 = vpack.c.bf16 %v252, %v252
        %v254 = vld [vmem:[%s1] sm:$0xff]
        %v255 = vld [vmem:[%s1 + $0x8] sm:$0xf]
        %v256 = vld [vmem:[%s1 + $0xc] sm:$0xff]
        %v257 = vld [vmem:[%s1 + $0x14] sm:$0xf]
        %v258 = vld [vmem:[%s1 + $0x18] sm:$0xff]
        %v259 = vld [vmem:[%s1 + $0x20] sm:$0xf]
        %v260 = vld [vmem:[%s1 + $0x24] sm:$0xff]
        %v261 = vld [vmem:[%s1 + $0x2c] sm:$0xf]
        %v262 = vld [vmem:[%s1 + $0x30] sm:$0xff]
        %v263 = vld [vmem:[%s1 + $0x38] sm:$0xf]
        %v264 = vld [vmem:[%s1 + $0x3c] sm:$0xff]
        %v265 = vld [vmem:[%s1 + $0x44] sm:$0xf]
        %v266 = vld [vmem:[%s2] sm:$0x7]
        %v268 = vlaneseq
        %v269 = vshrl.u32 %v268, 7
        %v270 = vsub.s32 0, %v269
        %v271 = vrot.slane %v266, %v270
        %v272 = vlaneseq
        %v273 = vshrl.u32 %v272, 7
        %v274 = vsub.s32 1, %v273
        %v275 = vrot.slane %v266, %v274
        %v276 = vlaneseq
        %v277 = vshrl.u32 %v276, 7
        %v278 = vsub.s32 2, %v277
        %v279 = vrot.slane %v266, %v278
        %v295 = vunpack.c.l.b16 %v254
        %v296 = vunpack.c.h.b16 %v254
        %v297 = vunpack.c.l.b16 %v255
        %v298 = vunpack.c.l.b16 %v256
        %v299 = vunpack.c.h.b16 %v256
        %v300 = vunpack.c.l.b16 %v257
        %v301 = vunpack.c.l.b16 %v258
        %v302 = vunpack.c.h.b16 %v258
        %v303 = vunpack.c.l.b16 %v259
        %v304 = vunpack.c.l.b16 %v260
        %v305 = vunpack.c.h.b16 %v260
        %v306 = vunpack.c.l.b16 %v261
        %v307 = vunpack.c.l.b16 %v262
        %v308 = vunpack.c.h.b16 %v262
        %v309 = vunpack.c.l.b16 %v263
        %v310 = vunpack.c.l.b16 %v264
        %v311 = vunpack.c.h.b16 %v264
        %v312 = vunpack.c.l.b16 %v265
        %v313 = vpack.c.b16 %v298, %v295
        %v314 = vpack.c.b16 %v299, %v296
        %v315 = vpack.c.b16 %v300, %v297
        %v316 = vpack.c.b16 %v304, %v301
        %v317 = vpack.c.b16 %v305, %v302
        %v318 = vpack.c.b16 %v306, %v303
        %v319 = vpack.c.b16 %v310, %v307
        %v320 = vpack.c.b16 %v311, %v308
        %v321 = vpack.c.b16 %v312, %v309
        %vm331 = vcmask 392192
        %v333 = vsel %vm331, %v253, 0
        %335 = vmatprep.subr.bf16.mxu0 0
        %336 = vmatpush1.bf16.msra.mxu0 0
        %337 = vmatprep.subr.bf16.mxu0 0
        %338 = vmatpush1.bf16.msra.mxu0 0
        %339 = vmatprep.subr.bf16.mxu0 0
        %340 = vmatpush1.bf16.msra.mxu0 0
        %341 = vmatprep.subr.bf16.mxu0 0
        %342 = vmatpush1.bf16.msra.mxu0 0
        %343 = vmatprep.subr.bf16.mxu0 0
        %344 = vmatpush1.bf16.msra.mxu0 0
        %345 = vmatprep.subr.bf16.mxu0 %v320
        %346 = vmatpush1.bf16.msra.mxu0 %v319
        %347 = vmatprep.subr.bf16.mxu0 %v317
        %348 = vmatpush1.bf16.msra.mxu0 %v316
        %349 = vmatprep.subr.bf16.mxu0 %v314
        %350 = vmatpush1.bf16.msra.mxu0 %v313
        %351 = vmatprep.subr.bf16.mxu0 0
        %352 = vmatpush2.bf16.msra.mxu0 0
        %353 = vmatprep.subr.bf16.mxu0 0
        %354 = vmatpush2.bf16.msra.mxu0 0
        %355 = vmatprep.subr.bf16.mxu0 0
        %356 = vmatpush2.bf16.msra.mxu0 0
        %357 = vmatprep.subr.bf16.mxu0 0
        %358 = vmatpush2.bf16.msra.mxu0 0
        %359 = vmatprep.subr.bf16.mxu0 0
        %360 = vmatpush2.bf16.msra.mxu0 0
        %361 = vmatprep.subr.bf16.mxu0 0
        %362 = vmatpush2.bf16.msra.mxu0 0
        %363 = vmatprep.subr.bf16.mxu0 0
        %364 = vmatpush2.bf16.msra.mxu0 0
        %365 = vmatprep.subr.bf16.mxu0 0
        %366 = vmatpush2.bf16.msra.mxu0 0
        %367 = vmatprep.mubr.bf16.mxu0 0
        %368 = vmatmul.mubr.bf16.gmra.mxu0 %v333
        %v369 = vpop.f32.mrf.mxu0
        %v370 = vadd.f32 %v271, %v369
        %v371 = vpop.f32.mrf.mxu0
        %v372 = vadd.f32 %v275, %v371
        %v373 = vpop.f32.mrf.mxu0
        %v374 = vpop.f32.mrf.mxu0
        %375 = vdwg.mxu0
        %376 = vmatprep.subr.bf16.mxu0 0
        %377 = vmatpush1.bf16.msra.mxu0 0
        %378 = vmatprep.subr.bf16.mxu0 0
        %379 = vmatpush1.bf16.msra.mxu0 0
        %380 = vmatprep.subr.bf16.mxu0 0
        %381 = vmatpush1.bf16.msra.mxu0 0
        %382 = vmatprep.subr.bf16.mxu0 0
        %383 = vmatpush1.bf16.msra.mxu0 0
        %384 = vmatprep.subr.bf16.mxu0 0
        %385 = vmatpush1.bf16.msra.mxu0 0
        %386 = vmatprep.subr.bf16.mxu0 0
        %387 = vmatpush1.bf16.msra.mxu0 %v321
        %388 = vmatprep.subr.bf16.mxu0 0
        %389 = vmatpush1.bf16.msra.mxu0 %v318
        %390 = vmatprep.subr.bf16.mxu0 0
        %391 = vmatpush1.bf16.msra.mxu0 %v315
        %392 = vmatprep.subr.bf16.mxu0 0
        %393 = vmatpush2.bf16.msra.mxu0 0
        %394 = vmatprep.subr.bf16.mxu0 0
        %395 = vmatpush2.bf16.msra.mxu0 0
        %396 = vmatprep.subr.bf16.mxu0 0
        %397 = vmatpush2.bf16.msra.mxu0 0
        %398 = vmatprep.subr.bf16.mxu0 0
        %399 = vmatpush2.bf16.msra.mxu0 0
        %400 = vmatprep.subr.bf16.mxu0 0
        %401 = vmatpush2.bf16.msra.mxu0 0
        %402 = vmatprep.subr.bf16.mxu0 0
        %403 = vmatpush2.bf16.msra.mxu0 0
        %404 = vmatprep.subr.bf16.mxu0 0
        %405 = vmatpush2.bf16.msra.mxu0 0
        %406 = vmatprep.subr.bf16.mxu0 0
        %407 = vmatpush2.bf16.msra.mxu0 0
        %408 = vmatprep.mubr.bf16.mxu0 0
        %409 = vmatmul.mubr.bf16.gmra.mxu0 %v333
        %v410 = vpop.f32.mrf.mxu0
        %v411 = vadd.f32 %v279, %v410
        %v412 = vpop.f32.mrf.mxu0
        %v413 = vpop.f32.mrf.mxu0
        %v414 = vpop.f32.mrf.mxu0
        %415 = vdwg.mxu0
        %v416 = vmax.f32 %v370, 0.0
        %v417 = vmax.f32 %v372, 0.0
        %v418 = vmax.f32 %v411, 0.0
        %v419 = vld [vmem:[%s246] sm:$0xff]
        %v420 = vld [vmem:[%s246 + $0x8] sm:$0xff]
        %v421 = vld [vmem:[%s246 + $0x10] sm:$0xff]
        %v422 = vld [vmem:[%s246 + $0x18] sm:$0xff]
        %v423 = vld [vmem:[%s246 + $0x20] sm:$0xff]
        %v424 = vld [vmem:[%s246 + $0x28] sm:$0xff]
        %v425 = vld [vmem:[%s246 + $0x30] sm:$0xff]
        %v426 = vld [vmem:[%s246 + $0x38] sm:$0xff]
        %v427 = vld [vmem:[%s246 + $0x40] sm:$0xff]
        %v428 = vld [vmem:[%s246 + $0x48] sm:$0xff]
        %v429 = vld [vmem:[%s246 + $0x50] sm:$0xff]
        %v430 = vld [vmem:[%s246 + $0x58] sm:$0xff]
        %v431 = vld [vmem:[%s246 + $0x60] sm:$0xff]
        %v432 = vld [vmem:[%s246 + $0x68] sm:$0xff]
        %v433 = vld [vmem:[%s246 + $0x70] sm:$0xff]
        %v434 = vld [vmem:[%s246 + $0x78] sm:$0xff]
        %v435 = vld [vmem:[%s246 + $0x80] sm:$0xff]
        %v436 = vld [vmem:[%s246 + $0x88] sm:$0xff]
        %v437 = vld [vmem:[%s246 + $0x90] sm:$0xff]
        %v438 = vld [vmem:[%s246 + $0x98] sm:$0xff]
        %v439 = vld [vmem:[%s246 + $0xa0] sm:$0xff]
        %v440 = vld [vmem:[%s246 + $0xa8] sm:$0xff]
        %v441 = vld [vmem:[%s246 + $0xb0] sm:$0xff]
        %v442 = vld [vmem:[%s246 + $0xb8] sm:$0xff]
        %v443 = vld [vmem:[%s246 + $0xc0] sm:$0xff]
        %v444 = vld [vmem:[%s246 + $0xc8] sm:$0xff]
        %v445 = vld [vmem:[%s246 + $0xd0] sm:$0xff]
        %v446 = vld [vmem:[%s246 + $0xd8] sm:$0xff]
        %v447 = vld [vmem:[%s246 + $0xe0] sm:$0xff]
        %v448 = vld [vmem:[%s246 + $0xe8] sm:$0xff]
        %v449 = vld [vmem:[%s246 + $0xf0] sm:$0xff]
        %v450 = vld [vmem:[%s246 + $0xf8] sm:$0xff]
        %v451 = vld [vmem:[%s246 + $0x100] sm:$0xff]
        %v452 = vld [vmem:[%s246 + $0x108] sm:$0xff]
        %v453 = vld [vmem:[%s246 + $0x110] sm:$0xff]
        %v454 = vld [vmem:[%s246 + $0x118] sm:$0xff]
        %v455 = vld [vmem:[%s246 + $0x120] sm:$0xff]
        %v456 = vld [vmem:[%s246 + $0x128] sm:$0xf]
        %v457 = vld [vmem:[%s246 + $0x12c] sm:$0x1]
        %v458 = vpack.c.bf16 %v416, %v416
        %v459 = vpack.c.bf16 %v417, %v417
        %v460 = vpack.c.bf16 %v418, %v418
        %v461 = vpack.c.bf16 %v420, %v419
        %v462 = vpack.c.bf16 %v422, %v421
        %v463 = vpack.c.bf16 %v424, %v423
        %v464 = vpack.c.bf16 %v426, %v425
        %v465 = vpack.c.bf16 %v428, %v427
        %v466 = vpack.c.bf16 %v430, %v429
        %v467 = vpack.c.bf16 %v432, %v431
        %v468 = vpack.c.bf16 %v434, %v433
        %v469 = vpack.c.bf16 %v436, %v435
        %v470 = vpack.c.bf16 %v438, %v437
        %v471 = vpack.c.bf16 %v440, %v439
        %v472 = vpack.c.bf16 %v442, %v441
        %v473 = vpack.c.bf16 %v444, %v443
        %v474 = vpack.c.bf16 %v446, %v445
        %v475 = vpack.c.bf16 %v448, %v447
        %v476 = vpack.c.bf16 %v450, %v449
        %v477 = vpack.c.bf16 %v452, %v451
        %v478 = vpack.c.bf16 %v454, %v453
        %v479 = vpack.c.bf16 %v456, %v455
        %v480 = vlaneseq
        %v481 = vshrl.u32 %v480, 7
        %v482 = vsub.s32 0, %v481
        %v483 = vrot.slane %v457, %v482
        %vm484 = vcmask 359424
        %v486 = vsel %vm484, %v460, 0
        %vm488 = vcmask 1045504
        %v490 = vsel %vm488, %v479, 0
        %492 = vmatprep.subr.bf16.mxu0 0
        %493 = vmatpush1.bf16.msra.mxu0 %v468
        %494 = vmatprep.subr.bf16.mxu0 0
        %495 = vmatpush1.bf16.msra.mxu0 %v467
        %496 = vmatprep.subr.bf16.mxu0 0
        %497 = vmatpush1.bf16.msra.mxu0 %v466
        %498 = vmatprep.subr.bf16.mxu0 0
        %499 = vmatpush1.bf16.msra.mxu0 %v465
        %500 = vmatprep.subr.bf16.mxu0 0
        %501 = vmatpush1.bf16.msra.mxu0 %v464
        %502 = vmatprep.subr.bf16.mxu0 0
        %503 = vmatpush1.bf16.msra.mxu0 %v463
        %504 = vmatprep.subr.bf16.mxu0 0
        %505 = vmatpush1.bf16.msra.mxu0 %v462
        %506 = vmatprep.subr.bf16.mxu0 0
        %507 = vmatpush1.bf16.msra.mxu0 %v461
        %508 = vmatprep.subr.bf16.mxu0 0
        %509 = vmatpush2.bf16.msra.mxu0 %v476
        %510 = vmatprep.subr.bf16.mxu0 0
        %511 = vmatpush2.bf16.msra.mxu0 %v475
        %512 = vmatprep.subr.bf16.mxu0 0
        %513 = vmatpush2.bf16.msra.mxu0 %v474
        %514 = vmatprep.subr.bf16.mxu0 0
        %515 = vmatpush2.bf16.msra.mxu0 %v473
        %516 = vmatprep.subr.bf16.mxu0 0
        %517 = vmatpush2.bf16.msra.mxu0 %v472
        %518 = vmatprep.subr.bf16.mxu0 0
        %519 = vmatpush2.bf16.msra.mxu0 %v471
        %520 = vmatprep.subr.bf16.mxu0 0
        %521 = vmatpush2.bf16.msra.mxu0 %v470
        %522 = vmatprep.subr.bf16.mxu0 0
        %523 = vmatpush2.bf16.msra.mxu0 %v469
        %524 = vmatprep.mubr.bf16.mxu0 %v459
        %525 = vmatmul.mubr.bf16.gmra.mxu0 %v458
        %v526 = vpop.f32.mrf.mxu0
        %v527 = vadd.f32 %v483, %v526
        %v528 = vpop.f32.mrf.mxu0
        %v529 = vpop.f32.mrf.mxu0
        %v530 = vpop.f32.mrf.mxu0
        %531 = vdwg.mxu0
        %532 = vmatprep.subr.bf16.mxu0 0
        %533 = vmatpush1.bf16.msra.mxu0 0
        %534 = vmatprep.subr.bf16.mxu0 0
        %535 = vmatpush1.bf16.msra.mxu0 0
        %536 = vmatprep.subr.bf16.mxu0 0
        %537 = vmatpush1.bf16.msra.mxu0 0
        %538 = vmatprep.subr.bf16.mxu0 0
        %539 = vmatpush1.bf16.msra.mxu0 0
        %540 = vmatprep.subr.bf16.mxu0 0
        %541 = vmatpush1.bf16.msra.mxu0 0
        %542 = vmatprep.subr.bf16.mxu0 0
        %543 = vmatpush1.bf16.msra.mxu0 %v490
        %544 = vmatprep.subr.bf16.mxu0 0
        %545 = vmatpush1.bf16.msra.mxu0 %v478
        %546 = vmatprep.subr.bf16.mxu0 0
        %547 = vmatpush1.bf16.msra.mxu0 %v477
        %548 = vmatprep.subr.bf16.mxu0 0
        %549 = vmatpush2.bf16.msra.mxu0 0
        %550 = vmatprep.subr.bf16.mxu0 0
        %551 = vmatpush2.bf16.msra.mxu0 0
        %552 = vmatprep.subr.bf16.mxu0 0
        %553 = vmatpush2.bf16.msra.mxu0 0
        %554 = vmatprep.subr.bf16.mxu0 0
        %555 = vmatpush2.bf16.msra.mxu0 0
        %556 = vmatprep.subr.bf16.mxu0 0
        %557 = vmatpush2.bf16.msra.mxu0 0
        %558 = vmatprep.subr.bf16.mxu0 0
        %559 = vmatpush2.bf16.msra.mxu0 0
        %560 = vmatprep.subr.bf16.mxu0 0
        %561 = vmatpush2.bf16.msra.mxu0 0
        %562 = vmatprep.subr.bf16.mxu0 0
        %563 = vmatpush2.bf16.msra.mxu0 0
        %564 = vmatprep.mubr.bf16.mxu0 0
        %565 = vmatmul.mubr.bf16.gmra.mxu0 %v486
        %v566 = vpop.f32.mrf.mxu0
        %v567 = vadd.f32 %v527, %v566
        %v568 = vpop.f32.mrf.mxu0
        %v569 = vpop.f32.mrf.mxu0
        %v570 = vpop.f32.mrf.mxu0
        %571 = vdwg.mxu0
        %vm572 = vcmask 130048
        %573 = vst.msk [vmem:[%s231] sm:$0xff] %vm572, %v567
        %v574 = vsel %vm572, %v567, -inf
        %575 = vmax.xlane.f32.xlu0 %v574
        %v576 = vpop.xlane.xlu0 %575
        %v577 = vsub.f32 %v567, %v576
        %v578 = vmul.f32 %v577, 1.442695
        %v579 = vpow.pop %v578
        %v580 = vsel %vm572, %v579, 0.0
        %581 = vadd.xlane.f32.xlu0 %v580
        %v582 = vpop.xlane.xlu0 %581
        %v583 = vrcp.pop %v582
        %v584 = vmul.f32 %v579, %v583
        %v585 = vsel %vm572, %v584, 0.0
        %v586 = vrot.slane %v585, 4
        %v587 = vadd.f32 %v585, %v586
        %v588 = vrot.slane %v587, 2
        %v589 = vadd.f32 %v587, %v588
        %v590 = vrot.slane %v589, 1
        %v591 = vadd.f32 %v589, %v590
        %592 = vst.msk [vmem:[%s250] sm:$0xff] %vm572, %v584
        %v593 = vsub.f32 %v591, %v584
        %595 = vrot.lane.b32.xlu0 %v593, 16
        %v596 = vpop.permute.xlu0 %595
        %vm598 = vcmask 261248
        %599 = vst.msk [vmem:[%s250] sm:$0xff] %vm598, %v596
        %s600 = sand.u32 %s122, 1
        %s601 = scalar_lea.sflag [#allocation3], %s600
        %s602 = sand.u32 %s122, 1
        %s603 = smul.addr %s602, 8
        %s604 = scalar_lea.vmem [#allocation2], %s603
        %p605 = scmp.lt.s32.totalorder %s20, 1
        %s606 = scalar_select %p605, %s20, 1
        %s607 = smul.addr %s606, 8
        %s608 = scalar_lea.vmem %s5, %s607
        // Predicated region
        $region37: #{sr_model_forward.10} parent=35 // pred_check
          %p609 = pneg %p132
        $region38: #{sr_model_forward.10} parent=35 // pred_check_branch
          %611 = sbr.rel (%p609) target = $region40
        $region39: #{sr_model_forward.10} parent=35 // pred_region
          %s613 = ssub.s32 128, 128
          %614 = vsyncadd %s601, %s613
          %s615 = smul.addr %s20, 128
          %s616 = scalar_lea.hbm %s4, %s615
          %s618 = sshll.u32 %s604, 4
          %s619 = int_to_ptr.vmem [resolvable:$true] %s618
          %621 = dma.vmem_to_hbm [thread:$0]  %s619, 128, %s616, %s601
        $region40: #{sr_model_forward.10} parent=35 // pred_fallthru
          _
        // Predicated region
        $region41: #{sr_model_forward.10} parent=35 // pred_check
          %p622 = pneg %p158
        $region42: #{sr_model_forward.10} parent=35 // pred_check_branch
          %624 = sbr.rel (%p622) target = $region44
        $region43: #{sr_model_forward.10} parent=35 // pred_region
          _
        $region44: #{sr_model_forward.10} parent=35 // pred_fallthru
          _
      $region36: #{sr_model_forward.10} parent=5 // pred_fallthru
        _
      %p625 = scmp.le.s32.totalorder 2, %s15
      // Predicated region
      $region45: #{sr_model_forward.10} parent=5 // pred_check
        %p626 = pneg %p625
      $region46: #{sr_model_forward.10} parent=5 // pred_check_branch
        %628 = sbr.rel (%p626) target = $region48
      $region47: #{sr_model_forward.10} parent=5 // pred_region
        %s629 = ssub.s32 %s15, 2
        // Predicated region
        $region49: #{sr_model_forward.10} parent=47 // pred_check
          %p630 = pneg %p138
        $region50: #{sr_model_forward.10} parent=47 // pred_check_branch
          %632 = sbr.rel (%p630) target = $region52
        $region51: #{sr_model_forward.10} parent=47 // pred_region
          %s633 = sand.u32 %s123, 1
          %s634 = scalar_lea.sflag [#allocation3], %s633
          %s635 = sand.u32 %s123, 1
          %s636 = smul.addr %s635, 8
          %s637 = scalar_lea.vmem [#allocation2], %s636
          %638 = dma.done %s634, 128
        $region52: #{sr_model_forward.10} parent=47 // pred_fallthru
          _
        // Predicated region
        $region53: #{sr_model_forward.10} parent=47 // pred_check
          %p639 = pneg %p164
        $region54: #{sr_model_forward.10} parent=47 // pred_check_branch
          %641 = sbr.rel (%p639) target = $region56
        $region55: #{sr_model_forward.10} parent=47 // pred_region
          %p642 = scmp.lt.s32.totalorder %s21, 1
          %s643 = scalar_select %p642, %s21, 1
          %s644 = smul.addr %s643, 8
          %s645 = scalar_lea.vmem %s5, %s644
        $region56: #{sr_model_forward.10} parent=47 // pred_fallthru
          _
      $region48: #{sr_model_forward.10} parent=5 // pred_fallthru
        _
    $region6: #{sr_model_forward.10} parent=1 // loop_footer
      %s19 = sadd.s32 1, %s15
    $region7: #{sr_model_forward.10} parent=1 // loop_footer_branch
      %14 = sbr.rel target = $region3
    $region8: #{sr_model_forward.10} parent=1 // loop_exit
      _
    %646 = vsyncpa [#allocation3], 1
    %s647 = scalar_lea.sflag [#allocation3], 1
    %648 = vsyncpa %s647, 1

// kernel: sr_model_forward.7
$region0: #{sr_model_forward.7}
  #allocation0 [shape = 'u32[]', space=smem, size = 0x4, offset = 0x4, fixed_abs, tag = 'smem constant byte address 0x4 - core index']
  #allocation1 [shape = 'u32[144,128]{1,0:T(1,128)}', space=vmem, size = 0x12000, scoped, tag = 'internal scratch']
  #allocation2 [shape = 'f32[8,2,96]{2,1,0:T(2,128)}', space=vmem, size = 0x2000, scoped, tag = 'scratch operand']
  #allocation3 [shape = 'f32[2,24]{1,0:T(2,128)}', space=vmem, size = 0x400, scoped, tag = 'scratch operand']
  #allocation4 [shape = 'f32[2,24]{1,0:T(2,128)}', space=vmem, size = 0x400, scoped, tag = 'scratch operand']
  %s0 = inlined_call_operand.vmem [shape: f32[8,2,40], index: 0, kind: input, shape index: {}]
  %s1 = inlined_call_operand.hbm [shape: bf16[2,40,96], index: 1, kind: input, shape index: {}]
  %s2 = inlined_call_operand.hbm [shape: f32[2,1,96], index: 2, kind: input, shape index: {}]
  %s3 = inlined_call_operand.hbm [shape: bf16[2,24,96], index: 3, kind: input, shape index: {}]
  %s4 = inlined_call_operand.vmem [shape: f32[2,2,24], index: 4, kind: input, shape index: {}]
  %s5 = inlined_call_operand.vmem [shape: f32[2,2,24], index: 5, kind: input, shape index: {}]
  %s6 = inlined_call_operand.vmem [shape: f32[2,8,2,24], index: 6, kind: output, shape index: {}]
  %s7 = sld [smem:[#allocation0]]
  $region83: #{sr_model_forward.7} parent=0
    _
  %s9 = ssub.s32 1, %s7
  %s10 = scalar_select 0, %s9, %s7
  $region1: #{sr_model_forward.7} parent=0
    #allocation5 [shape = 'u8[20480]{0}', space=vmem, size = 0x5000, scoped, tag = 'input window, operand 1']
    #allocation6 [shape = 's32[2]{0}', space=sflag, size = 0x8, scoped, tag = 'scoped memory for sr_model_forward.7']
    #allocation7 [shape = 'u8[1024]{0}', space=vmem, size = 0x400, scoped, tag = 'input window, operand 2']
    #allocation8 [shape = 's32[2]{0}', space=sflag, size = 0x8, scoped, tag = 'scoped memory for sr_model_forward.7']
    #allocation9 [shape = 'u8[12288]{0}', space=vmem, size = 0x3000, scoped, tag = 'input window, operand 3']
    %11 = vsyncpa [#allocation6], 0
    %s12 = scalar_lea.sflag [#allocation6], 1
    %13 = vsyncpa %s12, 0
    %14 = vsyncpa [#allocation8], 0
    %s15 = scalar_lea.sflag [#allocation8], 1
    %16 = vsyncpa %s15, 0
    loop: start=0, step=1, limit=4
    $region2: #{sr_model_forward.7} parent=1 // loop_pre_header
      _
    $region3: #{sr_model_forward.7} parent=1 // loop_header
      %s18 = sphi 0, %s22
      %p19 = scmp.ge.s32.totalorder %s18, 4
      %s26 = sphi 0, %s26
      %s28 = sphi 0, %s26
      %s29 = sphi 0, %s28
      %s43 = sphi 0, %s29
      %s49 = sphi 0, %s51
      %s52 = sphi 0, %s49
      %s53 = sphi 0, %s52
      %s69 = sphi 0, %s53
      %s75 = sphi 0, %s77
      %s78 = sphi 0, %s75
      %s79 = sphi 0, %s78
      %s95 = sphi 0, %s79
      %s101 = sphi 0, %s103
      %s104 = sphi 0, %s101
      %s105 = sphi 0, %s104
      %s121 = sphi 0, %s105
      %s127 = sphi 0, %s129
      %s130 = sphi 0, %s127
      %s131 = sphi 0, %s130
      %s147 = sphi 0, %s131
      %s153 = sphi 0, %s155
      %s156 = sphi 0, %s153
      %s157 = sphi 0, %s156
      %s173 = sphi 0, %s157
      %s179 = sphi 0, %s181
      %s182 = sphi 0, %s179
      %s183 = sphi 0, %s182
      %s199 = sphi 0, %s183
    $region4: #{sr_model_forward.7} parent=1 // loop_header_branch
      %21 = sbr.rel (%p19) target = $region8
    $region5: #{sr_model_forward.7} parent=1 // loop_body
      %s23 = ssub.s32 %s18, 1
      %s24 = ssub.s32 %s18, 2
      %s25 = sadd.s32 %s18, 1
      %s27 = sadd.s32 %s26, 1
      %p30 = scmp.eq.s32.totalorder %s18, 1
      %p31 = scmp.ne.s32.totalorder %s26, %s28
      %p32 = scmp.eq.s32.totalorder %s18, 0
      %p33 = por %p31, %p32
      %p34 = scmp.ne.s32.totalorder %s26, %s28
      %p35 = scmp.eq.s32.totalorder %s23, 1
      %p36 = por %p34, %p35
      %p37 = scmp.ne.s32.totalorder %s28, %s29
      %p38 = scmp.eq.s32.totalorder %s23, 0
      %p39 = por %p37, %p38
      %p40 = scmp.ne.s32.totalorder %s28, %s29
      %p41 = scmp.eq.s32.totalorder %s24, 1
      %p42 = por %p40, %p41
      %p44 = scmp.ne.s32.totalorder %s29, %s43
      %p45 = scmp.eq.s32.totalorder %s24, 0
      %p46 = por %p44, %p45
      %s47 = ssub.s32 %s18, %s25
      %p48 = scmp.eq.s32.totalorder %s47, 0
      %s50 = sadd.s32 %s49, 1
      %s51 = scalar_select %p48, %s49, %s50
      %p54 = pneg %p48
      %p55 = scmp.eq.s32.totalorder %s18, 1
      %p56 = por %p54, %p55
      %p57 = scmp.ne.s32.totalorder %s49, %s52
      %p58 = scmp.eq.s32.totalorder %s18, 0
      %p59 = por %p57, %p58
      %p60 = scmp.ne.s32.totalorder %s49, %s52
      %p61 = scmp.eq.s32.totalorder %s23, 1
      %p62 = por %p60, %p61
      %p63 = scmp.ne.s32.totalorder %s52, %s53
      %p64 = scmp.eq.s32.totalorder %s23, 0
      %p65 = por %p63, %p64
      %p66 = scmp.ne.s32.totalorder %s52, %s53
      %p67 = scmp.eq.s32.totalorder %s24, 1
      %p68 = por %p66, %p67
      %p70 = scmp.ne.s32.totalorder %s53, %s69
      %p71 = scmp.eq.s32.totalorder %s24, 0
      %p72 = por %p70, %p71
      %s73 = ssub.s32 %s18, %s25
      %p74 = scmp.eq.s32.totalorder %s73, 0
      %s76 = sadd.s32 %s75, 1
      %s77 = scalar_select %p74, %s75, %s76
      %p80 = pneg %p74
      %p81 = scmp.eq.s32.totalorder %s18, 1
      %p82 = por %p80, %p81
      %p83 = scmp.ne.s32.totalorder %s75, %s78
      %p84 = scmp.eq.s32.totalorder %s18, 0
      %p85 = por %p83, %p84
      %p86 = scmp.ne.s32.totalorder %s75, %s78
      %p87 = scmp.eq.s32.totalorder %s23, 1
      %p88 = por %p86, %p87
      %p89 = scmp.ne.s32.totalorder %s78, %s79
      %p90 = scmp.eq.s32.totalorder %s23, 0
      %p91 = por %p89, %p90
      %p92 = scmp.ne.s32.totalorder %s78, %s79
      %p93 = scmp.eq.s32.totalorder %s24, 1
      %p94 = por %p92, %p93
      %p96 = scmp.ne.s32.totalorder %s79, %s95
      %p97 = scmp.eq.s32.totalorder %s24, 0
      %p98 = por %p96, %p97
      %s99 = ssub.s32 %s18, %s25
      %p100 = scmp.eq.s32.totalorder %s99, 0
      %s102 = sadd.s32 %s101, 1
      %s103 = scalar_select %p100, %s101, %s102
      %p106 = pneg %p100
      %p107 = scmp.eq.s32.totalorder %s18, 1
      %p108 = por %p106, %p107
      %p109 = scmp.ne.s32.totalorder %s101, %s104
      %p110 = scmp.eq.s32.totalorder %s18, 0
      %p111 = por %p109, %p110
      %p112 = scmp.ne.s32.totalorder %s101, %s104
      %p113 = scmp.eq.s32.totalorder %s23, 1
      %p114 = por %p112, %p113
      %p115 = scmp.ne.s32.totalorder %s104, %s105
      %p116 = scmp.eq.s32.totalorder %s23, 0
      %p117 = por %p115, %p116
      %p118 = scmp.ne.s32.totalorder %s104, %s105
      %p119 = scmp.eq.s32.totalorder %s24, 1
      %p120 = por %p118, %p119
      %p122 = scmp.ne.s32.totalorder %s105, %s121
      %p123 = scmp.eq.s32.totalorder %s24, 0
      %p124 = por %p122, %p123
      %s125 = ssub.s32 %s18, %s25
      %p126 = scmp.eq.s32.totalorder %s125, 0
      %s128 = sadd.s32 %s127, 1
      %s129 = scalar_select %p126, %s127, %s128
      %p132 = pneg %p126
      %p133 = scmp.eq.s32.totalorder %s18, 1
      %p134 = por %p132, %p133
      %p135 = scmp.ne.s32.totalorder %s127, %s130
      %p136 = scmp.eq.s32.totalorder %s18, 0
      %p137 = por %p135, %p136
      %p138 = scmp.ne.s32.totalorder %s127, %s130
      %p139 = scmp.eq.s32.totalorder %s23, 1
      %p140 = por %p138, %p139
      %p141 = scmp.ne.s32.totalorder %s130, %s131
      %p142 = scmp.eq.s32.totalorder %s23, 0
      %p143 = por %p141, %p142
      %p144 = scmp.ne.s32.totalorder %s130, %s131
      %p145 = scmp.eq.s32.totalorder %s24, 1
      %p146 = por %p144, %p145
      %p148 = scmp.ne.s32.totalorder %s131, %s147
      %p149 = scmp.eq.s32.totalorder %s24, 0
      %p150 = por %p148, %p149
      %s151 = ssub.s32 %s18, %s25
      %p152 = scmp.eq.s32.totalorder %s151, 0
      %s154 = sadd.s32 %s153, 1
      %s155 = scalar_select %p152, %s153, %s154
      %p158 = pneg %p152
      %p159 = scmp.eq.s32.totalorder %s18, 1
      %p160 = por %p158, %p159
      %p161 = scmp.ne.s32.totalorder %s153, %s156
      %p162 = scmp.eq.s32.totalorder %s18, 0
      %p163 = por %p161, %p162
      %p164 = scmp.ne.s32.totalorder %s153, %s156
      %p165 = scmp.eq.s32.totalorder %s23, 1
      %p166 = por %p164, %p165
      %p167 = scmp.ne.s32.totalorder %s156, %s157
      %p168 = scmp.eq.s32.totalorder %s23, 0
      %p169 = por %p167, %p168
      %p170 = scmp.ne.s32.totalorder %s156, %s157
      %p171 = scmp.eq.s32.totalorder %s24, 1
      %p172 = por %p170, %p171
      %p174 = scmp.ne.s32.totalorder %s157, %s173
      %p175 = scmp.eq.s32.totalorder %s24, 0
      %p176 = por %p174, %p175
      %s177 = ssub.s32 %s18, %s25
      %p178 = scmp.eq.s32.totalorder %s177, 0
      %s180 = sadd.s32 %s179, 1
      %s181 = scalar_select %p178, %s179, %s180
      %p184 = pneg %p178
      %p185 = scmp.eq.s32.totalorder %s18, 1
      %p186 = por %p184, %p185
      %p187 = scmp.ne.s32.totalorder %s179, %s182
      %p188 = scmp.eq.s32.totalorder %s18, 0
      %p189 = por %p187, %p188
      %p190 = scmp.ne.s32.totalorder %s179, %s182
      %p191 = scmp.eq.s32.totalorder %s23, 1
      %p192 = por %p190, %p191
      %p193 = scmp.ne.s32.totalorder %s182, %s183
      %p194 = scmp.eq.s32.totalorder %s23, 0
      %p195 = por %p193, %p194
      %p196 = scmp.ne.s32.totalorder %s182, %s183
      %p197 = scmp.eq.s32.totalorder %s24, 1
      %p198 = por %p196, %p197
      %p200 = scmp.ne.s32.totalorder %s183, %s199
      %p201 = scmp.eq.s32.totalorder %s24, 0
      %p202 = por %p200, %p201
      %p203 = scmp.le.s32.totalorder 1, %s18
      %p204 = scmp.lt.s32.totalorder %s18, 3
      %p205 = pnand %p203, %p204
      %p206 = pneg %p205
      // Predicated region
      $region9: #{sr_model_forward.7} parent=5 // pred_check
        _
      $region10: #{sr_model_forward.7} parent=5 // pred_check_branch
        %208 = sbr.rel (%p205) target = $region12
      $region11: #{sr_model_forward.7} parent=5 // pred_region
        %s209 = ssub.s32 %s18, 1
        // Predicated region
        $region13: #{sr_model_forward.7} parent=11 // pred_check
          %p210 = pneg %p39
        $region14: #{sr_model_forward.7} parent=11 // pred_check_branch
          %212 = sbr.rel (%p210) target = $region16
        $region15: #{sr_model_forward.7} parent=11 // pred_region
          _
        $region16: #{sr_model_forward.7} parent=11 // pred_fallthru
          _
      $region12: #{sr_model_forward.7} parent=5 // pred_fallthru
        _
      %p213 = scmp.lt.s32.totalorder %s18, 2
      // Predicated region
      $region17: #{sr_model_forward.7} parent=5 // pred_check
        %p214 = pneg %p213
      $region18: #{sr_model_forward.7} parent=5 // pred_check_branch
        %216 = sbr.rel (%p214) target = $region20
      $region19: #{sr_model_forward.7} parent=5 // pred_region
        // Predicated region
        $region21: #{sr_model_forward.7} parent=19 // pred_check
          %p217 = pneg %p59
        $region22: #{sr_model_forward.7} parent=19 // pred_check_branch
          %219 = sbr.rel (%p217) target = $region24
        $region23: #{sr_model_forward.7} parent=19 // pred_region
          %s220 = sand.u32 %s49, 1
          %s221 = scalar_lea.sflag [#allocation6], %s220
          %s222 = sand.u32 %s49, 1
          %s223 = smul.addr %s222, 20
          %s224 = scalar_lea.vmem [#allocation5], %s223
          %s226 = ssub.s32 320, 320
          %227 = vsyncadd %s221, %s226
          %s228 = smul.addr %s18, 5
          %s229 = smul.addr %s228, 64
          %s230 = scalar_lea.hbm %s1, %s229
          %s231 = sshll.u32 %s224, 4
          %s232 = int_to_ptr.vmem [resolvable:$true] %s231
          %237 = dma.hbm_to_vmem [thread:$0]  %s230, 320, %s232, %s221, 64, 64, 4
        $region24: #{sr_model_forward.7} parent=19 // pred_fallthru
          _
        // Predicated region
        $region25: #{sr_model_forward.7} parent=19 // pred_check
          %p238 = pneg %p85
        $region26: #{sr_model_forward.7} parent=19 // pred_check_branch
          %240 = sbr.rel (%p238) target = $region28
        $region27: #{sr_model_forward.7} parent=19 // pred_region
          %s241 = sand.u32 %s18, 1
          %s242 = scalar_lea.sflag [#allocation8], %s241
          %s243 = sand.u32 %s75, 1
          %s244 = scalar_lea.vmem [#allocation7], %s243
          %s246 = ssub.s32 16, 16
          %247 = vsyncadd %s242, %s246
          %s248 = smul.addr %s18, 16
          %s249 = scalar_lea.hbm %s2, %s248
          %s251 = sshll.u32 %s244, 4
          %s252 = int_to_ptr.vmem [resolvable:$true] %s251
          %254 = dma.hbm_to_vmem [thread:$0]  %s249, 16, %s252, %s242
        $region28: #{sr_model_forward.7} parent=19 // pred_fallthru
          _
        // Predicated region
        $region29: #{sr_model_forward.7} parent=19 // pred_check
          %p255 = pneg %p111
        $region30: #{sr_model_forward.7} parent=19 // pred_check_branch
          %257 = sbr.rel (%p255) target = $region32
        $region31: #{sr_model_forward.7} parent=19 // pred_region
          %s258 = sand.u32 %s18, 1
          %s259 = scalar_lea.sflag [#allocation8], %s258
          %s260 = sand.u32 %s101, 1
          %s261 = smul.addr %s260, 12
          %s262 = scalar_lea.vmem [#allocation9], %s261
          %s264 = ssub.s32 192, 192
          %265 = vsyncadd %s259, %s264
          %s266 = smul.addr %s18, 3
          %s267 = smul.addr %s266, 64
          %s268 = scalar_lea.hbm %s3, %s267
          %s269 = sshll.u32 %s262, 4
          %s270 = int_to_ptr.vmem [resolvable:$true] %s269
          %275 = dma.hbm_to_vmem [thread:$0]  %s268, 192, %s270, %s259, 64, 64, 4
        $region32: #{sr_model_forward.7} parent=19 // pred_fallthru
          _
        // Predicated region
        $region33: #{sr_model_forward.7} parent=19 // pred_check
          %p276 = pneg %p137
        $region34: #{sr_model_forward.7} parent=19 // pred_check_branch
          %278 = sbr.rel (%p276) target = $region36
        $region35: #{sr_model_forward.7} parent=19 // pred_region
          %p279 = scmp.lt.s32.totalorder %s18, 1
          %s280 = scalar_select %p279, %s18, 1
          %s281 = smul.addr %s280, 2
          %s282 = scalar_lea.vmem %s4, %s281
        $region36: #{sr_model_forward.7} parent=19 // pred_fallthru
          _
        // Predicated region
        $region37: #{sr_model_forward.7} parent=19 // pred_check
          %p283 = pneg %p163
        $region38: #{sr_model_forward.7} parent=19 // pred_check_branch
          %285 = sbr.rel (%p283) target = $region40
        $region39: #{sr_model_forward.7} parent=19 // pred_region
          %p286 = scmp.lt.s32.totalorder %s18, 1
          %s287 = scalar_select %p286, %s18, 1
          %s288 = smul.addr %s287, 2
          %s289 = scalar_lea.vmem %s5, %s288
        $region40: #{sr_model_forward.7} parent=19 // pred_fallthru
          _
      $region20: #{sr_model_forward.7} parent=5 // pred_fallthru
        _
      %p290 = scmp.le.s32.totalorder 1, %s18
      %p291 = scmp.lt.s32.totalorder %s18, 3
      %p292 = pnand %p290, %p291
      %p293 = pneg %p292
      // Predicated region
      $region41: #{sr_model_forward.7} parent=5 // pred_check
        _
      $region42: #{sr_model_forward.7} parent=5 // pred_check_branch
        %295 = sbr.rel (%p292) target = $region44
      $region43: #{sr_model_forward.7} parent=5 // pred_region
        %s296 = ssub.s32 %s18, 1
        %s297 = sand.u32 %s52, 1
        %s298 = scalar_lea.sflag [#allocation6], %s297
        %s299 = sand.u32 %s52, 1
        %s300 = smul.addr %s299, 20
        %s301 = scalar_lea.vmem [#allocation5], %s300
        // Predicated region
        $region45: #{sr_model_forward.7} parent=43 // pred_check
          %p302 = pneg %p65
        $region46: #{sr_model_forward.7} parent=43 // pred_check_branch
          %304 = sbr.rel (%p302) target = $region48
        $region47: #{sr_model_forward.7} parent=43 // pred_region
          %305 = dma.done %s298, 320
        $region48: #{sr_model_forward.7} parent=43 // pred_fallthru
          _
        %s306 = sand.u32 %s23, 1
        %s307 = scalar_lea.sflag [#allocation8], %s306
        %s308 = sand.u32 %s78, 1
        %s309 = scalar_lea.vmem [#allocation7], %s308
        // Predicated region
        $region49: #{sr_model_forward.7} parent=43 // pred_check
          %p310 = pneg %p91
        $region50: #{sr_model_forward.7} parent=43 // pred_check_branch
          %312 = sbr.rel (%p310) target = $region52
        $region51: #{sr_model_forward.7} parent=43 // pred_region
          %313 = dma.done %s307, 16
        $region52: #{sr_model_forward.7} parent=43 // pred_fallthru
          _
        %s314 = sand.u32 %s23, 1
        %s315 = scalar_lea.sflag [#allocation8], %s314
        %s316 = sand.u32 %s104, 1
        %s317 = smul.addr %s316, 12
        %s318 = scalar_lea.vmem [#allocation9], %s317
        // Predicated region
        $region53: #{sr_model_forward.7} parent=43 // pred_check
          %p319 = pneg %p117
        $region54: #{sr_model_forward.7} parent=43 // pred_check_branch
          %321 = sbr.rel (%p319) target = $region56
        $region55: #{sr_model_forward.7} parent=43 // pred_region
          %322 = dma.done %s315, 192
        $region56: #{sr_model_forward.7} parent=43 // pred_fallthru
          _
        %p323 = pneg %p39
        %p324 = pneg %p36
        %s325 = sand.u32 %s52, 1
        %s326 = scalar_lea.sflag [#allocation6], %s325
        %s327 = sand.u32 %s52, 1
        %s328 = smul.addr %s327, 20
        %s329 = scalar_lea.vmem [#allocation5], %s328
        %p330 = pneg %p65
        %p331 = pneg %p62
        %s332 = sand.u32 %s23, 1
        %s333 = scalar_lea.sflag [#allocation8], %s332
        %s334 = sand.u32 %s78, 1
        %s335 = scalar_lea.vmem [#allocation7], %s334
        %p336 = pneg %p91
        %p337 = pneg %p88
        %s338 = sand.u32 %s23, 1
        %s339 = scalar_lea.sflag [#allocation8], %s338
        %s340 = sand.u32 %s104, 1
        %s341 = smul.addr %s340, 12
        %s342 = scalar_lea.vmem [#allocation9], %s341
        %p343 = pneg %p117
        %p344 = pneg %p114
        %p345 = scmp.lt.s32.totalorder %s23, 1
        %s346 = scalar_select %p345, %s23, 1
        %s347 = smul.addr %s346, 2
        %s348 = scalar_lea.vmem %s4, %s347
        %p349 = pneg %p143
        %p350 = pneg %p140
        %p351 = scmp.lt.s32.totalorder %s23, 1
        %s352 = scalar_select %p351, %s23, 1
        %s353 = smul.addr %s352, 2
        %s354 = scalar_lea.vmem %s5, %s353
        %p355 = pneg %p169
        %p356 = pneg %p166
        %p357 = pneg %p195
        %p358 = pneg %p192
        %p359 = scmp.lt.s32.totalorder %s23, 1
        %s360 = scalar_select %p359, %s23, 1
        %s361 = smul.addr %s360, 8
        %s362 = smul.addr %s361, 2
        %s363 = scalar_lea.vmem %s6, %s362
        %p364 = scmp.lt.s32.totalorder %s23, 1
        %s365 = scalar_select %p364, %s23, 1
        %s366 = smul.addr %s365, 2
        %s367 = scalar_lea.vmem %s4, %s366
        %p368 = scmp.lt.s32.totalorder %s23, 1
        %s369 = scalar_select %p368, %s23, 1
        %s370 = smul.addr %s369, 2
        %s371 = scalar_lea.vmem %s5, %s370
        %p372 = scmp.lt.s32.totalorder %s23, 1
        %s373 = scalar_select %p372, %s23, 1
        %s374 = smul.addr %s373, 8
        %s375 = smul.addr %s374, 2
        %s376 = scalar_lea.vmem %s6, %s375
        %v378 = vld [vmem:[%s301] sm:$0xf]
        %v379 = vld [vmem:[%s301 + $0x4] sm:$0xf]
        %v380 = vld [vmem:[%s301 + $0x8] sm:$0xf]
        %v381 = vld [vmem:[%s301 + $0xc] sm:$0xf]
        %v382 = vld [vmem:[%s301 + $0x10] sm:$0xf]
        %v383 = vld [vmem:[%s309] sm:$0x1]
        loop: start=0, step=1, limit=8
        $region57: #{sr_model_forward.7} parent=43 // loop_pre_header
          _
        $region58: #{sr_model_forward.7} parent=43 // loop_header
          %s385 = sphi 0, %s389
          %p386 = scmp.ge.s32.totalorder %s385, 8
        $region59: #{sr_model_forward.7} parent=43 // loop_header_branch
          %388 = sbr.rel (%p386) target = $region63
        $region60: #{sr_model_forward.7} parent=43 // loop_body
          %s390 = smul.u32 %s385, 2
          %s391 = scalar_lea.vmem %s0, %s390
          %v392 = vld [vmem:[%s391] sm:$0x3]
          %v393 = vpack.c.bf16 %v392, %v392
          %v395 = vlaneseq
          %v396 = vshrl.u32 %v395, 7
          %v397 = vsub.s32 0, %v396
          %v398 = vrot.slane %v383, %v397
          %v405 = vunpack.c.l.b16 %v378
          %v406 = vunpack.c.l.b16 %v379
          %v407 = vunpack.c.l.b16 %v380
          %v408 = vunpack.c.l.b16 %v381
          %v409 = vunpack.c.l.b16 %v382
          %v410 = vpack.c.b16 %v406, %v405
          %v411 = vpack.c.b16 %v408, %v407
          %v412 = vpack.c.b16 %v409, %v409
          %vm415 = vcmask 326656
          %v417 = vsel %vm415, %v393, 0
          %vm419 = vcmask 1043456
          %v421 = vsel %vm419, %v412, 0
          %423 = vmatprep.subr.bf16.mxu0 0
          %424 = vmatpush1.bf16.msra.mxu0 0
          %425 = vmatprep.subr.bf16.mxu0 0
          %426 = vmatpush1.bf16.msra.mxu0 0
          %427 = vmatprep.subr.bf16.mxu0 0
          %428 = vmatpush1.bf16.msra.mxu0 0
          %429 = vmatprep.subr.bf16.mxu0 0
          %430 = vmatpush1.bf16.msra.mxu0 0
          %431 = vmatprep.subr.bf16.mxu0 0
          %432 = vmatpush1.bf16.msra.mxu0 0
          %433 = vmatprep.subr.bf16.mxu0 0
          %434 = vmatpush1.bf16.msra.mxu0 %v421
          %435 = vmatprep.subr.bf16.mxu0 0
          %436 = vmatpush1.bf16.msra.mxu0 %v411
          %437 = vmatprep.subr.bf16.mxu0 0
          %438 = vmatpush1.bf16.msra.mxu0 %v410
          %439 = vmatprep.subr.bf16.mxu0 0
          %440 = vmatpush2.bf16.msra.mxu0 0
          %441 = vmatprep.subr.bf16.mxu0 0
          %442 = vmatpush2.bf16.msra.mxu0 0
          %443 = vmatprep.subr.bf16.mxu0 0
          %444 = vmatpush2.bf16.msra.mxu0 0
          %445 = vmatprep.subr.bf16.mxu0 0
          %446 = vmatpush2.bf16.msra.mxu0 0
          %447 = vmatprep.subr.bf16.mxu0 0
          %448 = vmatpush2.bf16.msra.mxu0 0
          %449 = vmatprep.subr.bf16.mxu0 0
          %450 = vmatpush2.bf16.msra.mxu0 0
          %451 = vmatprep.subr.bf16.mxu0 0
          %452 = vmatpush2.bf16.msra.mxu0 0
          %453 = vmatprep.subr.bf16.mxu0 0
          %454 = vmatpush2.bf16.msra.mxu0 0
          %455 = vmatprep.mubr.bf16.mxu0 0
          %456 = vmatmul.mubr.bf16.gmra.mxu0 %v417
          %v457 = vpop.f32.mrf.mxu0
          %v458 = vadd.f32 %v398, %v457
          %v459 = vpop.f32.mrf.mxu0
          %v460 = vpop.f32.mrf.mxu0
          %v461 = vpop.f32.mrf.mxu0
          %462 = vdwg.mxu0
          %s463 = scalar_lea.vmem [#allocation2], %s390
          %vm464 = vcmask 779264
          %465 = vst.msk [vmem:[%s463] sm:$0x3] %vm464, %v458
        $region61: #{sr_model_forward.7} parent=43 // loop_footer
          %s389 = sadd.s32 1, %s385
        $region62: #{sr_model_forward.7} parent=43 // loop_footer_branch
          %384 = sbr.rel target = $region58
        $region63: #{sr_model_forward.7} parent=43 // loop_exit
          _
        %v466 = vld [vmem:[%s318] sm:$0xf]
        %v467 = vld [vmem:[%s318 + $0x4] sm:$0xf]
        %v468 = vld [vmem:[%s318 + $0x8] sm:$0xf]
        %v469 = vld [vmem:[%s367] sm:$0x3]
        %vm470 = vcmask 189440
        %471 = vst.msk [vmem:[#allocation3] sm:$0x3] %vm470, %v469
        %v472 = vld [vmem:[%s371] sm:$0x3]
        %473 = vst.msk [vmem:[#allocation4] sm:$0x3] %vm470, %v472
        loop: start=0, step=1, limit=8
        $region64: #{sr_model_forward.7} parent=43 // loop_pre_header
          _
        $region65: #{sr_model_forward.7} parent=43 // loop_header
          %s475 = sphi 0, %s479
          %p476 = scmp.ge.s32.totalorder %s475, 8
        $region66: #{sr_model_forward.7} parent=43 // loop_header_branch
          %478 = sbr.rel (%p476) target = $region70
        $region67: #{sr_model_forward.7} parent=43 // loop_body
          %p480 = scmp.eq.s32.totalorder %s23, 0
          %s481 = ssub.s32 7, %s475
          %s482 = scalar_select %p480, %s475, %s481
          %s483 = smul.u32 %s482, 2
          %s484 = scalar_lea.vmem [#allocation2], %s483
          %v485 = vld [vmem:[%s484] sm:$0x3]
          %v486 = vld [vmem:[#allocation3] sm:$0x3]
          %v487 = vpack.c.bf16 %v486, %v486
          %v491 = vunpack.c.l.b16 %v466
          %v492 = vunpack.c.l.b16 %v467
          %v493 = vunpack.c.l.b16 %v468
          %v494 = vpack.c.b16 %v492, %v491
          %v495 = vpack.c.b16 %v493, %v493
          %vm497 = vcmask 195584
          %v499 = vsel %vm497, %v487, 0
          %vm501 = vcmask 1043456
          %v503 = vsel %vm501, %v495, 0
          %505 = vmatprep.subr.bf16.mxu0 0
          %506 = vmatpush1.bf16.msra.mxu0 0
          %507 = vmatprep.subr.bf16.mxu0 0
          %508 = vmatpush1.bf16.msra.mxu0 0
          %509 = vmatprep.subr.bf16.mxu0 0
          %510 = vmatpush1.bf16.msra.mxu0 0
          %511 = vmatprep.subr.bf16.mxu0 0
          %512 = vmatpush1.bf16.msra.mxu0 0
          %513 = vmatprep.subr.bf16.mxu0 0
          %514 = vmatpush1.bf16.msra.mxu0 0
          %515 = vmatprep.subr.bf16.mxu0 0
          %516 = vmatpush1.bf16.msra.mxu0 0
          %517 = vmatprep.subr.bf16.mxu0 0
          %518 = vmatpush1.bf16.msra.mxu0 %v503
          %519 = vmatprep.subr.bf16.mxu0 0
          %520 = vmatpush1.bf16.msra.mxu0 %v494
          %521 = vmatprep.subr.bf16.mxu0 0
          %522 = vmatpush2.bf16.msra.mxu0 0
          %523 = vmatprep.subr.bf16.mxu0 0
          %524 = vmatpush2.bf16.msra.mxu0 0
          %525 = vmatprep.subr.bf16.mxu0 0
          %526 = vmatpush2.bf16.msra.mxu0 0
          %527 = vmatprep.subr.bf16.mxu0 0
          %528 = vmatpush2.bf16.msra.mxu0 0
          %529 = vmatprep.subr.bf16.mxu0 0
          %530 = vmatpush2.bf16.msra.mxu0 0
          %531 = vmatprep.subr.bf16.mxu0 0
          %532 = vmatpush2.bf16.msra.mxu0 0
          %533 = vmatprep.subr.bf16.mxu0 0
          %534 = vmatpush2.bf16.msra.mxu0 0
          %535 = vmatprep.subr.bf16.mxu0 0
          %536 = vmatpush2.bf16.msra.mxu0 0
          %537 = vmatprep.mubr.bf16.mxu0 0
          %538 = vmatmul.mubr.bf16.gmra.mxu0 %v499
          %v539 = vpop.f32.mrf.mxu0
          %v540 = vadd.f32 0.0, %v539
          %v541 = vpop.f32.mrf.mxu0
          %v542 = vpop.f32.mrf.mxu0
          %v543 = vpop.f32.mrf.mxu0
          %544 = vdwg.mxu0
          %v545 = vadd.f32 %v485, %v540
          %v546 = vxor.u32 %v545, 2147483648
          %v547 = vmul.f32 %v546, 1.442695
          %v548 = vpow.pop %v547
          %v549 = vadd.f32 %v548, 1.0
          %v550 = vrcp.pop %v549
          %v551 = vmul.f32 1.0, %v550
          %v552 = vtanh.pop %v545
          %v553 = vld [vmem:[#allocation4] sm:$0x3]
          %555 = vrot.lane.b32.xlu0 %v553, 24
          %v556 = vpop.permute.xlu0 %555
          %v558 = vmul.f32 %v551, %v556
          %560 = vrot.lane.b32.xlu0 %v552, 80
          %v561 = vpop.permute.xlu0 %560
          %v563 = vmul.f32 %v551, %v561
          %565 = vrot.lane.b32.xlu0 %v563, 24
          %v566 = vpop.permute.xlu0 %565
          %v568 = vadd.f32 %v558, %v566
          %v569 = vtanh.pop %v568
          %571 = vrot.lane.b32.xlu0 %v569, 48
          %v572 = vpop.permute.xlu0 %571
          %v574 = vmul.f32 %v551, %v572
          %576 = vrot.lane.b32.xlu0 %v568, 104
          %v577 = vpop.permute.xlu0 %576
          %579 = vst.msk [vmem:[#allocation4] sm:$0x3] %vm470, %v577
          %581 = vrot.lane.b32.xlu0 %v574, 56
          %v582 = vpop.permute.xlu0 %581
          %584 = vst.msk [vmem:[#allocation3] sm:$0x3] %vm470, %v582
          %s585 = scalar_lea.vmem %s376, %s483
          %586 = vst.msk [vmem:[%s585] sm:$0x3] %vm470, %v582
        $region68: #{sr_model_forward.7} parent=43 // loop_footer
          %s479 = sadd.s32 1, %s475
        $region69: #{sr_model_forward.7} parent=43 // loop_footer_branch
          %474 = sbr.rel target = $region65
        $region70: #{sr_model_forward.7} parent=43 // loop_exit
          _
        %p587 = scmp.lt.s32.totalorder %s23, 1
        %s588 = scalar_select %p587, %s23, 1
        %s589 = smul.addr %s588, 8
        %s590 = smul.addr %s589, 2
        %s591 = scalar_lea.vmem %s6, %s590
        // Predicated region
        $region71: #{sr_model_forward.7} parent=43 // pred_check
          %p592 = pneg %p192
        $region72: #{sr_model_forward.7} parent=43 // pred_check_branch
          %594 = sbr.rel (%p592) target = $region74
        $region73: #{sr_model_forward.7} parent=43 // pred_region
          _
        $region74: #{sr_model_forward.7} parent=43 // pred_fallthru
          _
      $region44: #{sr_model_forward.7} parent=5 // pred_fallthru
        _
      %p595 = scmp.le.s32.totalorder 2, %s18
      // Predicated region
      $region75: #{sr_model_forward.7} parent=5 // pred_check
        %p596 = pneg %p595
      $region76: #{sr_model_forward.7} parent=5 // pred_check_branch
        %598 = sbr.rel (%p596) target = $region78
      $region77: #{sr_model_forward.7} parent=5 // pred_region
        %s599 = ssub.s32 %s18, 2
        // Predicated region
        $region79: #{sr_model_forward.7} parent=77 // pred_check
          %p600 = pneg %p198
        $region80: #{sr_model_forward.7} parent=77 // pred_check_branch
          %602 = sbr.rel (%p600) target = $region82
        $region81: #{sr_model_forward.7} parent=77 // pred_region
          %p603 = scmp.lt.s32.totalorder %s24, 1
          %s604 = scalar_select %p603, %s24, 1
          %s605 = smul.addr %s604, 8
          %s606 = smul.addr %s605, 2
          %s607 = scalar_lea.vmem %s6, %s606
        $region82: #{sr_model_forward.7} parent=77 // pred_fallthru
          _
      $region78: #{sr_model_forward.7} parent=5 // pred_fallthru
        _
    $region6: #{sr_model_forward.7} parent=1 // loop_footer
      %s22 = sadd.s32 1, %s18
    $region7: #{sr_model_forward.7} parent=1 // loop_footer_branch
      %17 = sbr.rel target = $region3
    $region8: #{sr_model_forward.7} parent=1 // loop_exit
      _
    %608 = vsyncpa [#allocation6], 1
    %s609 = scalar_lea.sflag [#allocation6], 1
    %610 = vsyncpa %s609, 1
    %611 = vsyncpa [#allocation8], 1
    %s612 = scalar_lea.sflag [#allocation8], 1
    %613 = vsyncpa %s612, 1

// kernel: sr_model_forward.11
$region0: #{sr_model_forward.11}
  #allocation0 [shape = 'u32[]', space=smem, size = 0x4, offset = 0x4, fixed_abs, tag = 'smem constant byte address 0x4 - core index']
  #allocation1 [shape = 'u32[144,128]{1,0:T(1,128)}', space=vmem, size = 0x12000, scoped, tag = 'internal scratch']
  #allocation2 [shape = 'f32[8,2,64]{2,1,0:T(2,128)}', space=vmem, size = 0x2000, scoped, tag = 'scratch operand']
  #allocation3 [shape = 'f32[2,16]{1,0:T(2,128)}', space=vmem, size = 0x400, scoped, tag = 'scratch operand']
  #allocation4 [shape = 'f32[2,16]{1,0:T(2,128)}', space=vmem, size = 0x400, scoped, tag = 'scratch operand']
  %s0 = inlined_call_operand.vmem [shape: f32[8,2,32], index: 0, kind: input, shape index: {}]
  %s1 = inlined_call_operand.vmem [shape: bf16[2,32,64], index: 1, kind: input, shape index: {}]
  %s2 = inlined_call_operand.vmem [shape: f32[2,1,64], index: 2, kind: input, shape index: {}]
  %s3 = inlined_call_operand.vmem [shape: bf16[2,16,64], index: 3, kind: input, shape index: {}]
  %s4 = inlined_call_operand.vmem [shape: f32[2,2,16], index: 4, kind: input, shape index: {}]
  %s5 = inlined_call_operand.vmem [shape: f32[2,2,16], index: 5, kind: input, shape index: {}]
  %s6 = inlined_call_operand.vmem [shape: f32[2,8,2,16], index: 6, kind: output, shape index: {}]
  %s7 = sld [smem:[#allocation0]]
  $region71: #{sr_model_forward.11} parent=0
    _
  %s9 = ssub.s32 1, %s7
  %s10 = scalar_select 0, %s9, %s7
  loop: start=0, step=1, limit=4
  $region2: #{sr_model_forward.11} parent=0 // loop_pre_header
    _
  $region3: #{sr_model_forward.11} parent=0 // loop_header
    %s12 = sphi 0, %s16
    %p13 = scmp.ge.s32.totalorder %s12, 4
    %s20 = sphi 0, %s20
    %s22 = sphi 0, %s20
    %s23 = sphi 0, %s22
    %s37 = sphi 0, %s23
    %s43 = sphi 0, %s45
    %s46 = sphi 0, %s43
    %s47 = sphi 0, %s46
    %s63 = sphi 0, %s47
    %s69 = sphi 0, %s71
    %s72 = sphi 0, %s69
    %s73 = sphi 0, %s72
    %s89 = sphi 0, %s73
    %s95 = sphi 0, %s97
    %s98 = sphi 0, %s95
    %s99 = sphi 0, %s98
    %s115 = sphi 0, %s99
    %s121 = sphi 0, %s123
    %s124 = sphi 0, %s121
    %s125 = sphi 0, %s124
    %s141 = sphi 0, %s125
    %s147 = sphi 0, %s149
    %s150 = sphi 0, %s147
    %s151 = sphi 0, %s150
    %s167 = sphi 0, %s151
    %s173 = sphi 0, %s175
    %s176 = sphi 0, %s173
    %s177 = sphi 0, %s176
    %s193 = sphi 0, %s177
  $region4: #{sr_model_forward.11} parent=0 // loop_header_branch
    %15 = sbr.rel (%p13) target = $region8
  $region5: #{sr_model_forward.11} parent=0 // loop_body
    %s17 = ssub.s32 %s12, 1
    %s18 = ssub.s32 %s12, 2
    %s19 = sadd.s32 %s12, 1
    %s21 = sadd.s32 %s20, 1
    %p24 = scmp.eq.s32.totalorder %s12, 1
    %p25 = scmp.ne.s32.totalorder %s20, %s22
    %p26 = scmp.eq.s32.totalorder %s12, 0
    %p27 = por %p25, %p26
    %p28 = scmp.ne.s32.totalorder %s20, %s22
    %p29 = scmp.eq.s32.totalorder %s17, 1
    %p30 = por %p28, %p29
    %p31 = scmp.ne.s32.totalorder %s22, %s23
    %p32 = scmp.eq.s32.totalorder %s17, 0
    %p33 = por %p31, %p32
    %p34 = scmp.ne.s32.totalorder %s22, %s23
    %p35 = scmp.eq.s32.totalorder %s18, 1
    %p36 = por %p34, %p35
    %p38 = scmp.ne.s32.totalorder %s23, %s37
    %p39 = scmp.eq.s32.totalorder %s18, 0
    %p40 = por %p38, %p39
    %s41 = ssub.s32 %s12, %s19
    %p42 = scmp.eq.s32.totalorder %s41, 0
    %s44 = sadd.s32 %s43, 1
    %s45 = scalar_select %p42, %s43, %s44
    %p48 = pneg %p42
    %p49 = scmp.eq.s32.totalorder %s12, 1
    %p50 = por %p48, %p49
    %p51 = scmp.ne.s32.totalorder %s43, %s46
    %p52 = scmp.eq.s32.totalorder %s12, 0
    %p53 = por %p51, %p52
    %p54 = scmp.ne.s32.totalorder %s43, %s46
    %p55 = scmp.eq.s32.totalorder %s17, 1
    %p56 = por %p54, %p55
    %p57 = scmp.ne.s32.totalorder %s46, %s47
    %p58 = scmp.eq.s32.totalorder %s17, 0
    %p59 = por %p57, %p58
    %p60 = scmp.ne.s32.totalorder %s46, %s47
    %p61 = scmp.eq.s32.totalorder %s18, 1
    %p62 = por %p60, %p61
    %p64 = scmp.ne.s32.totalorder %s47, %s63
    %p65 = scmp.eq.s32.totalorder %s18, 0
    %p66 = por %p64, %p65
    %s67 = ssub.s32 %s12, %s19
    %p68 = scmp.eq.s32.totalorder %s67, 0
    %s70 = sadd.s32 %s69, 1
    %s71 = scalar_select %p68, %s69, %s70
    %p74 = pneg %p68
    %p75 = scmp.eq.s32.totalorder %s12, 1
    %p76 = por %p74, %p75
    %p77 = scmp.ne.s32.totalorder %s69, %s72
    %p78 = scmp.eq.s32.totalorder %s12, 0
    %p79 = por %p77, %p78
    %p80 = scmp.ne.s32.totalorder %s69, %s72
    %p81 = scmp.eq.s32.totalorder %s17, 1
    %p82 = por %p80, %p81
    %p83 = scmp.ne.s32.totalorder %s72, %s73
    %p84 = scmp.eq.s32.totalorder %s17, 0
    %p85 = por %p83, %p84
    %p86 = scmp.ne.s32.totalorder %s72, %s73
    %p87 = scmp.eq.s32.totalorder %s18, 1
    %p88 = por %p86, %p87
    %p90 = scmp.ne.s32.totalorder %s73, %s89
    %p91 = scmp.eq.s32.totalorder %s18, 0
    %p92 = por %p90, %p91
    %s93 = ssub.s32 %s12, %s19
    %p94 = scmp.eq.s32.totalorder %s93, 0
    %s96 = sadd.s32 %s95, 1
    %s97 = scalar_select %p94, %s95, %s96
    %p100 = pneg %p94
    %p101 = scmp.eq.s32.totalorder %s12, 1
    %p102 = por %p100, %p101
    %p103 = scmp.ne.s32.totalorder %s95, %s98
    %p104 = scmp.eq.s32.totalorder %s12, 0
    %p105 = por %p103, %p104
    %p106 = scmp.ne.s32.totalorder %s95, %s98
    %p107 = scmp.eq.s32.totalorder %s17, 1
    %p108 = por %p106, %p107
    %p109 = scmp.ne.s32.totalorder %s98, %s99
    %p110 = scmp.eq.s32.totalorder %s17, 0
    %p111 = por %p109, %p110
    %p112 = scmp.ne.s32.totalorder %s98, %s99
    %p113 = scmp.eq.s32.totalorder %s18, 1
    %p114 = por %p112, %p113
    %p116 = scmp.ne.s32.totalorder %s99, %s115
    %p117 = scmp.eq.s32.totalorder %s18, 0
    %p118 = por %p116, %p117
    %s119 = ssub.s32 %s12, %s19
    %p120 = scmp.eq.s32.totalorder %s119, 0
    %s122 = sadd.s32 %s121, 1
    %s123 = scalar_select %p120, %s121, %s122
    %p126 = pneg %p120
    %p127 = scmp.eq.s32.totalorder %s12, 1
    %p128 = por %p126, %p127
    %p129 = scmp.ne.s32.totalorder %s121, %s124
    %p130 = scmp.eq.s32.totalorder %s12, 0
    %p131 = por %p129, %p130
    %p132 = scmp.ne.s32.totalorder %s121, %s124
    %p133 = scmp.eq.s32.totalorder %s17, 1
    %p134 = por %p132, %p133
    %p135 = scmp.ne.s32.totalorder %s124, %s125
    %p136 = scmp.eq.s32.totalorder %s17, 0
    %p137 = por %p135, %p136
    %p138 = scmp.ne.s32.totalorder %s124, %s125
    %p139 = scmp.eq.s32.totalorder %s18, 1
    %p140 = por %p138, %p139
    %p142 = scmp.ne.s32.totalorder %s125, %s141
    %p143 = scmp.eq.s32.totalorder %s18, 0
    %p144 = por %p142, %p143
    %s145 = ssub.s32 %s12, %s19
    %p146 = scmp.eq.s32.totalorder %s145, 0
    %s148 = sadd.s32 %s147, 1
    %s149 = scalar_select %p146, %s147, %s148
    %p152 = pneg %p146
    %p153 = scmp.eq.s32.totalorder %s12, 1
    %p154 = por %p152, %p153
    %p155 = scmp.ne.s32.totalorder %s147, %s150
    %p156 = scmp.eq.s32.totalorder %s12, 0
    %p157 = por %p155, %p156
    %p158 = scmp.ne.s32.totalorder %s147, %s150
    %p159 = scmp.eq.s32.totalorder %s17, 1
    %p160 = por %p158, %p159
    %p161 = scmp.ne.s32.totalorder %s150, %s151
    %p162 = scmp.eq.s32.totalorder %s17, 0
    %p163 = por %p161, %p162
    %p164 = scmp.ne.s32.totalorder %s150, %s151
    %p165 = scmp.eq.s32.totalorder %s18, 1
    %p166 = por %p164, %p165
    %p168 = scmp.ne.s32.totalorder %s151, %s167
    %p169 = scmp.eq.s32.totalorder %s18, 0
    %p170 = por %p168, %p169
    %s171 = ssub.s32 %s12, %s19
    %p172 = scmp.eq.s32.totalorder %s171, 0
    %s174 = sadd.s32 %s173, 1
    %s175 = scalar_select %p172, %s173, %s174
    %p178 = pneg %p172
    %p179 = scmp.eq.s32.totalorder %s12, 1
    %p180 = por %p178, %p179
    %p181 = scmp.ne.s32.totalorder %s173, %s176
    %p182 = scmp.eq.s32.totalorder %s12, 0
    %p183 = por %p181, %p182
    %p184 = scmp.ne.s32.totalorder %s173, %s176
    %p185 = scmp.eq.s32.totalorder %s17, 1
    %p186 = por %p184, %p185
    %p187 = scmp.ne.s32.totalorder %s176, %s177
    %p188 = scmp.eq.s32.totalorder %s17, 0
    %p189 = por %p187, %p188
    %p190 = scmp.ne.s32.totalorder %s176, %s177
    %p191 = scmp.eq.s32.totalorder %s18, 1
    %p192 = por %p190, %p191
    %p194 = scmp.ne.s32.totalorder %s177, %s193
    %p195 = scmp.eq.s32.totalorder %s18, 0
    %p196 = por %p194, %p195
    %p197 = scmp.le.s32.totalorder 1, %s12
    %p198 = scmp.lt.s32.totalorder %s12, 3
    %p199 = pnand %p197, %p198
    %p200 = pneg %p199
    // Predicated region
    $region9: #{sr_model_forward.11} parent=5 // pred_check
      _
    $region10: #{sr_model_forward.11} parent=5 // pred_check_branch
      %202 = sbr.rel (%p199) target = $region12
    $region11: #{sr_model_forward.11} parent=5 // pred_region
      %s203 = ssub.s32 %s12, 1
      // Predicated region
      $region13: #{sr_model_forward.11} parent=11 // pred_check
        %p204 = pneg %p33
      $region14: #{sr_model_forward.11} parent=11 // pred_check_branch
        %206 = sbr.rel (%p204) target = $region16
      $region15: #{sr_model_forward.11} parent=11 // pred_region
        _
      $region16: #{sr_model_forward.11} parent=11 // pred_fallthru
        _
    $region12: #{sr_model_forward.11} parent=5 // pred_fallthru
      _
    %p207 = scmp.lt.s32.totalorder %s12, 2
    // Predicated region
    $region17: #{sr_model_forward.11} parent=5 // pred_check
      %p208 = pneg %p207
    $region18: #{sr_model_forward.11} parent=5 // pred_check_branch
      %210 = sbr.rel (%p208) target = $region20
    $region19: #{sr_model_forward.11} parent=5 // pred_region
      // Predicated region
      $region21: #{sr_model_forward.11} parent=19 // pred_check
        %p211 = pneg %p53
      $region22: #{sr_model_forward.11} parent=19 // pred_check_branch
        %213 = sbr.rel (%p211) target = $region24
      $region23: #{sr_model_forward.11} parent=19 // pred_region
        %p214 = scmp.lt.s32.totalorder %s12, 1
        %s215 = scalar_select %p214, %s12, 1
        %s216 = smul.addr %s215, 4
        %s217 = smul.addr %s216, 4
        %s218 = scalar_lea.vmem %s1, %s217
      $region24: #{sr_model_forward.11} parent=19 // pred_fallthru
        _
      // Predicated region
      $region25: #{sr_model_forward.11} parent=19 // pred_check
        %p219 = pneg %p79
      $region26: #{sr_model_forward.11} parent=19 // pred_check_branch
        %221 = sbr.rel (%p219) target = $region28
      $region27: #{sr_model_forward.11} parent=19 // pred_region
        %p222 = scmp.lt.s32.totalorder %s12, 1
        %s223 = scalar_select %p222, %s12, 1
        %s224 = scalar_lea.vmem %s2, %s223
      $region28: #{sr_model_forward.11} parent=19 // pred_fallthru
        _
      // Predicated region
      $region29: #{sr_model_forward.11} parent=19 // pred_check
        %p225 = pneg %p105
      $region30: #{sr_model_forward.11} parent=19 // pred_check_branch
        %227 = sbr.rel (%p225) target = $region32
      $region31: #{sr_model_forward.11} parent=19 // pred_region
        %p228 = scmp.lt.s32.totalorder %s12, 1
        %s229 = scalar_select %p228, %s12, 1
        %s230 = smul.addr %s229, 2
        %s231 = smul.addr %s230, 4
        %s232 = scalar_lea.vmem %s3, %s231
      $region32: #{sr_model_forward.11} parent=19 // pred_fallthru
        _
      // Predicated region
      $region33: #{sr_model_forward.11} parent=19 // pred_check
        %p233 = pneg %p131
      $region34: #{sr_model_forward.11} parent=19 // pred_check_branch
        %235 = sbr.rel (%p233) target = $region36
      $region35: #{sr_model_forward.11} parent=19 // pred_region
        %p236 = scmp.lt.s32.totalorder %s12, 1
        %s237 = scalar_select %p236, %s12, 1
        %s238 = smul.addr %s237, 2
        %s239 = scalar_lea.vmem %s4, %s238
      $region36: #{sr_model_forward.11} parent=19 // pred_fallthru
        _
      // Predicated region
      $region37: #{sr_model_forward.11} parent=19 // pred_check
        %p240 = pneg %p157
      $region38: #{sr_model_forward.11} parent=19 // pred_check_branch
        %242 = sbr.rel (%p240) target = $region40
      $region39: #{sr_model_forward.11} parent=19 // pred_region
        %p243 = scmp.lt.s32.totalorder %s12, 1
        %s244 = scalar_select %p243, %s12, 1
        %s245 = smul.addr %s244, 2
        %s246 = scalar_lea.vmem %s5, %s245
      $region40: #{sr_model_forward.11} parent=19 // pred_fallthru
        _
    $region20: #{sr_model_forward.11} parent=5 // pred_fallthru
      _
    %p247 = scmp.le.s32.totalorder 1, %s12
    %p248 = scmp.lt.s32.totalorder %s12, 3
    %p249 = pnand %p247, %p248
    %p250 = pneg %p249
    // Predicated region
    $region41: #{sr_model_forward.11} parent=5 // pred_check
      _
    $region42: #{sr_model_forward.11} parent=5 // pred_check_branch
      %252 = sbr.rel (%p249) target = $region44
    $region43: #{sr_model_forward.11} parent=5 // pred_region
      %s253 = ssub.s32 %s12, 1
      %p254 = pneg %p33
      %p255 = pneg %p30
      %p256 = scmp.lt.s32.totalorder %s17, 1
      %s257 = scalar_select %p256, %s17, 1
      %s258 = smul.addr %s257, 4
      %s259 = smul.addr %s258, 4
      %s260 = scalar_lea.vmem %s1, %s259
      %p261 = pneg %p59
      %p262 = pneg %p56
      %p263 = scmp.lt.s32.totalorder %s17, 1
      %s264 = scalar_select %p263, %s17, 1
      %s265 = scalar_lea.vmem %s2, %s264
      %p266 = pneg %p85
      %p267 = pneg %p82
      %p268 = scmp.lt.s32.totalorder %s17, 1
      %s269 = scalar_select %p268, %s17, 1
      %s270 = smul.addr %s269, 2
      %s271 = smul.addr %s270, 4
      %s272 = scalar_lea.vmem %s3, %s271
      %p273 = pneg %p111
      %p274 = pneg %p108
      %p275 = scmp.lt.s32.totalorder %s17, 1
      %s276 = scalar_select %p275, %s17, 1
      %s277 = smul.addr %s276, 2
      %s278 = scalar_lea.vmem %s4, %s277
      %p279 = pneg %p137
      %p280 = pneg %p134
      %p281 = scmp.lt.s32.totalorder %s17, 1
      %s282 = scalar_select %p281, %s17, 1
      %s283 = smul.addr %s282, 2
      %s284 = scalar_lea.vmem %s5, %s283
      %p285 = pneg %p163
      %p286 = pneg %p160
      %p287 = pneg %p189
      %p288 = pneg %p186
      %p289 = scmp.lt.s32.totalorder %s17, 1
      %s290 = scalar_select %p289, %s17, 1
      %s291 = smul.addr %s290, 8
      %s292 = smul.addr %s291, 2
      %s293 = scalar_lea.vmem %s6, %s292
      %p294 = scmp.lt.s32.totalorder %s17, 1
      %s295 = scalar_select %p294, %s17, 1
      %s296 = smul.addr %s295, 4
      %s297 = smul.addr %s296, 4
      %s298 = scalar_lea.vmem %s1, %s297
      %p299 = scmp.lt.s32.totalorder %s17, 1
      %s300 = scalar_select %p299, %s17, 1
      %s301 = scalar_lea.vmem %s2, %s300
      %p302 = scmp.lt.s32.totalorder %s17, 1
      %s303 = scalar_select %p302, %s17, 1
      %s304 = smul.addr %s303, 2
      %s305 = smul.addr %s304, 4
      %s306 = scalar_lea.vmem %s3, %s305
      %p307 = scmp.lt.s32.totalorder %s17, 1
      %s308 = scalar_select %p307, %s17, 1
      %s309 = smul.addr %s308, 2
      %s310 = scalar_lea.vmem %s4, %s309
      %p311 = scmp.lt.s32.totalorder %s17, 1
      %s312 = scalar_select %p311, %s17, 1
      %s313 = smul.addr %s312, 2
      %s314 = scalar_lea.vmem %s5, %s313
      %p315 = scmp.lt.s32.totalorder %s17, 1
      %s316 = scalar_select %p315, %s17, 1
      %s317 = smul.addr %s316, 8
      %s318 = smul.addr %s317, 2
      %s319 = scalar_lea.vmem %s6, %s318
      %v321 = vld [vmem:[%s298] sm:$0xf]
      %v322 = vld [vmem:[%s298 + $0x4] sm:$0xf]
      %v323 = vld [vmem:[%s298 + $0x8] sm:$0xf]
      %v324 = vld [vmem:[%s298 + $0xc] sm:$0xf]
      %v325 = vld [vmem:[%s301] sm:$0x1]
      loop: start=0, step=1, limit=8
      $region45: #{sr_model_forward.11} parent=43 // loop_pre_header
        _
      $region46: #{sr_model_forward.11} parent=43 // loop_header
        %s327 = sphi 0, %s331
        %p328 = scmp.ge.s32.totalorder %s327, 8
      $region47: #{sr_model_forward.11} parent=43 // loop_header_branch
        %330 = sbr.rel (%p328) target = $region51
      $region48: #{sr_model_forward.11} parent=43 // loop_body
        %s332 = smul.u32 %s327, 2
        %s333 = scalar_lea.vmem %s0, %s332
        %v334 = vld [vmem:[%s333] sm:$0x3]
        %v335 = vpack.c.bf16 %v334, %v334
        %v337 = vlaneseq
        %v338 = vshrl.u32 %v337, 7
        %v339 = vsub.s32 0, %v338
        %v340 = vrot.slane %v325, %v339
        %v346 = vunpack.c.l.b16 %v321
        %v347 = vunpack.c.l.b16 %v322
        %v348 = vunpack.c.l.b16 %v323
        %v349 = vunpack.c.l.b16 %v324
        %v350 = vpack.c.b16 %v347, %v346
        %v351 = vpack.c.b16 %v349, %v348
        %vm354 = vcmask 261120
        %v356 = vsel %vm354, %v335, 0
        %358 = vmatprep.subr.bf16.mxu0 0
        %359 = vmatpush1.bf16.msra.mxu0 0
        %360 = vmatprep.subr.bf16.mxu0 0
        %361 = vmatpush1.bf16.msra.mxu0 0
        %362 = vmatprep.subr.bf16.mxu0 0
        %363 = vmatpush1.bf16.msra.mxu0 0
        %364 = vmatprep.subr.bf16.mxu0 0
        %365 = vmatpush1.bf16.msra.mxu0 0
        %366 = vmatprep.subr.bf16.mxu0 0
        %367 = vmatpush1.bf16.msra.mxu0 0
        %368 = vmatprep.subr.bf16.mxu0 0
        %369 = vmatpush1.bf16.msra.mxu0 0
        %370 = vmatprep.subr.bf16.mxu0 0
        %371 = vmatpush1.bf16.msra.mxu0 %v351
        %372 = vmatprep.subr.bf16.mxu0 0
        %373 = vmatpush1.bf16.msra.mxu0 %v350
        %374 = vmatprep.subr.bf16.mxu0 0
        %375 = vmatpush2.bf16.msra.mxu0 0
        %376 = vmatprep.subr.bf16.mxu0 0
        %377 = vmatpush2.bf16.msra.mxu0 0
        %378 = vmatprep.subr.bf16.mxu0 0
        %379 = vmatpush2.bf16.msra.mxu0 0
        %380 = vmatprep.subr.bf16.mxu0 0
        %381 = vmatpush2.bf16.msra.mxu0 0
        %382 = vmatprep.subr.bf16.mxu0 0
        %383 = vmatpush2.bf16.msra.mxu0 0
        %384 = vmatprep.subr.bf16.mxu0 0
        %385 = vmatpush2.bf16.msra.mxu0 0
        %386 = vmatprep.subr.bf16.mxu0 0
        %387 = vmatpush2.bf16.msra.mxu0 0
        %388 = vmatprep.subr.bf16.mxu0 0
        %389 = vmatpush2.bf16.msra.mxu0 0
        %390 = vmatprep.mubr.bf16.mxu0 0
        %391 = vmatmul.mubr.bf16.gmra.mxu0 %v356
        %v392 = vpop.f32.mrf.mxu0
        %v393 = vadd.f32 %v340, %v392
        %v394 = vpop.f32.mrf.mxu0
        %v395 = vpop.f32.mrf.mxu0
        %v396 = vpop.f32.mrf.mxu0
        %397 = vdwg.mxu0
        %s398 = scalar_lea.vmem [#allocation2], %s332
        %vm399 = vcmask 517120
        %400 = vst.msk [vmem:[%s398] sm:$0x3] %vm399, %v393
      $region49: #{sr_model_forward.11} parent=43 // loop_footer
        %s331 = sadd.s32 1, %s327
      $region50: #{sr_model_forward.11} parent=43 // loop_footer_branch
        %326 = sbr.rel target = $region46
      $region51: #{sr_model_forward.11} parent=43 // loop_exit
        _
      %v401 = vld [vmem:[%s306] sm:$0xf]
      %v402 = vld [vmem:[%s306 + $0x4] sm:$0xf]
      %v403 = vld [vmem:[%s310] sm:$0x3]
      %vm404 = vcmask 123904
      %405 = vst.msk [vmem:[#allocation3] sm:$0x3] %vm404, %v403
      %v406 = vld [vmem:[%s314] sm:$0x3]
      %407 = vst.msk [vmem:[#allocation4] sm:$0x3] %vm404, %v406
      loop: start=0, step=1, limit=8
      $region52: #{sr_model_forward.11} parent=43 // loop_pre_header
        _
      $region53: #{sr_model_forward.11} parent=43 // loop_header
        %s409 = sphi 0, %s413
        %p410 = scmp.ge.s32.totalorder %s409, 8
      $region54: #{sr_model_forward.11} parent=43 // loop_header_branch
        %412 = sbr.rel (%p410) target = $region58
      $region55: #{sr_model_forward.11} parent=43 // loop_body
        %p414 = scmp.eq.s32.totalorder %s17, 0
        %s415 = ssub.s32 7, %s409
        %s416 = scalar_select %p414, %s409, %s415
        %s417 = smul.u32 %s416, 2
        %s418 = scalar_lea.vmem [#allocation2], %s417
        %v419 = vld [vmem:[%s418] sm:$0x3]
        %v420 = vld [vmem:[#allocation3] sm:$0x3]
        %v421 = vpack.c.bf16 %v420, %v420
        %v424 = vunpack.c.l.b16 %v401
        %v425 = vunpack.c.l.b16 %v402
        %v426 = vpack.c.b16 %v425, %v424
        %vm428 = vcmask 130048
        %v430 = vsel %vm428, %v421, 0
        %432 = vmatprep.subr.bf16.mxu0 0
        %433 = vmatpush1.bf16.msra.mxu0 0
        %434 = vmatprep.subr.bf16.mxu0 0
        %435 = vmatpush1.bf16.msra.mxu0 0
        %436 = vmatprep.subr.bf16.mxu0 0
        %437 = vmatpush1.bf16.msra.mxu0 0
        %438 = vmatprep.subr.bf16.mxu0 0
        %439 = vmatpush1.bf16.msra.mxu0 0
        %440 = vmatprep.subr.bf16.mxu0 0
        %441 = vmatpush1.bf16.msra.mxu0 0
        %442 = vmatprep.subr.bf16.mxu0 0
        %443 = vmatpush1.bf16.msra.mxu0 0
        %444 = vmatprep.subr.bf16.mxu0 0
        %445 = vmatpush1.bf16.msra.mxu0 0
        %446 = vmatprep.subr.bf16.mxu0 0
        %447 = vmatpush1.bf16.msra.mxu0 %v426
        %448 = vmatprep.subr.bf16.mxu0 0
        %449 = vmatpush2.bf16.msra.mxu0 0
        %450 = vmatprep.subr.bf16.mxu0 0
        %451 = vmatpush2.bf16.msra.mxu0 0
        %452 = vmatprep.subr.bf16.mxu0 0
        %453 = vmatpush2.bf16.msra.mxu0 0
        %454 = vmatprep.subr.bf16.mxu0 0
        %455 = vmatpush2.bf16.msra.mxu0 0
        %456 = vmatprep.subr.bf16.mxu0 0
        %457 = vmatpush2.bf16.msra.mxu0 0
        %458 = vmatprep.subr.bf16.mxu0 0
        %459 = vmatpush2.bf16.msra.mxu0 0
        %460 = vmatprep.subr.bf16.mxu0 0
        %461 = vmatpush2.bf16.msra.mxu0 0
        %462 = vmatprep.subr.bf16.mxu0 0
        %463 = vmatpush2.bf16.msra.mxu0 0
        %464 = vmatprep.mubr.bf16.mxu0 0
        %465 = vmatmul.mubr.bf16.gmra.mxu0 %v430
        %v466 = vpop.f32.mrf.mxu0
        %v467 = vadd.f32 0.0, %v466
        %v468 = vpop.f32.mrf.mxu0
        %v469 = vpop.f32.mrf.mxu0
        %v470 = vpop.f32.mrf.mxu0
        %471 = vdwg.mxu0
        %v472 = vadd.f32 %v419, %v467
        %v473 = vxor.u32 %v472, 2147483648
        %v474 = vmul.f32 %v473, 1.442695
        %v475 = vpow.pop %v474
        %v476 = vadd.f32 %v475, 1.0
        %v477 = vrcp.pop %v476
        %v478 = vmul.f32 1.0, %v477
        %v479 = vtanh.pop %v472
        %v480 = vld [vmem:[#allocation4] sm:$0x3]
        %482 = vrot.lane.b32.xlu0 %v480, 16
        %v483 = vpop.permute.xlu0 %482
        %v485 = vmul.f32 %v478, %v483
        %487 = vrot.lane.b32.xlu0 %v479, 96
        %v488 = vpop.permute.xlu0 %487
        %v490 = vmul.f32 %v478, %v488
        %492 = vrot.lane.b32.xlu0 %v490, 16
        %v493 = vpop.permute.xlu0 %492
        %v495 = vadd.f32 %v485, %v493
        %v496 = vtanh.pop %v495
        %498 = vrot.lane.b32.xlu0 %v496, 32
        %v499 = vpop.permute.xlu0 %498
        %v501 = vmul.f32 %v478, %v499
        %503 = vrot.lane.b32.xlu0 %v495, 112
        %v504 = vpop.permute.xlu0 %503
        %506 = vst.msk [vmem:[#allocation4] sm:$0x3] %vm404, %v504
        %508 = vrot.lane.b32.xlu0 %v501, 80
        %v509 = vpop.permute.xlu0 %508
        %511 = vst.msk [vmem:[#allocation3] sm:$0x3] %vm404, %v509
        %s512 = scalar_lea.vmem %s319, %s417
        %513 = vst.msk [vmem:[%s512] sm:$0x3] %vm404, %v509
      $region56: #{sr_model_forward.11} parent=43 // loop_footer
        %s413 = sadd.s32 1, %s409
      $region57: #{sr_model_forward.11} parent=43 // loop_footer_branch
        %408 = sbr.rel target = $region53
      $region58: #{sr_model_forward.11} parent=43 // loop_exit
        _
      %p514 = scmp.lt.s32.totalorder %s17, 1
      %s515 = scalar_select %p514, %s17, 1
      %s516 = smul.addr %s515, 8
      %s517 = smul.addr %s516, 2
      %s518 = scalar_lea.vmem %s6, %s517
      // Predicated region
      $region59: #{sr_model_forward.11} parent=43 // pred_check
        %p519 = pneg %p186
      $region60: #{sr_model_forward.11} parent=43 // pred_check_branch
        %521 = sbr.rel (%p519) target = $region62
      $region61: #{sr_model_forward.11} parent=43 // pred_region
        _
      $region62: #{sr_model_forward.11} parent=43 // pred_fallthru
        _
    $region44: #{sr_model_forward.11} parent=5 // pred_fallthru
      _
    %p522 = scmp.le.s32.totalorder 2, %s12
    // Predicated region
    $region63: #{sr_model_forward.11} parent=5 // pred_check
      %p523 = pneg %p522
    $region64: #{sr_model_forward.11} parent=5 // pred_check_branch
      %525 = sbr.rel (%p523) target = $region66
    $region65: #{sr_model_forward.11} parent=5 // pred_region
      %s526 = ssub.s32 %s12, 2
      // Predicated region
      $region67: #{sr_model_forward.11} parent=65 // pred_check
        %p527 = pneg %p192
      $region68: #{sr_model_forward.11} parent=65 // pred_check_branch
        %529 = sbr.rel (%p527) target = $region70
      $region69: #{sr_model_forward.11} parent=65 // pred_region
        %p530 = scmp.lt.s32.totalorder %s18, 1
        %s531 = scalar_select %p530, %s18, 1
        %s532 = smul.addr %s531, 8
        %s533 = smul.addr %s532, 2
        %s534 = scalar_lea.vmem %s6, %s533
      $region70: #{sr_model_forward.11} parent=65 // pred_fallthru
        _
    $region66: #{sr_model_forward.11} parent=5 // pred_fallthru
      _
  $region6: #{sr_model_forward.11} parent=0 // loop_footer
    %s16 = sadd.s32 1, %s12
  $region7: #{sr_model_forward.11} parent=0 // loop_footer_branch
    %11 = sbr.rel target = $region3
  $region8: #{sr_model_forward.11} parent=0 // loop_exit
    _

// kernel: sr_model_forward.13
$region0: #{sr_model_forward.13}
  #allocation0 [shape = 'u32[]', space=smem, size = 0x4, offset = 0x4, fixed_abs, tag = 'smem constant byte address 0x4 - core index']
  #allocation1 [shape = 'u32[144,128]{1,0:T(1,128)}', space=vmem, size = 0x12000, scoped, tag = 'internal scratch']
  %s0 = inlined_call_operand.vmem [shape: f32[2,8,40], index: 0, kind: input, shape index: {}]
  %s1 = inlined_call_operand.vmem [shape: bf16[40,300], index: 1, kind: input, shape index: {}]
  %s2 = inlined_call_operand.vmem [shape: f32[1,300], index: 2, kind: input, shape index: {}]
  %s3 = inlined_call_operand.vmem [shape: bf16[300,200], index: 3, kind: input, shape index: {}]
  %s4 = inlined_call_operand.vmem [shape: f32[1,200], index: 4, kind: input, shape index: {}]
  %s5 = inlined_call_operand.vmem [shape: f32[2,8,32], index: 5, kind: input, shape index: {}]
  %s6 = inlined_call_operand.vmem [shape: bf16[32,16], index: 6, kind: input, shape index: {}]
  %s7 = inlined_call_operand.vmem [shape: f32[1,16], index: 7, kind: input, shape index: {}]
  %s8 = inlined_call_operand.vmem [shape: bf16[40,200], index: 8, kind: input, shape index: {}]
  %s9 = inlined_call_operand.hbm [shape: f32[2,8,16], index: 9, kind: output, shape index: {}]
  %s10 = sld [smem:[#allocation0]]
  $region69: #{sr_model_forward.13} parent=0
    _
  %s12 = ssub.s32 1, %s10
  %s13 = scalar_select 0, %s12, %s10
  $region1: #{sr_model_forward.13} parent=0
    #allocation2 [shape = 'u8[8192]{0}', space=vmem, size = 0x2000, scoped, tag = 'output window, operand 0']
    #allocation3 [shape = 's32[2]{0}', space=sflag, size = 0x8, scoped, tag = 'scoped memory for sr_model_forward.13']
    %14 = vsyncpa [#allocation3], 0
    %s15 = scalar_lea.sflag [#allocation3], 1
    %16 = vsyncpa %s15, 0
    loop: start=0, step=1, limit=4
    $region2: #{sr_model_forward.13} parent=1 // loop_pre_header
      _
    $region3: #{sr_model_forward.13} parent=1 // loop_header
      %s18 = sphi 0, %s22
      %p19 = scmp.ge.s32.totalorder %s18, 4
      %s28 = sphi 0, %s30
      %s31 = sphi 0, %s28
      %s32 = sphi 0, %s31
      %s48 = sphi 0, %s32
      %s52 = sphi 0, %s52
      %s54 = sphi 0, %s52
      %s55 = sphi 0, %s54
      %s69 = sphi 0, %s55
      %s73 = sphi 0, %s73
      %s75 = sphi 0, %s73
      %s76 = sphi 0, %s75
      %s90 = sphi 0, %s76
      %s94 = sphi 0, %s94
      %s96 = sphi 0, %s94
      %s97 = sphi 0, %s96
      %s111 = sphi 0, %s97
      %s115 = sphi 0, %s115
      %s117 = sphi 0, %s115
      %s118 = sphi 0, %s117
      %s132 = sphi 0, %s118
      %s138 = sphi 0, %s140
      %s141 = sphi 0, %s138
      %s142 = sphi 0, %s141
      %s158 = sphi 0, %s142
      %s162 = sphi 0, %s162
      %s164 = sphi 0, %s162
      %s165 = sphi 0, %s164
      %s179 = sphi 0, %s165
      %s183 = sphi 0, %s183
      %s185 = sphi 0, %s183
      %s186 = sphi 0, %s185
      %s200 = sphi 0, %s186
      %s204 = sphi 0, %s204
      %s206 = sphi 0, %s204
      %s207 = sphi 0, %s206
      %s221 = sphi 0, %s207
      %s227 = sphi 0, %s229
      %s230 = sphi 0, %s227
      %s231 = sphi 0, %s230
      %s247 = sphi 0, %s231
    $region4: #{sr_model_forward.13} parent=1 // loop_header_branch
      %21 = sbr.rel (%p19) target = $region8
    $region5: #{sr_model_forward.13} parent=1 // loop_body
      %s23 = ssub.s32 %s18, 1
      %s24 = ssub.s32 %s18, 2
      %s25 = sadd.s32 %s18, 1
      %s26 = ssub.s32 %s18, %s25
      %p27 = scmp.eq.s32.totalorder %s26, 0
      %s29 = sadd.s32 %s28, 1
      %s30 = scalar_select %p27, %s28, %s29
      %p33 = pneg %p27
      %p34 = scmp.eq.s32.totalorder %s18, 1
      %p35 = por %p33, %p34
      %p36 = scmp.ne.s32.totalorder %s28, %s31
      %p37 = scmp.eq.s32.totalorder %s18, 0
      %p38 = por %p36, %p37
      %p39 = scmp.ne.s32.totalorder %s28, %s31
      %p40 = scmp.eq.s32.totalorder %s23, 1
      %p41 = por %p39, %p40
      %p42 = scmp.ne.s32.totalorder %s31, %s32
      %p43 = scmp.eq.s32.totalorder %s23, 0
      %p44 = por %p42, %p43
      %p45 = scmp.ne.s32.totalorder %s31, %s32
      %p46 = scmp.eq.s32.totalorder %s24, 1
      %p47 = por %p45, %p46
      %p49 = scmp.ne.s32.totalorder %s32, %s48
      %p50 = scmp.eq.s32.totalorder %s24, 0
      %p51 = por %p49, %p50
      %s53 = sadd.s32 %s52, 1
      %p56 = scmp.eq.s32.totalorder %s18, 1
      %p57 = scmp.ne.s32.totalorder %s52, %s54
      %p58 = scmp.eq.s32.totalorder %s18, 0
      %p59 = por %p57, %p58
      %p60 = scmp.ne.s32.totalorder %s52, %s54
      %p61 = scmp.eq.s32.totalorder %s23, 1
      %p62 = por %p60, %p61
      %p63 = scmp.ne.s32.totalorder %s54, %s55
      %p64 = scmp.eq.s32.totalorder %s23, 0
      %p65 = por %p63, %p64
      %p66 = scmp.ne.s32.totalorder %s54, %s55
      %p67 = scmp.eq.s32.totalorder %s24, 1
      %p68 = por %p66, %p67
      %p70 = scmp.ne.s32.totalorder %s55, %s69
      %p71 = scmp.eq.s32.totalorder %s24, 0
      %p72 = por %p70, %p71
      %s74 = sadd.s32 %s73, 1
      %p77 = scmp.eq.s32.totalorder %s18, 1
      %p78 = scmp.ne.s32.totalorder %s73, %s75
      %p79 = scmp.eq.s32.totalorder %s18, 0
      %p80 = por %p78, %p79
      %p81 = scmp.ne.s32.totalorder %s73, %s75
      %p82 = scmp.eq.s32.totalorder %s23, 1
      %p83 = por %p81, %p82
      %p84 = scmp.ne.s32.totalorder %s75, %s76
      %p85 = scmp.eq.s32.totalorder %s23, 0
      %p86 = por %p84, %p85
      %p87 = scmp.ne.s32.totalorder %s75, %s76
      %p88 = scmp.eq.s32.totalorder %s24, 1
      %p89 = por %p87, %p88
      %p91 = scmp.ne.s32.totalorder %s76, %s90
      %p92 = scmp.eq.s32.totalorder %s24, 0
      %p93 = por %p91, %p92
      %s95 = sadd.s32 %s94, 1
      %p98 = scmp.eq.s32.totalorder %s18, 1
      %p99 = scmp.ne.s32.totalorder %s94, %s96
      %p100 = scmp.eq.s32.totalorder %s18, 0
      %p101 = por %p99, %p100
      %p102 = scmp.ne.s32.totalorder %s94, %s96
      %p103 = scmp.eq.s32.totalorder %s23, 1
      %p104 = por %p102, %p103
      %p105 = scmp.ne.s32.totalorder %s96, %s97
      %p106 = scmp.eq.s32.totalorder %s23, 0
      %p107 = por %p105, %p106
      %p108 = scmp.ne.s32.totalorder %s96, %s97
      %p109 = scmp.eq.s32.totalorder %s24, 1
      %p110 = por %p108, %p109
      %p112 = scmp.ne.s32.totalorder %s97, %s111
      %p113 = scmp.eq.s32.totalorder %s24, 0
      %p114 = por %p112, %p113
      %s116 = sadd.s32 %s115, 1
      %p119 = scmp.eq.s32.totalorder %s18, 1
      %p120 = scmp.ne.s32.totalorder %s115, %s117
      %p121 = scmp.eq.s32.totalorder %s18, 0
      %p122 = por %p120, %p121
      %p123 = scmp.ne.s32.totalorder %s115, %s117
      %p124 = scmp.eq.s32.totalorder %s23, 1
      %p125 = por %p123, %p124
      %p126 = scmp.ne.s32.totalorder %s117, %s118
      %p127 = scmp.eq.s32.totalorder %s23, 0
      %p128 = por %p126, %p127
      %p129 = scmp.ne.s32.totalorder %s117, %s118
      %p130 = scmp.eq.s32.totalorder %s24, 1
      %p131 = por %p129, %p130
      %p133 = scmp.ne.s32.totalorder %s118, %s132
      %p134 = scmp.eq.s32.totalorder %s24, 0
      %p135 = por %p133, %p134
      %s136 = ssub.s32 %s18, %s25
      %p137 = scmp.eq.s32.totalorder %s136, 0
      %s139 = sadd.s32 %s138, 1
      %s140 = scalar_select %p137, %s138, %s139
      %p143 = pneg %p137
      %p144 = scmp.eq.s32.totalorder %s18, 1
      %p145 = por %p143, %p144
      %p146 = scmp.ne.s32.totalorder %s138, %s141
      %p147 = scmp.eq.s32.totalorder %s18, 0
      %p148 = por %p146, %p147
      %p149 = scmp.ne.s32.totalorder %s138, %s141
      %p150 = scmp.eq.s32.totalorder %s23, 1
      %p151 = por %p149, %p150
      %p152 = scmp.ne.s32.totalorder %s141, %s142
      %p153 = scmp.eq.s32.totalorder %s23, 0
      %p154 = por %p152, %p153
      %p155 = scmp.ne.s32.totalorder %s141, %s142
      %p156 = scmp.eq.s32.totalorder %s24, 1
      %p157 = por %p155, %p156
      %p159 = scmp.ne.s32.totalorder %s142, %s158
      %p160 = scmp.eq.s32.totalorder %s24, 0
      %p161 = por %p159, %p160
      %s163 = sadd.s32 %s162, 1
      %p166 = scmp.eq.s32.totalorder %s18, 1
      %p167 = scmp.ne.s32.totalorder %s162, %s164
      %p168 = scmp.eq.s32.totalorder %s18, 0
      %p169 = por %p167, %p168
      %p170 = scmp.ne.s32.totalorder %s162, %s164
      %p171 = scmp.eq.s32.totalorder %s23, 1
      %p172 = por %p170, %p171
      %p173 = scmp.ne.s32.totalorder %s164, %s165
      %p174 = scmp.eq.s32.totalorder %s23, 0
      %p175 = por %p173, %p174
      %p176 = scmp.ne.s32.totalorder %s164, %s165
      %p177 = scmp.eq.s32.totalorder %s24, 1
      %p178 = por %p176, %p177
      %p180 = scmp.ne.s32.totalorder %s165, %s179
      %p181 = scmp.eq.s32.totalorder %s24, 0
      %p182 = por %p180, %p181
      %s184 = sadd.s32 %s183, 1
      %p187 = scmp.eq.s32.totalorder %s18, 1
      %p188 = scmp.ne.s32.totalorder %s183, %s185
      %p189 = scmp.eq.s32.totalorder %s18, 0
      %p190 = por %p188, %p189
      %p191 = scmp.ne.s32.totalorder %s183, %s185
      %p192 = scmp.eq.s32.totalorder %s23, 1
      %p193 = por %p191, %p192
      %p194 = scmp.ne.s32.totalorder %s185, %s186
      %p195 = scmp.eq.s32.totalorder %s23, 0
      %p196 = por %p194, %p195
      %p197 = scmp.ne.s32.totalorder %s185, %s186
      %p198 = scmp.eq.s32.totalorder %s24, 1
      %p199 = por %p197, %p198
      %p201 = scmp.ne.s32.totalorder %s186, %s200
      %p202 = scmp.eq.s32.totalorder %s24, 0
      %p203 = por %p201, %p202
      %s205 = sadd.s32 %s204, 1
      %p208 = scmp.eq.s32.totalorder %s18, 1
      %p209 = scmp.ne.s32.totalorder %s204, %s206
      %p210 = scmp.eq.s32.totalorder %s18, 0
      %p211 = por %p209, %p210
      %p212 = scmp.ne.s32.totalorder %s204, %s206
      %p213 = scmp.eq.s32.totalorder %s23, 1
      %p214 = por %p212, %p213
      %p215 = scmp.ne.s32.totalorder %s206, %s207
      %p216 = scmp.eq.s32.totalorder %s23, 0
      %p217 = por %p215, %p216
      %p218 = scmp.ne.s32.totalorder %s206, %s207
      %p219 = scmp.eq.s32.totalorder %s24, 1
      %p220 = por %p218, %p219
      %p222 = scmp.ne.s32.totalorder %s207, %s221
      %p223 = scmp.eq.s32.totalorder %s24, 0
      %p224 = por %p222, %p223
      %s225 = ssub.s32 %s18, %s25
      %p226 = scmp.eq.s32.totalorder %s225, 0
      %s228 = sadd.s32 %s227, 1
      %s229 = scalar_select %p226, %s227, %s228
      %p232 = pneg %p226
      %p233 = scmp.eq.s32.totalorder %s18, 1
      %p234 = por %p232, %p233
      %p235 = scmp.ne.s32.totalorder %s227, %s230
      %p236 = scmp.eq.s32.totalorder %s18, 0
      %p237 = por %p235, %p236
      %p238 = scmp.ne.s32.totalorder %s227, %s230
      %p239 = scmp.eq.s32.totalorder %s23, 1
      %p240 = por %p238, %p239
      %p241 = scmp.ne.s32.totalorder %s230, %s231
      %p242 = scmp.eq.s32.totalorder %s23, 0
      %p243 = por %p241, %p242
      %p244 = scmp.ne.s32.totalorder %s230, %s231
      %p245 = scmp.eq.s32.totalorder %s24, 1
      %p246 = por %p244, %p245
      %p248 = scmp.ne.s32.totalorder %s231, %s247
      %p249 = scmp.eq.s32.totalorder %s24, 0
      %p250 = por %p248, %p249
      %p251 = scmp.le.s32.totalorder 1, %s18
      %p252 = scmp.lt.s32.totalorder %s18, 3
      %p253 = pnand %p251, %p252
      %p254 = pneg %p253
      // Predicated region
      $region9: #{sr_model_forward.13} parent=5 // pred_check
        _
      $region10: #{sr_model_forward.13} parent=5 // pred_check_branch
        %256 = sbr.rel (%p253) target = $region12
      $region11: #{sr_model_forward.13} parent=5 // pred_region
        %s257 = ssub.s32 %s18, 1
        // Predicated region
        $region13: #{sr_model_forward.13} parent=11 // pred_check
          %p258 = pneg %p65
        $region14: #{sr_model_forward.13} parent=11 // pred_check_branch
          %260 = sbr.rel (%p258) target = $region16
        $region15: #{sr_model_forward.13} parent=11 // pred_region
          _
        $region16: #{sr_model_forward.13} parent=11 // pred_fallthru
          _
        // Predicated region
        $region17: #{sr_model_forward.13} parent=11 // pred_check
          %p261 = pneg %p86
        $region18: #{sr_model_forward.13} parent=11 // pred_check_branch
          %263 = sbr.rel (%p261) target = $region20
        $region19: #{sr_model_forward.13} parent=11 // pred_region
          _
        $region20: #{sr_model_forward.13} parent=11 // pred_fallthru
          _
        // Predicated region
        $region21: #{sr_model_forward.13} parent=11 // pred_check
          %p264 = pneg %p107
        $region22: #{sr_model_forward.13} parent=11 // pred_check_branch
          %266 = sbr.rel (%p264) target = $region24
        $region23: #{sr_model_forward.13} parent=11 // pred_region
          _
        $region24: #{sr_model_forward.13} parent=11 // pred_fallthru
          _
        // Predicated region
        $region25: #{sr_model_forward.13} parent=11 // pred_check
          %p267 = pneg %p128
        $region26: #{sr_model_forward.13} parent=11 // pred_check_branch
          %269 = sbr.rel (%p267) target = $region28
        $region27: #{sr_model_forward.13} parent=11 // pred_region
          _
        $region28: #{sr_model_forward.13} parent=11 // pred_fallthru
          _
        // Predicated region
        $region29: #{sr_model_forward.13} parent=11 // pred_check
          %p270 = pneg %p175
        $region30: #{sr_model_forward.13} parent=11 // pred_check_branch
          %272 = sbr.rel (%p270) target = $region32
        $region31: #{sr_model_forward.13} parent=11 // pred_region
          _
        $region32: #{sr_model_forward.13} parent=11 // pred_fallthru
          _
        // Predicated region
        $region33: #{sr_model_forward.13} parent=11 // pred_check
          %p273 = pneg %p196
        $region34: #{sr_model_forward.13} parent=11 // pred_check_branch
          %275 = sbr.rel (%p273) target = $region36
        $region35: #{sr_model_forward.13} parent=11 // pred_region
          _
        $region36: #{sr_model_forward.13} parent=11 // pred_fallthru
          _
        // Predicated region
        $region37: #{sr_model_forward.13} parent=11 // pred_check
          %p276 = pneg %p217
        $region38: #{sr_model_forward.13} parent=11 // pred_check_branch
          %278 = sbr.rel (%p276) target = $region40
        $region39: #{sr_model_forward.13} parent=11 // pred_region
          _
        $region40: #{sr_model_forward.13} parent=11 // pred_fallthru
          _
      $region12: #{sr_model_forward.13} parent=5 // pred_fallthru
        _
      %p279 = scmp.lt.s32.totalorder %s18, 2
      // Predicated region
      $region41: #{sr_model_forward.13} parent=5 // pred_check
        %p280 = pneg %p279
      $region42: #{sr_model_forward.13} parent=5 // pred_check_branch
        %282 = sbr.rel (%p280) target = $region44
      $region43: #{sr_model_forward.13} parent=5 // pred_region
        // Predicated region
        $region45: #{sr_model_forward.13} parent=43 // pred_check
          %p283 = pneg %p38
        $region46: #{sr_model_forward.13} parent=43 // pred_check_branch
          %285 = sbr.rel (%p283) target = $region48
        $region47: #{sr_model_forward.13} parent=43 // pred_region
          %p286 = scmp.lt.s32.totalorder %s18, 1
          %s287 = scalar_select %p286, %s18, 1
          %s288 = smul.addr %s287, 8
          %s289 = scalar_lea.vmem %s0, %s288
        $region48: #{sr_model_forward.13} parent=43 // pred_fallthru
          _
        // Predicated region
        $region49: #{sr_model_forward.13} parent=43 // pred_check
          %p290 = pneg %p148
        $region50: #{sr_model_forward.13} parent=43 // pred_check_branch
          %292 = sbr.rel (%p290) target = $region52
        $region51: #{sr_model_forward.13} parent=43 // pred_region
          %p293 = scmp.lt.s32.totalorder %s18, 1
          %s294 = scalar_select %p293, %s18, 1
          %s295 = smul.addr %s294, 8
          %s296 = scalar_lea.vmem %s5, %s295
        $region52: #{sr_model_forward.13} parent=43 // pred_fallthru
          _
      $region44: #{sr_model_forward.13} parent=5 // pred_fallthru
        _
      %p297 = scmp.le.s32.totalorder 1, %s18
      %p298 = scmp.lt.s32.totalorder %s18, 3
      %p299 = pnand %p297, %p298
      %p300 = pneg %p299
      // Predicated region
      $region53: #{sr_model_forward.13} parent=5 // pred_check
        _
      $region54: #{sr_model_forward.13} parent=5 // pred_check_branch
        %302 = sbr.rel (%p299) target = $region56
      $region55: #{sr_model_forward.13} parent=5 // pred_region
        %s303 = ssub.s32 %s18, 1
        %p304 = scmp.lt.s32.totalorder %s23, 1
        %s305 = scalar_select %p304, %s23, 1
        %s306 = smul.addr %s305, 8
        %s307 = scalar_lea.vmem %s0, %s306
        %p308 = pneg %p44
        %p309 = pneg %p41
        %p310 = pneg %p65
        %p311 = pneg %p62
        %p312 = pneg %p86
        %p313 = pneg %p83
        %p314 = pneg %p107
        %p315 = pneg %p104
        %p316 = pneg %p128
        %p317 = pneg %p125
        %p318 = scmp.lt.s32.totalorder %s23, 1
        %s319 = scalar_select %p318, %s23, 1
        %s320 = smul.addr %s319, 8
        %s321 = scalar_lea.vmem %s5, %s320
        %p322 = pneg %p154
        %p323 = pneg %p151
        %p324 = pneg %p175
        %p325 = pneg %p172
        %p326 = pneg %p196
        %p327 = pneg %p193
        %p328 = pneg %p217
        %p329 = pneg %p214
        %p330 = pneg %p243
        %p331 = pneg %p240
        %s332 = sand.u32 %s230, 1
        %s333 = scalar_lea.sflag [#allocation3], %s332
        %s334 = sand.u32 %s230, 1
        %s335 = smul.addr %s334, 8
        %s336 = scalar_lea.vmem [#allocation2], %s335
        %p337 = scmp.lt.s32.totalorder %s23, 1
        %s338 = scalar_select %p337, %s23, 1
        %s339 = smul.addr %s338, 8
        %s340 = scalar_lea.vmem %s0, %s339
        %p341 = scmp.lt.s32.totalorder %s23, 1
        %s342 = scalar_select %p341, %s23, 1
        %s343 = smul.addr %s342, 8
        %s344 = scalar_lea.vmem %s5, %s343
        %v346 = vld [vmem:[%s340] sm:$0xff]
        %v347 = vpack.c.bf16 %v346, %v346
        %v348 = vld [vmem:[%s1] sm:$0xff]
        %v349 = vld [vmem:[%s1 + $0x8] sm:$0xf]
        %v350 = vld [vmem:[%s1 + $0xc] sm:$0xff]
        %v351 = vld [vmem:[%s1 + $0x14] sm:$0xf]
        %v352 = vld [vmem:[%s1 + $0x18] sm:$0xff]
        %v353 = vld [vmem:[%s1 + $0x20] sm:$0xf]
        %v354 = vld [vmem:[%s1 + $0x24] sm:$0xff]
        %v355 = vld [vmem:[%s1 + $0x2c] sm:$0xf]
        %v356 = vld [vmem:[%s1 + $0x30] sm:$0xff]
        %v357 = vld [vmem:[%s1 + $0x38] sm:$0xf]
        %v358 = vld [vmem:[%s2] sm:$0x7]
        %v360 = vlaneseq
        %v361 = vshrl.u32 %v360, 7
        %v362 = vsub.s32 0, %v361
        %v363 = vrot.slane %v358, %v362
        %v364 = vlaneseq
        %v365 = vshrl.u32 %v364, 7
        %v366 = vsub.s32 1, %v365
        %v367 = vrot.slane %v358, %v366
        %v368 = vlaneseq
        %v369 = vshrl.u32 %v368, 7
        %v370 = vsub.s32 2, %v369
        %v371 = vrot.slane %v358, %v370
        %v385 = vunpack.c.l.b16 %v348
        %v386 = vunpack.c.h.b16 %v348
        %v387 = vunpack.c.l.b16 %v349
        %v388 = vunpack.c.l.b16 %v350
        %v389 = vunpack.c.h.b16 %v350
        %v390 = vunpack.c.l.b16 %v351
        %v391 = vunpack.c.l.b16 %v352
        %v392 = vunpack.c.h.b16 %v352
        %v393 = vunpack.c.l.b16 %v353
        %v394 = vunpack.c.l.b16 %v354
        %v395 = vunpack.c.h.b16 %v354
        %v396 = vunpack.c.l.b16 %v355
        %v397 = vunpack.c.l.b16 %v356
        %v398 = vunpack.c.h.b16 %v356
        %v399 = vunpack.c.l.b16 %v357
        %v400 = vpack.c.b16 %v388, %v385
        %v401 = vpack.c.b16 %v389, %v386
        %v402 = vpack.c.b16 %v390, %v387
        %v403 = vpack.c.b16 %v394, %v391
        %v404 = vpack.c.b16 %v395, %v392
        %v405 = vpack.c.b16 %v396, %v393
        %v406 = vpack.c.b16 %v397, %v397
        %v407 = vpack.c.b16 %v398, %v398
        %v408 = vpack.c.b16 %v399, %v399
        %vm415 = vcmask 326656
        %v417 = vsel %vm415, %v347, 0
        %vm419 = vcmask 1043456
        %v421 = vsel %vm419, %v406, 0
        %v424 = vsel %vm419, %v407, 0
        %v427 = vsel %vm419, %v408, 0
        %429 = vmatprep.subr.bf16.mxu0 0
        %430 = vmatpush1.bf16.msra.mxu0 0
        %431 = vmatprep.subr.bf16.mxu0 0
        %432 = vmatpush1.bf16.msra.mxu0 0
        %433 = vmatprep.subr.bf16.mxu0 0
        %434 = vmatpush1.bf16.msra.mxu0 0
        %435 = vmatprep.subr.bf16.mxu0 0
        %436 = vmatpush1.bf16.msra.mxu0 0
        %437 = vmatprep.subr.bf16.mxu0 0
        %438 = vmatpush1.bf16.msra.mxu0 0
        %439 = vmatprep.subr.bf16.mxu0 %v424
        %440 = vmatpush1.bf16.msra.mxu0 %v421
        %441 = vmatprep.subr.bf16.mxu0 %v404
        %442 = vmatpush1.bf16.msra.mxu0 %v403
        %443 = vmatprep.subr.bf16.mxu0 %v401
        %444 = vmatpush1.bf16.msra.mxu0 %v400
        %445 = vmatprep.subr.bf16.mxu0 0
        %446 = vmatpush2.bf16.msra.mxu0 0
        %447 = vmatprep.subr.bf16.mxu0 0
        %448 = vmatpush2.bf16.msra.mxu0 0
        %449 = vmatprep.subr.bf16.mxu0 0
        %450 = vmatpush2.bf16.msra.mxu0 0
        %451 = vmatprep.subr.bf16.mxu0 0
        %452 = vmatpush2.bf16.msra.mxu0 0
        %453 = vmatprep.subr.bf16.mxu0 0
        %454 = vmatpush2.bf16.msra.mxu0 0
        %455 = vmatprep.subr.bf16.mxu0 0
        %456 = vmatpush2.bf16.msra.mxu0 0
        %457 = vmatprep.subr.bf16.mxu0 0
        %458 = vmatpush2.bf16.msra.mxu0 0
        %459 = vmatprep.subr.bf16.mxu0 0
        %460 = vmatpush2.bf16.msra.mxu0 0
        %461 = vmatprep.mubr.bf16.mxu0 0
        %462 = vmatmul.mubr.bf16.gmra.mxu0 %v417
        %v463 = vpop.f32.mrf.mxu0
        %v464 = vadd.f32 %v363, %v463
        %v465 = vpop.f32.mrf.mxu0
        %v466 = vadd.f32 %v367, %v465
        %v467 = vpop.f32.mrf.mxu0
        %v468 = vpop.f32.mrf.mxu0
        %469 = vdwg.mxu0
        %470 = vmatprep.subr.bf16.mxu0 0
        %471 = vmatpush1.bf16.msra.mxu0 0
        %472 = vmatprep.subr.bf16.mxu0 0
        %473 = vmatpush1.bf16.msra.mxu0 0
        %474 = vmatprep.subr.bf16.mxu0 0
        %475 = vmatpush1.bf16.msra.mxu0 0
        %476 = vmatprep.subr.bf16.mxu0 0
        %477 = vmatpush1.bf16.msra.mxu0 0
        %478 = vmatprep.subr.bf16.mxu0 0
        %479 = vmatpush1.bf16.msra.mxu0 0
        %480 = vmatprep.subr.bf16.mxu0 0
        %481 = vmatpush1.bf16.msra.mxu0 %v427
        %482 = vmatprep.subr.bf16.mxu0 0
        %483 = vmatpush1.bf16.msra.mxu0 %v405
        %484 = vmatprep.subr.bf16.mxu0 0
        %485 = vmatpush1.bf16.msra.mxu0 %v402
        %486 = vmatprep.subr.bf16.mxu0 0
        %487 = vmatpush2.bf16.msra.mxu0 0
        %488 = vmatprep.subr.bf16.mxu0 0
        %489 = vmatpush2.bf16.msra.mxu0 0
        %490 = vmatprep.subr.bf16.mxu0 0
        %491 = vmatpush2.bf16.msra.mxu0 0
        %492 = vmatprep.subr.bf16.mxu0 0
        %493 = vmatpush2.bf16.msra.mxu0 0
        %494 = vmatprep.subr.bf16.mxu0 0
        %495 = vmatpush2.bf16.msra.mxu0 0
        %496 = vmatprep.subr.bf16.mxu0 0
        %497 = vmatpush2.bf16.msra.mxu0 0
        %498 = vmatprep.subr.bf16.mxu0 0
        %499 = vmatpush2.bf16.msra.mxu0 0
        %500 = vmatprep.subr.bf16.mxu0 0
        %501 = vmatpush2.bf16.msra.mxu0 0
        %502 = vmatprep.mubr.bf16.mxu0 0
        %503 = vmatmul.mubr.bf16.gmra.mxu0 %v417
        %v504 = vpop.f32.mrf.mxu0
        %v505 = vadd.f32 %v371, %v504
        %v506 = vpop.f32.mrf.mxu0
        %v507 = vpop.f32.mrf.mxu0
        %v508 = vpop.f32.mrf.mxu0
        %509 = vdwg.mxu0
        %v510 = vmax.f32 %v464, 0.0
        %v511 = vmax.f32 %v466, 0.0
        %v512 = vmax.f32 %v505, 0.0
        %v513 = vpack.c.bf16 %v510, %v510
        %v514 = vpack.c.bf16 %v511, %v511
        %v515 = vpack.c.bf16 %v512, %v512
        %v516 = vld [vmem:[%s3] sm:$0xff]
        %v517 = vld [vmem:[%s3 + $0x8] sm:$0xff]
        %v518 = vld [vmem:[%s3 + $0x10] sm:$0xff]
        %v519 = vld [vmem:[%s3 + $0x18] sm:$0xff]
        %v520 = vld [vmem:[%s3 + $0x20] sm:$0xff]
        %v521 = vld [vmem:[%s3 + $0x28] sm:$0xff]
        %v522 = vld [vmem:[%s3 + $0x30] sm:$0xff]
        %v523 = vld [vmem:[%s3 + $0x38] sm:$0xff]
        %v524 = vld [vmem:[%s3 + $0x40] sm:$0xff]
        %v525 = vld [vmem:[%s3 + $0x48] sm:$0xff]
        %v526 = vld [vmem:[%s3 + $0x50] sm:$0xff]
        %v527 = vld [vmem:[%s3 + $0x58] sm:$0xff]
        %v528 = vld [vmem:[%s3 + $0x60] sm:$0xff]
        %v529 = vld [vmem:[%s3 + $0x68] sm:$0xff]
        %v530 = vld [vmem:[%s3 + $0x70] sm:$0xff]
        %v531 = vld [vmem:[%s3 + $0x78] sm:$0xff]
        %v532 = vld [vmem:[%s3 + $0x80] sm:$0xff]
        %v533 = vld [vmem:[%s3 + $0x88] sm:$0xff]
        %v534 = vld [vmem:[%s3 + $0x90] sm:$0xff]
        %v535 = vld [vmem:[%s3 + $0x98] sm:$0xff]
        %v536 = vld [vmem:[%s3 + $0xa0] sm:$0xff]
        %v537 = vld [vmem:[%s3 + $0xa8] sm:$0xff]
        %v538 = vld [vmem:[%s3 + $0xb0] sm:$0xff]
        %v539 = vld [vmem:[%s3 + $0xb8] sm:$0xff]
        %v540 = vld [vmem:[%s3 + $0xc0] sm:$0xff]
        %v541 = vld [vmem:[%s3 + $0xc8] sm:$0xff]
        %v542 = vld [vmem:[%s3 + $0xd0] sm:$0xff]
        %v543 = vld [vmem:[%s3 + $0xd8] sm:$0xff]
        %v544 = vld [vmem:[%s3 + $0xe0] sm:$0xff]
        %v545 = vld [vmem:[%s3 + $0xe8] sm:$0xff]
        %v546 = vld [vmem:[%s3 + $0xf0] sm:$0xff]
        %v547 = vld [vmem:[%s3 + $0xf8] sm:$0xff]
        %v548 = vld [vmem:[%s3 + $0x100] sm:$0xff]
        %v549 = vld [vmem:[%s3 + $0x108] sm:$0xff]
        %v550 = vld [vmem:[%s3 + $0x110] sm:$0xff]
        %v551 = vld [vmem:[%s3 + $0x118] sm:$0xff]
        %v552 = vld [vmem:[%s3 + $0x120] sm:$0xff]
        %v553 = vld [vmem:[%s3 + $0x128] sm:$0x33]
        %v554 = vld [vmem:[%s4] sm:$0x3]
        %v556 = vlaneseq
        %v557 = vshrl.u32 %v556, 7
        %v558 = vsub.s32 0, %v557
        %v559 = vrot.slane %v554, %v558
        %v560 = vlaneseq
        %v561 = vshrl.u32 %v560, 7
        %v562 = vsub.s32 1, %v561
        %v563 = vrot.slane %v554, %v562
        %v604 = vunpack.c.l.b16 %v516
        %v605 = vunpack.c.h.b16 %v516
        %v606 = vunpack.c.l.b16 %v517
        %v607 = vunpack.c.h.b16 %v517
        %v608 = vunpack.c.l.b16 %v518
        %v609 = vunpack.c.h.b16 %v518
        %v610 = vunpack.c.l.b16 %v519
        %v611 = vunpack.c.h.b16 %v519
        %v612 = vunpack.c.l.b16 %v520
        %v613 = vunpack.c.h.b16 %v520
        %v614 = vunpack.c.l.b16 %v521
        %v615 = vunpack.c.h.b16 %v521
        %v616 = vunpack.c.l.b16 %v522
        %v617 = vunpack.c.h.b16 %v522
        %v618 = vunpack.c.l.b16 %v523
        %v619 = vunpack.c.h.b16 %v523
        %v620 = vunpack.c.l.b16 %v524
        %v621 = vunpack.c.h.b16 %v524
        %v622 = vunpack.c.l.b16 %v525
        %v623 = vunpack.c.h.b16 %v525
        %v624 = vunpack.c.l.b16 %v526
        %v625 = vunpack.c.h.b16 %v526
        %v626 = vunpack.c.l.b16 %v527
        %v627 = vunpack.c.h.b16 %v527
        %v628 = vunpack.c.l.b16 %v528
        %v629 = vunpack.c.h.b16 %v528
        %v630 = vunpack.c.l.b16 %v529
        %v631 = vunpack.c.h.b16 %v529
        %v632 = vunpack.c.l.b16 %v530
        %v633 = vunpack.c.h.b16 %v530
        %v634 = vunpack.c.l.b16 %v531
        %v635 = vunpack.c.h.b16 %v531
        %v636 = vunpack.c.l.b16 %v532
        %v637 = vunpack.c.h.b16 %v532
        %v638 = vunpack.c.l.b16 %v533
        %v639 = vunpack.c.h.b16 %v533
        %v640 = vunpack.c.l.b16 %v534
        %v641 = vunpack.c.h.b16 %v534
        %v642 = vunpack.c.l.b16 %v535
        %v643 = vunpack.c.h.b16 %v535
        %v644 = vunpack.c.l.b16 %v536
        %v645 = vunpack.c.h.b16 %v536
        %v646 = vunpack.c.l.b16 %v537
        %v647 = vunpack.c.h.b16 %v537
        %v648 = vunpack.c.l.b16 %v538
        %v649 = vunpack.c.h.b16 %v538
        %v650 = vunpack.c.l.b16 %v539
        %v651 = vunpack.c.h.b16 %v539
        %v652 = vunpack.c.l.b16 %v540
        %v653 = vunpack.c.h.b16 %v540
        %v654 = vunpack.c.l.b16 %v541
        %v655 = vunpack.c.h.b16 %v541
        %v656 = vunpack.c.l.b16 %v542
        %v657 = vunpack.c.h.b16 %v542
        %v658 = vunpack.c.l.b16 %v543
        %v659 = vunpack.c.h.b16 %v543
        %v660 = vunpack.c.l.b16 %v544
        %v661 = vunpack.c.h.b16 %v544
        %v662 = vunpack.c.l.b16 %v545
        %v663 = vunpack.c.h.b16 %v545
        %v664 = vunpack.c.l.b16 %v546
        %v665 = vunpack.c.h.b16 %v546
        %v666 = vunpack.c.l.b16 %v547
        %v667 = vunpack.c.h.b16 %v547
        %v668 = vunpack.c.l.b16 %v548
        %v669 = vunpack.c.h.b16 %v548
        %v670 = vunpack.c.l.b16 %v549
        %v671 = vunpack.c.h.b16 %v549
        %v672 = vunpack.c.l.b16 %v550
        %v673 = vunpack.c.h.b16 %v550
        %v674 = vunpack.c.l.b16 %v551
        %v675 = vunpack.c.h.b16 %v551
        %v676 = vunpack.c.l.b16 %v552
        %v677 = vunpack.c.h.b16 %v552
        %v678 = vunpack.c.l.b16 %v553
        %v679 = vunpack.c.h.b16 %v553
        %v680 = vpack.c.b16 %v606, %v604
        %v681 = vpack.c.b16 %v607, %v605
        %v682 = vpack.c.b16 %v610, %v608
        %v683 = vpack.c.b16 %v611, %v609
        %v684 = vpack.c.b16 %v614, %v612
        %v685 = vpack.c.b16 %v615, %v613
        %v686 = vpack.c.b16 %v618, %v616
        %v687 = vpack.c.b16 %v619, %v617
        %v688 = vpack.c.b16 %v622, %v620
        %v689 = vpack.c.b16 %v623, %v621
        %v690 = vpack.c.b16 %v626, %v624
        %v691 = vpack.c.b16 %v627, %v625
        %v692 = vpack.c.b16 %v630, %v628
        %v693 = vpack.c.b16 %v631, %v629
        %v694 = vpack.c.b16 %v634, %v632
        %v695 = vpack.c.b16 %v635, %v633
        %v696 = vpack.c.b16 %v638, %v636
        %v697 = vpack.c.b16 %v639, %v637
        %v698 = vpack.c.b16 %v642, %v640
        %v699 = vpack.c.b16 %v643, %v641
        %v700 = vpack.c.b16 %v646, %v644
        %v701 = vpack.c.b16 %v647, %v645
        %v702 = vpack.c.b16 %v650, %v648
        %v703 = vpack.c.b16 %v651, %v649
        %v704 = vpack.c.b16 %v654, %v652
        %v705 = vpack.c.b16 %v655, %v653
        %v706 = vpack.c.b16 %v658, %v656
        %v707 = vpack.c.b16 %v659, %v657
        %v708 = vpack.c.b16 %v662, %v660
        %v709 = vpack.c.b16 %v663, %v661
        %v710 = vpack.c.b16 %v666, %v664
        %v711 = vpack.c.b16 %v667, %v665
        %v712 = vpack.c.b16 %v670, %v668
        %v713 = vpack.c.b16 %v671, %v669
        %v714 = vpack.c.b16 %v674, %v672
        %v715 = vpack.c.b16 %v675, %v673
        %v716 = vpack.c.b16 %v678, %v676
        %v717 = vpack.c.b16 %v679, %v677
        %vm754 = vcmask 359424
        %v756 = vsel %vm754, %v515, 0
        %vm758 = vcmask 1045504
        %v760 = vsel %vm758, %v716, 0
        %v763 = vsel %vm758, %v717, 0
        %765 = vmatprep.subr.bf16.mxu0 %v695
        %766 = vmatpush1.bf16.msra.mxu0 %v694
        %767 = vmatprep.subr.bf16.mxu0 %v693
        %768 = vmatpush1.bf16.msra.mxu0 %v692
        %769 = vmatprep.subr.bf16.mxu0 %v691
        %770 = vmatpush1.bf16.msra.mxu0 %v690
        %771 = vmatprep.subr.bf16.mxu0 %v689
        %772 = vmatpush1.bf16.msra.mxu0 %v688
        %773 = vmatprep.subr.bf16.mxu0 %v687
        %774 = vmatpush1.bf16.msra.mxu0 %v686
        %775 = vmatprep.subr.bf16.mxu0 %v685
        %776 = vmatpush1.bf16.msra.mxu0 %v684
        %777 = vmatprep.subr.bf16.mxu0 %v683
        %778 = vmatpush1.bf16.msra.mxu0 %v682
        %779 = vmatprep.subr.bf16.mxu0 %v681
        %780 = vmatpush1.bf16.msra.mxu0 %v680
        %781 = vmatprep.subr.bf16.mxu0 %v711
        %782 = vmatpush2.bf16.msra.mxu0 %v710
        %783 = vmatprep.subr.bf16.mxu0 %v709
        %784 = vmatpush2.bf16.msra.mxu0 %v708
        %785 = vmatprep.subr.bf16.mxu0 %v707
        %786 = vmatpush2.bf16.msra.mxu0 %v706
        %787 = vmatprep.subr.bf16.mxu0 %v705
        %788 = vmatpush2.bf16.msra.mxu0 %v704
        %789 = vmatprep.subr.bf16.mxu0 %v703
        %790 = vmatpush2.bf16.msra.mxu0 %v702
        %791 = vmatprep.subr.bf16.mxu0 %v701
        %792 = vmatpush2.bf16.msra.mxu0 %v700
        %793 = vmatprep.subr.bf16.mxu0 %v699
        %794 = vmatpush2.bf16.msra.mxu0 %v698
        %795 = vmatprep.subr.bf16.mxu0 %v697
        %796 = vmatpush2.bf16.msra.mxu0 %v696
        %797 = vmatprep.mubr.bf16.mxu0 %v514
        %798 = vmatmul.mubr.bf16.gmra.mxu0 %v513
        %v799 = vpop.f32.mrf.mxu0
        %v800 = vadd.f32 %v559, %v799
        %v801 = vpop.f32.mrf.mxu0
        %v802 = vadd.f32 %v563, %v801
        %v803 = vpop.f32.mrf.mxu0
        %v804 = vpop.f32.mrf.mxu0
        %805 = vdwg.mxu0
        %806 = vmatprep.subr.bf16.mxu0 0
        %807 = vmatpush1.bf16.msra.mxu0 0
        %808 = vmatprep.subr.bf16.mxu0 0
        %809 = vmatpush1.bf16.msra.mxu0 0
        %810 = vmatprep.subr.bf16.mxu0 0
        %811 = vmatpush1.bf16.msra.mxu0 0
        %812 = vmatprep.subr.bf16.mxu0 0
        %813 = vmatpush1.bf16.msra.mxu0 0
        %814 = vmatprep.subr.bf16.mxu0 0
        %815 = vmatpush1.bf16.msra.mxu0 0
        %816 = vmatprep.subr.bf16.mxu0 %v763
        %817 = vmatpush1.bf16.msra.mxu0 %v760
        %818 = vmatprep.subr.bf16.mxu0 %v715
        %819 = vmatpush1.bf16.msra.mxu0 %v714
        %820 = vmatprep.subr.bf16.mxu0 %v713
        %821 = vmatpush1.bf16.msra.mxu0 %v712
        %822 = vmatprep.subr.bf16.mxu0 0
        %823 = vmatpush2.bf16.msra.mxu0 0
        %824 = vmatprep.subr.bf16.mxu0 0
        %825 = vmatpush2.bf16.msra.mxu0 0
        %826 = vmatprep.subr.bf16.mxu0 0
        %827 = vmatpush2.bf16.msra.mxu0 0
        %828 = vmatprep.subr.bf16.mxu0 0
        %829 = vmatpush2.bf16.msra.mxu0 0
        %830 = vmatprep.subr.bf16.mxu0 0
        %831 = vmatpush2.bf16.msra.mxu0 0
        %832 = vmatprep.subr.bf16.mxu0 0
        %833 = vmatpush2.bf16.msra.mxu0 0
        %834 = vmatprep.subr.bf16.mxu0 0
        %835 = vmatpush2.bf16.msra.mxu0 0
        %836 = vmatprep.subr.bf16.mxu0 0
        %837 = vmatpush2.bf16.msra.mxu0 0
        %838 = vmatprep.mubr.bf16.mxu0 0
        %839 = vmatmul.mubr.bf16.gmra.mxu0 %v756
        %v840 = vpop.f32.mrf.mxu0
        %v841 = vadd.f32 %v800, %v840
        %v842 = vpop.f32.mrf.mxu0
        %v843 = vadd.f32 %v802, %v842
        %v844 = vpop.f32.mrf.mxu0
        %v845 = vpop.f32.mrf.mxu0
        %846 = vdwg.mxu0
        %v847 = vld [vmem:[%s344] sm:$0xff]
        %v848 = vpack.c.bf16 %v847, %v847
        %v849 = vld [vmem:[%s6] sm:$0xf]
        %v850 = vld [vmem:[%s6 + $0x4] sm:$0xf]
        %v851 = vld [vmem:[%s6 + $0x8] sm:$0xf]
        %v852 = vld [vmem:[%s6 + $0xc] sm:$0xf]
        %v853 = vld [vmem:[%s7] sm:$0x1]
        %v855 = vlaneseq
        %v856 = vshrl.u32 %v855, 7
        %v857 = vsub.s32 0, %v856
        %v858 = vrot.slane %v853, %v857
        %v864 = vunpack.c.l.b16 %v849
        %v865 = vunpack.c.l.b16 %v850
        %v866 = vunpack.c.l.b16 %v851
        %v867 = vunpack.c.l.b16 %v852
        %v868 = vpack.c.b16 %v865, %v864
        %v869 = vpack.c.b16 %v867, %v866
        %vm872 = vcmask 261120
        %v874 = vsel %vm872, %v848, 0
        %876 = vmatprep.subr.bf16.mxu0 0
        %877 = vmatpush1.bf16.msra.mxu0 0
        %878 = vmatprep.subr.bf16.mxu0 0
        %879 = vmatpush1.bf16.msra.mxu0 0
        %880 = vmatprep.subr.bf16.mxu0 0
        %881 = vmatpush1.bf16.msra.mxu0 0
        %882 = vmatprep.subr.bf16.mxu0 0
        %883 = vmatpush1.bf16.msra.mxu0 0
        %884 = vmatprep.subr.bf16.mxu0 0
        %885 = vmatpush1.bf16.msra.mxu0 0
        %886 = vmatprep.subr.bf16.mxu0 0
        %887 = vmatpush1.bf16.msra.mxu0 0
        %888 = vmatprep.subr.bf16.mxu0 0
        %889 = vmatpush1.bf16.msra.mxu0 %v869
        %890 = vmatprep.subr.bf16.mxu0 0
        %891 = vmatpush1.bf16.msra.mxu0 %v868
        %892 = vmatprep.subr.bf16.mxu0 0
        %893 = vmatpush2.bf16.msra.mxu0 0
        %894 = vmatprep.subr.bf16.mxu0 0
        %895 = vmatpush2.bf16.msra.mxu0 0
        %896 = vmatprep.subr.bf16.mxu0 0
        %897 = vmatpush2.bf16.msra.mxu0 0
        %898 = vmatprep.subr.bf16.mxu0 0
        %899 = vmatpush2.bf16.msra.mxu0 0
        %900 = vmatprep.subr.bf16.mxu0 0
        %901 = vmatpush2.bf16.msra.mxu0 0
        %902 = vmatprep.subr.bf16.mxu0 0
        %903 = vmatpush2.bf16.msra.mxu0 0
        %904 = vmatprep.subr.bf16.mxu0 0
        %905 = vmatpush2.bf16.msra.mxu0 0
        %906 = vmatprep.subr.bf16.mxu0 0
        %907 = vmatpush2.bf16.msra.mxu0 0
        %908 = vmatprep.mubr.bf16.mxu0 0
        %909 = vmatmul.mubr.bf16.gmra.mxu0 %v874
        %v910 = vpop.f32.mrf.mxu0
        %v911 = vadd.f32 %v858, %v910
        %v912 = vpop.f32.mrf.mxu0
        %v913 = vpop.f32.mrf.mxu0
        %v914 = vpop.f32.mrf.mxu0
        %915 = vdwg.mxu0
        %v916 = vxor.u32 %v911, 2147483648
        %v917 = vmul.f32 %v916, 1.442695
        %v918 = vpow.pop %v917
        %v919 = vadd.f32 %v918, 1.0
        %v920 = vrcp.pop %v919
        %v921 = vmul.f32 1.0, %v920
        %v922 = vpack.c.bf16 %v921, %v921
        %v923 = vpack.c.bf16 %v841, %v841
        %v924 = vpack.c.bf16 %v843, %v843
        %925 = vxpose.xlu0.c.b16.start [1/8] %v922, 128
        %926 = vxpose.xlu0.c.b16.cont [2/8] 0, 128
        %927 = vxpose.xlu0.c.b16.cont [3/8] 0, 128
        %928 = vxpose.xlu0.c.b16.cont [4/8] 0, 128
        %929 = vxpose.xlu0.c.b16.cont [5/8] 0, 128
        %930 = vxpose.xlu0.c.b16.cont [6/8] 0, 128
        %931 = vxpose.xlu0.c.b16.cont [7/8] 0, 128
        %932 = vxpose.xlu0.c.b16.end [8/8] 0, 128
        %v933 = vpop.trf.xlu0
        %v934 = vpop.trf.xlu0
        %v935 = vpop.trf.xlu0
        %v936 = vpop.trf.xlu0
        %v937 = vpop.trf.xlu0
        %v938 = vpop.trf.xlu0
        %v939 = vpop.trf.xlu0
        %v940 = vpop.trf.xlu0
        %vm941 = vcmask 64512
        %v943 = vsel %vm941, %v933, 0
        %v946 = vsel %vm419, %v923, 0
        %v949 = vsel %vm419, %v924, 0
        %951 = vmatprep.subr.bf16.mxu0 0
        %952 = vmatpush1.bf16.msra.mxu0 0
        %953 = vmatprep.subr.bf16.mxu0 0
        %954 = vmatpush1.bf16.msra.mxu0 0
        %955 = vmatprep.subr.bf16.mxu0 0
        %956 = vmatpush1.bf16.msra.mxu0 0
        %957 = vmatprep.subr.bf16.mxu0 0
        %958 = vmatpush1.bf16.msra.mxu0 0
        %959 = vmatprep.subr.bf16.mxu0 0
        %960 = vmatpush1.bf16.msra.mxu0 0
        %961 = vmatprep.subr.bf16.mxu0 0
        %962 = vmatpush1.bf16.msra.mxu0 0
        %963 = vmatprep.subr.bf16.mxu0 0
        %964 = vmatpush1.bf16.msra.mxu0 0
        %965 = vmatprep.subr.bf16.mxu0 %v949
        %966 = vmatpush1.bf16.msra.mxu0 %v946
        %967 = vmatprep.subr.bf16.mxu0 0
        %968 = vmatpush2.bf16.msra.mxu0 0
        %969 = vmatprep.subr.bf16.mxu0 0
        %970 = vmatpush2.bf16.msra.mxu0 0
        %971 = vmatprep.subr.bf16.mxu0 0
        %972 = vmatpush2.bf16.msra.mxu0 0
        %973 = vmatprep.subr.bf16.mxu0 0
        %974 = vmatpush2.bf16.msra.mxu0 0
        %975 = vmatprep.subr.bf16.mxu0 0
        %976 = vmatpush2.bf16.msra.mxu0 0
        %977 = vmatprep.subr.bf16.mxu0 0
        %978 = vmatpush2.bf16.msra.mxu0 0
        %979 = vmatprep.subr.bf16.mxu0 0
        %980 = vmatpush2.bf16.msra.mxu0 0
        %981 = vmatprep.subr.bf16.mxu0 0
        %982 = vmatpush2.bf16.msra.mxu0 0
        %983 = vmatprep.mubr.bf16.mxu0 0
        %984 = vmatmul.mubr.bf16.gmra.mxu0 %v943
        %v985 = vpop.f32.mrf.mxu0
        %v986 = vadd.f32 0.0, %v985
        %v987 = vpop.f32.mrf.mxu0
        %v988 = vadd.f32 0.0, %v987
        %v989 = vpop.f32.mrf.mxu0
        %v990 = vadd.f32 0.0, %v989
        %v991 = vpop.f32.mrf.mxu0
        %v992 = vadd.f32 0.0, %v991
        %993 = vdwg.mxu0
        %v994 = vld [vmem:[%s8] sm:$0xff]
        %v995 = vld [vmem:[%s8 + $0x8] sm:$0xff]
        %v996 = vld [vmem:[%s8 + $0x10] sm:$0xff]
        %v997 = vld [vmem:[%s8 + $0x18] sm:$0xff]
        %v998 = vld [vmem:[%s8 + $0x20] sm:$0xff]
        %v1004 = vunpack.c.l.b16 %v994
        %v1005 = vunpack.c.h.b16 %v994
        %v1006 = vunpack.c.l.b16 %v995
        %v1007 = vunpack.c.h.b16 %v995
        %v1008 = vunpack.c.l.b16 %v996
        %v1009 = vunpack.c.h.b16 %v996
        %v1010 = vunpack.c.l.b16 %v997
        %v1011 = vunpack.c.h.b16 %v997
        %v1012 = vunpack.c.l.b16 %v998
        %v1013 = vunpack.c.h.b16 %v998
        %v1014 = vpack.c.b16 %v1006, %v1004
        %v1015 = vpack.c.b16 %v1007, %v1005
        %v1016 = vpack.c.b16 %v1010, %v1008
        %v1017 = vpack.c.b16 %v1011, %v1009
        %v1018 = vpack.c.b16 %v1012, %v1012
        %v1019 = vpack.c.b16 %v1013, %v1013
        %v1025 = vsel %vm419, %v1018, 0
        %v1028 = vsel %vm419, %v1019, 0
        %1030 = vmatprep.subr.bf16.mxu0 0
        %1031 = vmatpush1.bf16.msra.mxu0 0
        %1032 = vmatprep.subr.bf16.mxu0 0
        %1033 = vmatpush1.bf16.msra.mxu0 0
        %1034 = vmatprep.subr.bf16.mxu0 0
        %1035 = vmatpush1.bf16.msra.mxu0 0
        %1036 = vmatprep.subr.bf16.mxu0 0
        %1037 = vmatpush1.bf16.msra.mxu0 0
        %1038 = vmatprep.subr.bf16.mxu0 0
        %1039 = vmatpush1.bf16.msra.mxu0 0
        %1040 = vmatprep.subr.bf16.mxu0 %v1028
        %1041 = vmatpush1.bf16.msra.mxu0 %v1025
        %1042 = vmatprep.subr.bf16.mxu0 %v1017
        %1043 = vmatpush1.bf16.msra.mxu0 %v1016
        %1044 = vmatprep.subr.bf16.mxu0 %v1015
        %1045 = vmatpush1.bf16.msra.mxu0 %v1014
        %1046 = vmatprep.subr.bf16.mxu0 0
        %1047 = vmatpush2.bf16.msra.mxu0 0
        %1048 = vmatprep.subr.bf16.mxu0 0
        %1049 = vmatpush2.bf16.msra.mxu0 0
        %1050 = vmatprep.subr.bf16.mxu0 0
        %1051 = vmatpush2.bf16.msra.mxu0 0
        %1052 = vmatprep.subr.bf16.mxu0 0
        %1053 = vmatpush2.bf16.msra.mxu0 0
        %1054 = vmatprep.subr.bf16.mxu0 0
        %1055 = vmatpush2.bf16.msra.mxu0 0
        %1056 = vmatprep.subr.bf16.mxu0 0
        %1057 = vmatpush2.bf16.msra.mxu0 0
        %1058 = vmatprep.subr.bf16.mxu0 0
        %1059 = vmatpush2.bf16.msra.mxu0 0
        %1060 = vmatprep.subr.bf16.mxu0 0
        %1061 = vmatpush2.bf16.msra.mxu0 0
        %1062 = vmatprep.mubr.bf16.mxu0 0
        %1063 = vmatmul.mubr.bf16.gmra.mxu0 %v417
        %v1064 = vpop.f32.mrf.mxu0
        %v1065 = vadd.f32 0.0, %v1064
        %v1066 = vpop.f32.mrf.mxu0
        %v1067 = vadd.f32 0.0, %v1066
        %v1068 = vpop.f32.mrf.mxu0
        %v1069 = vpop.f32.mrf.mxu0
        %1070 = vdwg.mxu0
        %v1071 = vpack.c.bf16 %v1065, %v1065
        %v1072 = vpack.c.bf16 %v1067, %v1067
        %v1073 = vpack.c.bf16 %v990, %v986
        %v1074 = vpack.c.bf16 %v992, %v988
        %vm1075 = vcmask 588800
        %v1077 = vsel %vm1075, %v1072, 0
        %v1080 = vsel %vm1075, %v1074, 0
        %1082 = vmatprep.subr.bf16.mxu0 0
        %1083 = vmatpush1.bf16.xpose.msra.mxu0 0
        %1084 = vmatprep.subr.bf16.mxu0 0
        %1085 = vmatpush1.bf16.xpose.msra.mxu0 0
        %1086 = vmatprep.subr.bf16.mxu0 0
        %1087 = vmatpush1.bf16.xpose.msra.mxu0 0
        %1088 = vmatprep.subr.bf16.mxu0 0
        %1089 = vmatpush1.bf16.xpose.msra.mxu0 0
        %1090 = vmatprep.subr.bf16.mxu0 0
        %1091 = vmatpush1.bf16.xpose.msra.mxu0 0
        %1092 = vmatprep.subr.bf16.mxu0 0
        %1093 = vmatpush1.bf16.xpose.msra.mxu0 0
        %1094 = vmatprep.subr.bf16.mxu0 0
        %1095 = vmatpush1.bf16.xpose.msra.mxu0 0
        %1096 = vmatprep.subr.bf16.mxu0 %v1080
        %1097 = vmatpush1.bf16.xpose.msra.mxu0 %v1073
        %1098 = vmatprep.subr.bf16.mxu0 0
        %1099 = vmatpush2.bf16.xpose.msra.mxu0 0
        %1100 = vmatprep.subr.bf16.mxu0 0
        %1101 = vmatpush2.bf16.xpose.msra.mxu0 0
        %1102 = vmatprep.subr.bf16.mxu0 0
        %1103 = vmatpush2.bf16.xpose.msra.mxu0 0
        %1104 = vmatprep.subr.bf16.mxu0 0
        %1105 = vmatpush2.bf16.xpose.msra.mxu0 0
        %1106 = vmatprep.subr.bf16.mxu0 0
        %1107 = vmatpush2.bf16.xpose.msra.mxu0 0
        %1108 = vmatprep.subr.bf16.mxu0 0
        %1109 = vmatpush2.bf16.xpose.msra.mxu0 0
        %1110 = vmatprep.subr.bf16.mxu0 0
        %1111 = vmatpush2.bf16.xpose.msra.mxu0 0
        %1112 = vmatprep.subr.bf16.mxu0 0
        %1113 = vmatpush2.bf16.xpose.msra.mxu0 0
        %1114 = vmatprep.mubr.bf16.mxu0 %v1077
        %1115 = vmatmul.mubr.bf16.gmra.mxu0 %v1071
        %v1116 = vpop.f32.mrf.mxu0
        %v1117 = vadd.f32 0.0, %v1116
        %v1118 = vpop.f32.mrf.mxu0
        %v1119 = vpop.f32.mrf.mxu0
        %v1120 = vpop.f32.mrf.mxu0
        %1121 = vdwg.mxu0
        %v1122 = vlaneseq
        %v1123 = vand.u32 %v1122, 127
        %vm1124 = vcmp.eq.s32.totalorder %v1123, 1
        %v1125 = vsel %vm1124, 0.0, %v1117
        %vm1126 = vcmask 130048
        %1127 = vst.msk [vmem:[%s336] sm:$0xff] %vm1126, %v1125
        %s1128 = sand.u32 %s230, 1
        %s1129 = scalar_lea.sflag [#allocation3], %s1128
        %s1130 = sand.u32 %s230, 1
        %s1131 = smul.addr %s1130, 8
        %s1132 = scalar_lea.vmem [#allocation2], %s1131
        // Predicated region
        $region57: #{sr_model_forward.13} parent=55 // pred_check
          %p1133 = pneg %p240
        $region58: #{sr_model_forward.13} parent=55 // pred_check_branch
          %1135 = sbr.rel (%p1133) target = $region60
        $region59: #{sr_model_forward.13} parent=55 // pred_region
          %s1137 = ssub.s32 128, 128
          %1138 = vsyncadd %s1129, %s1137
          %s1139 = smul.addr %s23, 128
          %s1140 = scalar_lea.hbm %s9, %s1139
          %s1142 = sshll.u32 %s1132, 4
          %s1143 = int_to_ptr.vmem [resolvable:$true] %s1142
          %1145 = dma.vmem_to_hbm [thread:$0]  %s1143, 128, %s1140, %s1129
        $region60: #{sr_model_forward.13} parent=55 // pred_fallthru
          _
      $region56: #{sr_model_forward.13} parent=5 // pred_fallthru
        _
      %p1146 = scmp.le.s32.totalorder 2, %s18
      // Predicated region
      $region61: #{sr_model_forward.13} parent=5 // pred_check
        %p1147 = pneg %p1146
      $region62: #{sr_model_forward.13} parent=5 // pred_check_branch
        %1149 = sbr.rel (%p1147) target = $region64
      $region63: #{sr_model_forward.13} parent=5 // pred_region
        %s1150 = ssub.s32 %s18, 2
        // Predicated region
        $region65: #{sr_model_forward.13} parent=63 // pred_check
          %p1151 = pneg %p246
        $region66: #{sr_model_forward.13} parent=63 // pred_check_branch
          %1153 = sbr.rel (%p1151) target = $region68
        $region67: #{sr_model_forward.13} parent=63 // pred_region
          %s1154 = sand.u32 %s231, 1
          %s1155 = scalar_lea.sflag [#allocation3], %s1154
          %s1156 = sand.u32 %s231, 1
          %s1157 = smul.addr %s1156, 8
          %s1158 = scalar_lea.vmem [#allocation2], %s1157
          %1159 = dma.done %s1155, 128
        $region68: #{sr_model_forward.13} parent=63 // pred_fallthru
          _
      $region64: #{sr_model_forward.13} parent=5 // pred_fallthru
        _
    $region6: #{sr_model_forward.13} parent=1 // loop_footer
      %s22 = sadd.s32 1, %s18
    $region7: #{sr_model_forward.13} parent=1 // loop_footer_branch
      %17 = sbr.rel target = $region3
    $region8: #{sr_model_forward.13} parent=1 // loop_exit
      _
    %1160 = vsyncpa [#allocation3], 1
    %s1161 = scalar_lea.sflag [#allocation3], 1
    %1162 = vsyncpa %s1161, 1

// kernel: sr_model_forward.9
$region0: #{sr_model_forward.9}
  #allocation0 [shape = 'u32[]', space=smem, size = 0x4, offset = 0x4, fixed_abs, tag = 'smem constant byte address 0x4 - core index']
  #allocation1 [shape = 'u32[144,128]{1,0:T(1,128)}', space=vmem, size = 0x12000, scoped, tag = 'internal scratch']
  %s0 = inlined_call_operand.vmem [shape: f32[2,48], index: 0, kind: input, shape index: {}]
  %s1 = inlined_call_operand.hbm [shape: bf16[48,300], index: 1, kind: input, shape index: {}]
  %s2 = inlined_call_operand.hbm [shape: f32[1,300], index: 2, kind: input, shape index: {}]
  %s3 = inlined_call_operand.hbm [shape: bf16[300,4816], index: 3, kind: input, shape index: {}]
  %s4 = inlined_call_operand.hbm [shape: f32[1,4816], index: 4, kind: input, shape index: {}]
  %s5 = inlined_call_operand.vmem [shape: f32[2,4816], index: 5, kind: output, shape index: {}]
  %s6 = sld [smem:[#allocation0]]
  $region46: #{sr_model_forward.9} parent=0
    _
  %s8 = ssub.s32 1, %s6
  %s9 = scalar_select 0, %s8, %s6
  $region1: #{sr_model_forward.9} parent=0
    #allocation2 [shape = 'u8[36864]{0}', space=vmem, size = 0x9000, scoped, tag = 'input window, operand 1, single buffered']
    #allocation3 [shape = 's32[1]{0}', space=sflag, size = 0x4, scoped, tag = 'scoped memory for sr_model_forward.9']
    #allocation4 [shape = 'u8[1536]{0}', space=vmem, size = 0x800, scoped, tag = 'input window, operand 2, single buffered']
    #allocation5 [shape = 's32[1]{0}', space=sflag, size = 0x4, scoped, tag = 'scoped memory for sr_model_forward.9']
    #allocation6 [shape = 'u8[2957312]{0}', space=vmem, size = 0x2d2000, scoped, tag = 'input window, operand 3, single buffered']
    #allocation7 [shape = 'u8[19456]{0}', space=vmem, size = 0x4c00, scoped, tag = 'input window, operand 4, single buffered']
    #allocation8 [shape = 's32[1]{0}', space=sflag, size = 0x4, scoped, tag = 'scoped memory for sr_model_forward.9']
    %10 = vsyncpa [#allocation3], 0
    %11 = vsyncpa [#allocation5], 0
    %12 = vsyncpa [#allocation8], 0
    // Predicated region
    $region2: #{sr_model_forward.9} parent=1 // pred_check
      _
    $region3: #{sr_model_forward.9} parent=1 // pred_check_branch
      %14 = sbr.rel (0) target = $region5
    $region4: #{sr_model_forward.9} parent=1 // pred_region
      _
    $region5: #{sr_model_forward.9} parent=1 // pred_fallthru
      _
    // Predicated region
    $region6: #{sr_model_forward.9} parent=1 // pred_check
      _
    $region7: #{sr_model_forward.9} parent=1 // pred_check_branch
      %16 = sbr.rel (0) target = $region9
    $region8: #{sr_model_forward.9} parent=1 // pred_region
      %s18 = ssub.s32 1152, 1152
      %19 = vsyncadd [#allocation3], %s18
      %s20 = sshll.u32 [#allocation2], 4
      %s21 = int_to_ptr.vmem [resolvable:$true] %s20
      %26 = dma.hbm_to_vmem [thread:$0]  %s1, 1152, %s21, [#allocation3], 192, 192, 12
    $region9: #{sr_model_forward.9} parent=1 // pred_fallthru
      _
    // Predicated region
    $region10: #{sr_model_forward.9} parent=1 // pred_check
      _
    $region11: #{sr_model_forward.9} parent=1 // pred_check_branch
      %28 = sbr.rel (0) target = $region13
    $region12: #{sr_model_forward.9} parent=1 // pred_region
      %s30 = ssub.s32 48, 48
      %31 = vsyncadd [#allocation5], %s30
      %s33 = sshll.u32 [#allocation4], 4
      %s34 = int_to_ptr.vmem [resolvable:$true] %s33
      %36 = dma.hbm_to_vmem [thread:$0]  %s2, 48, %s34, [#allocation5]
    $region13: #{sr_model_forward.9} parent=1 // pred_fallthru
      _
    // Predicated region
    $region14: #{sr_model_forward.9} parent=1 // pred_check
      _
    $region15: #{sr_model_forward.9} parent=1 // pred_check_branch
      %38 = sbr.rel (0) target = $region17
    $region16: #{sr_model_forward.9} parent=1 // pred_region
      %s40 = ssub.s32 92416, 92416
      %41 = vsyncadd [#allocation5], %s40
      %s42 = sshll.u32 [#allocation6], 4
      %s43 = int_to_ptr.vmem [resolvable:$true] %s42
      %48 = dma.hbm_to_vmem [thread:$0]  %s3, 92416, %s43, [#allocation5], 2432, 2432, 152
    $region17: #{sr_model_forward.9} parent=1 // pred_fallthru
      _
    // Predicated region
    $region18: #{sr_model_forward.9} parent=1 // pred_check
      _
    $region19: #{sr_model_forward.9} parent=1 // pred_check_branch
      %50 = sbr.rel (0) target = $region21
    $region20: #{sr_model_forward.9} parent=1 // pred_region
      %s52 = ssub.s32 608, 608
      %53 = vsyncadd [#allocation8], %s52
      %s55 = sshll.u32 [#allocation7], 4
      %s56 = int_to_ptr.vmem [resolvable:$true] %s55
      %58 = dma.hbm_to_vmem [thread:$0]  %s4, 608, %s56, [#allocation8]
    $region21: #{sr_model_forward.9} parent=1 // pred_fallthru
      _
    // Predicated region
    $region22: #{sr_model_forward.9} parent=1 // pred_check
      _
    $region23: #{sr_model_forward.9} parent=1 // pred_check_branch
      %60 = sbr.rel (0) target = $region25
    $region24: #{sr_model_forward.9} parent=1 // pred_region
      %61 = dma.done [#allocation3], 1152
    $region25: #{sr_model_forward.9} parent=1 // pred_fallthru
      _
    // Predicated region
    $region26: #{sr_model_forward.9} parent=1 // pred_check
      _
    $region27: #{sr_model_forward.9} parent=1 // pred_check_branch
      %63 = sbr.rel (0) target = $region29
    $region28: #{sr_model_forward.9} parent=1 // pred_region
      %64 = dma.done [#allocation5], 48
    $region29: #{sr_model_forward.9} parent=1 // pred_fallthru
      _
    // Predicated region
    $region30: #{sr_model_forward.9} parent=1 // pred_check
      _
    $region31: #{sr_model_forward.9} parent=1 // pred_check_branch
      %66 = sbr.rel (0) target = $region33
    $region32: #{sr_model_forward.9} parent=1 // pred_region
      %67 = dma.done [#allocation5], 92416
    $region33: #{sr_model_forward.9} parent=1 // pred_fallthru
      _
    // Predicated region
    $region34: #{sr_model_forward.9} parent=1 // pred_check
      _
    $region35: #{sr_model_forward.9} parent=1 // pred_check_branch
      %69 = sbr.rel (0) target = $region37
    $region36: #{sr_model_forward.9} parent=1 // pred_region
      %70 = dma.done [#allocation8], 608
    $region37: #{sr_model_forward.9} parent=1 // pred_fallthru
      _
    %v72 = vld [vmem:[%s0] sm:$0x3]
    %v73 = vpack.c.bf16 %v72, %v72
    %v74 = vld [vmem:[#allocation2] sm:$0xff]
    %v75 = vld [vmem:[#allocation2 + $0x8] sm:$0xf]
    %v76 = vld [vmem:[#allocation2 + $0xc] sm:$0xff]
    %v77 = vld [vmem:[#allocation2 + $0x14] sm:$0xf]
    %v78 = vld [vmem:[#allocation2 + $0x18] sm:$0xff]
    %v79 = vld [vmem:[#allocation2 + $0x20] sm:$0xf]
    %v80 = vld [vmem:[#allocation2 + $0x24] sm:$0xff]
    %v81 = vld [vmem:[#allocation2 + $0x2c] sm:$0xf]
    %v82 = vld [vmem:[#allocation2 + $0x30] sm:$0xff]
    %v83 = vld [vmem:[#allocation2 + $0x38] sm:$0xf]
    %v84 = vld [vmem:[#allocation2 + $0x3c] sm:$0xff]
    %v85 = vld [vmem:[#allocation2 + $0x44] sm:$0xf]
    %v86 = vld [vmem:[#allocation4] sm:$0x7]
    %v88 = vlaneseq
    %v89 = vshrl.u32 %v88, 7
    %v90 = vsub.s32 0, %v89
    %v91 = vrot.slane %v86, %v90
    %v92 = vlaneseq
    %v93 = vshrl.u32 %v92, 7
    %v94 = vsub.s32 1, %v93
    %v95 = vrot.slane %v86, %v94
    %v96 = vlaneseq
    %v97 = vshrl.u32 %v96, 7
    %v98 = vsub.s32 2, %v97
    %v99 = vrot.slane %v86, %v98
    %v115 = vunpack.c.l.b16 %v74
    %v116 = vunpack.c.h.b16 %v74
    %v117 = vunpack.c.l.b16 %v75
    %v118 = vunpack.c.l.b16 %v76
    %v119 = vunpack.c.h.b16 %v76
    %v120 = vunpack.c.l.b16 %v77
    %v121 = vunpack.c.l.b16 %v78
    %v122 = vunpack.c.h.b16 %v78
    %v123 = vunpack.c.l.b16 %v79
    %v124 = vunpack.c.l.b16 %v80
    %v125 = vunpack.c.h.b16 %v80
    %v126 = vunpack.c.l.b16 %v81
    %v127 = vunpack.c.l.b16 %v82
    %v128 = vunpack.c.h.b16 %v82
    %v129 = vunpack.c.l.b16 %v83
    %v130 = vunpack.c.l.b16 %v84
    %v131 = vunpack.c.h.b16 %v84
    %v132 = vunpack.c.l.b16 %v85
    %v133 = vpack.c.b16 %v118, %v115
    %v134 = vpack.c.b16 %v119, %v116
    %v135 = vpack.c.b16 %v120, %v117
    %v136 = vpack.c.b16 %v124, %v121
    %v137 = vpack.c.b16 %v125, %v122
    %v138 = vpack.c.b16 %v126, %v123
    %v139 = vpack.c.b16 %v130, %v127
    %v140 = vpack.c.b16 %v131, %v128
    %v141 = vpack.c.b16 %v132, %v129
    %vm151 = vcmask 392192
    %v153 = vsel %vm151, %v73, 0
    %155 = vmatprep.subr.bf16.mxu0 0
    %156 = vmatpush1.bf16.msra.mxu0 0
    %157 = vmatprep.subr.bf16.mxu0 0
    %158 = vmatpush1.bf16.msra.mxu0 0
    %159 = vmatprep.subr.bf16.mxu0 0
    %160 = vmatpush1.bf16.msra.mxu0 0
    %161 = vmatprep.subr.bf16.mxu0 0
    %162 = vmatpush1.bf16.msra.mxu0 0
    %163 = vmatprep.subr.bf16.mxu0 0
    %164 = vmatpush1.bf16.msra.mxu0 0
    %165 = vmatprep.subr.bf16.mxu0 %v140
    %166 = vmatpush1.bf16.msra.mxu0 %v139
    %167 = vmatprep.subr.bf16.mxu0 %v137
    %168 = vmatpush1.bf16.msra.mxu0 %v136
    %169 = vmatprep.subr.bf16.mxu0 %v134
    %170 = vmatpush1.bf16.msra.mxu0 %v133
    %171 = vmatprep.subr.bf16.mxu0 0
    %172 = vmatpush2.bf16.msra.mxu0 0
    %173 = vmatprep.subr.bf16.mxu0 0
    %174 = vmatpush2.bf16.msra.mxu0 0
    %175 = vmatprep.subr.bf16.mxu0 0
    %176 = vmatpush2.bf16.msra.mxu0 0
    %177 = vmatprep.subr.bf16.mxu0 0
    %178 = vmatpush2.bf16.msra.mxu0 0
    %179 = vmatprep.subr.bf16.mxu0 0
    %180 = vmatpush2.bf16.msra.mxu0 0
    %181 = vmatprep.subr.bf16.mxu0 0
    %182 = vmatpush2.bf16.msra.mxu0 0
    %183 = vmatprep.subr.bf16.mxu0 0
    %184 = vmatpush2.bf16.msra.mxu0 0
    %185 = vmatprep.subr.bf16.mxu0 0
    %186 = vmatpush2.bf16.msra.mxu0 0
    %187 = vmatprep.mubr.bf16.mxu0 0
    %188 = vmatmul.mubr.bf16.gmra.mxu0 %v153
    %v189 = vpop.f32.mrf.mxu0
    %v190 = vadd.f32 %v91, %v189
    %v191 = vpop.f32.mrf.mxu0
    %v192 = vadd.f32 %v95, %v191
    %v193 = vpop.f32.mrf.mxu0
    %v194 = vpop.f32.mrf.mxu0
    %195 = vdwg.mxu0
    %196 = vmatprep.subr.bf16.mxu0 0
    %197 = vmatpush1.bf16.msra.mxu0 0
    %198 = vmatprep.subr.bf16.mxu0 0
    %199 = vmatpush1.bf16.msra.mxu0 0
    %200 = vmatprep.subr.bf16.mxu0 0
    %201 = vmatpush1.bf16.msra.mxu0 0
    %202 = vmatprep.subr.bf16.mxu0 0
    %203 = vmatpush1.bf16.msra.mxu0 0
    %204 = vmatprep.subr.bf16.mxu0 0
    %205 = vmatpush1.bf16.msra.mxu0 0
    %206 = vmatprep.subr.bf16.mxu0 0
    %207 = vmatpush1.bf16.msra.mxu0 %v141
    %208 = vmatprep.subr.bf16.mxu0 0
    %209 = vmatpush1.bf16.msra.mxu0 %v138
    %210 = vmatprep.subr.bf16.mxu0 0
    %211 = vmatpush1.bf16.msra.mxu0 %v135
    %212 = vmatprep.subr.bf16.mxu0 0
    %213 = vmatpush2.bf16.msra.mxu0 0
    %214 = vmatprep.subr.bf16.mxu0 0
    %215 = vmatpush2.bf16.msra.mxu0 0
    %216 = vmatprep.subr.bf16.mxu0 0
    %217 = vmatpush2.bf16.msra.mxu0 0
    %218 = vmatprep.subr.bf16.mxu0 0
    %219 = vmatpush2.bf16.msra.mxu0 0
    %220 = vmatprep.subr.bf16.mxu0 0
    %221 = vmatpush2.bf16.msra.mxu0 0
    %222 = vmatprep.subr.bf16.mxu0 0
    %223 = vmatpush2.bf16.msra.mxu0 0
    %224 = vmatprep.subr.bf16.mxu0 0
    %225 = vmatpush2.bf16.msra.mxu0 0
    %226 = vmatprep.subr.bf16.mxu0 0
    %227 = vmatpush2.bf16.msra.mxu0 0
    %228 = vmatprep.mubr.bf16.mxu0 0
    %229 = vmatmul.mubr.bf16.gmra.mxu0 %v153
    %v230 = vpop.f32.mrf.mxu0
    %v231 = vadd.f32 %v99, %v230
    %v232 = vpop.f32.mrf.mxu0
    %v233 = vpop.f32.mrf.mxu0
    %v234 = vpop.f32.mrf.mxu0
    %235 = vdwg.mxu0
    %v236 = vmax.f32 %v190, 0.0
    %v237 = vmax.f32 %v192, 0.0
    %v238 = vmax.f32 %v231, 0.0
    %v239 = vpack.c.bf16 %v236, %v236
    %v240 = vpack.c.bf16 %v237, %v237
    %v241 = vpack.c.bf16 %v238, %v238
    %v242 = vld [vmem:[#allocation6] sm:$0xff]
    %v243 = vld [vmem:[#allocation6 + $0x8] sm:$0xff]
    %v244 = vld [vmem:[#allocation6 + $0x10] sm:$0xff]
    %v245 = vld [vmem:[#allocation6 + $0x18] sm:$0xff]
    %v246 = vld [vmem:[#allocation6 + $0x20] sm:$0xff]
    %v247 = vld [vmem:[#allocation6 + $0x28] sm:$0xff]
    %v248 = vld [vmem:[#allocation6 + $0x30] sm:$0xff]
    %v249 = vld [vmem:[#allocation6 + $0x38] sm:$0xff]
    %v250 = vld [vmem:[#allocation6 + $0x40] sm:$0xff]
    %v251 = vld [vmem:[#allocation6 + $0x48] sm:$0xff]
    %v252 = vld [vmem:[#allocation6 + $0x50] sm:$0xff]
    %v253 = vld [vmem:[#allocation6 + $0x58] sm:$0xff]
    %v254 = vld [vmem:[#allocation6 + $0x60] sm:$0xff]
    %v255 = vld [vmem:[#allocation6 + $0x68] sm:$0xff]
    %v256 = vld [vmem:[#allocation6 + $0x70] sm:$0xff]
    %v257 = vld [vmem:[#allocation6 + $0x78] sm:$0xff]
    %v258 = vld [vmem:[#allocation6 + $0x80] sm:$0xff]
    %v259 = vld [vmem:[#allocation6 + $0x88] sm:$0xff]
    %v260 = vld [vmem:[#allocation6 + $0x90] sm:$0xff]
    %v261 = vld [vmem:[#allocation6 + $0x98] sm:$0xff]
    %v262 = vld [vmem:[#allocation6 + $0xa0] sm:$0xff]
    %v263 = vld [vmem:[#allocation6 + $0xa8] sm:$0xff]
    %v264 = vld [vmem:[#allocation6 + $0xb0] sm:$0xff]
    %v265 = vld [vmem:[#allocation6 + $0xb8] sm:$0xff]
    %v266 = vld [vmem:[#allocation6 + $0xc0] sm:$0xff]
    %v267 = vld [vmem:[#allocation6 + $0xc8] sm:$0xff]
    %v268 = vld [vmem:[#allocation6 + $0xd0] sm:$0xff]
    %v269 = vld [vmem:[#allocation6 + $0xd8] sm:$0xff]
    %v270 = vld [vmem:[#allocation6 + $0xe0] sm:$0xff]
    %v271 = vld [vmem:[#allocation6 + $0xe8] sm:$0xff]
    %v272 = vld [vmem:[#allocation6 + $0xf0] sm:$0xff]
    %v273 = vld [vmem:[#allocation6 + $0xf8] sm:$0xff]
    %v274 = vld [vmem:[#allocation6 + $0x100] sm:$0xff]
    %v275 = vld [vmem:[#allocation6 + $0x108] sm:$0xff]
    %v276 = vld [vmem:[#allocation6 + $0x110] sm:$0xff]
    %v277 = vld [vmem:[#allocation6 + $0x118] sm:$0xff]
    %v278 = vld [vmem:[#allocation6 + $0x120] sm:$0xff]
    %v279 = vld [vmem:[#allocation6 + $0x128] sm:$0xff]
    %v280 = vld [vmem:[#allocation6 + $0x130] sm:$0xff]
    %v281 = vld [vmem:[#allocation6 + $0x138] sm:$0xff]
    %v282 = vld [vmem:[#allocation6 + $0x140] sm:$0xff]
    %v283 = vld [vmem:[#allocation6 + $0x148] sm:$0xff]
    %v284 = vld [vmem:[#allocation6 + $0x150] sm:$0xff]
    %v285 = vld [vmem:[#allocation6 + $0x158] sm:$0xff]
    %v286 = vld [vmem:[#allocation6 + $0x160] sm:$0xff]
    %v287 = vld [vmem:[#allocation6 + $0x168] sm:$0xff]
    %v288 = vld [vmem:[#allocation6 + $0x170] sm:$0xff]
    %v289 = vld [vmem:[#allocation6 + $0x178] sm:$0xff]
    %v290 = vld [vmem:[#allocation6 + $0x180] sm:$0xff]
    %v291 = vld [vmem:[#allocation6 + $0x188] sm:$0xff]
    %v292 = vld [vmem:[#allocation6 + $0x190] sm:$0xff]
    %v293 = vld [vmem:[#allocation6 + $0x198] sm:$0xff]
    %v294 = vld [vmem:[#allocation6 + $0x1a0] sm:$0xff]
    %v295 = vld [vmem:[#allocation6 + $0x1a8] sm:$0xff]
    %v296 = vld [vmem:[#allocation6 + $0x1b0] sm:$0xff]
    %v297 = vld [vmem:[#allocation6 + $0x1b8] sm:$0xff]
    %v298 = vld [vmem:[#allocation6 + $0x1c0] sm:$0xff]
    %v299 = vld [vmem:[#allocation6 + $0x1c8] sm:$0xff]
    %v300 = vld [vmem:[#allocation6 + $0x1d0] sm:$0xff]
    %v301 = vld [vmem:[#allocation6 + $0x1d8] sm:$0xff]
    %v302 = vld [vmem:[#allocation6 + $0x1e0] sm:$0xff]
    %v303 = vld [vmem:[#allocation6 + $0x1e8] sm:$0xff]
    %v304 = vld [vmem:[#allocation6 + $0x1f0] sm:$0xff]
    %v305 = vld [vmem:[#allocation6 + $0x1f8] sm:$0xff]
    %v306 = vld [vmem:[#allocation6 + $0x200] sm:$0xff]
    %v307 = vld [vmem:[#allocation6 + $0x208] sm:$0xff]
    %v308 = vld [vmem:[#allocation6 + $0x210] sm:$0xff]
    %v309 = vld [vmem:[#allocation6 + $0x218] sm:$0xff]
    %v310 = vld [vmem:[#allocation6 + $0x220] sm:$0xff]
    %v311 = vld [vmem:[#allocation6 + $0x228] sm:$0xff]
    %v312 = vld [vmem:[#allocation6 + $0x230] sm:$0xff]
    %v313 = vld [vmem:[#allocation6 + $0x238] sm:$0xff]
    %v314 = vld [vmem:[#allocation6 + $0x240] sm:$0xff]
    %v315 = vld [vmem:[#allocation6 + $0x248] sm:$0xff]
    %v316 = vld [vmem:[#allocation6 + $0x250] sm:$0xff]
    %v317 = vld [vmem:[#allocation6 + $0x258] sm:$0xff]
    %v318 = vld [vmem:[#allocation6 + $0x260] sm:$0xff]
    %v319 = vld [vmem:[#allocation6 + $0x268] sm:$0xff]
    %v320 = vld [vmem:[#allocation6 + $0x270] sm:$0xff]
    %v321 = vld [vmem:[#allocation6 + $0x278] sm:$0xff]
    %v322 = vld [vmem:[#allocation6 + $0x280] sm:$0xff]
    %v323 = vld [vmem:[#allocation6 + $0x288] sm:$0xff]
    %v324 = vld [vmem:[#allocation6 + $0x290] sm:$0xff]
    %v325 = vld [vmem:[#allocation6 + $0x298] sm:$0xff]
    %v326 = vld [vmem:[#allocation6 + $0x2a0] sm:$0xff]
    %v327 = vld [vmem:[#allocation6 + $0x2a8] sm:$0xff]
    %v328 = vld [vmem:[#allocation6 + $0x2b0] sm:$0xff]
    %v329 = vld [vmem:[#allocation6 + $0x2b8] sm:$0xff]
    %v330 = vld [vmem:[#allocation6 + $0x2c0] sm:$0xff]
    %v331 = vld [vmem:[#allocation6 + $0x2c8] sm:$0xff]
    %v332 = vld [vmem:[#allocation6 + $0x2d0] sm:$0xff]
    %v333 = vld [vmem:[#allocation6 + $0x2d8] sm:$0xff]
    %v334 = vld [vmem:[#allocation6 + $0x2e0] sm:$0xff]
    %v335 = vld [vmem:[#allocation6 + $0x2e8] sm:$0xff]
    %v336 = vld [vmem:[#allocation6 + $0x2f0] sm:$0xff]
    %v337 = vld [vmem:[#allocation6 + $0x2f8] sm:$0xff]
    %v338 = vld [vmem:[#allocation6 + $0x300] sm:$0xff]
    %v339 = vld [vmem:[#allocation6 + $0x308] sm:$0xff]
    %v340 = vld [vmem:[#allocation6 + $0x310] sm:$0xff]
    %v341 = vld [vmem:[#allocation6 + $0x318] sm:$0xff]
    %v342 = vld [vmem:[#allocation6 + $0x320] sm:$0xff]
    %v343 = vld [vmem:[#allocation6 + $0x328] sm:$0xff]
    %v344 = vld [vmem:[#allocation6 + $0x330] sm:$0xff]
    %v345 = vld [vmem:[#allocation6 + $0x338] sm:$0xff]
    %v346 = vld [vmem:[#allocation6 + $0x340] sm:$0xff]
    %v347 = vld [vmem:[#allocation6 + $0x348] sm:$0xff]
    %v348 = vld [vmem:[#allocation6 + $0x350] sm:$0xff]
    %v349 = vld [vmem:[#allocation6 + $0x358] sm:$0xff]
    %v350 = vld [vmem:[#allocation6 + $0x360] sm:$0xff]
    %v351 = vld [vmem:[#allocation6 + $0x368] sm:$0xff]
    %v352 = vld [vmem:[#allocation6 + $0x370] sm:$0xff]
    %v353 = vld [vmem:[#allocation6 + $0x378] sm:$0xff]
    %v354 = vld [vmem:[#allocation6 + $0x380] sm:$0xff]
    %v355 = vld [vmem:[#allocation6 + $0x388] sm:$0xff]
    %v356 = vld [vmem:[#allocation6 + $0x390] sm:$0xff]
    %v357 = vld [vmem:[#allocation6 + $0x398] sm:$0xff]
    %v358 = vld [vmem:[#allocation6 + $0x3a0] sm:$0xff]
    %v359 = vld [vmem:[#allocation6 + $0x3a8] sm:$0xff]
    %v360 = vld [vmem:[#allocation6 + $0x3b0] sm:$0xff]
    %v361 = vld [vmem:[#allocation6 + $0x3b8] sm:$0xff]
    %v362 = vld [vmem:[#allocation6 + $0x3c0] sm:$0xff]
    %v363 = vld [vmem:[#allocation6 + $0x3c8] sm:$0xff]
    %v364 = vld [vmem:[#allocation6 + $0x3d0] sm:$0xff]
    %v365 = vld [vmem:[#allocation6 + $0x3d8] sm:$0xff]
    %v366 = vld [vmem:[#allocation6 + $0x3e0] sm:$0xff]
    %v367 = vld [vmem:[#allocation6 + $0x3e8] sm:$0xff]
    %v368 = vld [vmem:[#allocation6 + $0x3f0] sm:$0xff]
    %v369 = vld [vmem:[#allocation6 + $0x3f8] sm:$0xff]
    %v370 = vld [vmem:[#allocation6 + $0x400] sm:$0xff]
    %v371 = vld [vmem:[#allocation6 + $0x408] sm:$0xff]
    %v372 = vld [vmem:[#allocation6 + $0x410] sm:$0xff]
    %v373 = vld [vmem:[#allocation6 + $0x418] sm:$0xff]
    %v374 = vld [vmem:[#allocation6 + $0x420] sm:$0xff]
    %v375 = vld [vmem:[#allocation6 + $0x428] sm:$0xff]
    %v376 = vld [vmem:[#allocation6 + $0x430] sm:$0xff]
    %v377 = vld [vmem:[#allocation6 + $0x438] sm:$0xff]
    %v378 = vld [vmem:[#allocation6 + $0x440] sm:$0xff]
    %v379 = vld [vmem:[#allocation6 + $0x448] sm:$0xff]
    %v380 = vld [vmem:[#allocation6 + $0x450] sm:$0xff]
    %v381 = vld [vmem:[#allocation6 + $0x458] sm:$0xff]
    %v382 = vld [vmem:[#allocation6 + $0x460] sm:$0xff]
    %v383 = vld [vmem:[#allocation6 + $0x468] sm:$0xff]
    %v384 = vld [vmem:[#allocation6 + $0x470] sm:$0xff]
    %v385 = vld [vmem:[#allocation6 + $0x478] sm:$0xff]
    %v386 = vld [vmem:[#allocation6 + $0x480] sm:$0xff]
    %v387 = vld [vmem:[#allocation6 + $0x488] sm:$0xff]
    %v388 = vld [vmem:[#allocation6 + $0x490] sm:$0xff]
    %v389 = vld [vmem:[#allocation6 + $0x498] sm:$0xff]
    %v390 = vld [vmem:[#allocation6 + $0x4a0] sm:$0xff]
    %v391 = vld [vmem:[#allocation6 + $0x4a8] sm:$0xff]
    %v392 = vld [vmem:[#allocation6 + $0x4b0] sm:$0xff]
    %v393 = vld [vmem:[#allocation6 + $0x4b8] sm:$0xff]
    %v394 = vld [vmem:[#allocation6 + $0x4c0] sm:$0xff]
    %v395 = vld [vmem:[#allocation6 + $0x4c8] sm:$0xff]
    %v396 = vld [vmem:[#allocation6 + $0x4d0] sm:$0xff]
    %v397 = vld [vmem:[#allocation6 + $0x4d8] sm:$0xff]
    %v398 = vld [vmem:[#allocation6 + $0x4e0] sm:$0xff]
    %v399 = vld [vmem:[#allocation6 + $0x4e8] sm:$0xff]
    %v400 = vld [vmem:[#allocation6 + $0x4f0] sm:$0xff]
    %v401 = vld [vmem:[#allocation6 + $0x4f8] sm:$0xff]
    %v402 = vld [vmem:[#allocation6 + $0x500] sm:$0xff]
    %v403 = vld [vmem:[#allocation6 + $0x508] sm:$0xff]
    %v404 = vld [vmem:[#allocation6 + $0x510] sm:$0xff]
    %v405 = vld [vmem:[#allocation6 + $0x518] sm:$0xff]
    %v406 = vld [vmem:[#allocation6 + $0x520] sm:$0xff]
    %v407 = vld [vmem:[#allocation6 + $0x528] sm:$0xff]
    %v408 = vld [vmem:[#allocation6 + $0x530] sm:$0xff]
    %v409 = vld [vmem:[#allocation6 + $0x538] sm:$0xff]
    %v410 = vld [vmem:[#allocation6 + $0x540] sm:$0xff]
    %v411 = vld [vmem:[#allocation6 + $0x548] sm:$0xff]
    %v412 = vld [vmem:[#allocation6 + $0x550] sm:$0xff]
    %v413 = vld [vmem:[#allocation6 + $0x558] sm:$0xff]
    %v414 = vld [vmem:[#allocation6 + $0x560] sm:$0xff]
    %v415 = vld [vmem:[#allocation6 + $0x568] sm:$0xff]
    %v416 = vld [vmem:[#allocation6 + $0x570] sm:$0xff]
    %v417 = vld [vmem:[#allocation6 + $0x578] sm:$0xff]
    %v418 = vld [vmem:[#allocation6 + $0x580] sm:$0xff]
    %v419 = vld [vmem:[#allocation6 + $0x588] sm:$0xff]
    %v420 = vld [vmem:[#allocation6 + $0x590] sm:$0xff]
    %v421 = vld [vmem:[#allocation6 + $0x598] sm:$0xff]
    %v422 = vld [vmem:[#allocation6 + $0x5a0] sm:$0xff]
    %v423 = vld [vmem:[#allocation6 + $0x5a8] sm:$0xff]
    %v424 = vld [vmem:[#allocation6 + $0x5b0] sm:$0xff]
    %v425 = vld [vmem:[#allocation6 + $0x5b8] sm:$0xff]
    %v426 = vld [vmem:[#allocation6 + $0x5c0] sm:$0xff]
    %v427 = vld [vmem:[#allocation6 + $0x5c8] sm:$0xff]
    %v428 = vld [vmem:[#allocation6 + $0x5d0] sm:$0xff]
    %v429 = vld [vmem:[#allocation6 + $0x5d8] sm:$0xff]
    %v430 = vld [vmem:[#allocation6 + $0x5e0] sm:$0xff]
    %v431 = vld [vmem:[#allocation6 + $0x5e8] sm:$0xff]
    %v432 = vld [vmem:[#allocation6 + $0x5f0] sm:$0xff]
    %v433 = vld [vmem:[#allocation6 + $0x5f8] sm:$0xff]
    %v434 = vld [vmem:[#allocation6 + $0x600] sm:$0xff]
    %v435 = vld [vmem:[#allocation6 + $0x608] sm:$0xff]
    %v436 = vld [vmem:[#allocation6 + $0x610] sm:$0xff]
    %v437 = vld [vmem:[#allocation6 + $0x618] sm:$0xff]
    %v438 = vld [vmem:[#allocation6 + $0x620] sm:$0xff]
    %v439 = vld [vmem:[#allocation6 + $0x628] sm:$0xff]
    %v440 = vld [vmem:[#allocation6 + $0x630] sm:$0xff]
    %v441 = vld [vmem:[#allocation6 + $0x638] sm:$0xff]
    %v442 = vld [vmem:[#allocation6 + $0x640] sm:$0xff]
    %v443 = vld [vmem:[#allocation6 + $0x648] sm:$0xff]
    %v444 = vld [vmem:[#allocation6 + $0x650] sm:$0xff]
    %v445 = vld [vmem:[#allocation6 + $0x658] sm:$0xff]
    %v446 = vld [vmem:[#allocation6 + $0x660] sm:$0xff]
    %v447 = vld [vmem:[#allocation6 + $0x668] sm:$0xff]
    %v448 = vld [vmem:[#allocation6 + $0x670] sm:$0xff]
    %v449 = vld [vmem:[#allocation6 + $0x678] sm:$0xff]
    %v450 = vld [vmem:[#allocation6 + $0x680] sm:$0xff]
    %v451 = vld [vmem:[#allocation6 + $0x688] sm:$0xff]
    %v452 = vld [vmem:[#allocation6 + $0x690] sm:$0xff]
    %v453 = vld [vmem:[#allocation6 + $0x698] sm:$0xff]
    %v454 = vld [vmem:[#allocation6 + $0x6a0] sm:$0xff]
    %v455 = vld [vmem:[#allocation6 + $0x6a8] sm:$0xff]
    %v456 = vld [vmem:[#allocation6 + $0x6b0] sm:$0xff]
    %v457 = vld [vmem:[#allocation6 + $0x6b8] sm:$0xff]
    %v458 = vld [vmem:[#allocation6 + $0x6c0] sm:$0xff]
    %v459 = vld [vmem:[#allocation6 + $0x6c8] sm:$0xff]
    %v460 = vld [vmem:[#allocation6 + $0x6d0] sm:$0xff]
    %v461 = vld [vmem:[#allocation6 + $0x6d8] sm:$0xff]
    %v462 = vld [vmem:[#allocation6 + $0x6e0] sm:$0xff]
    %v463 = vld [vmem:[#allocation6 + $0x6e8] sm:$0xff]
    %v464 = vld [vmem:[#allocation6 + $0x6f0] sm:$0xff]
    %v465 = vld [vmem:[#allocation6 + $0x6f8] sm:$0xff]
    %v466 = vld [vmem:[#allocation6 + $0x700] sm:$0xff]
    %v467 = vld [vmem:[#allocation6 + $0x708] sm:$0xff]
    %v468 = vld [vmem:[#allocation6 + $0x710] sm:$0xff]
    %v469 = vld [vmem:[#allocation6 + $0x718] sm:$0xff]
    %v470 = vld [vmem:[#allocation6 + $0x720] sm:$0xff]
    %v471 = vld [vmem:[#allocation6 + $0x728] sm:$0xff]
    %v472 = vld [vmem:[#allocation6 + $0x730] sm:$0xff]
    %v473 = vld [vmem:[#allocation6 + $0x738] sm:$0xff]
    %v474 = vld [vmem:[#allocation6 + $0x740] sm:$0xff]
    %v475 = vld [vmem:[#allocation6 + $0x748] sm:$0xff]
    %v476 = vld [vmem:[#allocation6 + $0x750] sm:$0xff]
    %v477 = vld [vmem:[#allocation6 + $0x758] sm:$0xff]
    %v478 = vld [vmem:[#allocation6 + $0x760] sm:$0xff]
    %v479 = vld [vmem:[#allocation6 + $0x768] sm:$0xff]
    %v480 = vld [vmem:[#allocation6 + $0x770] sm:$0xff]
    %v481 = vld [vmem:[#allocation6 + $0x778] sm:$0xff]
    %v482 = vld [vmem:[#allocation6 + $0x780] sm:$0xff]
    %v483 = vld [vmem:[#allocation6 + $0x788] sm:$0xff]
    %v484 = vld [vmem:[#allocation6 + $0x790] sm:$0xff]
    %v485 = vld [vmem:[#allocation6 + $0x798] sm:$0xff]
    %v486 = vld [vmem:[#allocation6 + $0x7a0] sm:$0xff]
    %v487 = vld [vmem:[#allocation6 + $0x7a8] sm:$0xff]
    %v488 = vld [vmem:[#allocation6 + $0x7b0] sm:$0xff]
    %v489 = vld [vmem:[#allocation6 + $0x7b8] sm:$0xff]
    %v490 = vld [vmem:[#allocation6 + $0x7c0] sm:$0xff]
    %v491 = vld [vmem:[#allocation6 + $0x7c8] sm:$0xff]
    %v492 = vld [vmem:[#allocation6 + $0x7d0] sm:$0xff]
    %v493 = vld [vmem:[#allocation6 + $0x7d8] sm:$0xff]
    %v494 = vld [vmem:[#allocation6 + $0x7e0] sm:$0xff]
    %v495 = vld [vmem:[#allocation6 + $0x7e8] sm:$0xff]
    %v496 = vld [vmem:[#allocation6 + $0x7f0] sm:$0xff]
    %v497 = vld [vmem:[#allocation6 + $0x7f8] sm:$0xff]
    %v498 = vld [vmem:[#allocation6 + $0x800] sm:$0xff]
    %v499 = vld [vmem:[#allocation6 + $0x808] sm:$0xff]
    %v500 = vld [vmem:[#allocation6 + $0x810] sm:$0xff]
    %v501 = vld [vmem:[#allocation6 + $0x818] sm:$0xff]
    %v502 = vld [vmem:[#allocation6 + $0x820] sm:$0xff]
    %v503 = vld [vmem:[#allocation6 + $0x828] sm:$0xff]
    %v504 = vld [vmem:[#allocation6 + $0x830] sm:$0xff]
    %v505 = vld [vmem:[#allocation6 + $0x838] sm:$0xff]
    %v506 = vld [vmem:[#allocation6 + $0x840] sm:$0xff]
    %v507 = vld [vmem:[#allocation6 + $0x848] sm:$0xff]
    %v508 = vld [vmem:[#allocation6 + $0x850] sm:$0xff]
    %v509 = vld [vmem:[#allocation6 + $0x858] sm:$0xff]
    %v510 = vld [vmem:[#allocation6 + $0x860] sm:$0xff]
    %v511 = vld [vmem:[#allocation6 + $0x868] sm:$0xff]
    %v512 = vld [vmem:[#allocation6 + $0x870] sm:$0xff]
    %v513 = vld [vmem:[#allocation6 + $0x878] sm:$0xff]
    %v514 = vld [vmem:[#allocation6 + $0x880] sm:$0xff]
    %v515 = vld [vmem:[#allocation6 + $0x888] sm:$0xff]
    %v516 = vld [vmem:[#allocation6 + $0x890] sm:$0xff]
    %v517 = vld [vmem:[#allocation6 + $0x898] sm:$0xff]
    %v518 = vld [vmem:[#allocation6 + $0x8a0] sm:$0xff]
    %v519 = vld [vmem:[#allocation6 + $0x8a8] sm:$0xff]
    %v520 = vld [vmem:[#allocation6 + $0x8b0] sm:$0xff]
    %v521 = vld [vmem:[#allocation6 + $0x8b8] sm:$0xff]
    %v522 = vld [vmem:[#allocation6 + $0x8c0] sm:$0xff]
    %v523 = vld [vmem:[#allocation6 + $0x8c8] sm:$0xff]
    %v524 = vld [vmem:[#allocation6 + $0x8d0] sm:$0xff]
    %v525 = vld [vmem:[#allocation6 + $0x8d8] sm:$0xff]
    %v526 = vld [vmem:[#allocation6 + $0x8e0] sm:$0xff]
    %v527 = vld [vmem:[#allocation6 + $0x8e8] sm:$0xff]
    %v528 = vld [vmem:[#allocation6 + $0x8f0] sm:$0xff]
    %v529 = vld [vmem:[#allocation6 + $0x8f8] sm:$0xff]
    %v530 = vld [vmem:[#allocation6 + $0x900] sm:$0xff]
    %v531 = vld [vmem:[#allocation6 + $0x908] sm:$0xff]
    %v532 = vld [vmem:[#allocation6 + $0x910] sm:$0xff]
    %v533 = vld [vmem:[#allocation6 + $0x918] sm:$0xff]
    %v534 = vld [vmem:[#allocation6 + $0x920] sm:$0xff]
    %v535 = vld [vmem:[#allocation6 + $0x928] sm:$0xff]
    %v536 = vld [vmem:[#allocation6 + $0x930] sm:$0xff]
    %v537 = vld [vmem:[#allocation6 + $0x938] sm:$0xff]
    %v538 = vld [vmem:[#allocation6 + $0x940] sm:$0xff]
    %v539 = vld [vmem:[#allocation6 + $0x948] sm:$0xff]
    %v540 = vld [vmem:[#allocation6 + $0x950] sm:$0xff]
    %v541 = vld [vmem:[#allocation6 + $0x958] sm:$0xff]
    %v542 = vld [vmem:[#allocation6 + $0x960] sm:$0xff]
    %v543 = vld [vmem:[#allocation6 + $0x968] sm:$0xff]
    %v544 = vld [vmem:[#allocation6 + $0x970] sm:$0xff]
    %v545 = vld [vmem:[#allocation6 + $0x978] sm:$0xff]
    %v546 = vld [vmem:[#allocation6 + $0x980] sm:$0xff]
    %v547 = vld [vmem:[#allocation6 + $0x988] sm:$0xff]
    %v548 = vld [vmem:[#allocation6 + $0x990] sm:$0xff]
    %v549 = vld [vmem:[#allocation6 + $0x998] sm:$0xff]
    %v550 = vld [vmem:[#allocation6 + $0x9a0] sm:$0xff]
    %v551 = vld [vmem:[#allocation6 + $0x9a8] sm:$0xff]
    %v552 = vld [vmem:[#allocation6 + $0x9b0] sm:$0xff]
    %v553 = vld [vmem:[#allocation6 + $0x9b8] sm:$0xff]
    %v554 = vld [vmem:[#allocation6 + $0x9c0] sm:$0xff]
    %v555 = vld [vmem:[#allocation6 + $0x9c8] sm:$0xff]
    %v556 = vld [vmem:[#allocation6 + $0x9d0] sm:$0xff]
    %v557 = vld [vmem:[#allocation6 + $0x9d8] sm:$0xff]
    %v558 = vld [vmem:[#allocation6 + $0x9e0] sm:$0xff]
    %v559 = vld [vmem:[#allocation6 + $0x9e8] sm:$0xff]
    %v560 = vld [vmem:[#allocation6 + $0x9f0] sm:$0xff]
    %v561 = vld [vmem:[#allocation6 + $0x9f8] sm:$0xff]
    %v562 = vld [vmem:[#allocation6 + $0xa00] sm:$0xff]
    %v563 = vld [vmem:[#allocation6 + $0xa08] sm:$0xff]
    %v564 = vld [vmem:[#allocation6 + $0xa10] sm:$0xff]
    %v565 = vld [vmem:[#allocation6 + $0xa18] sm:$0xff]
    %v566 = vld [vmem:[#allocation6 + $0xa20] sm:$0xff]
    %v567 = vld [vmem:[#allocation6 + $0xa28] sm:$0xff]
    %v568 = vld [vmem:[#allocation6 + $0xa30] sm:$0xff]
    %v569 = vld [vmem:[#allocation6 + $0xa38] sm:$0xff]
    %v570 = vld [vmem:[#allocation6 + $0xa40] sm:$0xff]
    %v571 = vld [vmem:[#allocation6 + $0xa48] sm:$0xff]
    %v572 = vld [vmem:[#allocation6 + $0xa50] sm:$0xff]
    %v573 = vld [vmem:[#allocation6 + $0xa58] sm:$0xff]
    %v574 = vld [vmem:[#allocation6 + $0xa60] sm:$0xff]
    %v575 = vld [vmem:[#allocation6 + $0xa68] sm:$0xff]
    %v576 = vld [vmem:[#allocation6 + $0xa70] sm:$0xff]
    %v577 = vld [vmem:[#allocation6 + $0xa78] sm:$0xff]
    %v578 = vld [vmem:[#allocation6 + $0xa80] sm:$0xff]
    %v579 = vld [vmem:[#allocation6 + $0xa88] sm:$0xff]
    %v580 = vld [vmem:[#allocation6 + $0xa90] sm:$0xff]
    %v581 = vld [vmem:[#allocation6 + $0xa98] sm:$0xff]
    %v582 = vld [vmem:[#allocation6 + $0xaa0] sm:$0xff]
    %v583 = vld [vmem:[#allocation6 + $0xaa8] sm:$0xff]
    %v584 = vld [vmem:[#allocation6 + $0xab0] sm:$0xff]
    %v585 = vld [vmem:[#allocation6 + $0xab8] sm:$0xff]
    %v586 = vld [vmem:[#allocation6 + $0xac0] sm:$0xff]
    %v587 = vld [vmem:[#allocation6 + $0xac8] sm:$0xff]
    %v588 = vld [vmem:[#allocation6 + $0xad0] sm:$0xff]
    %v589 = vld [vmem:[#allocation6 + $0xad8] sm:$0xff]
    %v590 = vld [vmem:[#allocation6 + $0xae0] sm:$0xff]
    %v591 = vld [vmem:[#allocation6 + $0xae8] sm:$0xff]
    %v592 = vld [vmem:[#allocation6 + $0xaf0] sm:$0xff]
    %v593 = vld [vmem:[#allocation6 + $0xaf8] sm:$0xff]
    %v594 = vld [vmem:[#allocation6 + $0xb00] sm:$0xff]
    %v595 = vld [vmem:[#allocation6 + $0xb08] sm:$0xff]
    %v596 = vld [vmem:[#allocation6 + $0xb10] sm:$0xff]
    %v597 = vld [vmem:[#allocation6 + $0xb18] sm:$0xff]
    %v598 = vld [vmem:[#allocation6 + $0xb20] sm:$0xff]
    %v599 = vld [vmem:[#allocation6 + $0xb28] sm:$0xff]
    %v600 = vld [vmem:[#allocation6 + $0xb30] sm:$0xff]
    %v601 = vld [vmem:[#allocation6 + $0xb38] sm:$0xff]
    %v602 = vld [vmem:[#allocation6 + $0xb40] sm:$0xff]
    %v603 = vld [vmem:[#allocation6 + $0xb48] sm:$0xff]
    %v604 = vld [vmem:[#allocation6 + $0xb50] sm:$0xff]
    %v605 = vld [vmem:[#allocation6 + $0xb58] sm:$0xff]
    %v606 = vld [vmem:[#allocation6 + $0xb60] sm:$0xff]
    %v607 = vld [vmem:[#allocation6 + $0xb68] sm:$0xff]
    %v608 = vld [vmem:[#allocation6 + $0xb70] sm:$0xff]
    %v609 = vld [vmem:[#allocation6 + $0xb78] sm:$0xff]
    %v610 = vld [vmem:[#allocation6 + $0xb80] sm:$0xff]
    %v611 = vld [vmem:[#allocation6 + $0xb88] sm:$0xff]
    %v612 = vld [vmem:[#allocation6 + $0xb90] sm:$0xff]
    %v613 = vld [vmem:[#allocation6 + $0xb98] sm:$0xff]
    %v614 = vld [vmem:[#allocation6 + $0xba0] sm:$0xff]
    %v615 = vld [vmem:[#allocation6 + $0xba8] sm:$0xff]
    %v616 = vld [vmem:[#allocation6 + $0xbb0] sm:$0xff]
    %v617 = vld [vmem:[#allocation6 + $0xbb8] sm:$0xff]
    %v618 = vld [vmem:[#allocation6 + $0xbc0] sm:$0xff]
    %v619 = vld [vmem:[#allocation6 + $0xbc8] sm:$0xff]
    %v620 = vld [vmem:[#allocation6 + $0xbd0] sm:$0xff]
    %v621 = vld [vmem:[#allocation6 + $0xbd8] sm:$0xff]
    %v622 = vld [vmem:[#allocation6 + $0xbe0] sm:$0xff]
    %v623 = vld [vmem:[#allocation6 + $0xbe8] sm:$0xff]
    %v624 = vld [vmem:[#allocation6 + $0xbf0] sm:$0xff]
    %v625 = vld [vmem:[#allocation6 + $0xbf8] sm:$0xff]
    %v626 = vld [vmem:[#allocation6 + $0xc00] sm:$0xff]
    %v627 = vld [vmem:[#allocation6 + $0xc08] sm:$0xff]
    %v628 = vld [vmem:[#allocation6 + $0xc10] sm:$0xff]
    %v629 = vld [vmem:[#allocation6 + $0xc18] sm:$0xff]
    %v630 = vld [vmem:[#allocation6 + $0xc20] sm:$0xff]
    %v631 = vld [vmem:[#allocation6 + $0xc28] sm:$0xff]
    %v632 = vld [vmem:[#allocation6 + $0xc30] sm:$0xff]
    %v633 = vld [vmem:[#allocation6 + $0xc38] sm:$0xff]
    %v634 = vld [vmem:[#allocation6 + $0xc40] sm:$0xff]
    %v635 = vld [vmem:[#allocation6 + $0xc48] sm:$0xff]
    %v636 = vld [vmem:[#allocation6 + $0xc50] sm:$0xff]
    %v637 = vld [vmem:[#allocation6 + $0xc58] sm:$0xff]
    %v638 = vld [vmem:[#allocation6 + $0xc60] sm:$0xff]
    %v639 = vld [vmem:[#allocation6 + $0xc68] sm:$0xff]
    %v640 = vld [vmem:[#allocation6 + $0xc70] sm:$0xff]
    %v641 = vld [vmem:[#allocation6 + $0xc78] sm:$0xff]
    %v642 = vld [vmem:[#allocation6 + $0xc80] sm:$0xff]
    %v643 = vld [vmem:[#allocation6 + $0xc88] sm:$0xff]
    %v644 = vld [vmem:[#allocation6 + $0xc90] sm:$0xff]
    %v645 = vld [vmem:[#allocation6 + $0xc98] sm:$0xff]
    %v646 = vld [vmem:[#allocation6 + $0xca0] sm:$0xff]
    %v647 = vld [vmem:[#allocation6 + $0xca8] sm:$0xff]
    %v648 = vld [vmem:[#allocation6 + $0xcb0] sm:$0xff]
    %v649 = vld [vmem:[#allocation6 + $0xcb8] sm:$0xff]
    %v650 = vld [vmem:[#allocation6 + $0xcc0] sm:$0xff]
    %v651 = vld [vmem:[#allocation6 + $0xcc8] sm:$0xff]
    %v652 = vld [vmem:[#allocation6 + $0xcd0] sm:$0xff]
    %v653 = vld [vmem:[#allocation6 + $0xcd8] sm:$0xff]
    %v654 = vld [vmem:[#allocation6 + $0xce0] sm:$0xff]
    %v655 = vld [vmem:[#allocation6 + $0xce8] sm:$0xff]
    %v656 = vld [vmem:[#allocation6 + $0xcf0] sm:$0xff]
    %v657 = vld [vmem:[#allocation6 + $0xcf8] sm:$0xff]
    %v658 = vld [vmem:[#allocation6 + $0xd00] sm:$0xff]
    %v659 = vld [vmem:[#allocation6 + $0xd08] sm:$0xff]
    %v660 = vld [vmem:[#allocation6 + $0xd10] sm:$0xff]
    %v661 = vld [vmem:[#allocation6 + $0xd18] sm:$0xff]
    %v662 = vld [vmem:[#allocation6 + $0xd20] sm:$0xff]
    %v663 = vld [vmem:[#allocation6 + $0xd28] sm:$0xff]
    %v664 = vld [vmem:[#allocation6 + $0xd30] sm:$0xff]
    %v665 = vld [vmem:[#allocation6 + $0xd38] sm:$0xff]
    %v666 = vld [vmem:[#allocation6 + $0xd40] sm:$0xff]
    %v667 = vld [vmem:[#allocation6 + $0xd48] sm:$0xff]
    %v668 = vld [vmem:[#allocation6 + $0xd50] sm:$0xff]
    %v669 = vld [vmem:[#allocation6 + $0xd58] sm:$0xff]
    %v670 = vld [vmem:[#allocation6 + $0xd60] sm:$0xff]
    %v671 = vld [vmem:[#allocation6 + $0xd68] sm:$0xff]
    %v672 = vld [vmem:[#allocation6 + $0xd70] sm:$0xff]
    %v673 = vld [vmem:[#allocation6 + $0xd78] sm:$0xff]
    %v674 = vld [vmem:[#allocation6 + $0xd80] sm:$0xff]
    %v675 = vld [vmem:[#allocation6 + $0xd88] sm:$0xff]
    %v676 = vld [vmem:[#allocation6 + $0xd90] sm:$0xff]
    %v677 = vld [vmem:[#allocation6 + $0xd98] sm:$0xff]
    %v678 = vld [vmem:[#allocation6 + $0xda0] sm:$0xff]
    %v679 = vld [vmem:[#allocation6 + $0xda8] sm:$0xff]
    %v680 = vld [vmem:[#allocation6 + $0xdb0] sm:$0xff]
    %v681 = vld [vmem:[#allocation6 + $0xdb8] sm:$0xff]
    %v682 = vld [vmem:[#allocation6 + $0xdc0] sm:$0xff]
    %v683 = vld [vmem:[#allocation6 + $0xdc8] sm:$0xff]
    %v684 = vld [vmem:[#allocation6 + $0xdd0] sm:$0xff]
    %v685 = vld [vmem:[#allocation6 + $0xdd8] sm:$0xff]
    %v686 = vld [vmem:[#allocation6 + $0xde0] sm:$0xff]
    %v687 = vld [vmem:[#allocation6 + $0xde8] sm:$0xff]
    %v688 = vld [vmem:[#allocation6 + $0xdf0] sm:$0xff]
    %v689 = vld [vmem:[#allocation6 + $0xdf8] sm:$0xff]
    %v690 = vld [vmem:[#allocation6 + $0xe00] sm:$0xff]
    %v691 = vld [vmem:[#allocation6 + $0xe08] sm:$0xff]
    %v692 = vld [vmem:[#allocation6 + $0xe10] sm:$0xff]
    %v693 = vld [vmem:[#allocation6 + $0xe18] sm:$0xff]
    %v694 = vld [vmem:[#allocation6 + $0xe20] sm:$0xff]
    %v695 = vld [vmem:[#allocation6 + $0xe28] sm:$0xff]
    %v696 = vld [vmem:[#allocation6 + $0xe30] sm:$0xff]
    %v697 = vld [vmem:[#allocation6 + $0xe38] sm:$0xff]
    %v698 = vld [vmem:[#allocation6 + $0xe40] sm:$0xff]
    %v699 = vld [vmem:[#allocation6 + $0xe48] sm:$0xff]
    %v700 = vld [vmem:[#allocation6 + $0xe50] sm:$0xff]
    %v701 = vld [vmem:[#allocation6 + $0xe58] sm:$0xff]
    %v702 = vld [vmem:[#allocation6 + $0xe60] sm:$0xff]
    %v703 = vld [vmem:[#allocation6 + $0xe68] sm:$0xff]
    %v704 = vld [vmem:[#allocation6 + $0xe70] sm:$0xff]
    %v705 = vld [vmem:[#allocation6 + $0xe78] sm:$0xff]
    %v706 = vld [vmem:[#allocation6 + $0xe80] sm:$0xff]
    %v707 = vld [vmem:[#allocation6 + $0xe88] sm:$0xff]
    %v708 = vld [vmem:[#allocation6 + $0xe90] sm:$0xff]
    %v709 = vld [vmem:[#allocation6 + $0xe98] sm:$0xff]
    %v710 = vld [vmem:[#allocation6 + $0xea0] sm:$0xff]
    %v711 = vld [vmem:[#allocation6 + $0xea8] sm:$0xff]
    %v712 = vld [vmem:[#allocation6 + $0xeb0] sm:$0xff]
    %v713 = vld [vmem:[#allocation6 + $0xeb8] sm:$0xff]
    %v714 = vld [vmem:[#allocation6 + $0xec0] sm:$0xff]
    %v715 = vld [vmem:[#allocation6 + $0xec8] sm:$0xff]
    %v716 = vld [vmem:[#allocation6 + $0xed0] sm:$0xff]
    %v717 = vld [vmem:[#allocation6 + $0xed8] sm:$0xff]
    %v718 = vld [vmem:[#allocation6 + $0xee0] sm:$0xff]
    %v719 = vld [vmem:[#allocation6 + $0xee8] sm:$0xff]
    %v720 = vld [vmem:[#allocation6 + $0xef0] sm:$0xff]
    %v721 = vld [vmem:[#allocation6 + $0xef8] sm:$0xff]
    %v722 = vld [vmem:[#allocation6 + $0xf00] sm:$0xff]
    %v723 = vld [vmem:[#allocation6 + $0xf08] sm:$0xff]
    %v724 = vld [vmem:[#allocation6 + $0xf10] sm:$0xff]
    %v725 = vld [vmem:[#allocation6 + $0xf18] sm:$0xff]
    %v726 = vld [vmem:[#allocation6 + $0xf20] sm:$0xff]
    %v727 = vld [vmem:[#allocation6 + $0xf28] sm:$0xff]
    %v728 = vld [vmem:[#allocation6 + $0xf30] sm:$0xff]
    %v729 = vld [vmem:[#allocation6 + $0xf38] sm:$0xff]
    %v730 = vld [vmem:[#allocation6 + $0xf40] sm:$0xff]
    %v731 = vld [vmem:[#allocation6 + $0xf48] sm:$0xff]
    %v732 = vld [vmem:[#allocation6 + $0xf50] sm:$0xff]
    %v733 = vld [vmem:[#allocation6 + $0xf58] sm:$0xff]
    %v734 = vld [vmem:[#allocation6 + $0xf60] sm:$0xff]
    %v735 = vld [vmem:[#allocation6 + $0xf68] sm:$0xff]
    %v736 = vld [vmem:[#allocation6 + $0xf70] sm:$0xff]
    %v737 = vld [vmem:[#allocation6 + $0xf78] sm:$0xff]
    %v738 = vld [vmem:[#allocation6 + $0xf80] sm:$0xff]
    %v739 = vld [vmem:[#allocation6 + $0xf88] sm:$0xff]
    %v740 = vld [vmem:[#allocation6 + $0xf90] sm:$0xff]
    %v741 = vld [vmem:[#allocation6 + $0xf98] sm:$0xff]
    %v742 = vld [vmem:[#allocation6 + $0xfa0] sm:$0xff]
    %v743 = vld [vmem:[#allocation6 + $0xfa8] sm:$0xff]
    %v744 = vld [vmem:[#allocation6 + $0xfb0] sm:$0xff]
    %v745 = vld [vmem:[#allocation6 + $0xfb8] sm:$0xff]
    %v746 = vld [vmem:[#allocation6 + $0xfc0] sm:$0xff]
    %v747 = vld [vmem:[#allocation6 + $0xfc8] sm:$0xff]
    %v748 = vld [vmem:[#allocation6 + $0xfd0] sm:$0xff]
    %v749 = vld [vmem:[#allocation6 + $0xfd8] sm:$0xff]
    %v750 = vld [vmem:[#allocation6 + $0xfe0] sm:$0xff]
    %v751 = vld [vmem:[#allocation6 + $0xfe8] sm:$0xff]
    %v752 = vld [vmem:[#allocation6 + $0xff0] sm:$0xff]
    %v753 = vld [vmem:[#allocation6 + $0xff8] sm:$0xff]
    %v754 = vld [vmem:[#allocation6 + $0x1000] sm:$0xff]
    %v755 = vld [vmem:[#allocation6 + $0x1008] sm:$0xff]
    %v756 = vld [vmem:[#allocation6 + $0x1010] sm:$0xff]
    %v757 = vld [vmem:[#allocation6 + $0x1018] sm:$0xff]
    %v758 = vld [vmem:[#allocation6 + $0x1020] sm:$0xff]
    %v759 = vld [vmem:[#allocation6 + $0x1028] sm:$0xff]
    %v760 = vld [vmem:[#allocation6 + $0x1030] sm:$0xff]
    %v761 = vld [vmem:[#allocation6 + $0x1038] sm:$0xff]
    %v762 = vld [vmem:[#allocation6 + $0x1040] sm:$0xff]
    %v763 = vld [vmem:[#allocation6 + $0x1048] sm:$0xff]
    %v764 = vld [vmem:[#allocation6 + $0x1050] sm:$0xff]
    %v765 = vld [vmem:[#allocation6 + $0x1058] sm:$0xff]
    %v766 = vld [vmem:[#allocation6 + $0x1060] sm:$0xff]
    %v767 = vld [vmem:[#allocation6 + $0x1068] sm:$0xff]
    %v768 = vld [vmem:[#allocation6 + $0x1070] sm:$0xff]
    %v769 = vld [vmem:[#allocation6 + $0x1078] sm:$0xff]
    %v770 = vld [vmem:[#allocation6 + $0x1080] sm:$0xff]
    %v771 = vld [vmem:[#allocation6 + $0x1088] sm:$0xff]
    %v772 = vld [vmem:[#allocation6 + $0x1090] sm:$0xff]
    %v773 = vld [vmem:[#allocation6 + $0x1098] sm:$0xff]
    %v774 = vld [vmem:[#allocation6 + $0x10a0] sm:$0xff]
    %v775 = vld [vmem:[#allocation6 + $0x10a8] sm:$0xff]
    %v776 = vld [vmem:[#allocation6 + $0x10b0] sm:$0xff]
    %v777 = vld [vmem:[#allocation6 + $0x10b8] sm:$0xff]
    %v778 = vld [vmem:[#allocation6 + $0x10c0] sm:$0xff]
    %v779 = vld [vmem:[#allocation6 + $0x10c8] sm:$0xff]
    %v780 = vld [vmem:[#allocation6 + $0x10d0] sm:$0xff]
    %v781 = vld [vmem:[#allocation6 + $0x10d8] sm:$0xff]
    %v782 = vld [vmem:[#allocation6 + $0x10e0] sm:$0xff]
    %v783 = vld [vmem:[#allocation6 + $0x10e8] sm:$0xff]
    %v784 = vld [vmem:[#allocation6 + $0x10f0] sm:$0xff]
    %v785 = vld [vmem:[#allocation6 + $0x10f8] sm:$0xff]
    %v786 = vld [vmem:[#allocation6 + $0x1100] sm:$0xff]
    %v787 = vld [vmem:[#allocation6 + $0x1108] sm:$0xff]
    %v788 = vld [vmem:[#allocation6 + $0x1110] sm:$0xff]
    %v789 = vld [vmem:[#allocation6 + $0x1118] sm:$0xff]
    %v790 = vld [vmem:[#allocation6 + $0x1120] sm:$0xff]
    %v791 = vld [vmem:[#allocation6 + $0x1128] sm:$0xff]
    %v792 = vld [vmem:[#allocation6 + $0x1130] sm:$0xff]
    %v793 = vld [vmem:[#allocation6 + $0x1138] sm:$0xff]
    %v794 = vld [vmem:[#allocation6 + $0x1140] sm:$0xff]
    %v795 = vld [vmem:[#allocation6 + $0x1148] sm:$0xff]
    %v796 = vld [vmem:[#allocation6 + $0x1150] sm:$0xff]
    %v797 = vld [vmem:[#allocation6 + $0x1158] sm:$0xff]
    %v798 = vld [vmem:[#allocation6 + $0x1160] sm:$0xff]
    %v799 = vld [vmem:[#allocation6 + $0x1168] sm:$0xff]
    %v800 = vld [vmem:[#allocation6 + $0x1170] sm:$0xff]
    %v801 = vld [vmem:[#allocation6 + $0x1178] sm:$0xff]
    %v802 = vld [vmem:[#allocation6 + $0x1180] sm:$0xff]
    %v803 = vld [vmem:[#allocation6 + $0x1188] sm:$0xff]
    %v804 = vld [vmem:[#allocation6 + $0x1190] sm:$0xff]
    %v805 = vld [vmem:[#allocation6 + $0x1198] sm:$0xff]
    %v806 = vld [vmem:[#allocation6 + $0x11a0] sm:$0xff]
    %v807 = vld [vmem:[#allocation6 + $0x11a8] sm:$0xff]
    %v808 = vld [vmem:[#allocation6 + $0x11b0] sm:$0xff]
    %v809 = vld [vmem:[#allocation6 + $0x11b8] sm:$0xff]
    %v810 = vld [vmem:[#allocation6 + $0x11c0] sm:$0xff]
    %v811 = vld [vmem:[#allocation6 + $0x11c8] sm:$0xff]
    %v812 = vld [vmem:[#allocation6 + $0x11d0] sm:$0xff]
    %v813 = vld [vmem:[#allocation6 + $0x11d8] sm:$0xff]
    %v814 = vld [vmem:[#allocation6 + $0x11e0] sm:$0xff]
    %v815 = vld [vmem:[#allocation6 + $0x11e8] sm:$0xff]
    %v816 = vld [vmem:[#allocation6 + $0x11f0] sm:$0xff]
    %v817 = vld [vmem:[#allocation6 + $0x11f8] sm:$0xff]
    %v818 = vld [vmem:[#allocation6 + $0x1200] sm:$0xff]
    %v819 = vld [vmem:[#allocation6 + $0x1208] sm:$0xff]
    %v820 = vld [vmem:[#allocation6 + $0x1210] sm:$0xff]
    %v821 = vld [vmem:[#allocation6 + $0x1218] sm:$0xff]
    %v822 = vld [vmem:[#allocation6 + $0x1220] sm:$0xff]
    %v823 = vld [vmem:[#allocation6 + $0x1228] sm:$0xff]
    %v824 = vld [vmem:[#allocation6 + $0x1230] sm:$0xff]
    %v825 = vld [vmem:[#allocation6 + $0x1238] sm:$0xff]
    %v826 = vld [vmem:[#allocation6 + $0x1240] sm:$0xff]
    %v827 = vld [vmem:[#allocation6 + $0x1248] sm:$0xff]
    %v828 = vld [vmem:[#allocation6 + $0x1250] sm:$0xff]
    %v829 = vld [vmem:[#allocation6 + $0x1258] sm:$0xff]
    %v830 = vld [vmem:[#allocation6 + $0x1260] sm:$0xff]
    %v831 = vld [vmem:[#allocation6 + $0x1268] sm:$0xff]
    %v832 = vld [vmem:[#allocation6 + $0x1270] sm:$0xff]
    %v833 = vld [vmem:[#allocation6 + $0x1278] sm:$0xff]
    %v834 = vld [vmem:[#allocation6 + $0x1280] sm:$0xff]
    %v835 = vld [vmem:[#allocation6 + $0x1288] sm:$0xff]
    %v836 = vld [vmem:[#allocation6 + $0x1290] sm:$0xff]
    %v837 = vld [vmem:[#allocation6 + $0x1298] sm:$0xff]
    %v838 = vld [vmem:[#allocation6 + $0x12a0] sm:$0xff]
    %v839 = vld [vmem:[#allocation6 + $0x12a8] sm:$0xff]
    %v840 = vld [vmem:[#allocation6 + $0x12b0] sm:$0xff]
    %v841 = vld [vmem:[#allocation6 + $0x12b8] sm:$0xff]
    %v842 = vld [vmem:[#allocation6 + $0x12c0] sm:$0xff]
    %v843 = vld [vmem:[#allocation6 + $0x12c8] sm:$0xff]
    %v844 = vld [vmem:[#allocation6 + $0x12d0] sm:$0xff]
    %v845 = vld [vmem:[#allocation6 + $0x12d8] sm:$0xff]
    %v846 = vld [vmem:[#allocation6 + $0x12e0] sm:$0xff]
    %v847 = vld [vmem:[#allocation6 + $0x12e8] sm:$0xff]
    %v848 = vld [vmem:[#allocation6 + $0x12f0] sm:$0xff]
    %v849 = vld [vmem:[#allocation6 + $0x12f8] sm:$0xff]
    %v850 = vld [vmem:[#allocation6 + $0x1300] sm:$0xff]
    %v851 = vld [vmem:[#allocation6 + $0x1308] sm:$0xff]
    %v852 = vld [vmem:[#allocation6 + $0x1310] sm:$0xff]
    %v853 = vld [vmem:[#allocation6 + $0x1318] sm:$0xff]
    %v854 = vld [vmem:[#allocation6 + $0x1320] sm:$0xff]
    %v855 = vld [vmem:[#allocation6 + $0x1328] sm:$0xff]
    %v856 = vld [vmem:[#allocation6 + $0x1330] sm:$0xff]
    %v857 = vld [vmem:[#allocation6 + $0x1338] sm:$0xff]
    %v858 = vld [vmem:[#allocation6 + $0x1340] sm:$0xff]
    %v859 = vld [vmem:[#allocation6 + $0x1348] sm:$0xff]
    %v860 = vld [vmem:[#allocation6 + $0x1350] sm:$0xff]
    %v861 = vld [vmem:[#allocation6 + $0x1358] sm:$0xff]
    %v862 = vld [vmem:[#allocation6 + $0x1360] sm:$0xff]
    %v863 = vld [vmem:[#allocation6 + $0x1368] sm:$0xff]
    %v864 = vld [vmem:[#allocation6 + $0x1370] sm:$0xff]
    %v865 = vld [vmem:[#allocation6 + $0x1378] sm:$0xff]
    %v866 = vld [vmem:[#allocation6 + $0x1380] sm:$0xff]
    %v867 = vld [vmem:[#allocation6 + $0x1388] sm:$0xff]
    %v868 = vld [vmem:[#allocation6 + $0x1390] sm:$0xff]
    %v869 = vld [vmem:[#allocation6 + $0x1398] sm:$0xff]
    %v870 = vld [vmem:[#allocation6 + $0x13a0] sm:$0xff]
    %v871 = vld [vmem:[#allocation6 + $0x13a8] sm:$0xff]
    %v872 = vld [vmem:[#allocation6 + $0x13b0] sm:$0xff]
    %v873 = vld [vmem:[#allocation6 + $0x13b8] sm:$0xff]
    %v874 = vld [vmem:[#allocation6 + $0x13c0] sm:$0xff]
    %v875 = vld [vmem:[#allocation6 + $0x13c8] sm:$0xff]
    %v876 = vld [vmem:[#allocation6 + $0x13d0] sm:$0xff]
    %v877 = vld [vmem:[#allocation6 + $0x13d8] sm:$0xff]
    %v878 = vld [vmem:[#allocation6 + $0x13e0] sm:$0xff]
    %v879 = vld [vmem:[#allocation6 + $0x13e8] sm:$0xff]
    %v880 = vld [vmem:[#allocation6 + $0x13f0] sm:$0xff]
    %v881 = vld [vmem:[#allocation6 + $0x13f8] sm:$0xff]
    %v882 = vld [vmem:[#allocation6 + $0x1400] sm:$0xff]
    %v883 = vld [vmem:[#allocation6 + $0x1408] sm:$0xff]
    %v884 = vld [vmem:[#allocation6 + $0x1410] sm:$0xff]
    %v885 = vld [vmem:[#allocation6 + $0x1418] sm:$0xff]
    %v886 = vld [vmem:[#allocation6 + $0x1420] sm:$0xff]
    %v887 = vld [vmem:[#allocation6 + $0x1428] sm:$0xff]
    %v888 = vld [vmem:[#allocation6 + $0x1430] sm:$0xff]
    %v889 = vld [vmem:[#allocation6 + $0x1438] sm:$0xff]
    %v890 = vld [vmem:[#allocation6 + $0x1440] sm:$0xff]
    %v891 = vld [vmem:[#allocation6 + $0x1448] sm:$0xff]
    %v892 = vld [vmem:[#allocation6 + $0x1450] sm:$0xff]
    %v893 = vld [vmem:[#allocation6 + $0x1458] sm:$0xff]
    %v894 = vld [vmem:[#allocation6 + $0x1460] sm:$0xff]
    %v895 = vld [vmem:[#allocation6 + $0x1468] sm:$0xff]
    %v896 = vld [vmem:[#allocation6 + $0x1470] sm:$0xff]
    %v897 = vld [vmem:[#allocation6 + $0x1478] sm:$0xff]
    %v898 = vld [vmem:[#allocation6 + $0x1480] sm:$0xff]
    %v899 = vld [vmem:[#allocation6 + $0x1488] sm:$0xff]
    %v900 = vld [vmem:[#allocation6 + $0x1490] sm:$0xff]
    %v901 = vld [vmem:[#allocation6 + $0x1498] sm:$0xff]
    %v902 = vld [vmem:[#allocation6 + $0x14a0] sm:$0xff]
    %v903 = vld [vmem:[#allocation6 + $0x14a8] sm:$0xff]
    %v904 = vld [vmem:[#allocation6 + $0x14b0] sm:$0xff]
    %v905 = vld [vmem:[#allocation6 + $0x14b8] sm:$0xff]
    %v906 = vld [vmem:[#allocation6 + $0x14c0] sm:$0xff]
    %v907 = vld [vmem:[#allocation6 + $0x14c8] sm:$0xff]
    %v908 = vld [vmem:[#allocation6 + $0x14d0] sm:$0xff]
    %v909 = vld [vmem:[#allocation6 + $0x14d8] sm:$0xff]
    %v910 = vld [vmem:[#allocation6 + $0x14e0] sm:$0xff]
    %v911 = vld [vmem:[#allocation6 + $0x14e8] sm:$0xff]
    %v912 = vld [vmem:[#allocation6 + $0x14f0] sm:$0xff]
    %v913 = vld [vmem:[#allocation6 + $0x14f8] sm:$0xff]
    %v914 = vld [vmem:[#allocation6 + $0x1500] sm:$0xff]
    %v915 = vld [vmem:[#allocation6 + $0x1508] sm:$0xff]
    %v916 = vld [vmem:[#allocation6 + $0x1510] sm:$0xff]
    %v917 = vld [vmem:[#allocation6 + $0x1518] sm:$0xff]
    %v918 = vld [vmem:[#allocation6 + $0x1520] sm:$0xff]
    %v919 = vld [vmem:[#allocation6 + $0x1528] sm:$0xff]
    %v920 = vld [vmem:[#allocation6 + $0x1530] sm:$0xff]
    %v921 = vld [vmem:[#allocation6 + $0x1538] sm:$0xff]
    %v922 = vld [vmem:[#allocation6 + $0x1540] sm:$0xff]
    %v923 = vld [vmem:[#allocation6 + $0x1548] sm:$0xff]
    %v924 = vld [vmem:[#allocation6 + $0x1550] sm:$0xff]
    %v925 = vld [vmem:[#allocation6 + $0x1558] sm:$0xff]
    %v926 = vld [vmem:[#allocation6 + $0x1560] sm:$0xff]
    %v927 = vld [vmem:[#allocation6 + $0x1568] sm:$0xff]
    %v928 = vld [vmem:[#allocation6 + $0x1570] sm:$0xff]
    %v929 = vld [vmem:[#allocation6 + $0x1578] sm:$0xff]
    %v930 = vld [vmem:[#allocation6 + $0x1580] sm:$0xff]
    %v931 = vld [vmem:[#allocation6 + $0x1588] sm:$0xff]
    %v932 = vld [vmem:[#allocation6 + $0x1590] sm:$0xff]
    %v933 = vld [vmem:[#allocation6 + $0x1598] sm:$0xff]
    %v934 = vld [vmem:[#allocation6 + $0x15a0] sm:$0xff]
    %v935 = vld [vmem:[#allocation6 + $0x15a8] sm:$0xff]
    %v936 = vld [vmem:[#allocation6 + $0x15b0] sm:$0xff]
    %v937 = vld [vmem:[#allocation6 + $0x15b8] sm:$0xff]
    %v938 = vld [vmem:[#allocation6 + $0x15c0] sm:$0xff]
    %v939 = vld [vmem:[#allocation6 + $0x15c8] sm:$0xff]
    %v940 = vld [vmem:[#allocation6 + $0x15d0] sm:$0xff]
    %v941 = vld [vmem:[#allocation6 + $0x15d8] sm:$0xff]
    %v942 = vld [vmem:[#allocation6 + $0x15e0] sm:$0xff]
    %v943 = vld [vmem:[#allocation6 + $0x15e8] sm:$0xff]
    %v944 = vld [vmem:[#allocation6 + $0x15f0] sm:$0xff]
    %v945 = vld [vmem:[#allocation6 + $0x15f8] sm:$0x33]
    %v946 = vld [vmem:[#allocation6 + $0x1600] sm:$0x33]
    %v947 = vld [vmem:[#allocation6 + $0x1608] sm:$0x33]
    %v948 = vld [vmem:[#allocation6 + $0x1610] sm:$0x33]
    %v949 = vld [vmem:[#allocation6 + $0x1618] sm:$0x33]
    %v950 = vld [vmem:[#allocation6 + $0x1620] sm:$0x33]
    %v951 = vld [vmem:[#allocation6 + $0x1628] sm:$0x33]
    %v952 = vld [vmem:[#allocation6 + $0x1630] sm:$0x33]
    %v953 = vld [vmem:[#allocation6 + $0x1638] sm:$0x33]
    %v954 = vld [vmem:[#allocation6 + $0x1640] sm:$0x33]
    %v955 = vld [vmem:[#allocation6 + $0x1648] sm:$0x33]
    %v956 = vld [vmem:[#allocation6 + $0x1650] sm:$0x33]
    %v957 = vld [vmem:[#allocation6 + $0x1658] sm:$0x33]
    %v958 = vld [vmem:[#allocation6 + $0x1660] sm:$0x33]
    %v959 = vld [vmem:[#allocation6 + $0x1668] sm:$0x33]
    %v960 = vld [vmem:[#allocation6 + $0x1670] sm:$0x33]
    %v961 = vld [vmem:[#allocation6 + $0x1678] sm:$0x33]
    %v962 = vld [vmem:[#allocation6 + $0x1680] sm:$0x33]
    %v963 = vld [vmem:[#allocation6 + $0x1688] sm:$0x33]
    %v964 = vld [vmem:[#allocation7] sm:$0xff]
    %v965 = vld [vmem:[#allocation7 + $0x8] sm:$0xff]
    %v966 = vld [vmem:[#allocation7 + $0x10] sm:$0xff]
    %v967 = vld [vmem:[#allocation7 + $0x18] sm:$0xff]
    %v968 = vld [vmem:[#allocation7 + $0x20] sm:$0x3f]
    %v974 = vlaneseq
    %v975 = vshrl.u32 %v974, 7
    %v976 = vsub.s32 0, %v975
    %v977 = vrot.slane %v964, %v976
    %v978 = vlaneseq
    %v979 = vshrl.u32 %v978, 7
    %v980 = vsub.s32 1, %v979
    %v981 = vrot.slane %v964, %v980
    %v982 = vlaneseq
    %v983 = vshrl.u32 %v982, 7
    %v984 = vsub.s32 2, %v983
    %v985 = vrot.slane %v964, %v984
    %v986 = vlaneseq
    %v987 = vshrl.u32 %v986, 7
    %v988 = vsub.s32 3, %v987
    %v989 = vrot.slane %v964, %v988
    %v990 = vlaneseq
    %v991 = vshrl.u32 %v990, 7
    %v992 = vsub.s32 4, %v991
    %v993 = vrot.slane %v964, %v992
    %v994 = vlaneseq
    %v995 = vshrl.u32 %v994, 7
    %v996 = vsub.s32 5, %v995
    %v997 = vrot.slane %v964, %v996
    %v998 = vlaneseq
    %v999 = vshrl.u32 %v998, 7
    %v1000 = vsub.s32 6, %v999
    %v1001 = vrot.slane %v964, %v1000
    %v1002 = vlaneseq
    %v1003 = vshrl.u32 %v1002, 7
    %v1004 = vsub.s32 7, %v1003
    %v1005 = vrot.slane %v964, %v1004
    %v1006 = vlaneseq
    %v1007 = vshrl.u32 %v1006, 7
    %v1008 = vsub.s32 0, %v1007
    %v1009 = vrot.slane %v965, %v1008
    %v1010 = vlaneseq
    %v1011 = vshrl.u32 %v1010, 7
    %v1012 = vsub.s32 1, %v1011
    %v1013 = vrot.slane %v965, %v1012
    %v1014 = vlaneseq
    %v1015 = vshrl.u32 %v1014, 7
    %v1016 = vsub.s32 2, %v1015
    %v1017 = vrot.slane %v965, %v1016
    %v1018 = vlaneseq
    %v1019 = vshrl.u32 %v1018, 7
    %v1020 = vsub.s32 3, %v1019
    %v1021 = vrot.slane %v965, %v1020
    %v1022 = vlaneseq
    %v1023 = vshrl.u32 %v1022, 7
    %v1024 = vsub.s32 4, %v1023
    %v1025 = vrot.slane %v965, %v1024
    %v1026 = vlaneseq
    %v1027 = vshrl.u32 %v1026, 7
    %v1028 = vsub.s32 5, %v1027
    %v1029 = vrot.slane %v965, %v1028
    %v1030 = vlaneseq
    %v1031 = vshrl.u32 %v1030, 7
    %v1032 = vsub.s32 6, %v1031
    %v1033 = vrot.slane %v965, %v1032
    %v1034 = vlaneseq
    %v1035 = vshrl.u32 %v1034, 7
    %v1036 = vsub.s32 7, %v1035
    %v1037 = vrot.slane %v965, %v1036
    %v1038 = vlaneseq
    %v1039 = vshrl.u32 %v1038, 7
    %v1040 = vsub.s32 0, %v1039
    %v1041 = vrot.slane %v966, %v1040
    %v1042 = vlaneseq
    %v1043 = vshrl.u32 %v1042, 7
    %v1044 = vsub.s32 1, %v1043
    %v1045 = vrot.slane %v966, %v1044
    %v1046 = vlaneseq
    %v1047 = vshrl.u32 %v1046, 7
    %v1048 = vsub.s32 2, %v1047
    %v1049 = vrot.slane %v966, %v1048
    %v1050 = vlaneseq
    %v1051 = vshrl.u32 %v1050, 7
    %v1052 = vsub.s32 3, %v1051
    %v1053 = vrot.slane %v966, %v1052
    %v1054 = vlaneseq
    %v1055 = vshrl.u32 %v1054, 7
    %v1056 = vsub.s32 4, %v1055
    %v1057 = vrot.slane %v966, %v1056
    %v1058 = vlaneseq
    %v1059 = vshrl.u32 %v1058, 7
    %v1060 = vsub.s32 5, %v1059
    %v1061 = vrot.slane %v966, %v1060
    %v1062 = vlaneseq
    %v1063 = vshrl.u32 %v1062, 7
    %v1064 = vsub.s32 6, %v1063
    %v1065 = vrot.slane %v966, %v1064
    %v1066 = vlaneseq
    %v1067 = vshrl.u32 %v1066, 7
    %v1068 = vsub.s32 7, %v1067
    %v1069 = vrot.slane %v966, %v1068
    %v1070 = vlaneseq
    %v1071 = vshrl.u32 %v1070, 7
    %v1072 = vsub.s32 0, %v1071
    %v1073 = vrot.slane %v967, %v1072
    %v1074 = vlaneseq
    %v1075 = vshrl.u32 %v1074, 7
    %v1076 = vsub.s32 1, %v1075
    %v1077 = vrot.slane %v967, %v1076
    %v1078 = vlaneseq
    %v1079 = vshrl.u32 %v1078, 7
    %v1080 = vsub.s32 2, %v1079
    %v1081 = vrot.slane %v967, %v1080
    %v1082 = vlaneseq
    %v1083 = vshrl.u32 %v1082, 7
    %v1084 = vsub.s32 3, %v1083
    %v1085 = vrot.slane %v967, %v1084
    %v1086 = vlaneseq
    %v1087 = vshrl.u32 %v1086, 7
    %v1088 = vsub.s32 4, %v1087
    %v1089 = vrot.slane %v967, %v1088
    %v1090 = vlaneseq
    %v1091 = vshrl.u32 %v1090, 7
    %v1092 = vsub.s32 5, %v1091
    %v1093 = vrot.slane %v967, %v1092
    %v1094 = vlaneseq
    %v1095 = vshrl.u32 %v1094, 7
    %v1096 = vsub.s32 6, %v1095
    %v1097 = vrot.slane %v967, %v1096
    %v1098 = vlaneseq
    %v1099 = vshrl.u32 %v1098, 7
    %v1100 = vsub.s32 7, %v1099
    %v1101 = vrot.slane %v967, %v1100
    %v1102 = vlaneseq
    %v1103 = vshrl.u32 %v1102, 7
    %v1104 = vsub.s32 0, %v1103
    %v1105 = vrot.slane %v968, %v1104
    %v1106 = vlaneseq
    %v1107 = vshrl.u32 %v1106, 7
    %v1108 = vsub.s32 1, %v1107
    %v1109 = vrot.slane %v968, %v1108
    %v1110 = vlaneseq
    %v1111 = vshrl.u32 %v1110, 7
    %v1112 = vsub.s32 2, %v1111
    %v1113 = vrot.slane %v968, %v1112
    %v1114 = vlaneseq
    %v1115 = vshrl.u32 %v1114, 7
    %v1116 = vsub.s32 3, %v1115
    %v1117 = vrot.slane %v968, %v1116
    %v1118 = vlaneseq
    %v1119 = vshrl.u32 %v1118, 7
    %v1120 = vsub.s32 4, %v1119
    %v1121 = vrot.slane %v968, %v1120
    %v1122 = vlaneseq
    %v1123 = vshrl.u32 %v1122, 7
    %v1124 = vsub.s32 5, %v1123
    %v1125 = vrot.slane %v968, %v1124
    %v1886 = vunpack.c.l.b16 %v242
    %v1887 = vunpack.c.h.b16 %v242
    %v1888 = vunpack.c.l.b16 %v243
    %v1889 = vunpack.c.h.b16 %v243
    %v1890 = vunpack.c.l.b16 %v244
    %v1891 = vunpack.c.h.b16 %v244
    %v1892 = vunpack.c.l.b16 %v245
    %v1893 = vunpack.c.h.b16 %v245
    %v1894 = vunpack.c.l.b16 %v246
    %v1895 = vunpack.c.h.b16 %v246
    %v1896 = vunpack.c.l.b16 %v247
    %v1897 = vunpack.c.h.b16 %v247
    %v1898 = vunpack.c.l.b16 %v248
    %v1899 = vunpack.c.h.b16 %v248
    %v1900 = vunpack.c.l.b16 %v249
    %v1901 = vunpack.c.h.b16 %v249
    %v1902 = vunpack.c.l.b16 %v250
    %v1903 = vunpack.c.h.b16 %v250
    %v1904 = vunpack.c.l.b16 %v251
    %v1905 = vunpack.c.h.b16 %v251
    %v1906 = vunpack.c.l.b16 %v252
    %v1907 = vunpack.c.h.b16 %v252
    %v1908 = vunpack.c.l.b16 %v253
    %v1909 = vunpack.c.h.b16 %v253
    %v1910 = vunpack.c.l.b16 %v254
    %v1911 = vunpack.c.h.b16 %v254
    %v1912 = vunpack.c.l.b16 %v255
    %v1913 = vunpack.c.h.b16 %v255
    %v1914 = vunpack.c.l.b16 %v256
    %v1915 = vunpack.c.h.b16 %v256
    %v1916 = vunpack.c.l.b16 %v257
    %v1917 = vunpack.c.h.b16 %v257
    %v1918 = vunpack.c.l.b16 %v258
    %v1919 = vunpack.c.h.b16 %v258
    %v1920 = vunpack.c.l.b16 %v259
    %v1921 = vunpack.c.h.b16 %v259
    %v1922 = vunpack.c.l.b16 %v260
    %v1923 = vunpack.c.h.b16 %v260
    %v1924 = vunpack.c.l.b16 %v261
    %v1925 = vunpack.c.h.b16 %v261
    %v1926 = vunpack.c.l.b16 %v262
    %v1927 = vunpack.c.h.b16 %v262
    %v1928 = vunpack.c.l.b16 %v263
    %v1929 = vunpack.c.h.b16 %v263
    %v1930 = vunpack.c.l.b16 %v264
    %v1931 = vunpack.c.h.b16 %v264
    %v1932 = vunpack.c.l.b16 %v265
    %v1933 = vunpack.c.h.b16 %v265
    %v1934 = vunpack.c.l.b16 %v266
    %v1935 = vunpack.c.h.b16 %v266
    %v1936 = vunpack.c.l.b16 %v267
    %v1937 = vunpack.c.h.b16 %v267
    %v1938 = vunpack.c.l.b16 %v268
    %v1939 = vunpack.c.h.b16 %v268
    %v1940 = vunpack.c.l.b16 %v269
    %v1941 = vunpack.c.h.b16 %v269
    %v1942 = vunpack.c.l.b16 %v270
    %v1943 = vunpack.c.h.b16 %v270
    %v1944 = vunpack.c.l.b16 %v271
    %v1945 = vunpack.c.h.b16 %v271
    %v1946 = vunpack.c.l.b16 %v272
    %v1947 = vunpack.c.h.b16 %v272
    %v1948 = vunpack.c.l.b16 %v273
    %v1949 = vunpack.c.h.b16 %v273
    %v1950 = vunpack.c.l.b16 %v274
    %v1951 = vunpack.c.h.b16 %v274
    %v1952 = vunpack.c.l.b16 %v275
    %v1953 = vunpack.c.h.b16 %v275
    %v1954 = vunpack.c.l.b16 %v276
    %v1955 = vunpack.c.h.b16 %v276
    %v1956 = vunpack.c.l.b16 %v277
    %v1957 = vunpack.c.h.b16 %v277
    %v1958 = vunpack.c.l.b16 %v278
    %v1959 = vunpack.c.h.b16 %v278
    %v1960 = vunpack.c.l.b16 %v279
    %v1961 = vunpack.c.h.b16 %v279
    %v1962 = vunpack.c.l.b16 %v280
    %v1963 = vunpack.c.h.b16 %v280
    %v1964 = vunpack.c.l.b16 %v281
    %v1965 = vunpack.c.h.b16 %v281
    %v1966 = vunpack.c.l.b16 %v282
    %v1967 = vunpack.c.h.b16 %v282
    %v1968 = vunpack.c.l.b16 %v283
    %v1969 = vunpack.c.h.b16 %v283
    %v1970 = vunpack.c.l.b16 %v284
    %v1971 = vunpack.c.h.b16 %v284
    %v1972 = vunpack.c.l.b16 %v285
    %v1973 = vunpack.c.h.b16 %v285
    %v1974 = vunpack.c.l.b16 %v286
    %v1975 = vunpack.c.h.b16 %v286
    %v1976 = vunpack.c.l.b16 %v287
    %v1977 = vunpack.c.h.b16 %v287
    %v1978 = vunpack.c.l.b16 %v288
    %v1979 = vunpack.c.h.b16 %v288
    %v1980 = vunpack.c.l.b16 %v289
    %v1981 = vunpack.c.h.b16 %v289
    %v1982 = vunpack.c.l.b16 %v290
    %v1983 = vunpack.c.h.b16 %v290
    %v1984 = vunpack.c.l.b16 %v291
    %v1985 = vunpack.c.h.b16 %v291
    %v1986 = vunpack.c.l.b16 %v292
    %v1987 = vunpack.c.h.b16 %v292
    %v1988 = vunpack.c.l.b16 %v293
    %v1989 = vunpack.c.h.b16 %v293
    %v1990 = vunpack.c.l.b16 %v294
    %v1991 = vunpack.c.h.b16 %v294
    %v1992 = vunpack.c.l.b16 %v295
    %v1993 = vunpack.c.h.b16 %v295
    %v1994 = vunpack.c.l.b16 %v296
    %v1995 = vunpack.c.h.b16 %v296
    %v1996 = vunpack.c.l.b16 %v297
    %v1997 = vunpack.c.h.b16 %v297
    %v1998 = vunpack.c.l.b16 %v298
    %v1999 = vunpack.c.h.b16 %v298
    %v2000 = vunpack.c.l.b16 %v299
    %v2001 = vunpack.c.h.b16 %v299
    %v2002 = vunpack.c.l.b16 %v300
    %v2003 = vunpack.c.h.b16 %v300
    %v2004 = vunpack.c.l.b16 %v301
    %v2005 = vunpack.c.h.b16 %v301
    %v2006 = vunpack.c.l.b16 %v302
    %v2007 = vunpack.c.h.b16 %v302
    %v2008 = vunpack.c.l.b16 %v303
    %v2009 = vunpack.c.h.b16 %v303
    %v2010 = vunpack.c.l.b16 %v304
    %v2011 = vunpack.c.h.b16 %v304
    %v2012 = vunpack.c.l.b16 %v305
    %v2013 = vunpack.c.h.b16 %v305
    %v2014 = vunpack.c.l.b16 %v306
    %v2015 = vunpack.c.h.b16 %v306
    %v2016 = vunpack.c.l.b16 %v307
    %v2017 = vunpack.c.h.b16 %v307
    %v2018 = vunpack.c.l.b16 %v308
    %v2019 = vunpack.c.h.b16 %v308
    %v2020 = vunpack.c.l.b16 %v309
    %v2021 = vunpack.c.h.b16 %v309
    %v2022 = vunpack.c.l.b16 %v310
    %v2023 = vunpack.c.h.b16 %v310
    %v2024 = vunpack.c.l.b16 %v311
    %v2025 = vunpack.c.h.b16 %v311
    %v2026 = vunpack.c.l.b16 %v312
    %v2027 = vunpack.c.h.b16 %v312
    %v2028 = vunpack.c.l.b16 %v313
    %v2029 = vunpack.c.h.b16 %v313
    %v2030 = vunpack.c.l.b16 %v314
    %v2031 = vunpack.c.h.b16 %v314
    %v2032 = vunpack.c.l.b16 %v315
    %v2033 = vunpack.c.h.b16 %v315
    %v2034 = vunpack.c.l.b16 %v316
    %v2035 = vunpack.c.h.b16 %v316
    %v2036 = vunpack.c.l.b16 %v317
    %v2037 = vunpack.c.h.b16 %v317
    %v2038 = vunpack.c.l.b16 %v318
    %v2039 = vunpack.c.h.b16 %v318
    %v2040 = vunpack.c.l.b16 %v319
    %v2041 = vunpack.c.h.b16 %v319
    %v2042 = vunpack.c.l.b16 %v320
    %v2043 = vunpack.c.h.b16 %v320
    %v2044 = vunpack.c.l.b16 %v321
    %v2045 = vunpack.c.h.b16 %v321
    %v2046 = vunpack.c.l.b16 %v322
    %v2047 = vunpack.c.h.b16 %v322
    %v2048 = vunpack.c.l.b16 %v323
    %v2049 = vunpack.c.h.b16 %v323
    %v2050 = vunpack.c.l.b16 %v324
    %v2051 = vunpack.c.h.b16 %v324
    %v2052 = vunpack.c.l.b16 %v325
    %v2053 = vunpack.c.h.b16 %v325
    %v2054 = vunpack.c.l.b16 %v326
    %v2055 = vunpack.c.h.b16 %v326
    %v2056 = vunpack.c.l.b16 %v327
    %v2057 = vunpack.c.h.b16 %v327
    %v2058 = vunpack.c.l.b16 %v328
    %v2059 = vunpack.c.h.b16 %v328
    %v2060 = vunpack.c.l.b16 %v329
    %v2061 = vunpack.c.h.b16 %v329
    %v2062 = vunpack.c.l.b16 %v330
    %v2063 = vunpack.c.h.b16 %v330
    %v2064 = vunpack.c.l.b16 %v331
    %v2065 = vunpack.c.h.b16 %v331
    %v2066 = vunpack.c.l.b16 %v332
    %v2067 = vunpack.c.h.b16 %v332
    %v2068 = vunpack.c.l.b16 %v333
    %v2069 = vunpack.c.h.b16 %v333
    %v2070 = vunpack.c.l.b16 %v334
    %v2071 = vunpack.c.h.b16 %v334
    %v2072 = vunpack.c.l.b16 %v335
    %v2073 = vunpack.c.h.b16 %v335
    %v2074 = vunpack.c.l.b16 %v336
    %v2075 = vunpack.c.h.b16 %v336
    %v2076 = vunpack.c.l.b16 %v337
    %v2077 = vunpack.c.h.b16 %v337
    %v2078 = vunpack.c.l.b16 %v338
    %v2079 = vunpack.c.h.b16 %v338
    %v2080 = vunpack.c.l.b16 %v339
    %v2081 = vunpack.c.h.b16 %v339
    %v2082 = vunpack.c.l.b16 %v340
    %v2083 = vunpack.c.h.b16 %v340
    %v2084 = vunpack.c.l.b16 %v341
    %v2085 = vunpack.c.h.b16 %v341
    %v2086 = vunpack.c.l.b16 %v342
    %v2087 = vunpack.c.h.b16 %v342
    %v2088 = vunpack.c.l.b16 %v343
    %v2089 = vunpack.c.h.b16 %v343
    %v2090 = vunpack.c.l.b16 %v344
    %v2091 = vunpack.c.h.b16 %v344
    %v2092 = vunpack.c.l.b16 %v345
    %v2093 = vunpack.c.h.b16 %v345
    %v2094 = vunpack.c.l.b16 %v346
    %v2095 = vunpack.c.h.b16 %v346
    %v2096 = vunpack.c.l.b16 %v347
    %v2097 = vunpack.c.h.b16 %v347
    %v2098 = vunpack.c.l.b16 %v348
    %v2099 = vunpack.c.h.b16 %v348
    %v2100 = vunpack.c.l.b16 %v349
    %v2101 = vunpack.c.h.b16 %v349
    %v2102 = vunpack.c.l.b16 %v350
    %v2103 = vunpack.c.h.b16 %v350
    %v2104 = vunpack.c.l.b16 %v351
    %v2105 = vunpack.c.h.b16 %v351
    %v2106 = vunpack.c.l.b16 %v352
    %v2107 = vunpack.c.h.b16 %v352
    %v2108 = vunpack.c.l.b16 %v353
    %v2109 = vunpack.c.h.b16 %v353
    %v2110 = vunpack.c.l.b16 %v354
    %v2111 = vunpack.c.h.b16 %v354
    %v2112 = vunpack.c.l.b16 %v355
    %v2113 = vunpack.c.h.b16 %v355
    %v2114 = vunpack.c.l.b16 %v356
    %v2115 = vunpack.c.h.b16 %v356
    %v2116 = vunpack.c.l.b16 %v357
    %v2117 = vunpack.c.h.b16 %v357
    %v2118 = vunpack.c.l.b16 %v358
    %v2119 = vunpack.c.h.b16 %v358
    %v2120 = vunpack.c.l.b16 %v359
    %v2121 = vunpack.c.h.b16 %v359
    %v2122 = vunpack.c.l.b16 %v360
    %v2123 = vunpack.c.h.b16 %v360
    %v2124 = vunpack.c.l.b16 %v361
    %v2125 = vunpack.c.h.b16 %v361
    %v2126 = vunpack.c.l.b16 %v362
    %v2127 = vunpack.c.h.b16 %v362
    %v2128 = vunpack.c.l.b16 %v363
    %v2129 = vunpack.c.h.b16 %v363
    %v2130 = vunpack.c.l.b16 %v364
    %v2131 = vunpack.c.h.b16 %v364
    %v2132 = vunpack.c.l.b16 %v365
    %v2133 = vunpack.c.h.b16 %v365
    %v2134 = vunpack.c.l.b16 %v366
    %v2135 = vunpack.c.h.b16 %v366
    %v2136 = vunpack.c.l.b16 %v367
    %v2137 = vunpack.c.h.b16 %v367
    %v2138 = vunpack.c.l.b16 %v368
    %v2139 = vunpack.c.h.b16 %v368
    %v2140 = vunpack.c.l.b16 %v369
    %v2141 = vunpack.c.h.b16 %v369
    %v2142 = vunpack.c.l.b16 %v370
    %v2143 = vunpack.c.h.b16 %v370
    %v2144 = vunpack.c.l.b16 %v371
    %v2145 = vunpack.c.h.b16 %v371
    %v2146 = vunpack.c.l.b16 %v372
    %v2147 = vunpack.c.h.b16 %v372
    %v2148 = vunpack.c.l.b16 %v373
    %v2149 = vunpack.c.h.b16 %v373
    %v2150 = vunpack.c.l.b16 %v374
    %v2151 = vunpack.c.h.b16 %v374
    %v2152 = vunpack.c.l.b16 %v375
    %v2153 = vunpack.c.h.b16 %v375
    %v2154 = vunpack.c.l.b16 %v376
    %v2155 = vunpack.c.h.b16 %v376
    %v2156 = vunpack.c.l.b16 %v377
    %v2157 = vunpack.c.h.b16 %v377
    %v2158 = vunpack.c.l.b16 %v378
    %v2159 = vunpack.c.h.b16 %v378
    %v2160 = vunpack.c.l.b16 %v379
    %v2161 = vunpack.c.h.b16 %v379
    %v2162 = vunpack.c.l.b16 %v380
    %v2163 = vunpack.c.h.b16 %v380
    %v2164 = vunpack.c.l.b16 %v381
    %v2165 = vunpack.c.h.b16 %v381
    %v2166 = vunpack.c.l.b16 %v382
    %v2167 = vunpack.c.h.b16 %v382
    %v2168 = vunpack.c.l.b16 %v383
    %v2169 = vunpack.c.h.b16 %v383
    %v2170 = vunpack.c.l.b16 %v384
    %v2171 = vunpack.c.h.b16 %v384
    %v2172 = vunpack.c.l.b16 %v385
    %v2173 = vunpack.c.h.b16 %v385
    %v2174 = vunpack.c.l.b16 %v386
    %v2175 = vunpack.c.h.b16 %v386
    %v2176 = vunpack.c.l.b16 %v387
    %v2177 = vunpack.c.h.b16 %v387
    %v2178 = vunpack.c.l.b16 %v388
    %v2179 = vunpack.c.h.b16 %v388
    %v2180 = vunpack.c.l.b16 %v389
    %v2181 = vunpack.c.h.b16 %v389
    %v2182 = vunpack.c.l.b16 %v390
    %v2183 = vunpack.c.h.b16 %v390
    %v2184 = vunpack.c.l.b16 %v391
    %v2185 = vunpack.c.h.b16 %v391
    %v2186 = vunpack.c.l.b16 %v392
    %v2187 = vunpack.c.h.b16 %v392
    %v2188 = vunpack.c.l.b16 %v393
    %v2189 = vunpack.c.h.b16 %v393
    %v2190 = vunpack.c.l.b16 %v394
    %v2191 = vunpack.c.h.b16 %v394
    %v2192 = vunpack.c.l.b16 %v395
    %v2193 = vunpack.c.h.b16 %v395
    %v2194 = vunpack.c.l.b16 %v396
    %v2195 = vunpack.c.h.b16 %v396
    %v2196 = vunpack.c.l.b16 %v397
    %v2197 = vunpack.c.h.b16 %v397
    %v2198 = vunpack.c.l.b16 %v398
    %v2199 = vunpack.c.h.b16 %v398
    %v2200 = vunpack.c.l.b16 %v399
    %v2201 = vunpack.c.h.b16 %v399
    %v2202 = vunpack.c.l.b16 %v400
    %v2203 = vunpack.c.h.b16 %v400
    %v2204 = vunpack.c.l.b16 %v401
    %v2205 = vunpack.c.h.b16 %v401
    %v2206 = vunpack.c.l.b16 %v402
    %v2207 = vunpack.c.h.b16 %v402
    %v2208 = vunpack.c.l.b16 %v403
    %v2209 = vunpack.c.h.b16 %v403
    %v2210 = vunpack.c.l.b16 %v404
    %v2211 = vunpack.c.h.b16 %v404
    %v2212 = vunpack.c.l.b16 %v405
    %v2213 = vunpack.c.h.b16 %v405
    %v2214 = vunpack.c.l.b16 %v406
    %v2215 = vunpack.c.h.b16 %v406
    %v2216 = vunpack.c.l.b16 %v407
    %v2217 = vunpack.c.h.b16 %v407
    %v2218 = vunpack.c.l.b16 %v408
    %v2219 = vunpack.c.h.b16 %v408
    %v2220 = vunpack.c.l.b16 %v409
    %v2221 = vunpack.c.h.b16 %v409
    %v2222 = vunpack.c.l.b16 %v410
    %v2223 = vunpack.c.h.b16 %v410
    %v2224 = vunpack.c.l.b16 %v411
    %v2225 = vunpack.c.h.b16 %v411
    %v2226 = vunpack.c.l.b16 %v412
    %v2227 = vunpack.c.h.b16 %v412
    %v2228 = vunpack.c.l.b16 %v413
    %v2229 = vunpack.c.h.b16 %v413
    %v2230 = vunpack.c.l.b16 %v414
    %v2231 = vunpack.c.h.b16 %v414
    %v2232 = vunpack.c.l.b16 %v415
    %v2233 = vunpack.c.h.b16 %v415
    %v2234 = vunpack.c.l.b16 %v416
    %v2235 = vunpack.c.h.b16 %v416
    %v2236 = vunpack.c.l.b16 %v417
    %v2237 = vunpack.c.h.b16 %v417
    %v2238 = vunpack.c.l.b16 %v418
    %v2239 = vunpack.c.h.b16 %v418
    %v2240 = vunpack.c.l.b16 %v419
    %v2241 = vunpack.c.h.b16 %v419
    %v2242 = vunpack.c.l.b16 %v420
    %v2243 = vunpack.c.h.b16 %v420
    %v2244 = vunpack.c.l.b16 %v421
    %v2245 = vunpack.c.h.b16 %v421
    %v2246 = vunpack.c.l.b16 %v422
    %v2247 = vunpack.c.h.b16 %v422
    %v2248 = vunpack.c.l.b16 %v423
    %v2249 = vunpack.c.h.b16 %v423
    %v2250 = vunpack.c.l.b16 %v424
    %v2251 = vunpack.c.h.b16 %v424
    %v2252 = vunpack.c.l.b16 %v425
    %v2253 = vunpack.c.h.b16 %v425
    %v2254 = vunpack.c.l.b16 %v426
    %v2255 = vunpack.c.h.b16 %v426
    %v2256 = vunpack.c.l.b16 %v427
    %v2257 = vunpack.c.h.b16 %v427
    %v2258 = vunpack.c.l.b16 %v428
    %v2259 = vunpack.c.h.b16 %v428
    %v2260 = vunpack.c.l.b16 %v429
    %v2261 = vunpack.c.h.b16 %v429
    %v2262 = vunpack.c.l.b16 %v430
    %v2263 = vunpack.c.h.b16 %v430
    %v2264 = vunpack.c.l.b16 %v431
    %v2265 = vunpack.c.h.b16 %v431
    %v2266 = vunpack.c.l.b16 %v432
    %v2267 = vunpack.c.h.b16 %v432
    %v2268 = vunpack.c.l.b16 %v433
    %v2269 = vunpack.c.h.b16 %v433
    %v2270 = vunpack.c.l.b16 %v434
    %v2271 = vunpack.c.h.b16 %v434
    %v2272 = vunpack.c.l.b16 %v435
    %v2273 = vunpack.c.h.b16 %v435
    %v2274 = vunpack.c.l.b16 %v436
    %v2275 = vunpack.c.h.b16 %v436
    %v2276 = vunpack.c.l.b16 %v437
    %v2277 = vunpack.c.h.b16 %v437
    %v2278 = vunpack.c.l.b16 %v438
    %v2279 = vunpack.c.h.b16 %v438
    %v2280 = vunpack.c.l.b16 %v439
    %v2281 = vunpack.c.h.b16 %v439
    %v2282 = vunpack.c.l.b16 %v440
    %v2283 = vunpack.c.h.b16 %v440
    %v2284 = vunpack.c.l.b16 %v441
    %v2285 = vunpack.c.h.b16 %v441
    %v2286 = vunpack.c.l.b16 %v442
    %v2287 = vunpack.c.h.b16 %v442
    %v2288 = vunpack.c.l.b16 %v443
    %v2289 = vunpack.c.h.b16 %v443
    %v2290 = vunpack.c.l.b16 %v444
    %v2291 = vunpack.c.h.b16 %v444
    %v2292 = vunpack.c.l.b16 %v445
    %v2293 = vunpack.c.h.b16 %v445
    %v2294 = vunpack.c.l.b16 %v446
    %v2295 = vunpack.c.h.b16 %v446
    %v2296 = vunpack.c.l.b16 %v447
    %v2297 = vunpack.c.h.b16 %v447
    %v2298 = vunpack.c.l.b16 %v448
    %v2299 = vunpack.c.h.b16 %v448
    %v2300 = vunpack.c.l.b16 %v449
    %v2301 = vunpack.c.h.b16 %v449
    %v2302 = vunpack.c.l.b16 %v450
    %v2303 = vunpack.c.h.b16 %v450
    %v2304 = vunpack.c.l.b16 %v451
    %v2305 = vunpack.c.h.b16 %v451
    %v2306 = vunpack.c.l.b16 %v452
    %v2307 = vunpack.c.h.b16 %v452
    %v2308 = vunpack.c.l.b16 %v453
    %v2309 = vunpack.c.h.b16 %v453
    %v2310 = vunpack.c.l.b16 %v454
    %v2311 = vunpack.c.h.b16 %v454
    %v2312 = vunpack.c.l.b16 %v455
    %v2313 = vunpack.c.h.b16 %v455
    %v2314 = vunpack.c.l.b16 %v456
    %v2315 = vunpack.c.h.b16 %v456
    %v2316 = vunpack.c.l.b16 %v457
    %v2317 = vunpack.c.h.b16 %v457
    %v2318 = vunpack.c.l.b16 %v458
    %v2319 = vunpack.c.h.b16 %v458
    %v2320 = vunpack.c.l.b16 %v459
    %v2321 = vunpack.c.h.b16 %v459
    %v2322 = vunpack.c.l.b16 %v460
    %v2323 = vunpack.c.h.b16 %v460
    %v2324 = vunpack.c.l.b16 %v461
    %v2325 = vunpack.c.h.b16 %v461
    %v2326 = vunpack.c.l.b16 %v462
    %v2327 = vunpack.c.h.b16 %v462
    %v2328 = vunpack.c.l.b16 %v463
    %v2329 = vunpack.c.h.b16 %v463
    %v2330 = vunpack.c.l.b16 %v464
    %v2331 = vunpack.c.h.b16 %v464
    %v2332 = vunpack.c.l.b16 %v465
    %v2333 = vunpack.c.h.b16 %v465
    %v2334 = vunpack.c.l.b16 %v466
    %v2335 = vunpack.c.h.b16 %v466
    %v2336 = vunpack.c.l.b16 %v467
    %v2337 = vunpack.c.h.b16 %v467
    %v2338 = vunpack.c.l.b16 %v468
    %v2339 = vunpack.c.h.b16 %v468
    %v2340 = vunpack.c.l.b16 %v469
    %v2341 = vunpack.c.h.b16 %v469
    %v2342 = vunpack.c.l.b16 %v470
    %v2343 = vunpack.c.h.b16 %v470
    %v2344 = vunpack.c.l.b16 %v471
    %v2345 = vunpack.c.h.b16 %v471
    %v2346 = vunpack.c.l.b16 %v472
    %v2347 = vunpack.c.h.b16 %v472
    %v2348 = vunpack.c.l.b16 %v473
    %v2349 = vunpack.c.h.b16 %v473
    %v2350 = vunpack.c.l.b16 %v474
    %v2351 = vunpack.c.h.b16 %v474
    %v2352 = vunpack.c.l.b16 %v475
    %v2353 = vunpack.c.h.b16 %v475
    %v2354 = vunpack.c.l.b16 %v476
    %v2355 = vunpack.c.h.b16 %v476
    %v2356 = vunpack.c.l.b16 %v477
    %v2357 = vunpack.c.h.b16 %v477
    %v2358 = vunpack.c.l.b16 %v478
    %v2359 = vunpack.c.h.b16 %v478
    %v2360 = vunpack.c.l.b16 %v479
    %v2361 = vunpack.c.h.b16 %v479
    %v2362 = vunpack.c.l.b16 %v480
    %v2363 = vunpack.c.h.b16 %v480
    %v2364 = vunpack.c.l.b16 %v481
    %v2365 = vunpack.c.h.b16 %v481
    %v2366 = vunpack.c.l.b16 %v482
    %v2367 = vunpack.c.h.b16 %v482
    %v2368 = vunpack.c.l.b16 %v483
    %v2369 = vunpack.c.h.b16 %v483
    %v2370 = vunpack.c.l.b16 %v484
    %v2371 = vunpack.c.h.b16 %v484
    %v2372 = vunpack.c.l.b16 %v485
    %v2373 = vunpack.c.h.b16 %v485
    %v2374 = vunpack.c.l.b16 %v486
    %v2375 = vunpack.c.h.b16 %v486
    %v2376 = vunpack.c.l.b16 %v487
    %v2377 = vunpack.c.h.b16 %v487
    %v2378 = vunpack.c.l.b16 %v488
    %v2379 = vunpack.c.h.b16 %v488
    %v2380 = vunpack.c.l.b16 %v489
    %v2381 = vunpack.c.h.b16 %v489
    %v2382 = vunpack.c.l.b16 %v490
    %v2383 = vunpack.c.h.b16 %v490
    %v2384 = vunpack.c.l.b16 %v491
    %v2385 = vunpack.c.h.b16 %v491
    %v2386 = vunpack.c.l.b16 %v492
    %v2387 = vunpack.c.h.b16 %v492
    %v2388 = vunpack.c.l.b16 %v493
    %v2389 = vunpack.c.h.b16 %v493
    %v2390 = vunpack.c.l.b16 %v494
    %v2391 = vunpack.c.h.b16 %v494
    %v2392 = vunpack.c.l.b16 %v495
    %v2393 = vunpack.c.h.b16 %v495
    %v2394 = vunpack.c.l.b16 %v496
    %v2395 = vunpack.c.h.b16 %v496
    %v2396 = vunpack.c.l.b16 %v497
    %v2397 = vunpack.c.h.b16 %v497
    %v2398 = vunpack.c.l.b16 %v498
    %v2399 = vunpack.c.h.b16 %v498
    %v2400 = vunpack.c.l.b16 %v499
    %v2401 = vunpack.c.h.b16 %v499
    %v2402 = vunpack.c.l.b16 %v500
    %v2403 = vunpack.c.h.b16 %v500
    %v2404 = vunpack.c.l.b16 %v501
    %v2405 = vunpack.c.h.b16 %v501
    %v2406 = vunpack.c.l.b16 %v502
    %v2407 = vunpack.c.h.b16 %v502
    %v2408 = vunpack.c.l.b16 %v503
    %v2409 = vunpack.c.h.b16 %v503
    %v2410 = vunpack.c.l.b16 %v504
    %v2411 = vunpack.c.h.b16 %v504
    %v2412 = vunpack.c.l.b16 %v505
    %v2413 = vunpack.c.h.b16 %v505
    %v2414 = vunpack.c.l.b16 %v506
    %v2415 = vunpack.c.h.b16 %v506
    %v2416 = vunpack.c.l.b16 %v507
    %v2417 = vunpack.c.h.b16 %v507
    %v2418 = vunpack.c.l.b16 %v508
    %v2419 = vunpack.c.h.b16 %v508
    %v2420 = vunpack.c.l.b16 %v509
    %v2421 = vunpack.c.h.b16 %v509
    %v2422 = vunpack.c.l.b16 %v510
    %v2423 = vunpack.c.h.b16 %v510
    %v2424 = vunpack.c.l.b16 %v511
    %v2425 = vunpack.c.h.b16 %v511
    %v2426 = vunpack.c.l.b16 %v512
    %v2427 = vunpack.c.h.b16 %v512
    %v2428 = vunpack.c.l.b16 %v513
    %v2429 = vunpack.c.h.b16 %v513
    %v2430 = vunpack.c.l.b16 %v514
    %v2431 = vunpack.c.h.b16 %v514
    %v2432 = vunpack.c.l.b16 %v515
    %v2433 = vunpack.c.h.b16 %v515
    %v2434 = vunpack.c.l.b16 %v516
    %v2435 = vunpack.c.h.b16 %v516
    %v2436 = vunpack.c.l.b16 %v517
    %v2437 = vunpack.c.h.b16 %v517
    %v2438 = vunpack.c.l.b16 %v518
    %v2439 = vunpack.c.h.b16 %v518
    %v2440 = vunpack.c.l.b16 %v519
    %v2441 = vunpack.c.h.b16 %v519
    %v2442 = vunpack.c.l.b16 %v520
    %v2443 = vunpack.c.h.b16 %v520
    %v2444 = vunpack.c.l.b16 %v521
    %v2445 = vunpack.c.h.b16 %v521
    %v2446 = vunpack.c.l.b16 %v522
    %v2447 = vunpack.c.h.b16 %v522
    %v2448 = vunpack.c.l.b16 %v523
    %v2449 = vunpack.c.h.b16 %v523
    %v2450 = vunpack.c.l.b16 %v524
    %v2451 = vunpack.c.h.b16 %v524
    %v2452 = vunpack.c.l.b16 %v525
    %v2453 = vunpack.c.h.b16 %v525
    %v2454 = vunpack.c.l.b16 %v526
    %v2455 = vunpack.c.h.b16 %v526
    %v2456 = vunpack.c.l.b16 %v527
    %v2457 = vunpack.c.h.b16 %v527
    %v2458 = vunpack.c.l.b16 %v528
    %v2459 = vunpack.c.h.b16 %v528
    %v2460 = vunpack.c.l.b16 %v529
    %v2461 = vunpack.c.h.b16 %v529
    %v2462 = vunpack.c.l.b16 %v530
    %v2463 = vunpack.c.h.b16 %v530
    %v2464 = vunpack.c.l.b16 %v531
    %v2465 = vunpack.c.h.b16 %v531
    %v2466 = vunpack.c.l.b16 %v532
    %v2467 = vunpack.c.h.b16 %v532
    %v2468 = vunpack.c.l.b16 %v533
    %v2469 = vunpack.c.h.b16 %v533
    %v2470 = vunpack.c.l.b16 %v534
    %v2471 = vunpack.c.h.b16 %v534
    %v2472 = vunpack.c.l.b16 %v535
    %v2473 = vunpack.c.h.b16 %v535
    %v2474 = vunpack.c.l.b16 %v536
    %v2475 = vunpack.c.h.b16 %v536
    %v2476 = vunpack.c.l.b16 %v537
    %v2477 = vunpack.c.h.b16 %v537
    %v2478 = vunpack.c.l.b16 %v538
    %v2479 = vunpack.c.h.b16 %v538
    %v2480 = vunpack.c.l.b16 %v539
    %v2481 = vunpack.c.h.b16 %v539
    %v2482 = vunpack.c.l.b16 %v540
    %v2483 = vunpack.c.h.b16 %v540
    %v2484 = vunpack.c.l.b16 %v541
    %v2485 = vunpack.c.h.b16 %v541
    %v2486 = vunpack.c.l.b16 %v542
    %v2487 = vunpack.c.h.b16 %v542
    %v2488 = vunpack.c.l.b16 %v543
    %v2489 = vunpack.c.h.b16 %v543
    %v2490 = vunpack.c.l.b16 %v544
    %v2491 = vunpack.c.h.b16 %v544
    %v2492 = vunpack.c.l.b16 %v545
    %v2493 = vunpack.c.h.b16 %v545
    %v2494 = vunpack.c.l.b16 %v546
    %v2495 = vunpack.c.h.b16 %v546
    %v2496 = vunpack.c.l.b16 %v547
    %v2497 = vunpack.c.h.b16 %v547
    %v2498 = vunpack.c.l.b16 %v548
    %v2499 = vunpack.c.h.b16 %v548
    %v2500 = vunpack.c.l.b16 %v549
    %v2501 = vunpack.c.h.b16 %v549
    %v2502 = vunpack.c.l.b16 %v550
    %v2503 = vunpack.c.h.b16 %v550
    %v2504 = vunpack.c.l.b16 %v551
    %v2505 = vunpack.c.h.b16 %v551
    %v2506 = vunpack.c.l.b16 %v552
    %v2507 = vunpack.c.h.b16 %v552
    %v2508 = vunpack.c.l.b16 %v553
    %v2509 = vunpack.c.h.b16 %v553
    %v2510 = vunpack.c.l.b16 %v554
    %v2511 = vunpack.c.h.b16 %v554
    %v2512 = vunpack.c.l.b16 %v555
    %v2513 = vunpack.c.h.b16 %v555
    %v2514 = vunpack.c.l.b16 %v556
    %v2515 = vunpack.c.h.b16 %v556
    %v2516 = vunpack.c.l.b16 %v557
    %v2517 = vunpack.c.h.b16 %v557
    %v2518 = vunpack.c.l.b16 %v558
    %v2519 = vunpack.c.h.b16 %v558
    %v2520 = vunpack.c.l.b16 %v559
    %v2521 = vunpack.c.h.b16 %v559
    %v2522 = vunpack.c.l.b16 %v560
    %v2523 = vunpack.c.h.b16 %v560
    %v2524 = vunpack.c.l.b16 %v561
    %v2525 = vunpack.c.h.b16 %v561
    %v2526 = vunpack.c.l.b16 %v562
    %v2527 = vunpack.c.h.b16 %v562
    %v2528 = vunpack.c.l.b16 %v563
    %v2529 = vunpack.c.h.b16 %v563
    %v2530 = vunpack.c.l.b16 %v564
    %v2531 = vunpack.c.h.b16 %v564
    %v2532 = vunpack.c.l.b16 %v565
    %v2533 = vunpack.c.h.b16 %v565
    %v2534 = vunpack.c.l.b16 %v566
    %v2535 = vunpack.c.h.b16 %v566
    %v2536 = vunpack.c.l.b16 %v567
    %v2537 = vunpack.c.h.b16 %v567
    %v2538 = vunpack.c.l.b16 %v568
    %v2539 = vunpack.c.h.b16 %v568
    %v2540 = vunpack.c.l.b16 %v569
    %v2541 = vunpack.c.h.b16 %v569
    %v2542 = vunpack.c.l.b16 %v570
    %v2543 = vunpack.c.h.b16 %v570
    %v2544 = vunpack.c.l.b16 %v571
    %v2545 = vunpack.c.h.b16 %v571
    %v2546 = vunpack.c.l.b16 %v572
    %v2547 = vunpack.c.h.b16 %v572
    %v2548 = vunpack.c.l.b16 %v573
    %v2549 = vunpack.c.h.b16 %v573
    %v2550 = vunpack.c.l.b16 %v574
    %v2551 = vunpack.c.h.b16 %v574
    %v2552 = vunpack.c.l.b16 %v575
    %v2553 = vunpack.c.h.b16 %v575
    %v2554 = vunpack.c.l.b16 %v576
    %v2555 = vunpack.c.h.b16 %v576
    %v2556 = vunpack.c.l.b16 %v577
    %v2557 = vunpack.c.h.b16 %v577
    %v2558 = vunpack.c.l.b16 %v578
    %v2559 = vunpack.c.h.b16 %v578
    %v2560 = vunpack.c.l.b16 %v579
    %v2561 = vunpack.c.h.b16 %v579
    %v2562 = vunpack.c.l.b16 %v580
    %v2563 = vunpack.c.h.b16 %v580
    %v2564 = vunpack.c.l.b16 %v581
    %v2565 = vunpack.c.h.b16 %v581
    %v2566 = vunpack.c.l.b16 %v582
    %v2567 = vunpack.c.h.b16 %v582
    %v2568 = vunpack.c.l.b16 %v583
    %v2569 = vunpack.c.h.b16 %v583
    %v2570 = vunpack.c.l.b16 %v584
    %v2571 = vunpack.c.h.b16 %v584
    %v2572 = vunpack.c.l.b16 %v585
    %v2573 = vunpack.c.h.b16 %v585
    %v2574 = vunpack.c.l.b16 %v586
    %v2575 = vunpack.c.h.b16 %v586
    %v2576 = vunpack.c.l.b16 %v587
    %v2577 = vunpack.c.h.b16 %v587
    %v2578 = vunpack.c.l.b16 %v588
    %v2579 = vunpack.c.h.b16 %v588
    %v2580 = vunpack.c.l.b16 %v589
    %v2581 = vunpack.c.h.b16 %v589
    %v2582 = vunpack.c.l.b16 %v590
    %v2583 = vunpack.c.h.b16 %v590
    %v2584 = vunpack.c.l.b16 %v591
    %v2585 = vunpack.c.h.b16 %v591
    %v2586 = vunpack.c.l.b16 %v592
    %v2587 = vunpack.c.h.b16 %v592
    %v2588 = vunpack.c.l.b16 %v593
    %v2589 = vunpack.c.h.b16 %v593
    %v2590 = vunpack.c.l.b16 %v594
    %v2591 = vunpack.c.h.b16 %v594
    %v2592 = vunpack.c.l.b16 %v595
    %v2593 = vunpack.c.h.b16 %v595
    %v2594 = vunpack.c.l.b16 %v596
    %v2595 = vunpack.c.h.b16 %v596
    %v2596 = vunpack.c.l.b16 %v597
    %v2597 = vunpack.c.h.b16 %v597
    %v2598 = vunpack.c.l.b16 %v598
    %v2599 = vunpack.c.h.b16 %v598
    %v2600 = vunpack.c.l.b16 %v599
    %v2601 = vunpack.c.h.b16 %v599
    %v2602 = vunpack.c.l.b16 %v600
    %v2603 = vunpack.c.h.b16 %v600
    %v2604 = vunpack.c.l.b16 %v601
    %v2605 = vunpack.c.h.b16 %v601
    %v2606 = vunpack.c.l.b16 %v602
    %v2607 = vunpack.c.h.b16 %v602
    %v2608 = vunpack.c.l.b16 %v603
    %v2609 = vunpack.c.h.b16 %v603
    %v2610 = vunpack.c.l.b16 %v604
    %v2611 = vunpack.c.h.b16 %v604
    %v2612 = vunpack.c.l.b16 %v605
    %v2613 = vunpack.c.h.b16 %v605
    %v2614 = vunpack.c.l.b16 %v606
    %v2615 = vunpack.c.h.b16 %v606
    %v2616 = vunpack.c.l.b16 %v607
    %v2617 = vunpack.c.h.b16 %v607
    %v2618 = vunpack.c.l.b16 %v608
    %v2619 = vunpack.c.h.b16 %v608
    %v2620 = vunpack.c.l.b16 %v609
    %v2621 = vunpack.c.h.b16 %v609
    %v2622 = vunpack.c.l.b16 %v610
    %v2623 = vunpack.c.h.b16 %v610
    %v2624 = vunpack.c.l.b16 %v611
    %v2625 = vunpack.c.h.b16 %v611
    %v2626 = vunpack.c.l.b16 %v612
    %v2627 = vunpack.c.h.b16 %v612
    %v2628 = vunpack.c.l.b16 %v613
    %v2629 = vunpack.c.h.b16 %v613
    %v2630 = vunpack.c.l.b16 %v614
    %v2631 = vunpack.c.h.b16 %v614
    %v2632 = vunpack.c.l.b16 %v615
    %v2633 = vunpack.c.h.b16 %v615
    %v2634 = vunpack.c.l.b16 %v616
    %v2635 = vunpack.c.h.b16 %v616
    %v2636 = vunpack.c.l.b16 %v617
    %v2637 = vunpack.c.h.b16 %v617
    %v2638 = vunpack.c.l.b16 %v618
    %v2639 = vunpack.c.h.b16 %v618
    %v2640 = vunpack.c.l.b16 %v619
    %v2641 = vunpack.c.h.b16 %v619
    %v2642 = vunpack.c.l.b16 %v620
    %v2643 = vunpack.c.h.b16 %v620
    %v2644 = vunpack.c.l.b16 %v621
    %v2645 = vunpack.c.h.b16 %v621
    %v2646 = vunpack.c.l.b16 %v622
    %v2647 = vunpack.c.h.b16 %v622
    %v2648 = vunpack.c.l.b16 %v623
    %v2649 = vunpack.c.h.b16 %v623
    %v2650 = vunpack.c.l.b16 %v624
    %v2651 = vunpack.c.h.b16 %v624
    %v2652 = vunpack.c.l.b16 %v625
    %v2653 = vunpack.c.h.b16 %v625
    %v2654 = vunpack.c.l.b16 %v626
    %v2655 = vunpack.c.h.b16 %v626
    %v2656 = vunpack.c.l.b16 %v627
    %v2657 = vunpack.c.h.b16 %v627
    %v2658 = vunpack.c.l.b16 %v628
    %v2659 = vunpack.c.h.b16 %v628
    %v2660 = vunpack.c.l.b16 %v629
    %v2661 = vunpack.c.h.b16 %v629
    %v2662 = vunpack.c.l.b16 %v630
    %v2663 = vunpack.c.h.b16 %v630
    %v2664 = vunpack.c.l.b16 %v631
    %v2665 = vunpack.c.h.b16 %v631
    %v2666 = vunpack.c.l.b16 %v632
    %v2667 = vunpack.c.h.b16 %v632
    %v2668 = vunpack.c.l.b16 %v633
    %v2669 = vunpack.c.h.b16 %v633
    %v2670 = vunpack.c.l.b16 %v634
    %v2671 = vunpack.c.h.b16 %v634
    %v2672 = vunpack.c.l.b16 %v635
    %v2673 = vunpack.c.h.b16 %v635
    %v2674 = vunpack.c.l.b16 %v636
    %v2675 = vunpack.c.h.b16 %v636
    %v2676 = vunpack.c.l.b16 %v637
    %v2677 = vunpack.c.h.b16 %v637
    %v2678 = vunpack.c.l.b16 %v638
    %v2679 = vunpack.c.h.b16 %v638
    %v2680 = vunpack.c.l.b16 %v639
    %v2681 = vunpack.c.h.b16 %v639
    %v2682 = vunpack.c.l.b16 %v640
    %v2683 = vunpack.c.h.b16 %v640
    %v2684 = vunpack.c.l.b16 %v641
    %v2685 = vunpack.c.h.b16 %v641
    %v2686 = vunpack.c.l.b16 %v642
    %v2687 = vunpack.c.h.b16 %v642
    %v2688 = vunpack.c.l.b16 %v643
    %v2689 = vunpack.c.h.b16 %v643
    %v2690 = vunpack.c.l.b16 %v644
    %v2691 = vunpack.c.h.b16 %v644
    %v2692 = vunpack.c.l.b16 %v645
    %v2693 = vunpack.c.h.b16 %v645
    %v2694 = vunpack.c.l.b16 %v646
    %v2695 = vunpack.c.h.b16 %v646
    %v2696 = vunpack.c.l.b16 %v647
    %v2697 = vunpack.c.h.b16 %v647
    %v2698 = vunpack.c.l.b16 %v648
    %v2699 = vunpack.c.h.b16 %v648
    %v2700 = vunpack.c.l.b16 %v649
    %v2701 = vunpack.c.h.b16 %v649
    %v2702 = vunpack.c.l.b16 %v650
    %v2703 = vunpack.c.h.b16 %v650
    %v2704 = vunpack.c.l.b16 %v651
    %v2705 = vunpack.c.h.b16 %v651
    %v2706 = vunpack.c.l.b16 %v652
    %v2707 = vunpack.c.h.b16 %v652
    %v2708 = vunpack.c.l.b16 %v653
    %v2709 = vunpack.c.h.b16 %v653
    %v2710 = vunpack.c.l.b16 %v654
    %v2711 = vunpack.c.h.b16 %v654
    %v2712 = vunpack.c.l.b16 %v655
    %v2713 = vunpack.c.h.b16 %v655
    %v2714 = vunpack.c.l.b16 %v656
    %v2715 = vunpack.c.h.b16 %v656
    %v2716 = vunpack.c.l.b16 %v657
    %v2717 = vunpack.c.h.b16 %v657
    %v2718 = vunpack.c.l.b16 %v658
    %v2719 = vunpack.c.h.b16 %v658
    %v2720 = vunpack.c.l.b16 %v659
    %v2721 = vunpack.c.h.b16 %v659
    %v2722 = vunpack.c.l.b16 %v660
    %v2723 = vunpack.c.h.b16 %v660
    %v2724 = vunpack.c.l.b16 %v661
    %v2725 = vunpack.c.h.b16 %v661
    %v2726 = vunpack.c.l.b16 %v662
    %v2727 = vunpack.c.h.b16 %v662
    %v2728 = vunpack.c.l.b16 %v663
    %v2729 = vunpack.c.h.b16 %v663
    %v2730 = vunpack.c.l.b16 %v664
    %v2731 = vunpack.c.h.b16 %v664
    %v2732 = vunpack.c.l.b16 %v665
    %v2733 = vunpack.c.h.b16 %v665
    %v2734 = vunpack.c.l.b16 %v666
    %v2735 = vunpack.c.h.b16 %v666
    %v2736 = vunpack.c.l.b16 %v667
    %v2737 = vunpack.c.h.b16 %v667
    %v2738 = vunpack.c.l.b16 %v668
    %v2739 = vunpack.c.h.b16 %v668
    %v2740 = vunpack.c.l.b16 %v669
    %v2741 = vunpack.c.h.b16 %v669
    %v2742 = vunpack.c.l.b16 %v670
    %v2743 = vunpack.c.h.b16 %v670
    %v2744 = vunpack.c.l.b16 %v671
    %v2745 = vunpack.c.h.b16 %v671
    %v2746 = vunpack.c.l.b16 %v672
    %v2747 = vunpack.c.h.b16 %v672
    %v2748 = vunpack.c.l.b16 %v673
    %v2749 = vunpack.c.h.b16 %v673
    %v2750 = vunpack.c.l.b16 %v674
    %v2751 = vunpack.c.h.b16 %v674
    %v2752 = vunpack.c.l.b16 %v675
    %v2753 = vunpack.c.h.b16 %v675
    %v2754 = vunpack.c.l.b16 %v676
    %v2755 = vunpack.c.h.b16 %v676
    %v2756 = vunpack.c.l.b16 %v677
    %v2757 = vunpack.c.h.b16 %v677
    %v2758 = vunpack.c.l.b16 %v678
    %v2759 = vunpack.c.h.b16 %v678
    %v2760 = vunpack.c.l.b16 %v679
    %v2761 = vunpack.c.h.b16 %v679
    %v2762 = vunpack.c.l.b16 %v680
    %v2763 = vunpack.c.h.b16 %v680
    %v2764 = vunpack.c.l.b16 %v681
    %v2765 = vunpack.c.h.b16 %v681
    %v2766 = vunpack.c.l.b16 %v682
    %v2767 = vunpack.c.h.b16 %v682
    %v2768 = vunpack.c.l.b16 %v683
    %v2769 = vunpack.c.h.b16 %v683
    %v2770 = vunpack.c.l.b16 %v684
    %v2771 = vunpack.c.h.b16 %v684
    %v2772 = vunpack.c.l.b16 %v685
    %v2773 = vunpack.c.h.b16 %v685
    %v2774 = vunpack.c.l.b16 %v686
    %v2775 = vunpack.c.h.b16 %v686
    %v2776 = vunpack.c.l.b16 %v687
    %v2777 = vunpack.c.h.b16 %v687
    %v2778 = vunpack.c.l.b16 %v688
    %v2779 = vunpack.c.h.b16 %v688
    %v2780 = vunpack.c.l.b16 %v689
    %v2781 = vunpack.c.h.b16 %v689
    %v2782 = vunpack.c.l.b16 %v690
    %v2783 = vunpack.c.h.b16 %v690
    %v2784 = vunpack.c.l.b16 %v691
    %v2785 = vunpack.c.h.b16 %v691
    %v2786 = vunpack.c.l.b16 %v692
    %v2787 = vunpack.c.h.b16 %v692
    %v2788 = vunpack.c.l.b16 %v693
    %v2789 = vunpack.c.h.b16 %v693
    %v2790 = vunpack.c.l.b16 %v694
    %v2791 = vunpack.c.h.b16 %v694
    %v2792 = vunpack.c.l.b16 %v695
    %v2793 = vunpack.c.h.b16 %v695
    %v2794 = vunpack.c.l.b16 %v696
    %v2795 = vunpack.c.h.b16 %v696
    %v2796 = vunpack.c.l.b16 %v697
    %v2797 = vunpack.c.h.b16 %v697
    %v2798 = vunpack.c.l.b16 %v698
    %v2799 = vunpack.c.h.b16 %v698
    %v2800 = vunpack.c.l.b16 %v699
    %v2801 = vunpack.c.h.b16 %v699
    %v2802 = vunpack.c.l.b16 %v700
    %v2803 = vunpack.c.h.b16 %v700
    %v2804 = vunpack.c.l.b16 %v701
    %v2805 = vunpack.c.h.b16 %v701
    %v2806 = vunpack.c.l.b16 %v702
    %v2807 = vunpack.c.h.b16 %v702
    %v2808 = vunpack.c.l.b16 %v703
    %v2809 = vunpack.c.h.b16 %v703
    %v2810 = vunpack.c.l.b16 %v704
    %v2811 = vunpack.c.h.b16 %v704
    %v2812 = vunpack.c.l.b16 %v705
    %v2813 = vunpack.c.h.b16 %v705
    %v2814 = vunpack.c.l.b16 %v706
    %v2815 = vunpack.c.h.b16 %v706
    %v2816 = vunpack.c.l.b16 %v707
    %v2817 = vunpack.c.h.b16 %v707
    %v2818 = vunpack.c.l.b16 %v708
    %v2819 = vunpack.c.h.b16 %v708
    %v2820 = vunpack.c.l.b16 %v709
    %v2821 = vunpack.c.h.b16 %v709
    %v2822 = vunpack.c.l.b16 %v710
    %v2823 = vunpack.c.h.b16 %v710
    %v2824 = vunpack.c.l.b16 %v711
    %v2825 = vunpack.c.h.b16 %v711
    %v2826 = vunpack.c.l.b16 %v712
    %v2827 = vunpack.c.h.b16 %v712
    %v2828 = vunpack.c.l.b16 %v713
    %v2829 = vunpack.c.h.b16 %v713
    %v2830 = vunpack.c.l.b16 %v714
    %v2831 = vunpack.c.h.b16 %v714
    %v2832 = vunpack.c.l.b16 %v715
    %v2833 = vunpack.c.h.b16 %v715
    %v2834 = vunpack.c.l.b16 %v716
    %v2835 = vunpack.c.h.b16 %v716
    %v2836 = vunpack.c.l.b16 %v717
    %v2837 = vunpack.c.h.b16 %v717
    %v2838 = vunpack.c.l.b16 %v718
    %v2839 = vunpack.c.h.b16 %v718
    %v2840 = vunpack.c.l.b16 %v719
    %v2841 = vunpack.c.h.b16 %v719
    %v2842 = vunpack.c.l.b16 %v720
    %v2843 = vunpack.c.h.b16 %v720
    %v2844 = vunpack.c.l.b16 %v721
    %v2845 = vunpack.c.h.b16 %v721
    %v2846 = vunpack.c.l.b16 %v722
    %v2847 = vunpack.c.h.b16 %v722
    %v2848 = vunpack.c.l.b16 %v723
    %v2849 = vunpack.c.h.b16 %v723
    %v2850 = vunpack.c.l.b16 %v724
    %v2851 = vunpack.c.h.b16 %v724
    %v2852 = vunpack.c.l.b16 %v725
    %v2853 = vunpack.c.h.b16 %v725
    %v2854 = vunpack.c.l.b16 %v726
    %v2855 = vunpack.c.h.b16 %v726
    %v2856 = vunpack.c.l.b16 %v727
    %v2857 = vunpack.c.h.b16 %v727
    %v2858 = vunpack.c.l.b16 %v728
    %v2859 = vunpack.c.h.b16 %v728
    %v2860 = vunpack.c.l.b16 %v729
    %v2861 = vunpack.c.h.b16 %v729
    %v2862 = vunpack.c.l.b16 %v730
    %v2863 = vunpack.c.h.b16 %v730
    %v2864 = vunpack.c.l.b16 %v731
    %v2865 = vunpack.c.h.b16 %v731
    %v2866 = vunpack.c.l.b16 %v732
    %v2867 = vunpack.c.h.b16 %v732
    %v2868 = vunpack.c.l.b16 %v733
    %v2869 = vunpack.c.h.b16 %v733
    %v2870 = vunpack.c.l.b16 %v734
    %v2871 = vunpack.c.h.b16 %v734
    %v2872 = vunpack.c.l.b16 %v735
    %v2873 = vunpack.c.h.b16 %v735
    %v2874 = vunpack.c.l.b16 %v736
    %v2875 = vunpack.c.h.b16 %v736
    %v2876 = vunpack.c.l.b16 %v737
    %v2877 = vunpack.c.h.b16 %v737
    %v2878 = vunpack.c.l.b16 %v738
    %v2879 = vunpack.c.h.b16 %v738
    %v2880 = vunpack.c.l.b16 %v739
    %v2881 = vunpack.c.h.b16 %v739
    %v2882 = vunpack.c.l.b16 %v740
    %v2883 = vunpack.c.h.b16 %v740
    %v2884 = vunpack.c.l.b16 %v741
    %v2885 = vunpack.c.h.b16 %v741
    %v2886 = vunpack.c.l.b16 %v742
    %v2887 = vunpack.c.h.b16 %v742
    %v2888 = vunpack.c.l.b16 %v743
    %v2889 = vunpack.c.h.b16 %v743
    %v2890 = vunpack.c.l.b16 %v744
    %v2891 = vunpack.c.h.b16 %v744
    %v2892 = vunpack.c.l.b16 %v745
    %v2893 = vunpack.c.h.b16 %v745
    %v2894 = vunpack.c.l.b16 %v746
    %v2895 = vunpack.c.h.b16 %v746
    %v2896 = vunpack.c.l.b16 %v747
    %v2897 = vunpack.c.h.b16 %v747
    %v2898 = vunpack.c.l.b16 %v748
    %v2899 = vunpack.c.h.b16 %v748
    %v2900 = vunpack.c.l.b16 %v749
    %v2901 = vunpack.c.h.b16 %v749
    %v2902 = vunpack.c.l.b16 %v750
    %v2903 = vunpack.c.h.b16 %v750
    %v2904 = vunpack.c.l.b16 %v751
    %v2905 = vunpack.c.h.b16 %v751
    %v2906 = vunpack.c.l.b16 %v752
    %v2907 = vunpack.c.h.b16 %v752
    %v2908 = vunpack.c.l.b16 %v753
    %v2909 = vunpack.c.h.b16 %v753
    %v2910 = vunpack.c.l.b16 %v754
    %v2911 = vunpack.c.h.b16 %v754
    %v2912 = vunpack.c.l.b16 %v755
    %v2913 = vunpack.c.h.b16 %v755
    %v2914 = vunpack.c.l.b16 %v756
    %v2915 = vunpack.c.h.b16 %v756
    %v2916 = vunpack.c.l.b16 %v757
    %v2917 = vunpack.c.h.b16 %v757
    %v2918 = vunpack.c.l.b16 %v758
    %v2919 = vunpack.c.h.b16 %v758
    %v2920 = vunpack.c.l.b16 %v759
    %v2921 = vunpack.c.h.b16 %v759
    %v2922 = vunpack.c.l.b16 %v760
    %v2923 = vunpack.c.h.b16 %v760
    %v2924 = vunpack.c.l.b16 %v761
    %v2925 = vunpack.c.h.b16 %v761
    %v2926 = vunpack.c.l.b16 %v762
    %v2927 = vunpack.c.h.b16 %v762
    %v2928 = vunpack.c.l.b16 %v763
    %v2929 = vunpack.c.h.b16 %v763
    %v2930 = vunpack.c.l.b16 %v764
    %v2931 = vunpack.c.h.b16 %v764
    %v2932 = vunpack.c.l.b16 %v765
    %v2933 = vunpack.c.h.b16 %v765
    %v2934 = vunpack.c.l.b16 %v766
    %v2935 = vunpack.c.h.b16 %v766
    %v2936 = vunpack.c.l.b16 %v767
    %v2937 = vunpack.c.h.b16 %v767
    %v2938 = vunpack.c.l.b16 %v768
    %v2939 = vunpack.c.h.b16 %v768
    %v2940 = vunpack.c.l.b16 %v769
    %v2941 = vunpack.c.h.b16 %v769
    %v2942 = vunpack.c.l.b16 %v770
    %v2943 = vunpack.c.h.b16 %v770
    %v2944 = vunpack.c.l.b16 %v771
    %v2945 = vunpack.c.h.b16 %v771
    %v2946 = vunpack.c.l.b16 %v772
    %v2947 = vunpack.c.h.b16 %v772
    %v2948 = vunpack.c.l.b16 %v773
    %v2949 = vunpack.c.h.b16 %v773
    %v2950 = vunpack.c.l.b16 %v774
    %v2951 = vunpack.c.h.b16 %v774
    %v2952 = vunpack.c.l.b16 %v775
    %v2953 = vunpack.c.h.b16 %v775
    %v2954 = vunpack.c.l.b16 %v776
    %v2955 = vunpack.c.h.b16 %v776
    %v2956 = vunpack.c.l.b16 %v777
    %v2957 = vunpack.c.h.b16 %v777
    %v2958 = vunpack.c.l.b16 %v778
    %v2959 = vunpack.c.h.b16 %v778
    %v2960 = vunpack.c.l.b16 %v779
    %v2961 = vunpack.c.h.b16 %v779
    %v2962 = vunpack.c.l.b16 %v780
    %v2963 = vunpack.c.h.b16 %v780
    %v2964 = vunpack.c.l.b16 %v781
    %v2965 = vunpack.c.h.b16 %v781
    %v2966 = vunpack.c.l.b16 %v782
    %v2967 = vunpack.c.h.b16 %v782
    %v2968 = vunpack.c.l.b16 %v783
    %v2969 = vunpack.c.h.b16 %v783
    %v2970 = vunpack.c.l.b16 %v784
    %v2971 = vunpack.c.h.b16 %v784
    %v2972 = vunpack.c.l.b16 %v785
    %v2973 = vunpack.c.h.b16 %v785
    %v2974 = vunpack.c.l.b16 %v786
    %v2975 = vunpack.c.h.b16 %v786
    %v2976 = vunpack.c.l.b16 %v787
    %v2977 = vunpack.c.h.b16 %v787
    %v2978 = vunpack.c.l.b16 %v788
    %v2979 = vunpack.c.h.b16 %v788
    %v2980 = vunpack.c.l.b16 %v789
    %v2981 = vunpack.c.h.b16 %v789
    %v2982 = vunpack.c.l.b16 %v790
    %v2983 = vunpack.c.h.b16 %v790
    %v2984 = vunpack.c.l.b16 %v791
    %v2985 = vunpack.c.h.b16 %v791
    %v2986 = vunpack.c.l.b16 %v792
    %v2987 = vunpack.c.h.b16 %v792
    %v2988 = vunpack.c.l.b16 %v793
    %v2989 = vunpack.c.h.b16 %v793
    %v2990 = vunpack.c.l.b16 %v794
    %v2991 = vunpack.c.h.b16 %v794
    %v2992 = vunpack.c.l.b16 %v795
    %v2993 = vunpack.c.h.b16 %v795
    %v2994 = vunpack.c.l.b16 %v796
    %v2995 = vunpack.c.h.b16 %v796
    %v2996 = vunpack.c.l.b16 %v797
    %v2997 = vunpack.c.h.b16 %v797
    %v2998 = vunpack.c.l.b16 %v798
    %v2999 = vunpack.c.h.b16 %v798
    %v3000 = vunpack.c.l.b16 %v799
    %v3001 = vunpack.c.h.b16 %v799
    %v3002 = vunpack.c.l.b16 %v800
    %v3003 = vunpack.c.h.b16 %v800
    %v3004 = vunpack.c.l.b16 %v801
    %v3005 = vunpack.c.h.b16 %v801
    %v3006 = vunpack.c.l.b16 %v802
    %v3007 = vunpack.c.h.b16 %v802
    %v3008 = vunpack.c.l.b16 %v803
    %v3009 = vunpack.c.h.b16 %v803
    %v3010 = vunpack.c.l.b16 %v804
    %v3011 = vunpack.c.h.b16 %v804
    %v3012 = vunpack.c.l.b16 %v805
    %v3013 = vunpack.c.h.b16 %v805
    %v3014 = vunpack.c.l.b16 %v806
    %v3015 = vunpack.c.h.b16 %v806
    %v3016 = vunpack.c.l.b16 %v807
    %v3017 = vunpack.c.h.b16 %v807
    %v3018 = vunpack.c.l.b16 %v808
    %v3019 = vunpack.c.h.b16 %v808
    %v3020 = vunpack.c.l.b16 %v809
    %v3021 = vunpack.c.h.b16 %v809
    %v3022 = vunpack.c.l.b16 %v810
    %v3023 = vunpack.c.h.b16 %v810
    %v3024 = vunpack.c.l.b16 %v811
    %v3025 = vunpack.c.h.b16 %v811
    %v3026 = vunpack.c.l.b16 %v812
    %v3027 = vunpack.c.h.b16 %v812
    %v3028 = vunpack.c.l.b16 %v813
    %v3029 = vunpack.c.h.b16 %v813
    %v3030 = vunpack.c.l.b16 %v814
    %v3031 = vunpack.c.h.b16 %v814
    %v3032 = vunpack.c.l.b16 %v815
    %v3033 = vunpack.c.h.b16 %v815
    %v3034 = vunpack.c.l.b16 %v816
    %v3035 = vunpack.c.h.b16 %v816
    %v3036 = vunpack.c.l.b16 %v817
    %v3037 = vunpack.c.h.b16 %v817
    %v3038 = vunpack.c.l.b16 %v818
    %v3039 = vunpack.c.h.b16 %v818
    %v3040 = vunpack.c.l.b16 %v819
    %v3041 = vunpack.c.h.b16 %v819
    %v3042 = vunpack.c.l.b16 %v820
    %v3043 = vunpack.c.h.b16 %v820
    %v3044 = vunpack.c.l.b16 %v821
    %v3045 = vunpack.c.h.b16 %v821
    %v3046 = vunpack.c.l.b16 %v822
    %v3047 = vunpack.c.h.b16 %v822
    %v3048 = vunpack.c.l.b16 %v823
    %v3049 = vunpack.c.h.b16 %v823
    %v3050 = vunpack.c.l.b16 %v824
    %v3051 = vunpack.c.h.b16 %v824
    %v3052 = vunpack.c.l.b16 %v825
    %v3053 = vunpack.c.h.b16 %v825
    %v3054 = vunpack.c.l.b16 %v826
    %v3055 = vunpack.c.h.b16 %v826
    %v3056 = vunpack.c.l.b16 %v827
    %v3057 = vunpack.c.h.b16 %v827
    %v3058 = vunpack.c.l.b16 %v828
    %v3059 = vunpack.c.h.b16 %v828
    %v3060 = vunpack.c.l.b16 %v829
    %v3061 = vunpack.c.h.b16 %v829
    %v3062 = vunpack.c.l.b16 %v830
    %v3063 = vunpack.c.h.b16 %v830
    %v3064 = vunpack.c.l.b16 %v831
    %v3065 = vunpack.c.h.b16 %v831
    %v3066 = vunpack.c.l.b16 %v832
    %v3067 = vunpack.c.h.b16 %v832
    %v3068 = vunpack.c.l.b16 %v833
    %v3069 = vunpack.c.h.b16 %v833
    %v3070 = vunpack.c.l.b16 %v834
    %v3071 = vunpack.c.h.b16 %v834
    %v3072 = vunpack.c.l.b16 %v835
    %v3073 = vunpack.c.h.b16 %v835
    %v3074 = vunpack.c.l.b16 %v836
    %v3075 = vunpack.c.h.b16 %v836
    %v3076 = vunpack.c.l.b16 %v837
    %v3077 = vunpack.c.h.b16 %v837
    %v3078 = vunpack.c.l.b16 %v838
    %v3079 = vunpack.c.h.b16 %v838
    %v3080 = vunpack.c.l.b16 %v839
    %v3081 = vunpack.c.h.b16 %v839
    %v3082 = vunpack.c.l.b16 %v840
    %v3083 = vunpack.c.h.b16 %v840
    %v3084 = vunpack.c.l.b16 %v841
    %v3085 = vunpack.c.h.b16 %v841
    %v3086 = vunpack.c.l.b16 %v842
    %v3087 = vunpack.c.h.b16 %v842
    %v3088 = vunpack.c.l.b16 %v843
    %v3089 = vunpack.c.h.b16 %v843
    %v3090 = vunpack.c.l.b16 %v844
    %v3091 = vunpack.c.h.b16 %v844
    %v3092 = vunpack.c.l.b16 %v845
    %v3093 = vunpack.c.h.b16 %v845
    %v3094 = vunpack.c.l.b16 %v846
    %v3095 = vunpack.c.h.b16 %v846
    %v3096 = vunpack.c.l.b16 %v847
    %v3097 = vunpack.c.h.b16 %v847
    %v3098 = vunpack.c.l.b16 %v848
    %v3099 = vunpack.c.h.b16 %v848
    %v3100 = vunpack.c.l.b16 %v849
    %v3101 = vunpack.c.h.b16 %v849
    %v3102 = vunpack.c.l.b16 %v850
    %v3103 = vunpack.c.h.b16 %v850
    %v3104 = vunpack.c.l.b16 %v851
    %v3105 = vunpack.c.h.b16 %v851
    %v3106 = vunpack.c.l.b16 %v852
    %v3107 = vunpack.c.h.b16 %v852
    %v3108 = vunpack.c.l.b16 %v853
    %v3109 = vunpack.c.h.b16 %v853
    %v3110 = vunpack.c.l.b16 %v854
    %v3111 = vunpack.c.h.b16 %v854
    %v3112 = vunpack.c.l.b16 %v855
    %v3113 = vunpack.c.h.b16 %v855
    %v3114 = vunpack.c.l.b16 %v856
    %v3115 = vunpack.c.h.b16 %v856
    %v3116 = vunpack.c.l.b16 %v857
    %v3117 = vunpack.c.h.b16 %v857
    %v3118 = vunpack.c.l.b16 %v858
    %v3119 = vunpack.c.h.b16 %v858
    %v3120 = vunpack.c.l.b16 %v859
    %v3121 = vunpack.c.h.b16 %v859
    %v3122 = vunpack.c.l.b16 %v860
    %v3123 = vunpack.c.h.b16 %v860
    %v3124 = vunpack.c.l.b16 %v861
    %v3125 = vunpack.c.h.b16 %v861
    %v3126 = vunpack.c.l.b16 %v862
    %v3127 = vunpack.c.h.b16 %v862
    %v3128 = vunpack.c.l.b16 %v863
    %v3129 = vunpack.c.h.b16 %v863
    %v3130 = vunpack.c.l.b16 %v864
    %v3131 = vunpack.c.h.b16 %v864
    %v3132 = vunpack.c.l.b16 %v865
    %v3133 = vunpack.c.h.b16 %v865
    %v3134 = vunpack.c.l.b16 %v866
    %v3135 = vunpack.c.h.b16 %v866
    %v3136 = vunpack.c.l.b16 %v867
    %v3137 = vunpack.c.h.b16 %v867
    %v3138 = vunpack.c.l.b16 %v868
    %v3139 = vunpack.c.h.b16 %v868
    %v3140 = vunpack.c.l.b16 %v869
    %v3141 = vunpack.c.h.b16 %v869
    %v3142 = vunpack.c.l.b16 %v870
    %v3143 = vunpack.c.h.b16 %v870
    %v3144 = vunpack.c.l.b16 %v871
    %v3145 = vunpack.c.h.b16 %v871
    %v3146 = vunpack.c.l.b16 %v872
    %v3147 = vunpack.c.h.b16 %v872
    %v3148 = vunpack.c.l.b16 %v873
    %v3149 = vunpack.c.h.b16 %v873
    %v3150 = vunpack.c.l.b16 %v874
    %v3151 = vunpack.c.h.b16 %v874
    %v3152 = vunpack.c.l.b16 %v875
    %v3153 = vunpack.c.h.b16 %v875
    %v3154 = vunpack.c.l.b16 %v876
    %v3155 = vunpack.c.h.b16 %v876
    %v3156 = vunpack.c.l.b16 %v877
    %v3157 = vunpack.c.h.b16 %v877
    %v3158 = vunpack.c.l.b16 %v878
    %v3159 = vunpack.c.h.b16 %v878
    %v3160 = vunpack.c.l.b16 %v879
    %v3161 = vunpack.c.h.b16 %v879
    %v3162 = vunpack.c.l.b16 %v880
    %v3163 = vunpack.c.h.b16 %v880
    %v3164 = vunpack.c.l.b16 %v881
    %v3165 = vunpack.c.h.b16 %v881
    %v3166 = vunpack.c.l.b16 %v882
    %v3167 = vunpack.c.h.b16 %v882
    %v3168 = vunpack.c.l.b16 %v883
    %v3169 = vunpack.c.h.b16 %v883
    %v3170 = vunpack.c.l.b16 %v884
    %v3171 = vunpack.c.h.b16 %v884
    %v3172 = vunpack.c.l.b16 %v885
    %v3173 = vunpack.c.h.b16 %v885
    %v3174 = vunpack.c.l.b16 %v886
    %v3175 = vunpack.c.h.b16 %v886
    %v3176 = vunpack.c.l.b16 %v887
    %v3177 = vunpack.c.h.b16 %v887
    %v3178 = vunpack.c.l.b16 %v888
    %v3179 = vunpack.c.h.b16 %v888
    %v3180 = vunpack.c.l.b16 %v889
    %v3181 = vunpack.c.h.b16 %v889
    %v3182 = vunpack.c.l.b16 %v890
    %v3183 = vunpack.c.h.b16 %v890
    %v3184 = vunpack.c.l.b16 %v891
    %v3185 = vunpack.c.h.b16 %v891
    %v3186 = vunpack.c.l.b16 %v892
    %v3187 = vunpack.c.h.b16 %v892
    %v3188 = vunpack.c.l.b16 %v893
    %v3189 = vunpack.c.h.b16 %v893
    %v3190 = vunpack.c.l.b16 %v894
    %v3191 = vunpack.c.h.b16 %v894
    %v3192 = vunpack.c.l.b16 %v895
    %v3193 = vunpack.c.h.b16 %v895
    %v3194 = vunpack.c.l.b16 %v896
    %v3195 = vunpack.c.h.b16 %v896
    %v3196 = vunpack.c.l.b16 %v897
    %v3197 = vunpack.c.h.b16 %v897
    %v3198 = vunpack.c.l.b16 %v898
    %v3199 = vunpack.c.h.b16 %v898
    %v3200 = vunpack.c.l.b16 %v899
    %v3201 = vunpack.c.h.b16 %v899
    %v3202 = vunpack.c.l.b16 %v900
    %v3203 = vunpack.c.h.b16 %v900
    %v3204 = vunpack.c.l.b16 %v901
    %v3205 = vunpack.c.h.b16 %v901
    %v3206 = vunpack.c.l.b16 %v902
    %v3207 = vunpack.c.h.b16 %v902
    %v3208 = vunpack.c.l.b16 %v903
    %v3209 = vunpack.c.h.b16 %v903
    %v3210 = vunpack.c.l.b16 %v904
    %v3211 = vunpack.c.h.b16 %v904
    %v3212 = vunpack.c.l.b16 %v905
    %v3213 = vunpack.c.h.b16 %v905
    %v3214 = vunpack.c.l.b16 %v906
    %v3215 = vunpack.c.h.b16 %v906
    %v3216 = vunpack.c.l.b16 %v907
    %v3217 = vunpack.c.h.b16 %v907
    %v3218 = vunpack.c.l.b16 %v908
    %v3219 = vunpack.c.h.b16 %v908
    %v3220 = vunpack.c.l.b16 %v909
    %v3221 = vunpack.c.h.b16 %v909
    %v3222 = vunpack.c.l.b16 %v910
    %v3223 = vunpack.c.h.b16 %v910
    %v3224 = vunpack.c.l.b16 %v911
    %v3225 = vunpack.c.h.b16 %v911
    %v3226 = vunpack.c.l.b16 %v912
    %v3227 = vunpack.c.h.b16 %v912
    %v3228 = vunpack.c.l.b16 %v913
    %v3229 = vunpack.c.h.b16 %v913
    %v3230 = vunpack.c.l.b16 %v914
    %v3231 = vunpack.c.h.b16 %v914
    %v3232 = vunpack.c.l.b16 %v915
    %v3233 = vunpack.c.h.b16 %v915
    %v3234 = vunpack.c.l.b16 %v916
    %v3235 = vunpack.c.h.b16 %v916
    %v3236 = vunpack.c.l.b16 %v917
    %v3237 = vunpack.c.h.b16 %v917
    %v3238 = vunpack.c.l.b16 %v918
    %v3239 = vunpack.c.h.b16 %v918
    %v3240 = vunpack.c.l.b16 %v919
    %v3241 = vunpack.c.h.b16 %v919
    %v3242 = vunpack.c.l.b16 %v920
    %v3243 = vunpack.c.h.b16 %v920
    %v3244 = vunpack.c.l.b16 %v921
    %v3245 = vunpack.c.h.b16 %v921
    %v3246 = vunpack.c.l.b16 %v922
    %v3247 = vunpack.c.h.b16 %v922
    %v3248 = vunpack.c.l.b16 %v923
    %v3249 = vunpack.c.h.b16 %v923
    %v3250 = vunpack.c.l.b16 %v924
    %v3251 = vunpack.c.h.b16 %v924
    %v3252 = vunpack.c.l.b16 %v925
    %v3253 = vunpack.c.h.b16 %v925
    %v3254 = vunpack.c.l.b16 %v926
    %v3255 = vunpack.c.h.b16 %v926
    %v3256 = vunpack.c.l.b16 %v927
    %v3257 = vunpack.c.h.b16 %v927
    %v3258 = vunpack.c.l.b16 %v928
    %v3259 = vunpack.c.h.b16 %v928
    %v3260 = vunpack.c.l.b16 %v929
    %v3261 = vunpack.c.h.b16 %v929
    %v3262 = vunpack.c.l.b16 %v930
    %v3263 = vunpack.c.h.b16 %v930
    %v3264 = vunpack.c.l.b16 %v931
    %v3265 = vunpack.c.h.b16 %v931
    %v3266 = vunpack.c.l.b16 %v932
    %v3267 = vunpack.c.h.b16 %v932
    %v3268 = vunpack.c.l.b16 %v933
    %v3269 = vunpack.c.h.b16 %v933
    %v3270 = vunpack.c.l.b16 %v934
    %v3271 = vunpack.c.h.b16 %v934
    %v3272 = vunpack.c.l.b16 %v935
    %v3273 = vunpack.c.h.b16 %v935
    %v3274 = vunpack.c.l.b16 %v936
    %v3275 = vunpack.c.h.b16 %v936
    %v3276 = vunpack.c.l.b16 %v937
    %v3277 = vunpack.c.h.b16 %v937
    %v3278 = vunpack.c.l.b16 %v938
    %v3279 = vunpack.c.h.b16 %v938
    %v3280 = vunpack.c.l.b16 %v939
    %v3281 = vunpack.c.h.b16 %v939
    %v3282 = vunpack.c.l.b16 %v940
    %v3283 = vunpack.c.h.b16 %v940
    %v3284 = vunpack.c.l.b16 %v941
    %v3285 = vunpack.c.h.b16 %v941
    %v3286 = vunpack.c.l.b16 %v942
    %v3287 = vunpack.c.h.b16 %v942
    %v3288 = vunpack.c.l.b16 %v943
    %v3289 = vunpack.c.h.b16 %v943
    %v3290 = vunpack.c.l.b16 %v944
    %v3291 = vunpack.c.h.b16 %v944
    %v3292 = vunpack.c.l.b16 %v945
    %v3293 = vunpack.c.h.b16 %v945
    %v3294 = vunpack.c.l.b16 %v946
    %v3295 = vunpack.c.h.b16 %v946
    %v3296 = vunpack.c.l.b16 %v947
    %v3297 = vunpack.c.h.b16 %v947
    %v3298 = vunpack.c.l.b16 %v948
    %v3299 = vunpack.c.h.b16 %v948
    %v3300 = vunpack.c.l.b16 %v949
    %v3301 = vunpack.c.h.b16 %v949
    %v3302 = vunpack.c.l.b16 %v950
    %v3303 = vunpack.c.h.b16 %v950
    %v3304 = vunpack.c.l.b16 %v951
    %v3305 = vunpack.c.h.b16 %v951
    %v3306 = vunpack.c.l.b16 %v952
    %v3307 = vunpack.c.h.b16 %v952
    %v3308 = vunpack.c.l.b16 %v953
    %v3309 = vunpack.c.h.b16 %v953
    %v3310 = vunpack.c.l.b16 %v954
    %v3311 = vunpack.c.h.b16 %v954
    %v3312 = vunpack.c.l.b16 %v955
    %v3313 = vunpack.c.h.b16 %v955
    %v3314 = vunpack.c.l.b16 %v956
    %v3315 = vunpack.c.h.b16 %v956
    %v3316 = vunpack.c.l.b16 %v957
    %v3317 = vunpack.c.h.b16 %v957
    %v3318 = vunpack.c.l.b16 %v958
    %v3319 = vunpack.c.h.b16 %v958
    %v3320 = vunpack.c.l.b16 %v959
    %v3321 = vunpack.c.h.b16 %v959
    %v3322 = vunpack.c.l.b16 %v960
    %v3323 = vunpack.c.h.b16 %v960
    %v3324 = vunpack.c.l.b16 %v961
    %v3325 = vunpack.c.h.b16 %v961
    %v3326 = vunpack.c.l.b16 %v962
    %v3327 = vunpack.c.h.b16 %v962
    %v3328 = vunpack.c.l.b16 %v963
    %v3329 = vunpack.c.h.b16 %v963
    %v3330 = vpack.c.b16 %v1924, %v1886
    %v3331 = vpack.c.b16 %v1925, %v1887
    %v3332 = vpack.c.b16 %v1926, %v1888
    %v3333 = vpack.c.b16 %v1927, %v1889
    %v3334 = vpack.c.b16 %v1928, %v1890
    %v3335 = vpack.c.b16 %v1929, %v1891
    %v3336 = vpack.c.b16 %v1930, %v1892
    %v3337 = vpack.c.b16 %v1931, %v1893
    %v3338 = vpack.c.b16 %v1932, %v1894
    %v3339 = vpack.c.b16 %v1933, %v1895
    %v3340 = vpack.c.b16 %v1934, %v1896
    %v3341 = vpack.c.b16 %v1935, %v1897
    %v3342 = vpack.c.b16 %v1936, %v1898
    %v3343 = vpack.c.b16 %v1937, %v1899
    %v3344 = vpack.c.b16 %v1938, %v1900
    %v3345 = vpack.c.b16 %v1939, %v1901
    %v3346 = vpack.c.b16 %v1940, %v1902
    %v3347 = vpack.c.b16 %v1941, %v1903
    %v3348 = vpack.c.b16 %v1942, %v1904
    %v3349 = vpack.c.b16 %v1943, %v1905
    %v3350 = vpack.c.b16 %v1944, %v1906
    %v3351 = vpack.c.b16 %v1945, %v1907
    %v3352 = vpack.c.b16 %v1946, %v1908
    %v3353 = vpack.c.b16 %v1947, %v1909
    %v3354 = vpack.c.b16 %v1948, %v1910
    %v3355 = vpack.c.b16 %v1949, %v1911
    %v3356 = vpack.c.b16 %v1950, %v1912
    %v3357 = vpack.c.b16 %v1951, %v1913
    %v3358 = vpack.c.b16 %v1952, %v1914
    %v3359 = vpack.c.b16 %v1953, %v1915
    %v3360 = vpack.c.b16 %v1954, %v1916
    %v3361 = vpack.c.b16 %v1955, %v1917
    %v3362 = vpack.c.b16 %v1956, %v1918
    %v3363 = vpack.c.b16 %v1957, %v1919
    %v3364 = vpack.c.b16 %v1958, %v1920
    %v3365 = vpack.c.b16 %v1959, %v1921
    %v3366 = vpack.c.b16 %v1960, %v1922
    %v3367 = vpack.c.b16 %v1961, %v1923
    %v3368 = vpack.c.b16 %v2000, %v1962
    %v3369 = vpack.c.b16 %v2001, %v1963
    %v3370 = vpack.c.b16 %v2002, %v1964
    %v3371 = vpack.c.b16 %v2003, %v1965
    %v3372 = vpack.c.b16 %v2004, %v1966
    %v3373 = vpack.c.b16 %v2005, %v1967
    %v3374 = vpack.c.b16 %v2006, %v1968
    %v3375 = vpack.c.b16 %v2007, %v1969
    %v3376 = vpack.c.b16 %v2008, %v1970
    %v3377 = vpack.c.b16 %v2009, %v1971
    %v3378 = vpack.c.b16 %v2010, %v1972
    %v3379 = vpack.c.b16 %v2011, %v1973
    %v3380 = vpack.c.b16 %v2012, %v1974
    %v3381 = vpack.c.b16 %v2013, %v1975
    %v3382 = vpack.c.b16 %v2014, %v1976
    %v3383 = vpack.c.b16 %v2015, %v1977
    %v3384 = vpack.c.b16 %v2016, %v1978
    %v3385 = vpack.c.b16 %v2017, %v1979
    %v3386 = vpack.c.b16 %v2018, %v1980
    %v3387 = vpack.c.b16 %v2019, %v1981
    %v3388 = vpack.c.b16 %v2020, %v1982
    %v3389 = vpack.c.b16 %v2021, %v1983
    %v3390 = vpack.c.b16 %v2022, %v1984
    %v3391 = vpack.c.b16 %v2023, %v1985
    %v3392 = vpack.c.b16 %v2024, %v1986
    %v3393 = vpack.c.b16 %v2025, %v1987
    %v3394 = vpack.c.b16 %v2026, %v1988
    %v3395 = vpack.c.b16 %v2027, %v1989
    %v3396 = vpack.c.b16 %v2028, %v1990
    %v3397 = vpack.c.b16 %v2029, %v1991
    %v3398 = vpack.c.b16 %v2030, %v1992
    %v3399 = vpack.c.b16 %v2031, %v1993
    %v3400 = vpack.c.b16 %v2032, %v1994
    %v3401 = vpack.c.b16 %v2033, %v1995
    %v3402 = vpack.c.b16 %v2034, %v1996
    %v3403 = vpack.c.b16 %v2035, %v1997
    %v3404 = vpack.c.b16 %v2036, %v1998
    %v3405 = vpack.c.b16 %v2037, %v1999
    %v3406 = vpack.c.b16 %v2076, %v2038
    %v3407 = vpack.c.b16 %v2077, %v2039
    %v3408 = vpack.c.b16 %v2078, %v2040
    %v3409 = vpack.c.b16 %v2079, %v2041
    %v3410 = vpack.c.b16 %v2080, %v2042
    %v3411 = vpack.c.b16 %v2081, %v2043
    %v3412 = vpack.c.b16 %v2082, %v2044
    %v3413 = vpack.c.b16 %v2083, %v2045
    %v3414 = vpack.c.b16 %v2084, %v2046
    %v3415 = vpack.c.b16 %v2085, %v2047
    %v3416 = vpack.c.b16 %v2086, %v2048
    %v3417 = vpack.c.b16 %v2087, %v2049
    %v3418 = vpack.c.b16 %v2088, %v2050
    %v3419 = vpack.c.b16 %v2089, %v2051
    %v3420 = vpack.c.b16 %v2090, %v2052
    %v3421 = vpack.c.b16 %v2091, %v2053
    %v3422 = vpack.c.b16 %v2092, %v2054
    %v3423 = vpack.c.b16 %v2093, %v2055
    %v3424 = vpack.c.b16 %v2094, %v2056
    %v3425 = vpack.c.b16 %v2095, %v2057
    %v3426 = vpack.c.b16 %v2096, %v2058
    %v3427 = vpack.c.b16 %v2097, %v2059
    %v3428 = vpack.c.b16 %v2098, %v2060
    %v3429 = vpack.c.b16 %v2099, %v2061
    %v3430 = vpack.c.b16 %v2100, %v2062
    %v3431 = vpack.c.b16 %v2101, %v2063
    %v3432 = vpack.c.b16 %v2102, %v2064
    %v3433 = vpack.c.b16 %v2103, %v2065
    %v3434 = vpack.c.b16 %v2104, %v2066
    %v3435 = vpack.c.b16 %v2105, %v2067
    %v3436 = vpack.c.b16 %v2106, %v2068
    %v3437 = vpack.c.b16 %v2107, %v2069
    %v3438 = vpack.c.b16 %v2108, %v2070
    %v3439 = vpack.c.b16 %v2109, %v2071
    %v3440 = vpack.c.b16 %v2110, %v2072
    %v3441 = vpack.c.b16 %v2111, %v2073
    %v3442 = vpack.c.b16 %v2112, %v2074
    %v3443 = vpack.c.b16 %v2113, %v2075
    %v3444 = vpack.c.b16 %v2152, %v2114
    %v3445 = vpack.c.b16 %v2153, %v2115
    %v3446 = vpack.c.b16 %v2154, %v2116
    %v3447 = vpack.c.b16 %v2155, %v2117
    %v3448 = vpack.c.b16 %v2156, %v2118
    %v3449 = vpack.c.b16 %v2157, %v2119
    %v3450 = vpack.c.b16 %v2158, %v2120
    %v3451 = vpack.c.b16 %v2159, %v2121
    %v3452 = vpack.c.b16 %v2160, %v2122
    %v3453 = vpack.c.b16 %v2161, %v2123
    %v3454 = vpack.c.b16 %v2162, %v2124
    %v3455 = vpack.c.b16 %v2163, %v2125
    %v3456 = vpack.c.b16 %v2164, %v2126
    %v3457 = vpack.c.b16 %v2165, %v2127
    %v3458 = vpack.c.b16 %v2166, %v2128
    %v3459 = vpack.c.b16 %v2167, %v2129
    %v3460 = vpack.c.b16 %v2168, %v2130
    %v3461 = vpack.c.b16 %v2169, %v2131
    %v3462 = vpack.c.b16 %v2170, %v2132
    %v3463 = vpack.c.b16 %v2171, %v2133
    %v3464 = vpack.c.b16 %v2172, %v2134
    %v3465 = vpack.c.b16 %v2173, %v2135
    %v3466 = vpack.c.b16 %v2174, %v2136
    %v3467 = vpack.c.b16 %v2175, %v2137
    %v3468 = vpack.c.b16 %v2176, %v2138
    %v3469 = vpack.c.b16 %v2177, %v2139
    %v3470 = vpack.c.b16 %v2178, %v2140
    %v3471 = vpack.c.b16 %v2179, %v2141
    %v3472 = vpack.c.b16 %v2180, %v2142
    %v3473 = vpack.c.b16 %v2181, %v2143
    %v3474 = vpack.c.b16 %v2182, %v2144
    %v3475 = vpack.c.b16 %v2183, %v2145
    %v3476 = vpack.c.b16 %v2184, %v2146
    %v3477 = vpack.c.b16 %v2185, %v2147
    %v3478 = vpack.c.b16 %v2186, %v2148
    %v3479 = vpack.c.b16 %v2187, %v2149
    %v3480 = vpack.c.b16 %v2188, %v2150
    %v3481 = vpack.c.b16 %v2189, %v2151
    %v3482 = vpack.c.b16 %v2228, %v2190
    %v3483 = vpack.c.b16 %v2229, %v2191
    %v3484 = vpack.c.b16 %v2230, %v2192
    %v3485 = vpack.c.b16 %v2231, %v2193
    %v3486 = vpack.c.b16 %v2232, %v2194
    %v3487 = vpack.c.b16 %v2233, %v2195
    %v3488 = vpack.c.b16 %v2234, %v2196
    %v3489 = vpack.c.b16 %v2235, %v2197
    %v3490 = vpack.c.b16 %v2236, %v2198
    %v3491 = vpack.c.b16 %v2237, %v2199
    %v3492 = vpack.c.b16 %v2238, %v2200
    %v3493 = vpack.c.b16 %v2239, %v2201
    %v3494 = vpack.c.b16 %v2240, %v2202
    %v3495 = vpack.c.b16 %v2241, %v2203
    %v3496 = vpack.c.b16 %v2242, %v2204
    %v3497 = vpack.c.b16 %v2243, %v2205
    %v3498 = vpack.c.b16 %v2244, %v2206
    %v3499 = vpack.c.b16 %v2245, %v2207
    %v3500 = vpack.c.b16 %v2246, %v2208
    %v3501 = vpack.c.b16 %v2247, %v2209
    %v3502 = vpack.c.b16 %v2248, %v2210
    %v3503 = vpack.c.b16 %v2249, %v2211
    %v3504 = vpack.c.b16 %v2250, %v2212
    %v3505 = vpack.c.b16 %v2251, %v2213
    %v3506 = vpack.c.b16 %v2252, %v2214
    %v3507 = vpack.c.b16 %v2253, %v2215
    %v3508 = vpack.c.b16 %v2254, %v2216
    %v3509 = vpack.c.b16 %v2255, %v2217
    %v3510 = vpack.c.b16 %v2256, %v2218
    %v3511 = vpack.c.b16 %v2257, %v2219
    %v3512 = vpack.c.b16 %v2258, %v2220
    %v3513 = vpack.c.b16 %v2259, %v2221
    %v3514 = vpack.c.b16 %v2260, %v2222
    %v3515 = vpack.c.b16 %v2261, %v2223
    %v3516 = vpack.c.b16 %v2262, %v2224
    %v3517 = vpack.c.b16 %v2263, %v2225
    %v3518 = vpack.c.b16 %v2264, %v2226
    %v3519 = vpack.c.b16 %v2265, %v2227
    %v3520 = vpack.c.b16 %v2304, %v2266
    %v3521 = vpack.c.b16 %v2305, %v2267
    %v3522 = vpack.c.b16 %v2306, %v2268
    %v3523 = vpack.c.b16 %v2307, %v2269
    %v3524 = vpack.c.b16 %v2308, %v2270
    %v3525 = vpack.c.b16 %v2309, %v2271
    %v3526 = vpack.c.b16 %v2310, %v2272
    %v3527 = vpack.c.b16 %v2311, %v2273
    %v3528 = vpack.c.b16 %v2312, %v2274
    %v3529 = vpack.c.b16 %v2313, %v2275
    %v3530 = vpack.c.b16 %v2314, %v2276
    %v3531 = vpack.c.b16 %v2315, %v2277
    %v3532 = vpack.c.b16 %v2316, %v2278
    %v3533 = vpack.c.b16 %v2317, %v2279
    %v3534 = vpack.c.b16 %v2318, %v2280
    %v3535 = vpack.c.b16 %v2319, %v2281
    %v3536 = vpack.c.b16 %v2320, %v2282
    %v3537 = vpack.c.b16 %v2321, %v2283
    %v3538 = vpack.c.b16 %v2322, %v2284
    %v3539 = vpack.c.b16 %v2323, %v2285
    %v3540 = vpack.c.b16 %v2324, %v2286
    %v3541 = vpack.c.b16 %v2325, %v2287
    %v3542 = vpack.c.b16 %v2326, %v2288
    %v3543 = vpack.c.b16 %v2327, %v2289
    %v3544 = vpack.c.b16 %v2328, %v2290
    %v3545 = vpack.c.b16 %v2329, %v2291
    %v3546 = vpack.c.b16 %v2330, %v2292
    %v3547 = vpack.c.b16 %v2331, %v2293
    %v3548 = vpack.c.b16 %v2332, %v2294
    %v3549 = vpack.c.b16 %v2333, %v2295
    %v3550 = vpack.c.b16 %v2334, %v2296
    %v3551 = vpack.c.b16 %v2335, %v2297
    %v3552 = vpack.c.b16 %v2336, %v2298
    %v3553 = vpack.c.b16 %v2337, %v2299
    %v3554 = vpack.c.b16 %v2338, %v2300
    %v3555 = vpack.c.b16 %v2339, %v2301
    %v3556 = vpack.c.b16 %v2340, %v2302
    %v3557 = vpack.c.b16 %v2341, %v2303
    %v3558 = vpack.c.b16 %v2380, %v2342
    %v3559 = vpack.c.b16 %v2381, %v2343
    %v3560 = vpack.c.b16 %v2382, %v2344
    %v3561 = vpack.c.b16 %v2383, %v2345
    %v3562 = vpack.c.b16 %v2384, %v2346
    %v3563 = vpack.c.b16 %v2385, %v2347
    %v3564 = vpack.c.b16 %v2386, %v2348
    %v3565 = vpack.c.b16 %v2387, %v2349
    %v3566 = vpack.c.b16 %v2388, %v2350
    %v3567 = vpack.c.b16 %v2389, %v2351
    %v3568 = vpack.c.b16 %v2390, %v2352
    %v3569 = vpack.c.b16 %v2391, %v2353
    %v3570 = vpack.c.b16 %v2392, %v2354
    %v3571 = vpack.c.b16 %v2393, %v2355
    %v3572 = vpack.c.b16 %v2394, %v2356
    %v3573 = vpack.c.b16 %v2395, %v2357
    %v3574 = vpack.c.b16 %v2396, %v2358
    %v3575 = vpack.c.b16 %v2397, %v2359
    %v3576 = vpack.c.b16 %v2398, %v2360
    %v3577 = vpack.c.b16 %v2399, %v2361
    %v3578 = vpack.c.b16 %v2400, %v2362
    %v3579 = vpack.c.b16 %v2401, %v2363
    %v3580 = vpack.c.b16 %v2402, %v2364
    %v3581 = vpack.c.b16 %v2403, %v2365
    %v3582 = vpack.c.b16 %v2404, %v2366
    %v3583 = vpack.c.b16 %v2405, %v2367
    %v3584 = vpack.c.b16 %v2406, %v2368
    %v3585 = vpack.c.b16 %v2407, %v2369
    %v3586 = vpack.c.b16 %v2408, %v2370
    %v3587 = vpack.c.b16 %v2409, %v2371
    %v3588 = vpack.c.b16 %v2410, %v2372
    %v3589 = vpack.c.b16 %v2411, %v2373
    %v3590 = vpack.c.b16 %v2412, %v2374
    %v3591 = vpack.c.b16 %v2413, %v2375
    %v3592 = vpack.c.b16 %v2414, %v2376
    %v3593 = vpack.c.b16 %v2415, %v2377
    %v3594 = vpack.c.b16 %v2416, %v2378
    %v3595 = vpack.c.b16 %v2417, %v2379
    %v3596 = vpack.c.b16 %v2456, %v2418
    %v3597 = vpack.c.b16 %v2457, %v2419
    %v3598 = vpack.c.b16 %v2458, %v2420
    %v3599 = vpack.c.b16 %v2459, %v2421
    %v3600 = vpack.c.b16 %v2460, %v2422
    %v3601 = vpack.c.b16 %v2461, %v2423
    %v3602 = vpack.c.b16 %v2462, %v2424
    %v3603 = vpack.c.b16 %v2463, %v2425
    %v3604 = vpack.c.b16 %v2464, %v2426
    %v3605 = vpack.c.b16 %v2465, %v2427
    %v3606 = vpack.c.b16 %v2466, %v2428
    %v3607 = vpack.c.b16 %v2467, %v2429
    %v3608 = vpack.c.b16 %v2468, %v2430
    %v3609 = vpack.c.b16 %v2469, %v2431
    %v3610 = vpack.c.b16 %v2470, %v2432
    %v3611 = vpack.c.b16 %v2471, %v2433
    %v3612 = vpack.c.b16 %v2472, %v2434
    %v3613 = vpack.c.b16 %v2473, %v2435
    %v3614 = vpack.c.b16 %v2474, %v2436
    %v3615 = vpack.c.b16 %v2475, %v2437
    %v3616 = vpack.c.b16 %v2476, %v2438
    %v3617 = vpack.c.b16 %v2477, %v2439
    %v3618 = vpack.c.b16 %v2478, %v2440
    %v3619 = vpack.c.b16 %v2479, %v2441
    %v3620 = vpack.c.b16 %v2480, %v2442
    %v3621 = vpack.c.b16 %v2481, %v2443
    %v3622 = vpack.c.b16 %v2482, %v2444
    %v3623 = vpack.c.b16 %v2483, %v2445
    %v3624 = vpack.c.b16 %v2484, %v2446
    %v3625 = vpack.c.b16 %v2485, %v2447
    %v3626 = vpack.c.b16 %v2486, %v2448
    %v3627 = vpack.c.b16 %v2487, %v2449
    %v3628 = vpack.c.b16 %v2488, %v2450
    %v3629 = vpack.c.b16 %v2489, %v2451
    %v3630 = vpack.c.b16 %v2490, %v2452
    %v3631 = vpack.c.b16 %v2491, %v2453
    %v3632 = vpack.c.b16 %v2492, %v2454
    %v3633 = vpack.c.b16 %v2493, %v2455
    %v3634 = vpack.c.b16 %v2532, %v2494
    %v3635 = vpack.c.b16 %v2533, %v2495
    %v3636 = vpack.c.b16 %v2534, %v2496
    %v3637 = vpack.c.b16 %v2535, %v2497
    %v3638 = vpack.c.b16 %v2536, %v2498
    %v3639 = vpack.c.b16 %v2537, %v2499
    %v3640 = vpack.c.b16 %v2538, %v2500
    %v3641 = vpack.c.b16 %v2539, %v2501
    %v3642 = vpack.c.b16 %v2540, %v2502
    %v3643 = vpack.c.b16 %v2541, %v2503
    %v3644 = vpack.c.b16 %v2542, %v2504
    %v3645 = vpack.c.b16 %v2543, %v2505
    %v3646 = vpack.c.b16 %v2544, %v2506
    %v3647 = vpack.c.b16 %v2545, %v2507
    %v3648 = vpack.c.b16 %v2546, %v2508
    %v3649 = vpack.c.b16 %v2547, %v2509
    %v3650 = vpack.c.b16 %v2548, %v2510
    %v3651 = vpack.c.b16 %v2549, %v2511
    %v3652 = vpack.c.b16 %v2550, %v2512
    %v3653 = vpack.c.b16 %v2551, %v2513
    %v3654 = vpack.c.b16 %v2552, %v2514
    %v3655 = vpack.c.b16 %v2553, %v2515
    %v3656 = vpack.c.b16 %v2554, %v2516
    %v3657 = vpack.c.b16 %v2555, %v2517
    %v3658 = vpack.c.b16 %v2556, %v2518
    %v3659 = vpack.c.b16 %v2557, %v2519
    %v3660 = vpack.c.b16 %v2558, %v2520
    %v3661 = vpack.c.b16 %v2559, %v2521
    %v3662 = vpack.c.b16 %v2560, %v2522
    %v3663 = vpack.c.b16 %v2561, %v2523
    %v3664 = vpack.c.b16 %v2562, %v2524
    %v3665 = vpack.c.b16 %v2563, %v2525
    %v3666 = vpack.c.b16 %v2564, %v2526
    %v3667 = vpack.c.b16 %v2565, %v2527
    %v3668 = vpack.c.b16 %v2566, %v2528
    %v3669 = vpack.c.b16 %v2567, %v2529
    %v3670 = vpack.c.b16 %v2568, %v2530
    %v3671 = vpack.c.b16 %v2569, %v2531
    %v3672 = vpack.c.b16 %v2608, %v2570
    %v3673 = vpack.c.b16 %v2609, %v2571
    %v3674 = vpack.c.b16 %v2610, %v2572
    %v3675 = vpack.c.b16 %v2611, %v2573
    %v3676 = vpack.c.b16 %v2612, %v2574
    %v3677 = vpack.c.b16 %v2613, %v2575
    %v3678 = vpack.c.b16 %v2614, %v2576
    %v3679 = vpack.c.b16 %v2615, %v2577
    %v3680 = vpack.c.b16 %v2616, %v2578
    %v3681 = vpack.c.b16 %v2617, %v2579
    %v3682 = vpack.c.b16 %v2618, %v2580
    %v3683 = vpack.c.b16 %v2619, %v2581
    %v3684 = vpack.c.b16 %v2620, %v2582
    %v3685 = vpack.c.b16 %v2621, %v2583
    %v3686 = vpack.c.b16 %v2622, %v2584
    %v3687 = vpack.c.b16 %v2623, %v2585
    %v3688 = vpack.c.b16 %v2624, %v2586
    %v3689 = vpack.c.b16 %v2625, %v2587
    %v3690 = vpack.c.b16 %v2626, %v2588
    %v3691 = vpack.c.b16 %v2627, %v2589
    %v3692 = vpack.c.b16 %v2628, %v2590
    %v3693 = vpack.c.b16 %v2629, %v2591
    %v3694 = vpack.c.b16 %v2630, %v2592
    %v3695 = vpack.c.b16 %v2631, %v2593
    %v3696 = vpack.c.b16 %v2632, %v2594
    %v3697 = vpack.c.b16 %v2633, %v2595
    %v3698 = vpack.c.b16 %v2634, %v2596
    %v3699 = vpack.c.b16 %v2635, %v2597
    %v3700 = vpack.c.b16 %v2636, %v2598
    %v3701 = vpack.c.b16 %v2637, %v2599
    %v3702 = vpack.c.b16 %v2638, %v2600
    %v3703 = vpack.c.b16 %v2639, %v2601
    %v3704 = vpack.c.b16 %v2640, %v2602
    %v3705 = vpack.c.b16 %v2641, %v2603
    %v3706 = vpack.c.b16 %v2642, %v2604
    %v3707 = vpack.c.b16 %v2643, %v2605
    %v3708 = vpack.c.b16 %v2644, %v2606
    %v3709 = vpack.c.b16 %v2645, %v2607
    %v3710 = vpack.c.b16 %v2684, %v2646
    %v3711 = vpack.c.b16 %v2685, %v2647
    %v3712 = vpack.c.b16 %v2686, %v2648
    %v3713 = vpack.c.b16 %v2687, %v2649
    %v3714 = vpack.c.b16 %v2688, %v2650
    %v3715 = vpack.c.b16 %v2689, %v2651
    %v3716 = vpack.c.b16 %v2690, %v2652
    %v3717 = vpack.c.b16 %v2691, %v2653
    %v3718 = vpack.c.b16 %v2692, %v2654
    %v3719 = vpack.c.b16 %v2693, %v2655
    %v3720 = vpack.c.b16 %v2694, %v2656
    %v3721 = vpack.c.b16 %v2695, %v2657
    %v3722 = vpack.c.b16 %v2696, %v2658
    %v3723 = vpack.c.b16 %v2697, %v2659
    %v3724 = vpack.c.b16 %v2698, %v2660
    %v3725 = vpack.c.b16 %v2699, %v2661
    %v3726 = vpack.c.b16 %v2700, %v2662
    %v3727 = vpack.c.b16 %v2701, %v2663
    %v3728 = vpack.c.b16 %v2702, %v2664
    %v3729 = vpack.c.b16 %v2703, %v2665
    %v3730 = vpack.c.b16 %v2704, %v2666
    %v3731 = vpack.c.b16 %v2705, %v2667
    %v3732 = vpack.c.b16 %v2706, %v2668
    %v3733 = vpack.c.b16 %v2707, %v2669
    %v3734 = vpack.c.b16 %v2708, %v2670
    %v3735 = vpack.c.b16 %v2709, %v2671
    %v3736 = vpack.c.b16 %v2710, %v2672
    %v3737 = vpack.c.b16 %v2711, %v2673
    %v3738 = vpack.c.b16 %v2712, %v2674
    %v3739 = vpack.c.b16 %v2713, %v2675
    %v3740 = vpack.c.b16 %v2714, %v2676
    %v3741 = vpack.c.b16 %v2715, %v2677
    %v3742 = vpack.c.b16 %v2716, %v2678
    %v3743 = vpack.c.b16 %v2717, %v2679
    %v3744 = vpack.c.b16 %v2718, %v2680
    %v3745 = vpack.c.b16 %v2719, %v2681
    %v3746 = vpack.c.b16 %v2720, %v2682
    %v3747 = vpack.c.b16 %v2721, %v2683
    %v3748 = vpack.c.b16 %v2760, %v2722
    %v3749 = vpack.c.b16 %v2761, %v2723
    %v3750 = vpack.c.b16 %v2762, %v2724
    %v3751 = vpack.c.b16 %v2763, %v2725
    %v3752 = vpack.c.b16 %v2764, %v2726
    %v3753 = vpack.c.b16 %v2765, %v2727
    %v3754 = vpack.c.b16 %v2766, %v2728
    %v3755 = vpack.c.b16 %v2767, %v2729
    %v3756 = vpack.c.b16 %v2768, %v2730
    %v3757 = vpack.c.b16 %v2769, %v2731
    %v3758 = vpack.c.b16 %v2770, %v2732
    %v3759 = vpack.c.b16 %v2771, %v2733
    %v3760 = vpack.c.b16 %v2772, %v2734
    %v3761 = vpack.c.b16 %v2773, %v2735
    %v3762 = vpack.c.b16 %v2774, %v2736
    %v3763 = vpack.c.b16 %v2775, %v2737
    %v3764 = vpack.c.b16 %v2776, %v2738
    %v3765 = vpack.c.b16 %v2777, %v2739
    %v3766 = vpack.c.b16 %v2778, %v2740
    %v3767 = vpack.c.b16 %v2779, %v2741
    %v3768 = vpack.c.b16 %v2780, %v2742
    %v3769 = vpack.c.b16 %v2781, %v2743
    %v3770 = vpack.c.b16 %v2782, %v2744
    %v3771 = vpack.c.b16 %v2783, %v2745
    %v3772 = vpack.c.b16 %v2784, %v2746
    %v3773 = vpack.c.b16 %v2785, %v2747
    %v3774 = vpack.c.b16 %v2786, %v2748
    %v3775 = vpack.c.b16 %v2787, %v2749
    %v3776 = vpack.c.b16 %v2788, %v2750
    %v3777 = vpack.c.b16 %v2789, %v2751
    %v3778 = vpack.c.b16 %v2790, %v2752
    %v3779 = vpack.c.b16 %v2791, %v2753
    %v3780 = vpack.c.b16 %v2792, %v2754
    %v3781 = vpack.c.b16 %v2793, %v2755
    %v3782 = vpack.c.b16 %v2794, %v2756
    %v3783 = vpack.c.b16 %v2795, %v2757
    %v3784 = vpack.c.b16 %v2796, %v2758
    %v3785 = vpack.c.b16 %v2797, %v2759
    %v3786 = vpack.c.b16 %v2836, %v2798
    %v3787 = vpack.c.b16 %v2837, %v2799
    %v3788 = vpack.c.b16 %v2838, %v2800
    %v3789 = vpack.c.b16 %v2839, %v2801
    %v3790 = vpack.c.b16 %v2840, %v2802
    %v3791 = vpack.c.b16 %v2841, %v2803
    %v3792 = vpack.c.b16 %v2842, %v2804
    %v3793 = vpack.c.b16 %v2843, %v2805
    %v3794 = vpack.c.b16 %v2844, %v2806
    %v3795 = vpack.c.b16 %v2845, %v2807
    %v3796 = vpack.c.b16 %v2846, %v2808
    %v3797 = vpack.c.b16 %v2847, %v2809
    %v3798 = vpack.c.b16 %v2848, %v2810
    %v3799 = vpack.c.b16 %v2849, %v2811
    %v3800 = vpack.c.b16 %v2850, %v2812
    %v3801 = vpack.c.b16 %v2851, %v2813
    %v3802 = vpack.c.b16 %v2852, %v2814
    %v3803 = vpack.c.b16 %v2853, %v2815
    %v3804 = vpack.c.b16 %v2854, %v2816
    %v3805 = vpack.c.b16 %v2855, %v2817
    %v3806 = vpack.c.b16 %v2856, %v2818
    %v3807 = vpack.c.b16 %v2857, %v2819
    %v3808 = vpack.c.b16 %v2858, %v2820
    %v3809 = vpack.c.b16 %v2859, %v2821
    %v3810 = vpack.c.b16 %v2860, %v2822
    %v3811 = vpack.c.b16 %v2861, %v2823
    %v3812 = vpack.c.b16 %v2862, %v2824
    %v3813 = vpack.c.b16 %v2863, %v2825
    %v3814 = vpack.c.b16 %v2864, %v2826
    %v3815 = vpack.c.b16 %v2865, %v2827
    %v3816 = vpack.c.b16 %v2866, %v2828
    %v3817 = vpack.c.b16 %v2867, %v2829
    %v3818 = vpack.c.b16 %v2868, %v2830
    %v3819 = vpack.c.b16 %v2869, %v2831
    %v3820 = vpack.c.b16 %v2870, %v2832
    %v3821 = vpack.c.b16 %v2871, %v2833
    %v3822 = vpack.c.b16 %v2872, %v2834
    %v3823 = vpack.c.b16 %v2873, %v2835
    %v3824 = vpack.c.b16 %v2912, %v2874
    %v3825 = vpack.c.b16 %v2913, %v2875
    %v3826 = vpack.c.b16 %v2914, %v2876
    %v3827 = vpack.c.b16 %v2915, %v2877
    %v3828 = vpack.c.b16 %v2916, %v2878
    %v3829 = vpack.c.b16 %v2917, %v2879
    %v3830 = vpack.c.b16 %v2918, %v2880
    %v3831 = vpack.c.b16 %v2919, %v2881
    %v3832 = vpack.c.b16 %v2920, %v2882
    %v3833 = vpack.c.b16 %v2921, %v2883
    %v3834 = vpack.c.b16 %v2922, %v2884
    %v3835 = vpack.c.b16 %v2923, %v2885
    %v3836 = vpack.c.b16 %v2924, %v2886
    %v3837 = vpack.c.b16 %v2925, %v2887
    %v3838 = vpack.c.b16 %v2926, %v2888
    %v3839 = vpack.c.b16 %v2927, %v2889
    %v3840 = vpack.c.b16 %v2928, %v2890
    %v3841 = vpack.c.b16 %v2929, %v2891
    %v3842 = vpack.c.b16 %v2930, %v2892
    %v3843 = vpack.c.b16 %v2931, %v2893
    %v3844 = vpack.c.b16 %v2932, %v2894
    %v3845 = vpack.c.b16 %v2933, %v2895
    %v3846 = vpack.c.b16 %v2934, %v2896
    %v3847 = vpack.c.b16 %v2935, %v2897
    %v3848 = vpack.c.b16 %v2936, %v2898
    %v3849 = vpack.c.b16 %v2937, %v2899
    %v3850 = vpack.c.b16 %v2938, %v2900
    %v3851 = vpack.c.b16 %v2939, %v2901
    %v3852 = vpack.c.b16 %v2940, %v2902
    %v3853 = vpack.c.b16 %v2941, %v2903
    %v3854 = vpack.c.b16 %v2942, %v2904
    %v3855 = vpack.c.b16 %v2943, %v2905
    %v3856 = vpack.c.b16 %v2944, %v2906
    %v3857 = vpack.c.b16 %v2945, %v2907
    %v3858 = vpack.c.b16 %v2946, %v2908
    %v3859 = vpack.c.b16 %v2947, %v2909
    %v3860 = vpack.c.b16 %v2948, %v2910
    %v3861 = vpack.c.b16 %v2949, %v2911
    %v3862 = vpack.c.b16 %v2988, %v2950
    %v3863 = vpack.c.b16 %v2989, %v2951
    %v3864 = vpack.c.b16 %v2990, %v2952
    %v3865 = vpack.c.b16 %v2991, %v2953
    %v3866 = vpack.c.b16 %v2992, %v2954
    %v3867 = vpack.c.b16 %v2993, %v2955
    %v3868 = vpack.c.b16 %v2994, %v2956
    %v3869 = vpack.c.b16 %v2995, %v2957
    %v3870 = vpack.c.b16 %v2996, %v2958
    %v3871 = vpack.c.b16 %v2997, %v2959
    %v3872 = vpack.c.b16 %v2998, %v2960
    %v3873 = vpack.c.b16 %v2999, %v2961
    %v3874 = vpack.c.b16 %v3000, %v2962
    %v3875 = vpack.c.b16 %v3001, %v2963
    %v3876 = vpack.c.b16 %v3002, %v2964
    %v3877 = vpack.c.b16 %v3003, %v2965
    %v3878 = vpack.c.b16 %v3004, %v2966
    %v3879 = vpack.c.b16 %v3005, %v2967
    %v3880 = vpack.c.b16 %v3006, %v2968
    %v3881 = vpack.c.b16 %v3007, %v2969
    %v3882 = vpack.c.b16 %v3008, %v2970
    %v3883 = vpack.c.b16 %v3009, %v2971
    %v3884 = vpack.c.b16 %v3010, %v2972
    %v3885 = vpack.c.b16 %v3011, %v2973
    %v3886 = vpack.c.b16 %v3012, %v2974
    %v3887 = vpack.c.b16 %v3013, %v2975
    %v3888 = vpack.c.b16 %v3014, %v2976
    %v3889 = vpack.c.b16 %v3015, %v2977
    %v3890 = vpack.c.b16 %v3016, %v2978
    %v3891 = vpack.c.b16 %v3017, %v2979
    %v3892 = vpack.c.b16 %v3018, %v2980
    %v3893 = vpack.c.b16 %v3019, %v2981
    %v3894 = vpack.c.b16 %v3020, %v2982
    %v3895 = vpack.c.b16 %v3021, %v2983
    %v3896 = vpack.c.b16 %v3022, %v2984
    %v3897 = vpack.c.b16 %v3023, %v2985
    %v3898 = vpack.c.b16 %v3024, %v2986
    %v3899 = vpack.c.b16 %v3025, %v2987
    %v3900 = vpack.c.b16 %v3064, %v3026
    %v3901 = vpack.c.b16 %v3065, %v3027
    %v3902 = vpack.c.b16 %v3066, %v3028
    %v3903 = vpack.c.b16 %v3067, %v3029
    %v3904 = vpack.c.b16 %v3068, %v3030
    %v3905 = vpack.c.b16 %v3069, %v3031
    %v3906 = vpack.c.b16 %v3070, %v3032
    %v3907 = vpack.c.b16 %v3071, %v3033
    %v3908 = vpack.c.b16 %v3072, %v3034
    %v3909 = vpack.c.b16 %v3073, %v3035
    %v3910 = vpack.c.b16 %v3074, %v3036
    %v3911 = vpack.c.b16 %v3075, %v3037
    %v3912 = vpack.c.b16 %v3076, %v3038
    %v3913 = vpack.c.b16 %v3077, %v3039
    %v3914 = vpack.c.b16 %v3078, %v3040
    %v3915 = vpack.c.b16 %v3079, %v3041
    %v3916 = vpack.c.b16 %v3080, %v3042
    %v3917 = vpack.c.b16 %v3081, %v3043
    %v3918 = vpack.c.b16 %v3082, %v3044
    %v3919 = vpack.c.b16 %v3083, %v3045
    %v3920 = vpack.c.b16 %v3084, %v3046
    %v3921 = vpack.c.b16 %v3085, %v3047
    %v3922 = vpack.c.b16 %v3086, %v3048
    %v3923 = vpack.c.b16 %v3087, %v3049
    %v3924 = vpack.c.b16 %v3088, %v3050
    %v3925 = vpack.c.b16 %v3089, %v3051
    %v3926 = vpack.c.b16 %v3090, %v3052
    %v3927 = vpack.c.b16 %v3091, %v3053
    %v3928 = vpack.c.b16 %v3092, %v3054
    %v3929 = vpack.c.b16 %v3093, %v3055
    %v3930 = vpack.c.b16 %v3094, %v3056
    %v3931 = vpack.c.b16 %v3095, %v3057
    %v3932 = vpack.c.b16 %v3096, %v3058
    %v3933 = vpack.c.b16 %v3097, %v3059
    %v3934 = vpack.c.b16 %v3098, %v3060
    %v3935 = vpack.c.b16 %v3099, %v3061
    %v3936 = vpack.c.b16 %v3100, %v3062
    %v3937 = vpack.c.b16 %v3101, %v3063
    %v3938 = vpack.c.b16 %v3140, %v3102
    %v3939 = vpack.c.b16 %v3141, %v3103
    %v3940 = vpack.c.b16 %v3142, %v3104
    %v3941 = vpack.c.b16 %v3143, %v3105
    %v3942 = vpack.c.b16 %v3144, %v3106
    %v3943 = vpack.c.b16 %v3145, %v3107
    %v3944 = vpack.c.b16 %v3146, %v3108
    %v3945 = vpack.c.b16 %v3147, %v3109
    %v3946 = vpack.c.b16 %v3148, %v3110
    %v3947 = vpack.c.b16 %v3149, %v3111
    %v3948 = vpack.c.b16 %v3150, %v3112
    %v3949 = vpack.c.b16 %v3151, %v3113
    %v3950 = vpack.c.b16 %v3152, %v3114
    %v3951 = vpack.c.b16 %v3153, %v3115
    %v3952 = vpack.c.b16 %v3154, %v3116
    %v3953 = vpack.c.b16 %v3155, %v3117
    %v3954 = vpack.c.b16 %v3156, %v3118
    %v3955 = vpack.c.b16 %v3157, %v3119
    %v3956 = vpack.c.b16 %v3158, %v3120
    %v3957 = vpack.c.b16 %v3159, %v3121
    %v3958 = vpack.c.b16 %v3160, %v3122
    %v3959 = vpack.c.b16 %v3161, %v3123
    %v3960 = vpack.c.b16 %v3162, %v3124
    %v3961 = vpack.c.b16 %v3163, %v3125
    %v3962 = vpack.c.b16 %v3164, %v3126
    %v3963 = vpack.c.b16 %v3165, %v3127
    %v3964 = vpack.c.b16 %v3166, %v3128
    %v3965 = vpack.c.b16 %v3167, %v3129
    %v3966 = vpack.c.b16 %v3168, %v3130
    %v3967 = vpack.c.b16 %v3169, %v3131
    %v3968 = vpack.c.b16 %v3170, %v3132
    %v3969 = vpack.c.b16 %v3171, %v3133
    %v3970 = vpack.c.b16 %v3172, %v3134
    %v3971 = vpack.c.b16 %v3173, %v3135
    %v3972 = vpack.c.b16 %v3174, %v3136
    %v3973 = vpack.c.b16 %v3175, %v3137
    %v3974 = vpack.c.b16 %v3176, %v3138
    %v3975 = vpack.c.b16 %v3177, %v3139
    %v3976 = vpack.c.b16 %v3216, %v3178
    %v3977 = vpack.c.b16 %v3217, %v3179
    %v3978 = vpack.c.b16 %v3218, %v3180
    %v3979 = vpack.c.b16 %v3219, %v3181
    %v3980 = vpack.c.b16 %v3220, %v3182
    %v3981 = vpack.c.b16 %v3221, %v3183
    %v3982 = vpack.c.b16 %v3222, %v3184
    %v3983 = vpack.c.b16 %v3223, %v3185
    %v3984 = vpack.c.b16 %v3224, %v3186
    %v3985 = vpack.c.b16 %v3225, %v3187
    %v3986 = vpack.c.b16 %v3226, %v3188
    %v3987 = vpack.c.b16 %v3227, %v3189
    %v3988 = vpack.c.b16 %v3228, %v3190
    %v3989 = vpack.c.b16 %v3229, %v3191
    %v3990 = vpack.c.b16 %v3230, %v3192
    %v3991 = vpack.c.b16 %v3231, %v3193
    %v3992 = vpack.c.b16 %v3232, %v3194
    %v3993 = vpack.c.b16 %v3233, %v3195
    %v3994 = vpack.c.b16 %v3234, %v3196
    %v3995 = vpack.c.b16 %v3235, %v3197
    %v3996 = vpack.c.b16 %v3236, %v3198
    %v3997 = vpack.c.b16 %v3237, %v3199
    %v3998 = vpack.c.b16 %v3238, %v3200
    %v3999 = vpack.c.b16 %v3239, %v3201
    %v4000 = vpack.c.b16 %v3240, %v3202
    %v4001 = vpack.c.b16 %v3241, %v3203
    %v4002 = vpack.c.b16 %v3242, %v3204
    %v4003 = vpack.c.b16 %v3243, %v3205
    %v4004 = vpack.c.b16 %v3244, %v3206
    %v4005 = vpack.c.b16 %v3245, %v3207
    %v4006 = vpack.c.b16 %v3246, %v3208
    %v4007 = vpack.c.b16 %v3247, %v3209
    %v4008 = vpack.c.b16 %v3248, %v3210
    %v4009 = vpack.c.b16 %v3249, %v3211
    %v4010 = vpack.c.b16 %v3250, %v3212
    %v4011 = vpack.c.b16 %v3251, %v3213
    %v4012 = vpack.c.b16 %v3252, %v3214
    %v4013 = vpack.c.b16 %v3253, %v3215
    %v4014 = vpack.c.b16 %v3292, %v3254
    %v4015 = vpack.c.b16 %v3293, %v3255
    %v4016 = vpack.c.b16 %v3294, %v3256
    %v4017 = vpack.c.b16 %v3295, %v3257
    %v4018 = vpack.c.b16 %v3296, %v3258
    %v4019 = vpack.c.b16 %v3297, %v3259
    %v4020 = vpack.c.b16 %v3298, %v3260
    %v4021 = vpack.c.b16 %v3299, %v3261
    %v4022 = vpack.c.b16 %v3300, %v3262
    %v4023 = vpack.c.b16 %v3301, %v3263
    %v4024 = vpack.c.b16 %v3302, %v3264
    %v4025 = vpack.c.b16 %v3303, %v3265
    %v4026 = vpack.c.b16 %v3304, %v3266
    %v4027 = vpack.c.b16 %v3305, %v3267
    %v4028 = vpack.c.b16 %v3306, %v3268
    %v4029 = vpack.c.b16 %v3307, %v3269
    %v4030 = vpack.c.b16 %v3308, %v3270
    %v4031 = vpack.c.b16 %v3309, %v3271
    %v4032 = vpack.c.b16 %v3310, %v3272
    %v4033 = vpack.c.b16 %v3311, %v3273
    %v4034 = vpack.c.b16 %v3312, %v3274
    %v4035 = vpack.c.b16 %v3313, %v3275
    %v4036 = vpack.c.b16 %v3314, %v3276
    %v4037 = vpack.c.b16 %v3315, %v3277
    %v4038 = vpack.c.b16 %v3316, %v3278
    %v4039 = vpack.c.b16 %v3317, %v3279
    %v4040 = vpack.c.b16 %v3318, %v3280
    %v4041 = vpack.c.b16 %v3319, %v3281
    %v4042 = vpack.c.b16 %v3320, %v3282
    %v4043 = vpack.c.b16 %v3321, %v3283
    %v4044 = vpack.c.b16 %v3322, %v3284
    %v4045 = vpack.c.b16 %v3323, %v3285
    %v4046 = vpack.c.b16 %v3324, %v3286
    %v4047 = vpack.c.b16 %v3325, %v3287
    %v4048 = vpack.c.b16 %v3326, %v3288
    %v4049 = vpack.c.b16 %v3327, %v3289
    %v4050 = vpack.c.b16 %v3328, %v3290
    %v4051 = vpack.c.b16 %v3329, %v3291
    %vm4736 = vcmask 359424
    %v4738 = vsel %vm4736, %v241, 0
    %vm4740 = vcmask 1045504
    %v4742 = vsel %vm4740, %v4014, 0
    %v4745 = vsel %vm4740, %v4015, 0
    %v4748 = vsel %vm4740, %v4016, 0
    %v4751 = vsel %vm4740, %v4017, 0
    %v4754 = vsel %vm4740, %v4018, 0
    %v4757 = vsel %vm4740, %v4019, 0
    %v4760 = vsel %vm4740, %v4020, 0
    %v4763 = vsel %vm4740, %v4021, 0
    %v4766 = vsel %vm4740, %v4022, 0
    %v4769 = vsel %vm4740, %v4023, 0
    %v4772 = vsel %vm4740, %v4024, 0
    %v4775 = vsel %vm4740, %v4025, 0
    %v4778 = vsel %vm4740, %v4026, 0
    %v4781 = vsel %vm4740, %v4027, 0
    %v4784 = vsel %vm4740, %v4028, 0
    %v4787 = vsel %vm4740, %v4029, 0
    %v4790 = vsel %vm4740, %v4030, 0
    %v4793 = vsel %vm4740, %v4031, 0
    %v4796 = vsel %vm4740, %v4032, 0
    %v4799 = vsel %vm4740, %v4033, 0
    %v4802 = vsel %vm4740, %v4034, 0
    %v4805 = vsel %vm4740, %v4035, 0
    %v4808 = vsel %vm4740, %v4036, 0
    %v4811 = vsel %vm4740, %v4037, 0
    %v4814 = vsel %vm4740, %v4038, 0
    %v4817 = vsel %vm4740, %v4039, 0
    %v4820 = vsel %vm4740, %v4040, 0
    %v4823 = vsel %vm4740, %v4041, 0
    %v4826 = vsel %vm4740, %v4042, 0
    %v4829 = vsel %vm4740, %v4043, 0
    %v4832 = vsel %vm4740, %v4044, 0
    %v4835 = vsel %vm4740, %v4045, 0
    %v4838 = vsel %vm4740, %v4046, 0
    %v4841 = vsel %vm4740, %v4047, 0
    %v4844 = vsel %vm4740, %v4048, 0
    %v4847 = vsel %vm4740, %v4049, 0
    %v4850 = vsel %vm4740, %v4050, 0
    %v4853 = vsel %vm4740, %v4051, 0
    %4855 = vmatprep.subr.bf16.mxu0 %v3597
    %4856 = vmatpush1.bf16.msra.mxu0 %v3596
    %4857 = vmatprep.subr.bf16.mxu0 %v3559
    %4858 = vmatpush1.bf16.msra.mxu0 %v3558
    %4859 = vmatprep.subr.bf16.mxu0 %v3521
    %4860 = vmatpush1.bf16.msra.mxu0 %v3520
    %4861 = vmatprep.subr.bf16.mxu0 %v3483
    %4862 = vmatpush1.bf16.msra.mxu0 %v3482
    %4863 = vmatprep.subr.bf16.mxu0 %v3445
    %4864 = vmatpush1.bf16.msra.mxu0 %v3444
    %4865 = vmatprep.subr.bf16.mxu0 %v3407
    %4866 = vmatpush1.bf16.msra.mxu0 %v3406
    %4867 = vmatprep.subr.bf16.mxu0 %v3369
    %4868 = vmatpush1.bf16.msra.mxu0 %v3368
    %4869 = vmatprep.subr.bf16.mxu0 %v3331
    %4870 = vmatpush1.bf16.msra.mxu0 %v3330
    %4871 = vmatprep.subr.bf16.mxu0 %v3901
    %4872 = vmatpush2.bf16.msra.mxu0 %v3900
    %4873 = vmatprep.subr.bf16.mxu0 %v3863
    %4874 = vmatpush2.bf16.msra.mxu0 %v3862
    %4875 = vmatprep.subr.bf16.mxu0 %v3825
    %4876 = vmatpush2.bf16.msra.mxu0 %v3824
    %4877 = vmatprep.subr.bf16.mxu0 %v3787
    %4878 = vmatpush2.bf16.msra.mxu0 %v3786
    %4879 = vmatprep.subr.bf16.mxu0 %v3749
    %4880 = vmatpush2.bf16.msra.mxu0 %v3748
    %4881 = vmatprep.subr.bf16.mxu0 %v3711
    %4882 = vmatpush2.bf16.msra.mxu0 %v3710
    %4883 = vmatprep.subr.bf16.mxu0 %v3673
    %4884 = vmatpush2.bf16.msra.mxu0 %v3672
    %4885 = vmatprep.subr.bf16.mxu0 %v3635
    %4886 = vmatpush2.bf16.msra.mxu0 %v3634
    %4887 = vmatprep.mubr.bf16.mxu0 %v240
    %4888 = vmatmul.mubr.bf16.gmra.mxu0 %v239
    %v4889 = vpop.f32.mrf.mxu0
    %v4890 = vadd.f32 %v977, %v4889
    %v4891 = vpop.f32.mrf.mxu0
    %v4892 = vadd.f32 %v981, %v4891
    %v4893 = vpop.f32.mrf.mxu0
    %v4894 = vpop.f32.mrf.mxu0
    %4895 = vdwg.mxu0
    %4896 = vmatprep.subr.bf16.mxu0 0
    %4897 = vmatpush1.bf16.msra.mxu0 0
    %4898 = vmatprep.subr.bf16.mxu0 0
    %4899 = vmatpush1.bf16.msra.mxu0 0
    %4900 = vmatprep.subr.bf16.mxu0 0
    %4901 = vmatpush1.bf16.msra.mxu0 0
    %4902 = vmatprep.subr.bf16.mxu0 0
    %4903 = vmatpush1.bf16.msra.mxu0 0
    %4904 = vmatprep.subr.bf16.mxu0 0
    %4905 = vmatpush1.bf16.msra.mxu0 0
    %4906 = vmatprep.subr.bf16.mxu0 %v4745
    %4907 = vmatpush1.bf16.msra.mxu0 %v4742
    %4908 = vmatprep.subr.bf16.mxu0 %v3977
    %4909 = vmatpush1.bf16.msra.mxu0 %v3976
    %4910 = vmatprep.subr.bf16.mxu0 %v3939
    %4911 = vmatpush1.bf16.msra.mxu0 %v3938
    %4912 = vmatprep.subr.bf16.mxu0 0
    %4913 = vmatpush2.bf16.msra.mxu0 0
    %4914 = vmatprep.subr.bf16.mxu0 0
    %4915 = vmatpush2.bf16.msra.mxu0 0
    %4916 = vmatprep.subr.bf16.mxu0 0
    %4917 = vmatpush2.bf16.msra.mxu0 0
    %4918 = vmatprep.subr.bf16.mxu0 0
    %4919 = vmatpush2.bf16.msra.mxu0 0
    %4920 = vmatprep.subr.bf16.mxu0 0
    %4921 = vmatpush2.bf16.msra.mxu0 0
    %4922 = vmatprep.subr.bf16.mxu0 0
    %4923 = vmatpush2.bf16.msra.mxu0 0
    %4924 = vmatprep.subr.bf16.mxu0 0
    %4925 = vmatpush2.bf16.msra.mxu0 0
    %4926 = vmatprep.subr.bf16.mxu0 0
    %4927 = vmatpush2.bf16.msra.mxu0 0
    %4928 = vmatprep.mubr.bf16.mxu0 0
    %4929 = vmatmul.mubr.bf16.gmra.mxu0 %v4738
    %v4930 = vpop.f32.mrf.mxu0
    %v4931 = vadd.f32 %v4890, %v4930
    %v4932 = vpop.f32.mrf.mxu0
    %v4933 = vadd.f32 %v4892, %v4932
    %v4934 = vpop.f32.mrf.mxu0
    %v4935 = vpop.f32.mrf.mxu0
    %4936 = vdwg.mxu0
    %4937 = vmatprep.subr.bf16.mxu0 %v3599
    %4938 = vmatpush1.bf16.msra.mxu0 %v3598
    %4939 = vmatprep.subr.bf16.mxu0 %v3561
    %4940 = vmatpush1.bf16.msra.mxu0 %v3560
    %4941 = vmatprep.subr.bf16.mxu0 %v3523
    %4942 = vmatpush1.bf16.msra.mxu0 %v3522
    %4943 = vmatprep.subr.bf16.mxu0 %v3485
    %4944 = vmatpush1.bf16.msra.mxu0 %v3484
    %4945 = vmatprep.subr.bf16.mxu0 %v3447
    %4946 = vmatpush1.bf16.msra.mxu0 %v3446
    %4947 = vmatprep.subr.bf16.mxu0 %v3409
    %4948 = vmatpush1.bf16.msra.mxu0 %v3408
    %4949 = vmatprep.subr.bf16.mxu0 %v3371
    %4950 = vmatpush1.bf16.msra.mxu0 %v3370
    %4951 = vmatprep.subr.bf16.mxu0 %v3333
    %4952 = vmatpush1.bf16.msra.mxu0 %v3332
    %4953 = vmatprep.subr.bf16.mxu0 %v3903
    %4954 = vmatpush2.bf16.msra.mxu0 %v3902
    %4955 = vmatprep.subr.bf16.mxu0 %v3865
    %4956 = vmatpush2.bf16.msra.mxu0 %v3864
    %4957 = vmatprep.subr.bf16.mxu0 %v3827
    %4958 = vmatpush2.bf16.msra.mxu0 %v3826
    %4959 = vmatprep.subr.bf16.mxu0 %v3789
    %4960 = vmatpush2.bf16.msra.mxu0 %v3788
    %4961 = vmatprep.subr.bf16.mxu0 %v3751
    %4962 = vmatpush2.bf16.msra.mxu0 %v3750
    %4963 = vmatprep.subr.bf16.mxu0 %v3713
    %4964 = vmatpush2.bf16.msra.mxu0 %v3712
    %4965 = vmatprep.subr.bf16.mxu0 %v3675
    %4966 = vmatpush2.bf16.msra.mxu0 %v3674
    %4967 = vmatprep.subr.bf16.mxu0 %v3637
    %4968 = vmatpush2.bf16.msra.mxu0 %v3636
    %4969 = vmatprep.mubr.bf16.mxu0 %v240
    %4970 = vmatmul.mubr.bf16.gmra.mxu0 %v239
    %v4971 = vpop.f32.mrf.mxu0
    %v4972 = vadd.f32 %v985, %v4971
    %v4973 = vpop.f32.mrf.mxu0
    %v4974 = vadd.f32 %v989, %v4973
    %v4975 = vpop.f32.mrf.mxu0
    %v4976 = vpop.f32.mrf.mxu0
    %4977 = vdwg.mxu0
    %4978 = vmatprep.subr.bf16.mxu0 0
    %4979 = vmatpush1.bf16.msra.mxu0 0
    %4980 = vmatprep.subr.bf16.mxu0 0
    %4981 = vmatpush1.bf16.msra.mxu0 0
    %4982 = vmatprep.subr.bf16.mxu0 0
    %4983 = vmatpush1.bf16.msra.mxu0 0
    %4984 = vmatprep.subr.bf16.mxu0 0
    %4985 = vmatpush1.bf16.msra.mxu0 0
    %4986 = vmatprep.subr.bf16.mxu0 0
    %4987 = vmatpush1.bf16.msra.mxu0 0
    %4988 = vmatprep.subr.bf16.mxu0 %v4751
    %4989 = vmatpush1.bf16.msra.mxu0 %v4748
    %4990 = vmatprep.subr.bf16.mxu0 %v3979
    %4991 = vmatpush1.bf16.msra.mxu0 %v3978
    %4992 = vmatprep.subr.bf16.mxu0 %v3941
    %4993 = vmatpush1.bf16.msra.mxu0 %v3940
    %4994 = vmatprep.subr.bf16.mxu0 0
    %4995 = vmatpush2.bf16.msra.mxu0 0
    %4996 = vmatprep.subr.bf16.mxu0 0
    %4997 = vmatpush2.bf16.msra.mxu0 0
    %4998 = vmatprep.subr.bf16.mxu0 0
    %4999 = vmatpush2.bf16.msra.mxu0 0
    %5000 = vmatprep.subr.bf16.mxu0 0
    %5001 = vmatpush2.bf16.msra.mxu0 0
    %5002 = vmatprep.subr.bf16.mxu0 0
    %5003 = vmatpush2.bf16.msra.mxu0 0
    %5004 = vmatprep.subr.bf16.mxu0 0
    %5005 = vmatpush2.bf16.msra.mxu0 0
    %5006 = vmatprep.subr.bf16.mxu0 0
    %5007 = vmatpush2.bf16.msra.mxu0 0
    %5008 = vmatprep.subr.bf16.mxu0 0
    %5009 = vmatpush2.bf16.msra.mxu0 0
    %5010 = vmatprep.mubr.bf16.mxu0 0
    %5011 = vmatmul.mubr.bf16.gmra.mxu0 %v4738
    %v5012 = vpop.f32.mrf.mxu0
    %v5013 = vadd.f32 %v4972, %v5012
    %v5014 = vpop.f32.mrf.mxu0
    %v5015 = vadd.f32 %v4974, %v5014
    %v5016 = vpop.f32.mrf.mxu0
    %v5017 = vpop.f32.mrf.mxu0
    %5018 = vdwg.mxu0
    %5019 = vmatprep.subr.bf16.mxu0 %v3601
    %5020 = vmatpush1.bf16.msra.mxu0 %v3600
    %5021 = vmatprep.subr.bf16.mxu0 %v3563
    %5022 = vmatpush1.bf16.msra.mxu0 %v3562
    %5023 = vmatprep.subr.bf16.mxu0 %v3525
    %5024 = vmatpush1.bf16.msra.mxu0 %v3524
    %5025 = vmatprep.subr.bf16.mxu0 %v3487
    %5026 = vmatpush1.bf16.msra.mxu0 %v3486
    %5027 = vmatprep.subr.bf16.mxu0 %v3449
    %5028 = vmatpush1.bf16.msra.mxu0 %v3448
    %5029 = vmatprep.subr.bf16.mxu0 %v3411
    %5030 = vmatpush1.bf16.msra.mxu0 %v3410
    %5031 = vmatprep.subr.bf16.mxu0 %v3373
    %5032 = vmatpush1.bf16.msra.mxu0 %v3372
    %5033 = vmatprep.subr.bf16.mxu0 %v3335
    %5034 = vmatpush1.bf16.msra.mxu0 %v3334
    %5035 = vmatprep.subr.bf16.mxu0 %v3905
    %5036 = vmatpush2.bf16.msra.mxu0 %v3904
    %5037 = vmatprep.subr.bf16.mxu0 %v3867
    %5038 = vmatpush2.bf16.msra.mxu0 %v3866
    %5039 = vmatprep.subr.bf16.mxu0 %v3829
    %5040 = vmatpush2.bf16.msra.mxu0 %v3828
    %5041 = vmatprep.subr.bf16.mxu0 %v3791
    %5042 = vmatpush2.bf16.msra.mxu0 %v3790
    %5043 = vmatprep.subr.bf16.mxu0 %v3753
    %5044 = vmatpush2.bf16.msra.mxu0 %v3752
    %5045 = vmatprep.subr.bf16.mxu0 %v3715
    %5046 = vmatpush2.bf16.msra.mxu0 %v3714
    %5047 = vmatprep.subr.bf16.mxu0 %v3677
    %5048 = vmatpush2.bf16.msra.mxu0 %v3676
    %5049 = vmatprep.subr.bf16.mxu0 %v3639
    %5050 = vmatpush2.bf16.msra.mxu0 %v3638
    %5051 = vmatprep.mubr.bf16.mxu0 %v240
    %5052 = vmatmul.mubr.bf16.gmra.mxu0 %v239
    %v5053 = vpop.f32.mrf.mxu0
    %v5054 = vadd.f32 %v993, %v5053
    %v5055 = vpop.f32.mrf.mxu0
    %v5056 = vadd.f32 %v997, %v5055
    %v5057 = vpop.f32.mrf.mxu0
    %v5058 = vpop.f32.mrf.mxu0
    %5059 = vdwg.mxu0
    %5060 = vmatprep.subr.bf16.mxu0 0
    %5061 = vmatpush1.bf16.msra.mxu0 0
    %5062 = vmatprep.subr.bf16.mxu0 0
    %5063 = vmatpush1.bf16.msra.mxu0 0
    %5064 = vmatprep.subr.bf16.mxu0 0
    %5065 = vmatpush1.bf16.msra.mxu0 0
    %5066 = vmatprep.subr.bf16.mxu0 0
    %5067 = vmatpush1.bf16.msra.mxu0 0
    %5068 = vmatprep.subr.bf16.mxu0 0
    %5069 = vmatpush1.bf16.msra.mxu0 0
    %5070 = vmatprep.subr.bf16.mxu0 %v4757
    %5071 = vmatpush1.bf16.msra.mxu0 %v4754
    %5072 = vmatprep.subr.bf16.mxu0 %v3981
    %5073 = vmatpush1.bf16.msra.mxu0 %v3980
    %5074 = vmatprep.subr.bf16.mxu0 %v3943
    %5075 = vmatpush1.bf16.msra.mxu0 %v3942
    %5076 = vmatprep.subr.bf16.mxu0 0
    %5077 = vmatpush2.bf16.msra.mxu0 0
    %5078 = vmatprep.subr.bf16.mxu0 0
    %5079 = vmatpush2.bf16.msra.mxu0 0
    %5080 = vmatprep.subr.bf16.mxu0 0
    %5081 = vmatpush2.bf16.msra.mxu0 0
    %5082 = vmatprep.subr.bf16.mxu0 0
    %5083 = vmatpush2.bf16.msra.mxu0 0
    %5084 = vmatprep.subr.bf16.mxu0 0
    %5085 = vmatpush2.bf16.msra.mxu0 0
    %5086 = vmatprep.subr.bf16.mxu0 0
    %5087 = vmatpush2.bf16.msra.mxu0 0
    %5088 = vmatprep.subr.bf16.mxu0 0
    %5089 = vmatpush2.bf16.msra.mxu0 0
    %5090 = vmatprep.subr.bf16.mxu0 0
    %5091 = vmatpush2.bf16.msra.mxu0 0
    %5092 = vmatprep.mubr.bf16.mxu0 0
    %5093 = vmatmul.mubr.bf16.gmra.mxu0 %v4738
    %v5094 = vpop.f32.mrf.mxu0
    %v5095 = vadd.f32 %v5054, %v5094
    %v5096 = vpop.f32.mrf.mxu0
    %v5097 = vadd.f32 %v5056, %v5096
    %v5098 = vpop.f32.mrf.mxu0
    %v5099 = vpop.f32.mrf.mxu0
    %5100 = vdwg.mxu0
    %5101 = vmatprep.subr.bf16.mxu0 %v3603
    %5102 = vmatpush1.bf16.msra.mxu0 %v3602
    %5103 = vmatprep.subr.bf16.mxu0 %v3565
    %5104 = vmatpush1.bf16.msra.mxu0 %v3564
    %5105 = vmatprep.subr.bf16.mxu0 %v3527
    %5106 = vmatpush1.bf16.msra.mxu0 %v3526
    %5107 = vmatprep.subr.bf16.mxu0 %v3489
    %5108 = vmatpush1.bf16.msra.mxu0 %v3488
    %5109 = vmatprep.subr.bf16.mxu0 %v3451
    %5110 = vmatpush1.bf16.msra.mxu0 %v3450
    %5111 = vmatprep.subr.bf16.mxu0 %v3413
    %5112 = vmatpush1.bf16.msra.mxu0 %v3412
    %5113 = vmatprep.subr.bf16.mxu0 %v3375
    %5114 = vmatpush1.bf16.msra.mxu0 %v3374
    %5115 = vmatprep.subr.bf16.mxu0 %v3337
    %5116 = vmatpush1.bf16.msra.mxu0 %v3336
    %5117 = vmatprep.subr.bf16.mxu0 %v3907
    %5118 = vmatpush2.bf16.msra.mxu0 %v3906
    %5119 = vmatprep.subr.bf16.mxu0 %v3869
    %5120 = vmatpush2.bf16.msra.mxu0 %v3868
    %5121 = vmatprep.subr.bf16.mxu0 %v3831
    %5122 = vmatpush2.bf16.msra.mxu0 %v3830
    %5123 = vmatprep.subr.bf16.mxu0 %v3793
    %5124 = vmatpush2.bf16.msra.mxu0 %v3792
    %5125 = vmatprep.subr.bf16.mxu0 %v3755
    %5126 = vmatpush2.bf16.msra.mxu0 %v3754
    %5127 = vmatprep.subr.bf16.mxu0 %v3717
    %5128 = vmatpush2.bf16.msra.mxu0 %v3716
    %5129 = vmatprep.subr.bf16.mxu0 %v3679
    %5130 = vmatpush2.bf16.msra.mxu0 %v3678
    %5131 = vmatprep.subr.bf16.mxu0 %v3641
    %5132 = vmatpush2.bf16.msra.mxu0 %v3640
    %5133 = vmatprep.mubr.bf16.mxu0 %v240
    %5134 = vmatmul.mubr.bf16.gmra.mxu0 %v239
    %v5135 = vpop.f32.mrf.mxu0
    %v5136 = vadd.f32 %v1001, %v5135
    %v5137 = vpop.f32.mrf.mxu0
    %v5138 = vadd.f32 %v1005, %v5137
    %v5139 = vpop.f32.mrf.mxu0
    %v5140 = vpop.f32.mrf.mxu0
    %5141 = vdwg.mxu0
    %5142 = vmatprep.subr.bf16.mxu0 0
    %5143 = vmatpush1.bf16.msra.mxu0 0
    %5144 = vmatprep.subr.bf16.mxu0 0
    %5145 = vmatpush1.bf16.msra.mxu0 0
    %5146 = vmatprep.subr.bf16.mxu0 0
    %5147 = vmatpush1.bf16.msra.mxu0 0
    %5148 = vmatprep.subr.bf16.mxu0 0
    %5149 = vmatpush1.bf16.msra.mxu0 0
    %5150 = vmatprep.subr.bf16.mxu0 0
    %5151 = vmatpush1.bf16.msra.mxu0 0
    %5152 = vmatprep.subr.bf16.mxu0 %v4763
    %5153 = vmatpush1.bf16.msra.mxu0 %v4760
    %5154 = vmatprep.subr.bf16.mxu0 %v3983
    %5155 = vmatpush1.bf16.msra.mxu0 %v3982
    %5156 = vmatprep.subr.bf16.mxu0 %v3945
    %5157 = vmatpush1.bf16.msra.mxu0 %v3944
    %5158 = vmatprep.subr.bf16.mxu0 0
    %5159 = vmatpush2.bf16.msra.mxu0 0
    %5160 = vmatprep.subr.bf16.mxu0 0
    %5161 = vmatpush2.bf16.msra.mxu0 0
    %5162 = vmatprep.subr.bf16.mxu0 0
    %5163 = vmatpush2.bf16.msra.mxu0 0
    %5164 = vmatprep.subr.bf16.mxu0 0
    %5165 = vmatpush2.bf16.msra.mxu0 0
    %5166 = vmatprep.subr.bf16.mxu0 0
    %5167 = vmatpush2.bf16.msra.mxu0 0
    %5168 = vmatprep.subr.bf16.mxu0 0
    %5169 = vmatpush2.bf16.msra.mxu0 0
    %5170 = vmatprep.subr.bf16.mxu0 0
    %5171 = vmatpush2.bf16.msra.mxu0 0
    %5172 = vmatprep.subr.bf16.mxu0 0
    %5173 = vmatpush2.bf16.msra.mxu0 0
    %5174 = vmatprep.mubr.bf16.mxu0 0
    %5175 = vmatmul.mubr.bf16.gmra.mxu0 %v4738
    %v5176 = vpop.f32.mrf.mxu0
    %v5177 = vadd.f32 %v5136, %v5176
    %v5178 = vpop.f32.mrf.mxu0
    %v5179 = vadd.f32 %v5138, %v5178
    %v5180 = vpop.f32.mrf.mxu0
    %v5181 = vpop.f32.mrf.mxu0
    %5182 = vdwg.mxu0
    %5183 = vmatprep.subr.bf16.mxu0 %v3605
    %5184 = vmatpush1.bf16.msra.mxu0 %v3604
    %5185 = vmatprep.subr.bf16.mxu0 %v3567
    %5186 = vmatpush1.bf16.msra.mxu0 %v3566
    %5187 = vmatprep.subr.bf16.mxu0 %v3529
    %5188 = vmatpush1.bf16.msra.mxu0 %v3528
    %5189 = vmatprep.subr.bf16.mxu0 %v3491
    %5190 = vmatpush1.bf16.msra.mxu0 %v3490
    %5191 = vmatprep.subr.bf16.mxu0 %v3453
    %5192 = vmatpush1.bf16.msra.mxu0 %v3452
    %5193 = vmatprep.subr.bf16.mxu0 %v3415
    %5194 = vmatpush1.bf16.msra.mxu0 %v3414
    %5195 = vmatprep.subr.bf16.mxu0 %v3377
    %5196 = vmatpush1.bf16.msra.mxu0 %v3376
    %5197 = vmatprep.subr.bf16.mxu0 %v3339
    %5198 = vmatpush1.bf16.msra.mxu0 %v3338
    %5199 = vmatprep.subr.bf16.mxu0 %v3909
    %5200 = vmatpush2.bf16.msra.mxu0 %v3908
    %5201 = vmatprep.subr.bf16.mxu0 %v3871
    %5202 = vmatpush2.bf16.msra.mxu0 %v3870
    %5203 = vmatprep.subr.bf16.mxu0 %v3833
    %5204 = vmatpush2.bf16.msra.mxu0 %v3832
    %5205 = vmatprep.subr.bf16.mxu0 %v3795
    %5206 = vmatpush2.bf16.msra.mxu0 %v3794
    %5207 = vmatprep.subr.bf16.mxu0 %v3757
    %5208 = vmatpush2.bf16.msra.mxu0 %v3756
    %5209 = vmatprep.subr.bf16.mxu0 %v3719
    %5210 = vmatpush2.bf16.msra.mxu0 %v3718
    %5211 = vmatprep.subr.bf16.mxu0 %v3681
    %5212 = vmatpush2.bf16.msra.mxu0 %v3680
    %5213 = vmatprep.subr.bf16.mxu0 %v3643
    %5214 = vmatpush2.bf16.msra.mxu0 %v3642
    %5215 = vmatprep.mubr.bf16.mxu0 %v240
    %5216 = vmatmul.mubr.bf16.gmra.mxu0 %v239
    %v5217 = vpop.f32.mrf.mxu0
    %v5218 = vadd.f32 %v1009, %v5217
    %v5219 = vpop.f32.mrf.mxu0
    %v5220 = vadd.f32 %v1013, %v5219
    %v5221 = vpop.f32.mrf.mxu0
    %v5222 = vpop.f32.mrf.mxu0
    %5223 = vdwg.mxu0
    %5224 = vmatprep.subr.bf16.mxu0 0
    %5225 = vmatpush1.bf16.msra.mxu0 0
    %5226 = vmatprep.subr.bf16.mxu0 0
    %5227 = vmatpush1.bf16.msra.mxu0 0
    %5228 = vmatprep.subr.bf16.mxu0 0
    %5229 = vmatpush1.bf16.msra.mxu0 0
    %5230 = vmatprep.subr.bf16.mxu0 0
    %5231 = vmatpush1.bf16.msra.mxu0 0
    %5232 = vmatprep.subr.bf16.mxu0 0
    %5233 = vmatpush1.bf16.msra.mxu0 0
    %5234 = vmatprep.subr.bf16.mxu0 %v4769
    %5235 = vmatpush1.bf16.msra.mxu0 %v4766
    %5236 = vmatprep.subr.bf16.mxu0 %v3985
    %5237 = vmatpush1.bf16.msra.mxu0 %v3984
    %5238 = vmatprep.subr.bf16.mxu0 %v3947
    %5239 = vmatpush1.bf16.msra.mxu0 %v3946
    %5240 = vmatprep.subr.bf16.mxu0 0
    %5241 = vmatpush2.bf16.msra.mxu0 0
    %5242 = vmatprep.subr.bf16.mxu0 0
    %5243 = vmatpush2.bf16.msra.mxu0 0
    %5244 = vmatprep.subr.bf16.mxu0 0
    %5245 = vmatpush2.bf16.msra.mxu0 0
    %5246 = vmatprep.subr.bf16.mxu0 0
    %5247 = vmatpush2.bf16.msra.mxu0 0
    %5248 = vmatprep.subr.bf16.mxu0 0
    %5249 = vmatpush2.bf16.msra.mxu0 0
    %5250 = vmatprep.subr.bf16.mxu0 0
    %5251 = vmatpush2.bf16.msra.mxu0 0
    %5252 = vmatprep.subr.bf16.mxu0 0
    %5253 = vmatpush2.bf16.msra.mxu0 0
    %5254 = vmatprep.subr.bf16.mxu0 0
    %5255 = vmatpush2.bf16.msra.mxu0 0
    %5256 = vmatprep.mubr.bf16.mxu0 0
    %5257 = vmatmul.mubr.bf16.gmra.mxu0 %v4738
    %v5258 = vpop.f32.mrf.mxu0
    %v5259 = vadd.f32 %v5218, %v5258
    %v5260 = vpop.f32.mrf.mxu0
    %v5261 = vadd.f32 %v5220, %v5260
    %v5262 = vpop.f32.mrf.mxu0
    %v5263 = vpop.f32.mrf.mxu0
    %5264 = vdwg.mxu0
    %5265 = vmatprep.subr.bf16.mxu0 %v3607
    %5266 = vmatpush1.bf16.msra.mxu0 %v3606
    %5267 = vmatprep.subr.bf16.mxu0 %v3569
    %5268 = vmatpush1.bf16.msra.mxu0 %v3568
    %5269 = vmatprep.subr.bf16.mxu0 %v3531
    %5270 = vmatpush1.bf16.msra.mxu0 %v3530
    %5271 = vmatprep.subr.bf16.mxu0 %v3493
    %5272 = vmatpush1.bf16.msra.mxu0 %v3492
    %5273 = vmatprep.subr.bf16.mxu0 %v3455
    %5274 = vmatpush1.bf16.msra.mxu0 %v3454
    %5275 = vmatprep.subr.bf16.mxu0 %v3417
    %5276 = vmatpush1.bf16.msra.mxu0 %v3416
    %5277 = vmatprep.subr.bf16.mxu0 %v3379
    %5278 = vmatpush1.bf16.msra.mxu0 %v3378
    %5279 = vmatprep.subr.bf16.mxu0 %v3341
    %5280 = vmatpush1.bf16.msra.mxu0 %v3340
    %5281 = vmatprep.subr.bf16.mxu0 %v3911
    %5282 = vmatpush2.bf16.msra.mxu0 %v3910
    %5283 = vmatprep.subr.bf16.mxu0 %v3873
    %5284 = vmatpush2.bf16.msra.mxu0 %v3872
    %5285 = vmatprep.subr.bf16.mxu0 %v3835
    %5286 = vmatpush2.bf16.msra.mxu0 %v3834
    %5287 = vmatprep.subr.bf16.mxu0 %v3797
    %5288 = vmatpush2.bf16.msra.mxu0 %v3796
    %5289 = vmatprep.subr.bf16.mxu0 %v3759
    %5290 = vmatpush2.bf16.msra.mxu0 %v3758
    %5291 = vmatprep.subr.bf16.mxu0 %v3721
    %5292 = vmatpush2.bf16.msra.mxu0 %v3720
    %5293 = vmatprep.subr.bf16.mxu0 %v3683
    %5294 = vmatpush2.bf16.msra.mxu0 %v3682
    %5295 = vmatprep.subr.bf16.mxu0 %v3645
    %5296 = vmatpush2.bf16.msra.mxu0 %v3644
    %5297 = vmatprep.mubr.bf16.mxu0 %v240
    %5298 = vmatmul.mubr.bf16.gmra.mxu0 %v239
    %v5299 = vpop.f32.mrf.mxu0
    %v5300 = vadd.f32 %v1017, %v5299
    %v5301 = vpop.f32.mrf.mxu0
    %v5302 = vadd.f32 %v1021, %v5301
    %v5303 = vpop.f32.mrf.mxu0
    %v5304 = vpop.f32.mrf.mxu0
    %5305 = vdwg.mxu0
    %5306 = vmatprep.subr.bf16.mxu0 0
    %5307 = vmatpush1.bf16.msra.mxu0 0
    %5308 = vmatprep.subr.bf16.mxu0 0
    %5309 = vmatpush1.bf16.msra.mxu0 0
    %5310 = vmatprep.subr.bf16.mxu0 0
    %5311 = vmatpush1.bf16.msra.mxu0 0
    %5312 = vmatprep.subr.bf16.mxu0 0
    %5313 = vmatpush1.bf16.msra.mxu0 0
    %5314 = vmatprep.subr.bf16.mxu0 0
    %5315 = vmatpush1.bf16.msra.mxu0 0
    %5316 = vmatprep.subr.bf16.mxu0 %v4775
    %5317 = vmatpush1.bf16.msra.mxu0 %v4772
    %5318 = vmatprep.subr.bf16.mxu0 %v3987
    %5319 = vmatpush1.bf16.msra.mxu0 %v3986
    %5320 = vmatprep.subr.bf16.mxu0 %v3949
    %5321 = vmatpush1.bf16.msra.mxu0 %v3948
    %5322 = vmatprep.subr.bf16.mxu0 0
    %5323 = vmatpush2.bf16.msra.mxu0 0
    %5324 = vmatprep.subr.bf16.mxu0 0
    %5325 = vmatpush2.bf16.msra.mxu0 0
    %5326 = vmatprep.subr.bf16.mxu0 0
    %5327 = vmatpush2.bf16.msra.mxu0 0
    %5328 = vmatprep.subr.bf16.mxu0 0
    %5329 = vmatpush2.bf16.msra.mxu0 0
    %5330 = vmatprep.subr.bf16.mxu0 0
    %5331 = vmatpush2.bf16.msra.mxu0 0
    %5332 = vmatprep.subr.bf16.mxu0 0
    %5333 = vmatpush2.bf16.msra.mxu0 0
    %5334 = vmatprep.subr.bf16.mxu0 0
    %5335 = vmatpush2.bf16.msra.mxu0 0
    %5336 = vmatprep.subr.bf16.mxu0 0
    %5337 = vmatpush2.bf16.msra.mxu0 0
    %5338 = vmatprep.mubr.bf16.mxu0 0
    %5339 = vmatmul.mubr.bf16.gmra.mxu0 %v4738
    %v5340 = vpop.f32.mrf.mxu0
    %v5341 = vadd.f32 %v5300, %v5340
    %v5342 = vpop.f32.mrf.mxu0
    %v5343 = vadd.f32 %v5302, %v5342
    %v5344 = vpop.f32.mrf.mxu0
    %v5345 = vpop.f32.mrf.mxu0
    %5346 = vdwg.mxu0
    %5347 = vmatprep.subr.bf16.mxu0 %v3609
    %5348 = vmatpush1.bf16.msra.mxu0 %v3608
    %5349 = vmatprep.subr.bf16.mxu0 %v3571
    %5350 = vmatpush1.bf16.msra.mxu0 %v3570
    %5351 = vmatprep.subr.bf16.mxu0 %v3533
    %5352 = vmatpush1.bf16.msra.mxu0 %v3532
    %5353 = vmatprep.subr.bf16.mxu0 %v3495
    %5354 = vmatpush1.bf16.msra.mxu0 %v3494
    %5355 = vmatprep.subr.bf16.mxu0 %v3457
    %5356 = vmatpush1.bf16.msra.mxu0 %v3456
    %5357 = vmatprep.subr.bf16.mxu0 %v3419
    %5358 = vmatpush1.bf16.msra.mxu0 %v3418
    %5359 = vmatprep.subr.bf16.mxu0 %v3381
    %5360 = vmatpush1.bf16.msra.mxu0 %v3380
    %5361 = vmatprep.subr.bf16.mxu0 %v3343
    %5362 = vmatpush1.bf16.msra.mxu0 %v3342
    %5363 = vmatprep.subr.bf16.mxu0 %v3913
    %5364 = vmatpush2.bf16.msra.mxu0 %v3912
    %5365 = vmatprep.subr.bf16.mxu0 %v3875
    %5366 = vmatpush2.bf16.msra.mxu0 %v3874
    %5367 = vmatprep.subr.bf16.mxu0 %v3837
    %5368 = vmatpush2.bf16.msra.mxu0 %v3836
    %5369 = vmatprep.subr.bf16.mxu0 %v3799
    %5370 = vmatpush2.bf16.msra.mxu0 %v3798
    %5371 = vmatprep.subr.bf16.mxu0 %v3761
    %5372 = vmatpush2.bf16.msra.mxu0 %v3760
    %5373 = vmatprep.subr.bf16.mxu0 %v3723
    %5374 = vmatpush2.bf16.msra.mxu0 %v3722
    %5375 = vmatprep.subr.bf16.mxu0 %v3685
    %5376 = vmatpush2.bf16.msra.mxu0 %v3684
    %5377 = vmatprep.subr.bf16.mxu0 %v3647
    %5378 = vmatpush2.bf16.msra.mxu0 %v3646
    %5379 = vmatprep.mubr.bf16.mxu0 %v240
    %5380 = vmatmul.mubr.bf16.gmra.mxu0 %v239
    %v5381 = vpop.f32.mrf.mxu0
    %v5382 = vadd.f32 %v1025, %v5381
    %v5383 = vpop.f32.mrf.mxu0
    %v5384 = vadd.f32 %v1029, %v5383
    %v5385 = vpop.f32.mrf.mxu0
    %v5386 = vpop.f32.mrf.mxu0
    %5387 = vdwg.mxu0
    %5388 = vmatprep.subr.bf16.mxu0 0
    %5389 = vmatpush1.bf16.msra.mxu0 0
    %5390 = vmatprep.subr.bf16.mxu0 0
    %5391 = vmatpush1.bf16.msra.mxu0 0
    %5392 = vmatprep.subr.bf16.mxu0 0
    %5393 = vmatpush1.bf16.msra.mxu0 0
    %5394 = vmatprep.subr.bf16.mxu0 0
    %5395 = vmatpush1.bf16.msra.mxu0 0
    %5396 = vmatprep.subr.bf16.mxu0 0
    %5397 = vmatpush1.bf16.msra.mxu0 0
    %5398 = vmatprep.subr.bf16.mxu0 %v4781
    %5399 = vmatpush1.bf16.msra.mxu0 %v4778
    %5400 = vmatprep.subr.bf16.mxu0 %v3989
    %5401 = vmatpush1.bf16.msra.mxu0 %v3988
    %5402 = vmatprep.subr.bf16.mxu0 %v3951
    %5403 = vmatpush1.bf16.msra.mxu0 %v3950
    %5404 = vmatprep.subr.bf16.mxu0 0
    %5405 = vmatpush2.bf16.msra.mxu0 0
    %5406 = vmatprep.subr.bf16.mxu0 0
    %5407 = vmatpush2.bf16.msra.mxu0 0
    %5408 = vmatprep.subr.bf16.mxu0 0
    %5409 = vmatpush2.bf16.msra.mxu0 0
    %5410 = vmatprep.subr.bf16.mxu0 0
    %5411 = vmatpush2.bf16.msra.mxu0 0
    %5412 = vmatprep.subr.bf16.mxu0 0
    %5413 = vmatpush2.bf16.msra.mxu0 0
    %5414 = vmatprep.subr.bf16.mxu0 0
    %5415 = vmatpush2.bf16.msra.mxu0 0
    %5416 = vmatprep.subr.bf16.mxu0 0
    %5417 = vmatpush2.bf16.msra.mxu0 0
    %5418 = vmatprep.subr.bf16.mxu0 0
    %5419 = vmatpush2.bf16.msra.mxu0 0
    %5420 = vmatprep.mubr.bf16.mxu0 0
    %5421 = vmatmul.mubr.bf16.gmra.mxu0 %v4738
    %v5422 = vpop.f32.mrf.mxu0
    %v5423 = vadd.f32 %v5382, %v5422
    %v5424 = vpop.f32.mrf.mxu0
    %v5425 = vadd.f32 %v5384, %v5424
    %v5426 = vpop.f32.mrf.mxu0
    %v5427 = vpop.f32.mrf.mxu0
    %5428 = vdwg.mxu0
    %5429 = vmatprep.subr.bf16.mxu0 %v3611
    %5430 = vmatpush1.bf16.msra.mxu0 %v3610
    %5431 = vmatprep.subr.bf16.mxu0 %v3573
    %5432 = vmatpush1.bf16.msra.mxu0 %v3572
    %5433 = vmatprep.subr.bf16.mxu0 %v3535
    %5434 = vmatpush1.bf16.msra.mxu0 %v3534
    %5435 = vmatprep.subr.bf16.mxu0 %v3497
    %5436 = vmatpush1.bf16.msra.mxu0 %v3496
    %5437 = vmatprep.subr.bf16.mxu0 %v3459
    %5438 = vmatpush1.bf16.msra.mxu0 %v3458
    %5439 = vmatprep.subr.bf16.mxu0 %v3421
    %5440 = vmatpush1.bf16.msra.mxu0 %v3420
    %5441 = vmatprep.subr.bf16.mxu0 %v3383
    %5442 = vmatpush1.bf16.msra.mxu0 %v3382
    %5443 = vmatprep.subr.bf16.mxu0 %v3345
    %5444 = vmatpush1.bf16.msra.mxu0 %v3344
    %5445 = vmatprep.subr.bf16.mxu0 %v3915
    %5446 = vmatpush2.bf16.msra.mxu0 %v3914
    %5447 = vmatprep.subr.bf16.mxu0 %v3877
    %5448 = vmatpush2.bf16.msra.mxu0 %v3876
    %5449 = vmatprep.subr.bf16.mxu0 %v3839
    %5450 = vmatpush2.bf16.msra.mxu0 %v3838
    %5451 = vmatprep.subr.bf16.mxu0 %v3801
    %5452 = vmatpush2.bf16.msra.mxu0 %v3800
    %5453 = vmatprep.subr.bf16.mxu0 %v3763
    %5454 = vmatpush2.bf16.msra.mxu0 %v3762
    %5455 = vmatprep.subr.bf16.mxu0 %v3725
    %5456 = vmatpush2.bf16.msra.mxu0 %v3724
    %5457 = vmatprep.subr.bf16.mxu0 %v3687
    %5458 = vmatpush2.bf16.msra.mxu0 %v3686
    %5459 = vmatprep.subr.bf16.mxu0 %v3649
    %5460 = vmatpush2.bf16.msra.mxu0 %v3648
    %5461 = vmatprep.mubr.bf16.mxu0 %v240
    %5462 = vmatmul.mubr.bf16.gmra.mxu0 %v239
    %v5463 = vpop.f32.mrf.mxu0
    %v5464 = vadd.f32 %v1033, %v5463
    %v5465 = vpop.f32.mrf.mxu0
    %v5466 = vadd.f32 %v1037, %v5465
    %v5467 = vpop.f32.mrf.mxu0
    %v5468 = vpop.f32.mrf.mxu0
    %5469 = vdwg.mxu0
    %5470 = vmatprep.subr.bf16.mxu0 0
    %5471 = vmatpush1.bf16.msra.mxu0 0
    %5472 = vmatprep.subr.bf16.mxu0 0
    %5473 = vmatpush1.bf16.msra.mxu0 0
    %5474 = vmatprep.subr.bf16.mxu0 0
    %5475 = vmatpush1.bf16.msra.mxu0 0
    %5476 = vmatprep.subr.bf16.mxu0 0
    %5477 = vmatpush1.bf16.msra.mxu0 0
    %5478 = vmatprep.subr.bf16.mxu0 0
    %5479 = vmatpush1.bf16.msra.mxu0 0
    %5480 = vmatprep.subr.bf16.mxu0 %v4787
    %5481 = vmatpush1.bf16.msra.mxu0 %v4784
    %5482 = vmatprep.subr.bf16.mxu0 %v3991
    %5483 = vmatpush1.bf16.msra.mxu0 %v3990
    %5484 = vmatprep.subr.bf16.mxu0 %v3953
    %5485 = vmatpush1.bf16.msra.mxu0 %v3952
    %5486 = vmatprep.subr.bf16.mxu0 0
    %5487 = vmatpush2.bf16.msra.mxu0 0
    %5488 = vmatprep.subr.bf16.mxu0 0
    %5489 = vmatpush2.bf16.msra.mxu0 0
    %5490 = vmatprep.subr.bf16.mxu0 0
    %5491 = vmatpush2.bf16.msra.mxu0 0
    %5492 = vmatprep.subr.bf16.mxu0 0
    %5493 = vmatpush2.bf16.msra.mxu0 0
    %5494 = vmatprep.subr.bf16.mxu0 0
    %5495 = vmatpush2.bf16.msra.mxu0 0
    %5496 = vmatprep.subr.bf16.mxu0 0
    %5497 = vmatpush2.bf16.msra.mxu0 0
    %5498 = vmatprep.subr.bf16.mxu0 0
    %5499 = vmatpush2.bf16.msra.mxu0 0
    %5500 = vmatprep.subr.bf16.mxu0 0
    %5501 = vmatpush2.bf16.msra.mxu0 0
    %5502 = vmatprep.mubr.bf16.mxu0 0
    %5503 = vmatmul.mubr.bf16.gmra.mxu0 %v4738
    %v5504 = vpop.f32.mrf.mxu0
    %v5505 = vadd.f32 %v5464, %v5504
    %v5506 = vpop.f32.mrf.mxu0
    %v5507 = vadd.f32 %v5466, %v5506
    %v5508 = vpop.f32.mrf.mxu0
    %v5509 = vpop.f32.mrf.mxu0
    %5510 = vdwg.mxu0
    %5511 = vmatprep.subr.bf16.mxu0 %v3613
    %5512 = vmatpush1.bf16.msra.mxu0 %v3612
    %5513 = vmatprep.subr.bf16.mxu0 %v3575
    %5514 = vmatpush1.bf16.msra.mxu0 %v3574
    %5515 = vmatprep.subr.bf16.mxu0 %v3537
    %5516 = vmatpush1.bf16.msra.mxu0 %v3536
    %5517 = vmatprep.subr.bf16.mxu0 %v3499
    %5518 = vmatpush1.bf16.msra.mxu0 %v3498
    %5519 = vmatprep.subr.bf16.mxu0 %v3461
    %5520 = vmatpush1.bf16.msra.mxu0 %v3460
    %5521 = vmatprep.subr.bf16.mxu0 %v3423
    %5522 = vmatpush1.bf16.msra.mxu0 %v3422
    %5523 = vmatprep.subr.bf16.mxu0 %v3385
    %5524 = vmatpush1.bf16.msra.mxu0 %v3384
    %5525 = vmatprep.subr.bf16.mxu0 %v3347
    %5526 = vmatpush1.bf16.msra.mxu0 %v3346
    %5527 = vmatprep.subr.bf16.mxu0 %v3917
    %5528 = vmatpush2.bf16.msra.mxu0 %v3916
    %5529 = vmatprep.subr.bf16.mxu0 %v3879
    %5530 = vmatpush2.bf16.msra.mxu0 %v3878
    %5531 = vmatprep.subr.bf16.mxu0 %v3841
    %5532 = vmatpush2.bf16.msra.mxu0 %v3840
    %5533 = vmatprep.subr.bf16.mxu0 %v3803
    %5534 = vmatpush2.bf16.msra.mxu0 %v3802
    %5535 = vmatprep.subr.bf16.mxu0 %v3765
    %5536 = vmatpush2.bf16.msra.mxu0 %v3764
    %5537 = vmatprep.subr.bf16.mxu0 %v3727
    %5538 = vmatpush2.bf16.msra.mxu0 %v3726
    %5539 = vmatprep.subr.bf16.mxu0 %v3689
    %5540 = vmatpush2.bf16.msra.mxu0 %v3688
    %5541 = vmatprep.subr.bf16.mxu0 %v3651
    %5542 = vmatpush2.bf16.msra.mxu0 %v3650
    %5543 = vmatprep.mubr.bf16.mxu0 %v240
    %5544 = vmatmul.mubr.bf16.gmra.mxu0 %v239
    %v5545 = vpop.f32.mrf.mxu0
    %v5546 = vadd.f32 %v1041, %v5545
    %v5547 = vpop.f32.mrf.mxu0
    %v5548 = vadd.f32 %v1045, %v5547
    %v5549 = vpop.f32.mrf.mxu0
    %v5550 = vpop.f32.mrf.mxu0
    %5551 = vdwg.mxu0
    %5552 = vmatprep.subr.bf16.mxu0 0
    %5553 = vmatpush1.bf16.msra.mxu0 0
    %5554 = vmatprep.subr.bf16.mxu0 0
    %5555 = vmatpush1.bf16.msra.mxu0 0
    %5556 = vmatprep.subr.bf16.mxu0 0
    %5557 = vmatpush1.bf16.msra.mxu0 0
    %5558 = vmatprep.subr.bf16.mxu0 0
    %5559 = vmatpush1.bf16.msra.mxu0 0
    %5560 = vmatprep.subr.bf16.mxu0 0
    %5561 = vmatpush1.bf16.msra.mxu0 0
    %5562 = vmatprep.subr.bf16.mxu0 %v4793
    %5563 = vmatpush1.bf16.msra.mxu0 %v4790
    %5564 = vmatprep.subr.bf16.mxu0 %v3993
    %5565 = vmatpush1.bf16.msra.mxu0 %v3992
    %5566 = vmatprep.subr.bf16.mxu0 %v3955
    %5567 = vmatpush1.bf16.msra.mxu0 %v3954
    %5568 = vmatprep.subr.bf16.mxu0 0
    %5569 = vmatpush2.bf16.msra.mxu0 0
    %5570 = vmatprep.subr.bf16.mxu0 0
    %5571 = vmatpush2.bf16.msra.mxu0 0
    %5572 = vmatprep.subr.bf16.mxu0 0
    %5573 = vmatpush2.bf16.msra.mxu0 0
    %5574 = vmatprep.subr.bf16.mxu0 0
    %5575 = vmatpush2.bf16.msra.mxu0 0
    %5576 = vmatprep.subr.bf16.mxu0 0
    %5577 = vmatpush2.bf16.msra.mxu0 0
    %5578 = vmatprep.subr.bf16.mxu0 0
    %5579 = vmatpush2.bf16.msra.mxu0 0
    %5580 = vmatprep.subr.bf16.mxu0 0
    %5581 = vmatpush2.bf16.msra.mxu0 0
    %5582 = vmatprep.subr.bf16.mxu0 0
    %5583 = vmatpush2.bf16.msra.mxu0 0
    %5584 = vmatprep.mubr.bf16.mxu0 0
    %5585 = vmatmul.mubr.bf16.gmra.mxu0 %v4738
    %v5586 = vpop.f32.mrf.mxu0
    %v5587 = vadd.f32 %v5546, %v5586
    %v5588 = vpop.f32.mrf.mxu0
    %v5589 = vadd.f32 %v5548, %v5588
    %v5590 = vpop.f32.mrf.mxu0
    %v5591 = vpop.f32.mrf.mxu0
    %5592 = vdwg.mxu0
    %5593 = vmatprep.subr.bf16.mxu0 %v3615
    %5594 = vmatpush1.bf16.msra.mxu0 %v3614
    %5595 = vmatprep.subr.bf16.mxu0 %v3577
    %5596 = vmatpush1.bf16.msra.mxu0 %v3576
    %5597 = vmatprep.subr.bf16.mxu0 %v3539
    %5598 = vmatpush1.bf16.msra.mxu0 %v3538
    %5599 = vmatprep.subr.bf16.mxu0 %v3501
    %5600 = vmatpush1.bf16.msra.mxu0 %v3500
    %5601 = vmatprep.subr.bf16.mxu0 %v3463
    %5602 = vmatpush1.bf16.msra.mxu0 %v3462
    %5603 = vmatprep.subr.bf16.mxu0 %v3425
    %5604 = vmatpush1.bf16.msra.mxu0 %v3424
    %5605 = vmatprep.subr.bf16.mxu0 %v3387
    %5606 = vmatpush1.bf16.msra.mxu0 %v3386
    %5607 = vmatprep.subr.bf16.mxu0 %v3349
    %5608 = vmatpush1.bf16.msra.mxu0 %v3348
    %5609 = vmatprep.subr.bf16.mxu0 %v3919
    %5610 = vmatpush2.bf16.msra.mxu0 %v3918
    %5611 = vmatprep.subr.bf16.mxu0 %v3881
    %5612 = vmatpush2.bf16.msra.mxu0 %v3880
    %5613 = vmatprep.subr.bf16.mxu0 %v3843
    %5614 = vmatpush2.bf16.msra.mxu0 %v3842
    %5615 = vmatprep.subr.bf16.mxu0 %v3805
    %5616 = vmatpush2.bf16.msra.mxu0 %v3804
    %5617 = vmatprep.subr.bf16.mxu0 %v3767
    %5618 = vmatpush2.bf16.msra.mxu0 %v3766
    %5619 = vmatprep.subr.bf16.mxu0 %v3729
    %5620 = vmatpush2.bf16.msra.mxu0 %v3728
    %5621 = vmatprep.subr.bf16.mxu0 %v3691
    %5622 = vmatpush2.bf16.msra.mxu0 %v3690
    %5623 = vmatprep.subr.bf16.mxu0 %v3653
    %5624 = vmatpush2.bf16.msra.mxu0 %v3652
    %5625 = vmatprep.mubr.bf16.mxu0 %v240
    %5626 = vmatmul.mubr.bf16.gmra.mxu0 %v239
    %v5627 = vpop.f32.mrf.mxu0
    %v5628 = vadd.f32 %v1049, %v5627
    %v5629 = vpop.f32.mrf.mxu0
    %v5630 = vadd.f32 %v1053, %v5629
    %v5631 = vpop.f32.mrf.mxu0
    %v5632 = vpop.f32.mrf.mxu0
    %5633 = vdwg.mxu0
    %5634 = vmatprep.subr.bf16.mxu0 0
    %5635 = vmatpush1.bf16.msra.mxu0 0
    %5636 = vmatprep.subr.bf16.mxu0 0
    %5637 = vmatpush1.bf16.msra.mxu0 0
    %5638 = vmatprep.subr.bf16.mxu0 0
    %5639 = vmatpush1.bf16.msra.mxu0 0
    %5640 = vmatprep.subr.bf16.mxu0 0
    %5641 = vmatpush1.bf16.msra.mxu0 0
    %5642 = vmatprep.subr.bf16.mxu0 0
    %5643 = vmatpush1.bf16.msra.mxu0 0
    %5644 = vmatprep.subr.bf16.mxu0 %v4799
    %5645 = vmatpush1.bf16.msra.mxu0 %v4796
    %5646 = vmatprep.subr.bf16.mxu0 %v3995
    %5647 = vmatpush1.bf16.msra.mxu0 %v3994
    %5648 = vmatprep.subr.bf16.mxu0 %v3957
    %5649 = vmatpush1.bf16.msra.mxu0 %v3956
    %5650 = vmatprep.subr.bf16.mxu0 0
    %5651 = vmatpush2.bf16.msra.mxu0 0
    %5652 = vmatprep.subr.bf16.mxu0 0
    %5653 = vmatpush2.bf16.msra.mxu0 0
    %5654 = vmatprep.subr.bf16.mxu0 0
    %5655 = vmatpush2.bf16.msra.mxu0 0
    %5656 = vmatprep.subr.bf16.mxu0 0
    %5657 = vmatpush2.bf16.msra.mxu0 0
    %5658 = vmatprep.subr.bf16.mxu0 0
    %5659 = vmatpush2.bf16.msra.mxu0 0
    %5660 = vmatprep.subr.bf16.mxu0 0
    %5661 = vmatpush2.bf16.msra.mxu0 0
    %5662 = vmatprep.subr.bf16.mxu0 0
    %5663 = vmatpush2.bf16.msra.mxu0 0
    %5664 = vmatprep.subr.bf16.mxu0 0
    %5665 = vmatpush2.bf16.msra.mxu0 0
    %5666 = vmatprep.mubr.bf16.mxu0 0
    %5667 = vmatmul.mubr.bf16.gmra.mxu0 %v4738
    %v5668 = vpop.f32.mrf.mxu0
    %v5669 = vadd.f32 %v5628, %v5668
    %v5670 = vpop.f32.mrf.mxu0
    %v5671 = vadd.f32 %v5630, %v5670
    %v5672 = vpop.f32.mrf.mxu0
    %v5673 = vpop.f32.mrf.mxu0
    %5674 = vdwg.mxu0
    %5675 = vmatprep.subr.bf16.mxu0 %v3617
    %5676 = vmatpush1.bf16.msra.mxu0 %v3616
    %5677 = vmatprep.subr.bf16.mxu0 %v3579
    %5678 = vmatpush1.bf16.msra.mxu0 %v3578
    %5679 = vmatprep.subr.bf16.mxu0 %v3541
    %5680 = vmatpush1.bf16.msra.mxu0 %v3540
    %5681 = vmatprep.subr.bf16.mxu0 %v3503
    %5682 = vmatpush1.bf16.msra.mxu0 %v3502
    %5683 = vmatprep.subr.bf16.mxu0 %v3465
    %5684 = vmatpush1.bf16.msra.mxu0 %v3464
    %5685 = vmatprep.subr.bf16.mxu0 %v3427
    %5686 = vmatpush1.bf16.msra.mxu0 %v3426
    %5687 = vmatprep.subr.bf16.mxu0 %v3389
    %5688 = vmatpush1.bf16.msra.mxu0 %v3388
    %5689 = vmatprep.subr.bf16.mxu0 %v3351
    %5690 = vmatpush1.bf16.msra.mxu0 %v3350
    %5691 = vmatprep.subr.bf16.mxu0 %v3921
    %5692 = vmatpush2.bf16.msra.mxu0 %v3920
    %5693 = vmatprep.subr.bf16.mxu0 %v3883
    %5694 = vmatpush2.bf16.msra.mxu0 %v3882
    %5695 = vmatprep.subr.bf16.mxu0 %v3845
    %5696 = vmatpush2.bf16.msra.mxu0 %v3844
    %5697 = vmatprep.subr.bf16.mxu0 %v3807
    %5698 = vmatpush2.bf16.msra.mxu0 %v3806
    %5699 = vmatprep.subr.bf16.mxu0 %v3769
    %5700 = vmatpush2.bf16.msra.mxu0 %v3768
    %5701 = vmatprep.subr.bf16.mxu0 %v3731
    %5702 = vmatpush2.bf16.msra.mxu0 %v3730
    %5703 = vmatprep.subr.bf16.mxu0 %v3693
    %5704 = vmatpush2.bf16.msra.mxu0 %v3692
    %5705 = vmatprep.subr.bf16.mxu0 %v3655
    %5706 = vmatpush2.bf16.msra.mxu0 %v3654
    %5707 = vmatprep.mubr.bf16.mxu0 %v240
    %5708 = vmatmul.mubr.bf16.gmra.mxu0 %v239
    %v5709 = vpop.f32.mrf.mxu0
    %v5710 = vadd.f32 %v1057, %v5709
    %v5711 = vpop.f32.mrf.mxu0
    %v5712 = vadd.f32 %v1061, %v5711
    %v5713 = vpop.f32.mrf.mxu0
    %v5714 = vpop.f32.mrf.mxu0
    %5715 = vdwg.mxu0
    %5716 = vmatprep.subr.bf16.mxu0 0
    %5717 = vmatpush1.bf16.msra.mxu0 0
    %5718 = vmatprep.subr.bf16.mxu0 0
    %5719 = vmatpush1.bf16.msra.mxu0 0
    %5720 = vmatprep.subr.bf16.mxu0 0
    %5721 = vmatpush1.bf16.msra.mxu0 0
    %5722 = vmatprep.subr.bf16.mxu0 0
    %5723 = vmatpush1.bf16.msra.mxu0 0
    %5724 = vmatprep.subr.bf16.mxu0 0
    %5725 = vmatpush1.bf16.msra.mxu0 0
    %5726 = vmatprep.subr.bf16.mxu0 %v4805
    %5727 = vmatpush1.bf16.msra.mxu0 %v4802
    %5728 = vmatprep.subr.bf16.mxu0 %v3997
    %5729 = vmatpush1.bf16.msra.mxu0 %v3996
    %5730 = vmatprep.subr.bf16.mxu0 %v3959
    %5731 = vmatpush1.bf16.msra.mxu0 %v3958
    %5732 = vmatprep.subr.bf16.mxu0 0
    %5733 = vmatpush2.bf16.msra.mxu0 0
    %5734 = vmatprep.subr.bf16.mxu0 0
    %5735 = vmatpush2.bf16.msra.mxu0 0
    %5736 = vmatprep.subr.bf16.mxu0 0
    %5737 = vmatpush2.bf16.msra.mxu0 0
    %5738 = vmatprep.subr.bf16.mxu0 0
    %5739 = vmatpush2.bf16.msra.mxu0 0
    %5740 = vmatprep.subr.bf16.mxu0 0
    %5741 = vmatpush2.bf16.msra.mxu0 0
    %5742 = vmatprep.subr.bf16.mxu0 0
    %5743 = vmatpush2.bf16.msra.mxu0 0
    %5744 = vmatprep.subr.bf16.mxu0 0
    %5745 = vmatpush2.bf16.msra.mxu0 0
    %5746 = vmatprep.subr.bf16.mxu0 0
    %5747 = vmatpush2.bf16.msra.mxu0 0
    %5748 = vmatprep.mubr.bf16.mxu0 0
    %5749 = vmatmul.mubr.bf16.gmra.mxu0 %v4738
    %v5750 = vpop.f32.mrf.mxu0
    %v5751 = vadd.f32 %v5710, %v5750
    %v5752 = vpop.f32.mrf.mxu0
    %v5753 = vadd.f32 %v5712, %v5752
    %v5754 = vpop.f32.mrf.mxu0
    %v5755 = vpop.f32.mrf.mxu0
    %5756 = vdwg.mxu0
    %5757 = vmatprep.subr.bf16.mxu0 %v3619
    %5758 = vmatpush1.bf16.msra.mxu0 %v3618
    %5759 = vmatprep.subr.bf16.mxu0 %v3581
    %5760 = vmatpush1.bf16.msra.mxu0 %v3580
    %5761 = vmatprep.subr.bf16.mxu0 %v3543
    %5762 = vmatpush1.bf16.msra.mxu0 %v3542
    %5763 = vmatprep.subr.bf16.mxu0 %v3505
    %5764 = vmatpush1.bf16.msra.mxu0 %v3504
    %5765 = vmatprep.subr.bf16.mxu0 %v3467
    %5766 = vmatpush1.bf16.msra.mxu0 %v3466
    %5767 = vmatprep.subr.bf16.mxu0 %v3429
    %5768 = vmatpush1.bf16.msra.mxu0 %v3428
    %5769 = vmatprep.subr.bf16.mxu0 %v3391
    %5770 = vmatpush1.bf16.msra.mxu0 %v3390
    %5771 = vmatprep.subr.bf16.mxu0 %v3353
    %5772 = vmatpush1.bf16.msra.mxu0 %v3352
    %5773 = vmatprep.subr.bf16.mxu0 %v3923
    %5774 = vmatpush2.bf16.msra.mxu0 %v3922
    %5775 = vmatprep.subr.bf16.mxu0 %v3885
    %5776 = vmatpush2.bf16.msra.mxu0 %v3884
    %5777 = vmatprep.subr.bf16.mxu0 %v3847
    %5778 = vmatpush2.bf16.msra.mxu0 %v3846
    %5779 = vmatprep.subr.bf16.mxu0 %v3809
    %5780 = vmatpush2.bf16.msra.mxu0 %v3808
    %5781 = vmatprep.subr.bf16.mxu0 %v3771
    %5782 = vmatpush2.bf16.msra.mxu0 %v3770
    %5783 = vmatprep.subr.bf16.mxu0 %v3733
    %5784 = vmatpush2.bf16.msra.mxu0 %v3732
    %5785 = vmatprep.subr.bf16.mxu0 %v3695
    %5786 = vmatpush2.bf16.msra.mxu0 %v3694
    %5787 = vmatprep.subr.bf16.mxu0 %v3657
    %5788 = vmatpush2.bf16.msra.mxu0 %v3656
    %5789 = vmatprep.mubr.bf16.mxu0 %v240
    %5790 = vmatmul.mubr.bf16.gmra.mxu0 %v239
    %v5791 = vpop.f32.mrf.mxu0
    %v5792 = vadd.f32 %v1065, %v5791
    %v5793 = vpop.f32.mrf.mxu0
    %v5794 = vadd.f32 %v1069, %v5793
    %v5795 = vpop.f32.mrf.mxu0
    %v5796 = vpop.f32.mrf.mxu0
    %5797 = vdwg.mxu0
    %5798 = vmatprep.subr.bf16.mxu0 0
    %5799 = vmatpush1.bf16.msra.mxu0 0
    %5800 = vmatprep.subr.bf16.mxu0 0
    %5801 = vmatpush1.bf16.msra.mxu0 0
    %5802 = vmatprep.subr.bf16.mxu0 0
    %5803 = vmatpush1.bf16.msra.mxu0 0
    %5804 = vmatprep.subr.bf16.mxu0 0
    %5805 = vmatpush1.bf16.msra.mxu0 0
    %5806 = vmatprep.subr.bf16.mxu0 0
    %5807 = vmatpush1.bf16.msra.mxu0 0
    %5808 = vmatprep.subr.bf16.mxu0 %v4811
    %5809 = vmatpush1.bf16.msra.mxu0 %v4808
    %5810 = vmatprep.subr.bf16.mxu0 %v3999
    %5811 = vmatpush1.bf16.msra.mxu0 %v3998
    %5812 = vmatprep.subr.bf16.mxu0 %v3961
    %5813 = vmatpush1.bf16.msra.mxu0 %v3960
    %5814 = vmatprep.subr.bf16.mxu0 0
    %5815 = vmatpush2.bf16.msra.mxu0 0
    %5816 = vmatprep.subr.bf16.mxu0 0
    %5817 = vmatpush2.bf16.msra.mxu0 0
    %5818 = vmatprep.subr.bf16.mxu0 0
    %5819 = vmatpush2.bf16.msra.mxu0 0
    %5820 = vmatprep.subr.bf16.mxu0 0
    %5821 = vmatpush2.bf16.msra.mxu0 0
    %5822 = vmatprep.subr.bf16.mxu0 0
    %5823 = vmatpush2.bf16.msra.mxu0 0
    %5824 = vmatprep.subr.bf16.mxu0 0
    %5825 = vmatpush2.bf16.msra.mxu0 0
    %5826 = vmatprep.subr.bf16.mxu0 0
    %5827 = vmatpush2.bf16.msra.mxu0 0
    %5828 = vmatprep.subr.bf16.mxu0 0
    %5829 = vmatpush2.bf16.msra.mxu0 0
    %5830 = vmatprep.mubr.bf16.mxu0 0
    %5831 = vmatmul.mubr.bf16.gmra.mxu0 %v4738
    %v5832 = vpop.f32.mrf.mxu0
    %v5833 = vadd.f32 %v5792, %v5832
    %v5834 = vpop.f32.mrf.mxu0
    %v5835 = vadd.f32 %v5794, %v5834
    %v5836 = vpop.f32.mrf.mxu0
    %v5837 = vpop.f32.mrf.mxu0
    %5838 = vdwg.mxu0
    %5839 = vmatprep.subr.bf16.mxu0 %v3621
    %5840 = vmatpush1.bf16.msra.mxu0 %v3620
    %5841 = vmatprep.subr.bf16.mxu0 %v3583
    %5842 = vmatpush1.bf16.msra.mxu0 %v3582
    %5843 = vmatprep.subr.bf16.mxu0 %v3545
    %5844 = vmatpush1.bf16.msra.mxu0 %v3544
    %5845 = vmatprep.subr.bf16.mxu0 %v3507
    %5846 = vmatpush1.bf16.msra.mxu0 %v3506
    %5847 = vmatprep.subr.bf16.mxu0 %v3469
    %5848 = vmatpush1.bf16.msra.mxu0 %v3468
    %5849 = vmatprep.subr.bf16.mxu0 %v3431
    %5850 = vmatpush1.bf16.msra.mxu0 %v3430
    %5851 = vmatprep.subr.bf16.mxu0 %v3393
    %5852 = vmatpush1.bf16.msra.mxu0 %v3392
    %5853 = vmatprep.subr.bf16.mxu0 %v3355
    %5854 = vmatpush1.bf16.msra.mxu0 %v3354
    %5855 = vmatprep.subr.bf16.mxu0 %v3925
    %5856 = vmatpush2.bf16.msra.mxu0 %v3924
    %5857 = vmatprep.subr.bf16.mxu0 %v3887
    %5858 = vmatpush2.bf16.msra.mxu0 %v3886
    %5859 = vmatprep.subr.bf16.mxu0 %v3849
    %5860 = vmatpush2.bf16.msra.mxu0 %v3848
    %5861 = vmatprep.subr.bf16.mxu0 %v3811
    %5862 = vmatpush2.bf16.msra.mxu0 %v3810
    %5863 = vmatprep.subr.bf16.mxu0 %v3773
    %5864 = vmatpush2.bf16.msra.mxu0 %v3772
    %5865 = vmatprep.subr.bf16.mxu0 %v3735
    %5866 = vmatpush2.bf16.msra.mxu0 %v3734
    %5867 = vmatprep.subr.bf16.mxu0 %v3697
    %5868 = vmatpush2.bf16.msra.mxu0 %v3696
    %5869 = vmatprep.subr.bf16.mxu0 %v3659
    %5870 = vmatpush2.bf16.msra.mxu0 %v3658
    %5871 = vmatprep.mubr.bf16.mxu0 %v240
    %5872 = vmatmul.mubr.bf16.gmra.mxu0 %v239
    %v5873 = vpop.f32.mrf.mxu0
    %v5874 = vadd.f32 %v1073, %v5873
    %v5875 = vpop.f32.mrf.mxu0
    %v5876 = vadd.f32 %v1077, %v5875
    %v5877 = vpop.f32.mrf.mxu0
    %v5878 = vpop.f32.mrf.mxu0
    %5879 = vdwg.mxu0
    %5880 = vmatprep.subr.bf16.mxu0 0
    %5881 = vmatpush1.bf16.msra.mxu0 0
    %5882 = vmatprep.subr.bf16.mxu0 0
    %5883 = vmatpush1.bf16.msra.mxu0 0
    %5884 = vmatprep.subr.bf16.mxu0 0
    %5885 = vmatpush1.bf16.msra.mxu0 0
    %5886 = vmatprep.subr.bf16.mxu0 0
    %5887 = vmatpush1.bf16.msra.mxu0 0
    %5888 = vmatprep.subr.bf16.mxu0 0
    %5889 = vmatpush1.bf16.msra.mxu0 0
    %5890 = vmatprep.subr.bf16.mxu0 %v4817
    %5891 = vmatpush1.bf16.msra.mxu0 %v4814
    %5892 = vmatprep.subr.bf16.mxu0 %v4001
    %5893 = vmatpush1.bf16.msra.mxu0 %v4000
    %5894 = vmatprep.subr.bf16.mxu0 %v3963
    %5895 = vmatpush1.bf16.msra.mxu0 %v3962
    %5896 = vmatprep.subr.bf16.mxu0 0
    %5897 = vmatpush2.bf16.msra.mxu0 0
    %5898 = vmatprep.subr.bf16.mxu0 0
    %5899 = vmatpush2.bf16.msra.mxu0 0
    %5900 = vmatprep.subr.bf16.mxu0 0
    %5901 = vmatpush2.bf16.msra.mxu0 0
    %5902 = vmatprep.subr.bf16.mxu0 0
    %5903 = vmatpush2.bf16.msra.mxu0 0
    %5904 = vmatprep.subr.bf16.mxu0 0
    %5905 = vmatpush2.bf16.msra.mxu0 0
    %5906 = vmatprep.subr.bf16.mxu0 0
    %5907 = vmatpush2.bf16.msra.mxu0 0
    %5908 = vmatprep.subr.bf16.mxu0 0
    %5909 = vmatpush2.bf16.msra.mxu0 0
    %5910 = vmatprep.subr.bf16.mxu0 0
    %5911 = vmatpush2.bf16.msra.mxu0 0
    %5912 = vmatprep.mubr.bf16.mxu0 0
    %5913 = vmatmul.mubr.bf16.gmra.mxu0 %v4738
    %v5914 = vpop.f32.mrf.mxu0
    %v5915 = vadd.f32 %v5874, %v5914
    %v5916 = vpop.f32.mrf.mxu0
    %v5917 = vadd.f32 %v5876, %v5916
    %v5918 = vpop.f32.mrf.mxu0
    %v5919 = vpop.f32.mrf.mxu0
    %5920 = vdwg.mxu0
    %5921 = vmatprep.subr.bf16.mxu0 %v3623
    %5922 = vmatpush1.bf16.msra.mxu0 %v3622
    %5923 = vmatprep.subr.bf16.mxu0 %v3585
    %5924 = vmatpush1.bf16.msra.mxu0 %v3584
    %5925 = vmatprep.subr.bf16.mxu0 %v3547
    %5926 = vmatpush1.bf16.msra.mxu0 %v3546
    %5927 = vmatprep.subr.bf16.mxu0 %v3509
    %5928 = vmatpush1.bf16.msra.mxu0 %v3508
    %5929 = vmatprep.subr.bf16.mxu0 %v3471
    %5930 = vmatpush1.bf16.msra.mxu0 %v3470
    %5931 = vmatprep.subr.bf16.mxu0 %v3433
    %5932 = vmatpush1.bf16.msra.mxu0 %v3432
    %5933 = vmatprep.subr.bf16.mxu0 %v3395
    %5934 = vmatpush1.bf16.msra.mxu0 %v3394
    %5935 = vmatprep.subr.bf16.mxu0 %v3357
    %5936 = vmatpush1.bf16.msra.mxu0 %v3356
    %5937 = vmatprep.subr.bf16.mxu0 %v3927
    %5938 = vmatpush2.bf16.msra.mxu0 %v3926
    %5939 = vmatprep.subr.bf16.mxu0 %v3889
    %5940 = vmatpush2.bf16.msra.mxu0 %v3888
    %5941 = vmatprep.subr.bf16.mxu0 %v3851
    %5942 = vmatpush2.bf16.msra.mxu0 %v3850
    %5943 = vmatprep.subr.bf16.mxu0 %v3813
    %5944 = vmatpush2.bf16.msra.mxu0 %v3812
    %5945 = vmatprep.subr.bf16.mxu0 %v3775
    %5946 = vmatpush2.bf16.msra.mxu0 %v3774
    %5947 = vmatprep.subr.bf16.mxu0 %v3737
    %5948 = vmatpush2.bf16.msra.mxu0 %v3736
    %5949 = vmatprep.subr.bf16.mxu0 %v3699
    %5950 = vmatpush2.bf16.msra.mxu0 %v3698
    %5951 = vmatprep.subr.bf16.mxu0 %v3661
    %5952 = vmatpush2.bf16.msra.mxu0 %v3660
    %5953 = vmatprep.mubr.bf16.mxu0 %v240
    %5954 = vmatmul.mubr.bf16.gmra.mxu0 %v239
    %v5955 = vpop.f32.mrf.mxu0
    %v5956 = vadd.f32 %v1081, %v5955
    %v5957 = vpop.f32.mrf.mxu0
    %v5958 = vadd.f32 %v1085, %v5957
    %v5959 = vpop.f32.mrf.mxu0
    %v5960 = vpop.f32.mrf.mxu0
    %5961 = vdwg.mxu0
    %5962 = vmatprep.subr.bf16.mxu0 0
    %5963 = vmatpush1.bf16.msra.mxu0 0
    %5964 = vmatprep.subr.bf16.mxu0 0
    %5965 = vmatpush1.bf16.msra.mxu0 0
    %5966 = vmatprep.subr.bf16.mxu0 0
    %5967 = vmatpush1.bf16.msra.mxu0 0
    %5968 = vmatprep.subr.bf16.mxu0 0
    %5969 = vmatpush1.bf16.msra.mxu0 0
    %5970 = vmatprep.subr.bf16.mxu0 0
    %5971 = vmatpush1.bf16.msra.mxu0 0
    %5972 = vmatprep.subr.bf16.mxu0 %v4823
    %5973 = vmatpush1.bf16.msra.mxu0 %v4820
    %5974 = vmatprep.subr.bf16.mxu0 %v4003
    %5975 = vmatpush1.bf16.msra.mxu0 %v4002
    %5976 = vmatprep.subr.bf16.mxu0 %v3965
    %5977 = vmatpush1.bf16.msra.mxu0 %v3964
    %5978 = vmatprep.subr.bf16.mxu0 0
    %5979 = vmatpush2.bf16.msra.mxu0 0
    %5980 = vmatprep.subr.bf16.mxu0 0
    %5981 = vmatpush2.bf16.msra.mxu0 0
    %5982 = vmatprep.subr.bf16.mxu0 0
    %5983 = vmatpush2.bf16.msra.mxu0 0
    %5984 = vmatprep.subr.bf16.mxu0 0
    %5985 = vmatpush2.bf16.msra.mxu0 0
    %5986 = vmatprep.subr.bf16.mxu0 0
    %5987 = vmatpush2.bf16.msra.mxu0 0
    %5988 = vmatprep.subr.bf16.mxu0 0
    %5989 = vmatpush2.bf16.msra.mxu0 0
    %5990 = vmatprep.subr.bf16.mxu0 0
    %5991 = vmatpush2.bf16.msra.mxu0 0
    %5992 = vmatprep.subr.bf16.mxu0 0
    %5993 = vmatpush2.bf16.msra.mxu0 0
    %5994 = vmatprep.mubr.bf16.mxu0 0
    %5995 = vmatmul.mubr.bf16.gmra.mxu0 %v4738
    %v5996 = vpop.f32.mrf.mxu0
    %v5997 = vadd.f32 %v5956, %v5996
    %v5998 = vpop.f32.mrf.mxu0
    %v5999 = vadd.f32 %v5958, %v5998
    %v6000 = vpop.f32.mrf.mxu0
    %v6001 = vpop.f32.mrf.mxu0
    %6002 = vdwg.mxu0
    %6003 = vmatprep.subr.bf16.mxu0 %v3625
    %6004 = vmatpush1.bf16.msra.mxu0 %v3624
    %6005 = vmatprep.subr.bf16.mxu0 %v3587
    %6006 = vmatpush1.bf16.msra.mxu0 %v3586
    %6007 = vmatprep.subr.bf16.mxu0 %v3549
    %6008 = vmatpush1.bf16.msra.mxu0 %v3548
    %6009 = vmatprep.subr.bf16.mxu0 %v3511
    %6010 = vmatpush1.bf16.msra.mxu0 %v3510
    %6011 = vmatprep.subr.bf16.mxu0 %v3473
    %6012 = vmatpush1.bf16.msra.mxu0 %v3472
    %6013 = vmatprep.subr.bf16.mxu0 %v3435
    %6014 = vmatpush1.bf16.msra.mxu0 %v3434
    %6015 = vmatprep.subr.bf16.mxu0 %v3397
    %6016 = vmatpush1.bf16.msra.mxu0 %v3396
    %6017 = vmatprep.subr.bf16.mxu0 %v3359
    %6018 = vmatpush1.bf16.msra.mxu0 %v3358
    %6019 = vmatprep.subr.bf16.mxu0 %v3929
    %6020 = vmatpush2.bf16.msra.mxu0 %v3928
    %6021 = vmatprep.subr.bf16.mxu0 %v3891
    %6022 = vmatpush2.bf16.msra.mxu0 %v3890
    %6023 = vmatprep.subr.bf16.mxu0 %v3853
    %6024 = vmatpush2.bf16.msra.mxu0 %v3852
    %6025 = vmatprep.subr.bf16.mxu0 %v3815
    %6026 = vmatpush2.bf16.msra.mxu0 %v3814
    %6027 = vmatprep.subr.bf16.mxu0 %v3777
    %6028 = vmatpush2.bf16.msra.mxu0 %v3776
    %6029 = vmatprep.subr.bf16.mxu0 %v3739
    %6030 = vmatpush2.bf16.msra.mxu0 %v3738
    %6031 = vmatprep.subr.bf16.mxu0 %v3701
    %6032 = vmatpush2.bf16.msra.mxu0 %v3700
    %6033 = vmatprep.subr.bf16.mxu0 %v3663
    %6034 = vmatpush2.bf16.msra.mxu0 %v3662
    %6035 = vmatprep.mubr.bf16.mxu0 %v240
    %6036 = vmatmul.mubr.bf16.gmra.mxu0 %v239
    %v6037 = vpop.f32.mrf.mxu0
    %v6038 = vadd.f32 %v1089, %v6037
    %v6039 = vpop.f32.mrf.mxu0
    %v6040 = vadd.f32 %v1093, %v6039
    %v6041 = vpop.f32.mrf.mxu0
    %v6042 = vpop.f32.mrf.mxu0
    %6043 = vdwg.mxu0
    %6044 = vmatprep.subr.bf16.mxu0 0
    %6045 = vmatpush1.bf16.msra.mxu0 0
    %6046 = vmatprep.subr.bf16.mxu0 0
    %6047 = vmatpush1.bf16.msra.mxu0 0
    %6048 = vmatprep.subr.bf16.mxu0 0
    %6049 = vmatpush1.bf16.msra.mxu0 0
    %6050 = vmatprep.subr.bf16.mxu0 0
    %6051 = vmatpush1.bf16.msra.mxu0 0
    %6052 = vmatprep.subr.bf16.mxu0 0
    %6053 = vmatpush1.bf16.msra.mxu0 0
    %6054 = vmatprep.subr.bf16.mxu0 %v4829
    %6055 = vmatpush1.bf16.msra.mxu0 %v4826
    %6056 = vmatprep.subr.bf16.mxu0 %v4005
    %6057 = vmatpush1.bf16.msra.mxu0 %v4004
    %6058 = vmatprep.subr.bf16.mxu0 %v3967
    %6059 = vmatpush1.bf16.msra.mxu0 %v3966
    %6060 = vmatprep.subr.bf16.mxu0 0
    %6061 = vmatpush2.bf16.msra.mxu0 0
    %6062 = vmatprep.subr.bf16.mxu0 0
    %6063 = vmatpush2.bf16.msra.mxu0 0
    %6064 = vmatprep.subr.bf16.mxu0 0
    %6065 = vmatpush2.bf16.msra.mxu0 0
    %6066 = vmatprep.subr.bf16.mxu0 0
    %6067 = vmatpush2.bf16.msra.mxu0 0
    %6068 = vmatprep.subr.bf16.mxu0 0
    %6069 = vmatpush2.bf16.msra.mxu0 0
    %6070 = vmatprep.subr.bf16.mxu0 0
    %6071 = vmatpush2.bf16.msra.mxu0 0
    %6072 = vmatprep.subr.bf16.mxu0 0
    %6073 = vmatpush2.bf16.msra.mxu0 0
    %6074 = vmatprep.subr.bf16.mxu0 0
    %6075 = vmatpush2.bf16.msra.mxu0 0
    %6076 = vmatprep.mubr.bf16.mxu0 0
    %6077 = vmatmul.mubr.bf16.gmra.mxu0 %v4738
    %v6078 = vpop.f32.mrf.mxu0
    %v6079 = vadd.f32 %v6038, %v6078
    %v6080 = vpop.f32.mrf.mxu0
    %v6081 = vadd.f32 %v6040, %v6080
    %v6082 = vpop.f32.mrf.mxu0
    %v6083 = vpop.f32.mrf.mxu0
    %6084 = vdwg.mxu0
    %6085 = vmatprep.subr.bf16.mxu0 %v3627
    %6086 = vmatpush1.bf16.msra.mxu0 %v3626
    %6087 = vmatprep.subr.bf16.mxu0 %v3589
    %6088 = vmatpush1.bf16.msra.mxu0 %v3588
    %6089 = vmatprep.subr.bf16.mxu0 %v3551
    %6090 = vmatpush1.bf16.msra.mxu0 %v3550
    %6091 = vmatprep.subr.bf16.mxu0 %v3513
    %6092 = vmatpush1.bf16.msra.mxu0 %v3512
    %6093 = vmatprep.subr.bf16.mxu0 %v3475
    %6094 = vmatpush1.bf16.msra.mxu0 %v3474
    %6095 = vmatprep.subr.bf16.mxu0 %v3437
    %6096 = vmatpush1.bf16.msra.mxu0 %v3436
    %6097 = vmatprep.subr.bf16.mxu0 %v3399
    %6098 = vmatpush1.bf16.msra.mxu0 %v3398
    %6099 = vmatprep.subr.bf16.mxu0 %v3361
    %6100 = vmatpush1.bf16.msra.mxu0 %v3360
    %6101 = vmatprep.subr.bf16.mxu0 %v3931
    %6102 = vmatpush2.bf16.msra.mxu0 %v3930
    %6103 = vmatprep.subr.bf16.mxu0 %v3893
    %6104 = vmatpush2.bf16.msra.mxu0 %v3892
    %6105 = vmatprep.subr.bf16.mxu0 %v3855
    %6106 = vmatpush2.bf16.msra.mxu0 %v3854
    %6107 = vmatprep.subr.bf16.mxu0 %v3817
    %6108 = vmatpush2.bf16.msra.mxu0 %v3816
    %6109 = vmatprep.subr.bf16.mxu0 %v3779
    %6110 = vmatpush2.bf16.msra.mxu0 %v3778
    %6111 = vmatprep.subr.bf16.mxu0 %v3741
    %6112 = vmatpush2.bf16.msra.mxu0 %v3740
    %6113 = vmatprep.subr.bf16.mxu0 %v3703
    %6114 = vmatpush2.bf16.msra.mxu0 %v3702
    %6115 = vmatprep.subr.bf16.mxu0 %v3665
    %6116 = vmatpush2.bf16.msra.mxu0 %v3664
    %6117 = vmatprep.mubr.bf16.mxu0 %v240
    %6118 = vmatmul.mubr.bf16.gmra.mxu0 %v239
    %v6119 = vpop.f32.mrf.mxu0
    %v6120 = vadd.f32 %v1097, %v6119
    %v6121 = vpop.f32.mrf.mxu0
    %v6122 = vadd.f32 %v1101, %v6121
    %v6123 = vpop.f32.mrf.mxu0
    %v6124 = vpop.f32.mrf.mxu0
    %6125 = vdwg.mxu0
    %6126 = vmatprep.subr.bf16.mxu0 0
    %6127 = vmatpush1.bf16.msra.mxu0 0
    %6128 = vmatprep.subr.bf16.mxu0 0
    %6129 = vmatpush1.bf16.msra.mxu0 0
    %6130 = vmatprep.subr.bf16.mxu0 0
    %6131 = vmatpush1.bf16.msra.mxu0 0
    %6132 = vmatprep.subr.bf16.mxu0 0
    %6133 = vmatpush1.bf16.msra.mxu0 0
    %6134 = vmatprep.subr.bf16.mxu0 0
    %6135 = vmatpush1.bf16.msra.mxu0 0
    %6136 = vmatprep.subr.bf16.mxu0 %v4835
    %6137 = vmatpush1.bf16.msra.mxu0 %v4832
    %6138 = vmatprep.subr.bf16.mxu0 %v4007
    %6139 = vmatpush1.bf16.msra.mxu0 %v4006
    %6140 = vmatprep.subr.bf16.mxu0 %v3969
    %6141 = vmatpush1.bf16.msra.mxu0 %v3968
    %6142 = vmatprep.subr.bf16.mxu0 0
    %6143 = vmatpush2.bf16.msra.mxu0 0
    %6144 = vmatprep.subr.bf16.mxu0 0
    %6145 = vmatpush2.bf16.msra.mxu0 0
    %6146 = vmatprep.subr.bf16.mxu0 0
    %6147 = vmatpush2.bf16.msra.mxu0 0
    %6148 = vmatprep.subr.bf16.mxu0 0
    %6149 = vmatpush2.bf16.msra.mxu0 0
    %6150 = vmatprep.subr.bf16.mxu0 0
    %6151 = vmatpush2.bf16.msra.mxu0 0
    %6152 = vmatprep.subr.bf16.mxu0 0
    %6153 = vmatpush2.bf16.msra.mxu0 0
    %6154 = vmatprep.subr.bf16.mxu0 0
    %6155 = vmatpush2.bf16.msra.mxu0 0
    %6156 = vmatprep.subr.bf16.mxu0 0
    %6157 = vmatpush2.bf16.msra.mxu0 0
    %6158 = vmatprep.mubr.bf16.mxu0 0
    %6159 = vmatmul.mubr.bf16.gmra.mxu0 %v4738
    %v6160 = vpop.f32.mrf.mxu0
    %v6161 = vadd.f32 %v6120, %v6160
    %v6162 = vpop.f32.mrf.mxu0
    %v6163 = vadd.f32 %v6122, %v6162
    %v6164 = vpop.f32.mrf.mxu0
    %v6165 = vpop.f32.mrf.mxu0
    %6166 = vdwg.mxu0
    %6167 = vmatprep.subr.bf16.mxu0 %v3629
    %6168 = vmatpush1.bf16.msra.mxu0 %v3628
    %6169 = vmatprep.subr.bf16.mxu0 %v3591
    %6170 = vmatpush1.bf16.msra.mxu0 %v3590
    %6171 = vmatprep.subr.bf16.mxu0 %v3553
    %6172 = vmatpush1.bf16.msra.mxu0 %v3552
    %6173 = vmatprep.subr.bf16.mxu0 %v3515
    %6174 = vmatpush1.bf16.msra.mxu0 %v3514
    %6175 = vmatprep.subr.bf16.mxu0 %v3477
    %6176 = vmatpush1.bf16.msra.mxu0 %v3476
    %6177 = vmatprep.subr.bf16.mxu0 %v3439
    %6178 = vmatpush1.bf16.msra.mxu0 %v3438
    %6179 = vmatprep.subr.bf16.mxu0 %v3401
    %6180 = vmatpush1.bf16.msra.mxu0 %v3400
    %6181 = vmatprep.subr.bf16.mxu0 %v3363
    %6182 = vmatpush1.bf16.msra.mxu0 %v3362
    %6183 = vmatprep.subr.bf16.mxu0 %v3933
    %6184 = vmatpush2.bf16.msra.mxu0 %v3932
    %6185 = vmatprep.subr.bf16.mxu0 %v3895
    %6186 = vmatpush2.bf16.msra.mxu0 %v3894
    %6187 = vmatprep.subr.bf16.mxu0 %v3857
    %6188 = vmatpush2.bf16.msra.mxu0 %v3856
    %6189 = vmatprep.subr.bf16.mxu0 %v3819
    %6190 = vmatpush2.bf16.msra.mxu0 %v3818
    %6191 = vmatprep.subr.bf16.mxu0 %v3781
    %6192 = vmatpush2.bf16.msra.mxu0 %v3780
    %6193 = vmatprep.subr.bf16.mxu0 %v3743
    %6194 = vmatpush2.bf16.msra.mxu0 %v3742
    %6195 = vmatprep.subr.bf16.mxu0 %v3705
    %6196 = vmatpush2.bf16.msra.mxu0 %v3704
    %6197 = vmatprep.subr.bf16.mxu0 %v3667
    %6198 = vmatpush2.bf16.msra.mxu0 %v3666
    %6199 = vmatprep.mubr.bf16.mxu0 %v240
    %6200 = vmatmul.mubr.bf16.gmra.mxu0 %v239
    %v6201 = vpop.f32.mrf.mxu0
    %v6202 = vadd.f32 %v1105, %v6201
    %v6203 = vpop.f32.mrf.mxu0
    %v6204 = vadd.f32 %v1109, %v6203
    %v6205 = vpop.f32.mrf.mxu0
    %v6206 = vpop.f32.mrf.mxu0
    %6207 = vdwg.mxu0
    %6208 = vmatprep.subr.bf16.mxu0 0
    %6209 = vmatpush1.bf16.msra.mxu0 0
    %6210 = vmatprep.subr.bf16.mxu0 0
    %6211 = vmatpush1.bf16.msra.mxu0 0
    %6212 = vmatprep.subr.bf16.mxu0 0
    %6213 = vmatpush1.bf16.msra.mxu0 0
    %6214 = vmatprep.subr.bf16.mxu0 0
    %6215 = vmatpush1.bf16.msra.mxu0 0
    %6216 = vmatprep.subr.bf16.mxu0 0
    %6217 = vmatpush1.bf16.msra.mxu0 0
    %6218 = vmatprep.subr.bf16.mxu0 %v4841
    %6219 = vmatpush1.bf16.msra.mxu0 %v4838
    %6220 = vmatprep.subr.bf16.mxu0 %v4009
    %6221 = vmatpush1.bf16.msra.mxu0 %v4008
    %6222 = vmatprep.subr.bf16.mxu0 %v3971
    %6223 = vmatpush1.bf16.msra.mxu0 %v3970
    %6224 = vmatprep.subr.bf16.mxu0 0
    %6225 = vmatpush2.bf16.msra.mxu0 0
    %6226 = vmatprep.subr.bf16.mxu0 0
    %6227 = vmatpush2.bf16.msra.mxu0 0
    %6228 = vmatprep.subr.bf16.mxu0 0
    %6229 = vmatpush2.bf16.msra.mxu0 0
    %6230 = vmatprep.subr.bf16.mxu0 0
    %6231 = vmatpush2.bf16.msra.mxu0 0
    %6232 = vmatprep.subr.bf16.mxu0 0
    %6233 = vmatpush2.bf16.msra.mxu0 0
    %6234 = vmatprep.subr.bf16.mxu0 0
    %6235 = vmatpush2.bf16.msra.mxu0 0
    %6236 = vmatprep.subr.bf16.mxu0 0
    %6237 = vmatpush2.bf16.msra.mxu0 0
    %6238 = vmatprep.subr.bf16.mxu0 0
    %6239 = vmatpush2.bf16.msra.mxu0 0
    %6240 = vmatprep.mubr.bf16.mxu0 0
    %6241 = vmatmul.mubr.bf16.gmra.mxu0 %v4738
    %v6242 = vpop.f32.mrf.mxu0
    %v6243 = vadd.f32 %v6202, %v6242
    %v6244 = vpop.f32.mrf.mxu0
    %v6245 = vadd.f32 %v6204, %v6244
    %v6246 = vpop.f32.mrf.mxu0
    %v6247 = vpop.f32.mrf.mxu0
    %6248 = vdwg.mxu0
    %6249 = vmatprep.subr.bf16.mxu0 %v3631
    %6250 = vmatpush1.bf16.msra.mxu0 %v3630
    %6251 = vmatprep.subr.bf16.mxu0 %v3593
    %6252 = vmatpush1.bf16.msra.mxu0 %v3592
    %6253 = vmatprep.subr.bf16.mxu0 %v3555
    %6254 = vmatpush1.bf16.msra.mxu0 %v3554
    %6255 = vmatprep.subr.bf16.mxu0 %v3517
    %6256 = vmatpush1.bf16.msra.mxu0 %v3516
    %6257 = vmatprep.subr.bf16.mxu0 %v3479
    %6258 = vmatpush1.bf16.msra.mxu0 %v3478
    %6259 = vmatprep.subr.bf16.mxu0 %v3441
    %6260 = vmatpush1.bf16.msra.mxu0 %v3440
    %6261 = vmatprep.subr.bf16.mxu0 %v3403
    %6262 = vmatpush1.bf16.msra.mxu0 %v3402
    %6263 = vmatprep.subr.bf16.mxu0 %v3365
    %6264 = vmatpush1.bf16.msra.mxu0 %v3364
    %6265 = vmatprep.subr.bf16.mxu0 %v3935
    %6266 = vmatpush2.bf16.msra.mxu0 %v3934
    %6267 = vmatprep.subr.bf16.mxu0 %v3897
    %6268 = vmatpush2.bf16.msra.mxu0 %v3896
    %6269 = vmatprep.subr.bf16.mxu0 %v3859
    %6270 = vmatpush2.bf16.msra.mxu0 %v3858
    %6271 = vmatprep.subr.bf16.mxu0 %v3821
    %6272 = vmatpush2.bf16.msra.mxu0 %v3820
    %6273 = vmatprep.subr.bf16.mxu0 %v3783
    %6274 = vmatpush2.bf16.msra.mxu0 %v3782
    %6275 = vmatprep.subr.bf16.mxu0 %v3745
    %6276 = vmatpush2.bf16.msra.mxu0 %v3744
    %6277 = vmatprep.subr.bf16.mxu0 %v3707
    %6278 = vmatpush2.bf16.msra.mxu0 %v3706
    %6279 = vmatprep.subr.bf16.mxu0 %v3669
    %6280 = vmatpush2.bf16.msra.mxu0 %v3668
    %6281 = vmatprep.mubr.bf16.mxu0 %v240
    %6282 = vmatmul.mubr.bf16.gmra.mxu0 %v239
    %v6283 = vpop.f32.mrf.mxu0
    %v6284 = vadd.f32 %v1113, %v6283
    %v6285 = vpop.f32.mrf.mxu0
    %v6286 = vadd.f32 %v1117, %v6285
    %v6287 = vpop.f32.mrf.mxu0
    %v6288 = vpop.f32.mrf.mxu0
    %6289 = vdwg.mxu0
    %6290 = vmatprep.subr.bf16.mxu0 0
    %6291 = vmatpush1.bf16.msra.mxu0 0
    %6292 = vmatprep.subr.bf16.mxu0 0
    %6293 = vmatpush1.bf16.msra.mxu0 0
    %6294 = vmatprep.subr.bf16.mxu0 0
    %6295 = vmatpush1.bf16.msra.mxu0 0
    %6296 = vmatprep.subr.bf16.mxu0 0
    %6297 = vmatpush1.bf16.msra.mxu0 0
    %6298 = vmatprep.subr.bf16.mxu0 0
    %6299 = vmatpush1.bf16.msra.mxu0 0
    %6300 = vmatprep.subr.bf16.mxu0 %v4847
    %6301 = vmatpush1.bf16.msra.mxu0 %v4844
    %6302 = vmatprep.subr.bf16.mxu0 %v4011
    %6303 = vmatpush1.bf16.msra.mxu0 %v4010
    %6304 = vmatprep.subr.bf16.mxu0 %v3973
    %6305 = vmatpush1.bf16.msra.mxu0 %v3972
    %6306 = vmatprep.subr.bf16.mxu0 0
    %6307 = vmatpush2.bf16.msra.mxu0 0
    %6308 = vmatprep.subr.bf16.mxu0 0
    %6309 = vmatpush2.bf16.msra.mxu0 0
    %6310 = vmatprep.subr.bf16.mxu0 0
    %6311 = vmatpush2.bf16.msra.mxu0 0
    %6312 = vmatprep.subr.bf16.mxu0 0
    %6313 = vmatpush2.bf16.msra.mxu0 0
    %6314 = vmatprep.subr.bf16.mxu0 0
    %6315 = vmatpush2.bf16.msra.mxu0 0
    %6316 = vmatprep.subr.bf16.mxu0 0
    %6317 = vmatpush2.bf16.msra.mxu0 0
    %6318 = vmatprep.subr.bf16.mxu0 0
    %6319 = vmatpush2.bf16.msra.mxu0 0
    %6320 = vmatprep.subr.bf16.mxu0 0
    %6321 = vmatpush2.bf16.msra.mxu0 0
    %6322 = vmatprep.mubr.bf16.mxu0 0
    %6323 = vmatmul.mubr.bf16.gmra.mxu0 %v4738
    %v6324 = vpop.f32.mrf.mxu0
    %v6325 = vadd.f32 %v6284, %v6324
    %v6326 = vpop.f32.mrf.mxu0
    %v6327 = vadd.f32 %v6286, %v6326
    %v6328 = vpop.f32.mrf.mxu0
    %v6329 = vpop.f32.mrf.mxu0
    %6330 = vdwg.mxu0
    %6331 = vmatprep.subr.bf16.mxu0 %v3633
    %6332 = vmatpush1.bf16.msra.mxu0 %v3632
    %6333 = vmatprep.subr.bf16.mxu0 %v3595
    %6334 = vmatpush1.bf16.msra.mxu0 %v3594
    %6335 = vmatprep.subr.bf16.mxu0 %v3557
    %6336 = vmatpush1.bf16.msra.mxu0 %v3556
    %6337 = vmatprep.subr.bf16.mxu0 %v3519
    %6338 = vmatpush1.bf16.msra.mxu0 %v3518
    %6339 = vmatprep.subr.bf16.mxu0 %v3481
    %6340 = vmatpush1.bf16.msra.mxu0 %v3480
    %6341 = vmatprep.subr.bf16.mxu0 %v3443
    %6342 = vmatpush1.bf16.msra.mxu0 %v3442
    %6343 = vmatprep.subr.bf16.mxu0 %v3405
    %6344 = vmatpush1.bf16.msra.mxu0 %v3404
    %6345 = vmatprep.subr.bf16.mxu0 %v3367
    %6346 = vmatpush1.bf16.msra.mxu0 %v3366
    %6347 = vmatprep.subr.bf16.mxu0 %v3937
    %6348 = vmatpush2.bf16.msra.mxu0 %v3936
    %6349 = vmatprep.subr.bf16.mxu0 %v3899
    %6350 = vmatpush2.bf16.msra.mxu0 %v3898
    %6351 = vmatprep.subr.bf16.mxu0 %v3861
    %6352 = vmatpush2.bf16.msra.mxu0 %v3860
    %6353 = vmatprep.subr.bf16.mxu0 %v3823
    %6354 = vmatpush2.bf16.msra.mxu0 %v3822
    %6355 = vmatprep.subr.bf16.mxu0 %v3785
    %6356 = vmatpush2.bf16.msra.mxu0 %v3784
    %6357 = vmatprep.subr.bf16.mxu0 %v3747
    %6358 = vmatpush2.bf16.msra.mxu0 %v3746
    %6359 = vmatprep.subr.bf16.mxu0 %v3709
    %6360 = vmatpush2.bf16.msra.mxu0 %v3708
    %6361 = vmatprep.subr.bf16.mxu0 %v3671
    %6362 = vmatpush2.bf16.msra.mxu0 %v3670
    %6363 = vmatprep.mubr.bf16.mxu0 %v240
    %6364 = vmatmul.mubr.bf16.gmra.mxu0 %v239
    %v6365 = vpop.f32.mrf.mxu0
    %v6366 = vadd.f32 %v1121, %v6365
    %v6367 = vpop.f32.mrf.mxu0
    %v6368 = vadd.f32 %v1125, %v6367
    %v6369 = vpop.f32.mrf.mxu0
    %v6370 = vpop.f32.mrf.mxu0
    %6371 = vdwg.mxu0
    %6372 = vmatprep.subr.bf16.mxu0 0
    %6373 = vmatpush1.bf16.msra.mxu0 0
    %6374 = vmatprep.subr.bf16.mxu0 0
    %6375 = vmatpush1.bf16.msra.mxu0 0
    %6376 = vmatprep.subr.bf16.mxu0 0
    %6377 = vmatpush1.bf16.msra.mxu0 0
    %6378 = vmatprep.subr.bf16.mxu0 0
    %6379 = vmatpush1.bf16.msra.mxu0 0
    %6380 = vmatprep.subr.bf16.mxu0 0
    %6381 = vmatpush1.bf16.msra.mxu0 0
    %6382 = vmatprep.subr.bf16.mxu0 %v4853
    %6383 = vmatpush1.bf16.msra.mxu0 %v4850
    %6384 = vmatprep.subr.bf16.mxu0 %v4013
    %6385 = vmatpush1.bf16.msra.mxu0 %v4012
    %6386 = vmatprep.subr.bf16.mxu0 %v3975
    %6387 = vmatpush1.bf16.msra.mxu0 %v3974
    %6388 = vmatprep.subr.bf16.mxu0 0
    %6389 = vmatpush2.bf16.msra.mxu0 0
    %6390 = vmatprep.subr.bf16.mxu0 0
    %6391 = vmatpush2.bf16.msra.mxu0 0
    %6392 = vmatprep.subr.bf16.mxu0 0
    %6393 = vmatpush2.bf16.msra.mxu0 0
    %6394 = vmatprep.subr.bf16.mxu0 0
    %6395 = vmatpush2.bf16.msra.mxu0 0
    %6396 = vmatprep.subr.bf16.mxu0 0
    %6397 = vmatpush2.bf16.msra.mxu0 0
    %6398 = vmatprep.subr.bf16.mxu0 0
    %6399 = vmatpush2.bf16.msra.mxu0 0
    %6400 = vmatprep.subr.bf16.mxu0 0
    %6401 = vmatpush2.bf16.msra.mxu0 0
    %6402 = vmatprep.subr.bf16.mxu0 0
    %6403 = vmatpush2.bf16.msra.mxu0 0
    %6404 = vmatprep.mubr.bf16.mxu0 0
    %6405 = vmatmul.mubr.bf16.gmra.mxu0 %v4738
    %v6406 = vpop.f32.mrf.mxu0
    %v6407 = vadd.f32 %v6366, %v6406
    %v6408 = vpop.f32.mrf.mxu0
    %v6409 = vadd.f32 %v6368, %v6408
    %v6410 = vpop.f32.mrf.mxu0
    %v6411 = vpop.f32.mrf.mxu0
    %6412 = vdwg.mxu0
    %v6451 = vcombine.low %v4931, %v4933
    %v6452 = vcombine.low %v5013, %v5015
    %v6454 = vunpack.c.l.s4 1983009808
    %v6455 = vunpack.c.0.s8 %v6454
    %v6456 = vlaneseq
    %v6457 = vshrl.u32 %v6456, 7
    %v6458 = vsub.s32 %v6455, %v6457
    %v6459 = vrot.slane %v6451, %v6458
    %v6461 = vunpack.c.l.s4 1983009808
    %v6462 = vunpack.c.0.s8 %v6461
    %v6463 = vlaneseq
    %v6464 = vshrl.u32 %v6463, 7
    %v6465 = vsub.s32 %v6462, %v6464
    %v6466 = vrot.slane %v6452, %v6465
    %v6467 = vcombine.low %v6459, %v6466
    %v6468 = vcombine.low %v5095, %v5097
    %v6469 = vcombine.low %v5177, %v5179
    %v6471 = vunpack.c.l.s4 1983009808
    %v6472 = vunpack.c.0.s8 %v6471
    %v6473 = vlaneseq
    %v6474 = vshrl.u32 %v6473, 7
    %v6475 = vsub.s32 %v6472, %v6474
    %v6476 = vrot.slane %v6468, %v6475
    %v6478 = vunpack.c.l.s4 1983009808
    %v6479 = vunpack.c.0.s8 %v6478
    %v6480 = vlaneseq
    %v6481 = vshrl.u32 %v6480, 7
    %v6482 = vsub.s32 %v6479, %v6481
    %v6483 = vrot.slane %v6469, %v6482
    %v6484 = vcombine.low %v6476, %v6483
    %v6485 = vcombine.low %v5259, %v5261
    %v6486 = vcombine.low %v5341, %v5343
    %v6488 = vunpack.c.l.s4 1983009808
    %v6489 = vunpack.c.0.s8 %v6488
    %v6490 = vlaneseq
    %v6491 = vshrl.u32 %v6490, 7
    %v6492 = vsub.s32 %v6489, %v6491
    %v6493 = vrot.slane %v6485, %v6492
    %v6495 = vunpack.c.l.s4 1983009808
    %v6496 = vunpack.c.0.s8 %v6495
    %v6497 = vlaneseq
    %v6498 = vshrl.u32 %v6497, 7
    %v6499 = vsub.s32 %v6496, %v6498
    %v6500 = vrot.slane %v6486, %v6499
    %v6501 = vcombine.low %v6493, %v6500
    %v6502 = vcombine.low %v5423, %v5425
    %v6503 = vcombine.low %v5505, %v5507
    %v6505 = vunpack.c.l.s4 1983009808
    %v6506 = vunpack.c.0.s8 %v6505
    %v6507 = vlaneseq
    %v6508 = vshrl.u32 %v6507, 7
    %v6509 = vsub.s32 %v6506, %v6508
    %v6510 = vrot.slane %v6502, %v6509
    %v6512 = vunpack.c.l.s4 1983009808
    %v6513 = vunpack.c.0.s8 %v6512
    %v6514 = vlaneseq
    %v6515 = vshrl.u32 %v6514, 7
    %v6516 = vsub.s32 %v6513, %v6515
    %v6517 = vrot.slane %v6503, %v6516
    %v6518 = vcombine.low %v6510, %v6517
    %v6519 = vcombine.low %v5587, %v5589
    %v6520 = vcombine.low %v5669, %v5671
    %v6522 = vunpack.c.l.s4 1983009808
    %v6523 = vunpack.c.0.s8 %v6522
    %v6524 = vlaneseq
    %v6525 = vshrl.u32 %v6524, 7
    %v6526 = vsub.s32 %v6523, %v6525
    %v6527 = vrot.slane %v6519, %v6526
    %v6529 = vunpack.c.l.s4 1983009808
    %v6530 = vunpack.c.0.s8 %v6529
    %v6531 = vlaneseq
    %v6532 = vshrl.u32 %v6531, 7
    %v6533 = vsub.s32 %v6530, %v6532
    %v6534 = vrot.slane %v6520, %v6533
    %v6535 = vcombine.low %v6527, %v6534
    %v6536 = vcombine.low %v5751, %v5753
    %v6537 = vcombine.low %v5833, %v5835
    %v6539 = vunpack.c.l.s4 1983009808
    %v6540 = vunpack.c.0.s8 %v6539
    %v6541 = vlaneseq
    %v6542 = vshrl.u32 %v6541, 7
    %v6543 = vsub.s32 %v6540, %v6542
    %v6544 = vrot.slane %v6536, %v6543
    %v6546 = vunpack.c.l.s4 1983009808
    %v6547 = vunpack.c.0.s8 %v6546
    %v6548 = vlaneseq
    %v6549 = vshrl.u32 %v6548, 7
    %v6550 = vsub.s32 %v6547, %v6549
    %v6551 = vrot.slane %v6537, %v6550
    %v6552 = vcombine.low %v6544, %v6551
    %v6553 = vcombine.low %v5915, %v5917
    %v6554 = vcombine.low %v5997, %v5999
    %v6556 = vunpack.c.l.s4 1983009808
    %v6557 = vunpack.c.0.s8 %v6556
    %v6558 = vlaneseq
    %v6559 = vshrl.u32 %v6558, 7
    %v6560 = vsub.s32 %v6557, %v6559
    %v6561 = vrot.slane %v6553, %v6560
    %v6563 = vunpack.c.l.s4 1983009808
    %v6564 = vunpack.c.0.s8 %v6563
    %v6565 = vlaneseq
    %v6566 = vshrl.u32 %v6565, 7
    %v6567 = vsub.s32 %v6564, %v6566
    %v6568 = vrot.slane %v6554, %v6567
    %v6569 = vcombine.low %v6561, %v6568
    %v6570 = vcombine.low %v6079, %v6081
    %v6571 = vcombine.low %v6161, %v6163
    %v6573 = vunpack.c.l.s4 1983009808
    %v6574 = vunpack.c.0.s8 %v6573
    %v6575 = vlaneseq
    %v6576 = vshrl.u32 %v6575, 7
    %v6577 = vsub.s32 %v6574, %v6576
    %v6578 = vrot.slane %v6570, %v6577
    %v6580 = vunpack.c.l.s4 1983009808
    %v6581 = vunpack.c.0.s8 %v6580
    %v6582 = vlaneseq
    %v6583 = vshrl.u32 %v6582, 7
    %v6584 = vsub.s32 %v6581, %v6583
    %v6585 = vrot.slane %v6571, %v6584
    %v6586 = vcombine.low %v6578, %v6585
    %v6587 = vcombine.low %v6243, %v6245
    %v6588 = vcombine.low %v6325, %v6327
    %v6590 = vunpack.c.l.s4 1983009808
    %v6591 = vunpack.c.0.s8 %v6590
    %v6592 = vlaneseq
    %v6593 = vshrl.u32 %v6592, 7
    %v6594 = vsub.s32 %v6591, %v6593
    %v6595 = vrot.slane %v6587, %v6594
    %v6597 = vunpack.c.l.s4 1983009808
    %v6598 = vunpack.c.0.s8 %v6597
    %v6599 = vlaneseq
    %v6600 = vshrl.u32 %v6599, 7
    %v6601 = vsub.s32 %v6598, %v6600
    %v6602 = vrot.slane %v6588, %v6601
    %v6603 = vcombine.low %v6595, %v6602
    %v6604 = vcombine.low %v6407, %v6409
    %v6606 = vunpack.c.l.s4 1983009808
    %v6607 = vunpack.c.0.s8 %v6606
    %v6608 = vlaneseq
    %v6609 = vshrl.u32 %v6608, 7
    %v6610 = vsub.s32 %v6607, %v6609
    %v6611 = vrot.slane %v6604, %v6610
    %6622 = vst [vmem:[%s5] sm:$0xff] %v6467
    %6623 = vst [vmem:[%s5 + $0x8] sm:$0xff] %v6484
    %6624 = vst [vmem:[%s5 + $0x10] sm:$0xff] %v6501
    %6625 = vst [vmem:[%s5 + $0x18] sm:$0xff] %v6518
    %6626 = vst [vmem:[%s5 + $0x20] sm:$0xff] %v6535
    %6627 = vst [vmem:[%s5 + $0x28] sm:$0xff] %v6552
    %6628 = vst [vmem:[%s5 + $0x30] sm:$0xff] %v6569
    %6629 = vst [vmem:[%s5 + $0x38] sm:$0xff] %v6586
    %6630 = vst [vmem:[%s5 + $0x40] sm:$0xff] %v6603
    %vm6631 = vcmask 1041408
    %vm6632 = vcmask 650242
    %vm6633 = vmor %vm6632, %vm6631
    %6634 = vst.msk [vmem:[%s5 + $0x48] sm:$0xf] %vm6633, %v6611
    // Predicated region
    $region38: #{sr_model_forward.9} parent=1 // pred_check
      _
    $region39: #{sr_model_forward.9} parent=1 // pred_check_branch
      %6636 = sbr.rel (0) target = $region41
    $region40: #{sr_model_forward.9} parent=1 // pred_region
      _
    $region41: #{sr_model_forward.9} parent=1 // pred_fallthru
      _
    // Predicated region
    $region42: #{sr_model_forward.9} parent=1 // pred_check
      _
    $region43: #{sr_model_forward.9} parent=1 // pred_check_branch
      %6638 = sbr.rel (0) target = $region45
    $region44: #{sr_model_forward.9} parent=1 // pred_region
      _
    $region45: #{sr_model_forward.9} parent=1 // pred_fallthru
      _
    %6639 = vsyncpa [#allocation3], 1
    %6640 = vsyncpa [#allocation5], 1
    %6641 = vsyncpa [#allocation8], 1

</llo_original>
